<compile_context>
chip_gen: v7x
topology: tpu7x:2x2x1
jax: 0.10.0
libtpu: 0.0.40
codegen_flags: <defaults>
</compile_context>

<pallas_src>
import jax
import jax.numpy as jnp
from jax.experimental import pallas as pl
from jax.experimental.pallas import tpu as pltpu


# ----------------------------------------------------------------------------
# Fused LeNet5 kernel (one grid step == one sample)
# ----------------------------------------------------------------------------
def _lenet5_kernel(cols1_ref, w1_ref, b1_ref, w2_ref, b2_ref, w3_ref, b3_ref,
                   fc1w_ref, fc1b_ref, fc2w_ref, fc2b_ref,
                   out_ref, p1_s, h2_s, m2_s):
    f32 = jnp.float32
    w1 = w1_ref[...]                       # (32, 128)
    b1 = b1_ref[...]                       # (1, 128)

    # ---- Cov1: conv(1->6, 5x5) + sigmoid + 2x2/2 max-pool -------------------
    # cols1 rows are parity-ordered: r = p*196 + y*14 + x, where the conv1
    # output pixel is (2y + p//2, 2x + p%2).  Pool == elementwise max over p.
    p1 = None
    for p in range(4):
        h = jnp.dot(cols1_ref[pl.ds(p * 196, 196), :], w1,
                    preferred_element_type=f32)
        h = jax.nn.sigmoid(h + b1)                         # (196, 128)
        p1 = h if p1 is None else jnp.maximum(p1, h)       # VPU pairwise max
    p1_s[pl.ds(0, 196), :] = p1                            # rows r = y*14 + x
    p1_s[pl.ds(196, 4), :] = jnp.zeros((4, 128), f32)      # pad for 140-row windows

    # ---- Cov2: conv(6->16, 5x5) as 25 shifted matmuls + sigmoid -------------
    # acc2 row k = Y*14 + X  (conv2 output coords; columns X in 0..9 are valid,
    # X in 10..13 are wrap-around garbage that is never read afterwards).
    acc2 = jnp.broadcast_to(b2_ref[...], (140, 128))
    for t in range(25):
        i, j = divmod(t, 5)
        lhs = p1_s[pl.ds(i * 14 + j, 140), 0:8]            # (140, 8)
        acc2 = acc2 + jnp.dot(lhs, w2_ref[t], preferred_element_type=f32)
    h2_s[...] = jax.nn.sigmoid(acc2)                       # (140, 128)

    # ---- 2x2/2 max-pool of the valid 10x10 region (pairwise VPU maxes) ------
    m2 = jnp.maximum(
        jnp.maximum(h2_s[pl.ds(0, 125), :], h2_s[pl.ds(1, 125), :]),
        jnp.maximum(h2_s[pl.ds(14, 125), :], h2_s[pl.ds(15, 125), :]))
    m2_s[pl.ds(0, 125), :] = m2        # pooled value (u, v) sits at row 28u + 2v

    # ---- Cov3: conv(16->120, 5x5) on the 5x5 map -> (1, 128) + sigmoid ------
    acc3 = b3_ref[...]
    for t in range(25):
        u, v = divmod(t, 5)
        lhs = m2_s[pl.ds(28 * u + 2 * v, 1), 0:16]         # (1, 16)
        acc3 = acc3 + jnp.dot(lhs, w3_ref[t], preferred_element_type=f32)
    h3 = jax.nn.sigmoid(acc3)                              # (1, 128), 120 valid

    # ---- fc1 + sigmoid, fc2 (no activation) ---------------------------------
    z1 = jax.nn.sigmoid(
        jnp.dot(h3, fc1w_ref[...], preferred_element_type=f32) + fc1b_ref[...])
    logits = (jnp.dot(z1, fc2w_ref[...], preferred_element_type=f32)
              + fc2b_ref[...])                             # (1, 128), 10 valid

    out_ref[0] = jnp.broadcast_to(logits, (8, 128))


# ----------------------------------------------------------------------------
# Wrapper-side layout prep (pure index shuffling on tiny tensors)
# ----------------------------------------------------------------------------
def _im2col_conv1_parity(x):
    """x: (N, 1, 32, 32) -> (N*784, 32).

    Rows ordered (n, pool-parity p, y, x) with p = (Y%2)*2 + (X%2),
    (Y, X) = conv1 output pixel; columns = 5x5 tap (i*5+j), zero-padded to 32.
    """
    N = x.shape[0]
    img = x[:, 0]                                          # (N, 32, 32)
    taps = [img[:, i:i + 28, j:j + 28] for i in range(5) for j in range(5)]
    p = jnp.stack(taps, axis=-1)                           # (N, 28, 28, 25)
    p = p.reshape(N, 14, 2, 14, 2, 25)                     # (N, y, dy, x, dx, 25)
    p = p.transpose(0, 2, 4, 1, 3, 5)                      # (N, dy, dx, y, x, 25)
    p = p.reshape(N * 784, 25)
    return jnp.pad(p, ((0, 0), (0, 7)))                    # K: 25 -> 32


def _pack_conv1(w, b):
    # torch (6,1,5,5) -> (32, 128): rows = tap (i*5+j), cols = out channel.
    cout = w.shape[0]
    wm = w.reshape(cout, 25).T                             # (25, 6)
    wp = jnp.zeros((32, 128), jnp.float32).at[:25, :cout].set(wm)
    bp = jnp.zeros((1, 128), jnp.float32).at[0, :cout].set(b)
    return wp, bp


def _pack_conv(w, b, k_pad):
    # torch (Cout, Cin, 5, 5) -> (25, k_pad, 128): [tap, cin, cout], zero padded.
    cout, cin = w.shape[0], w.shape[1]
    wt = w.transpose(2, 3, 1, 0).reshape(25, cin, cout)
    wp = jnp.zeros((25, k_pad, 128), jnp.float32).at[:, :cin, :cout].set(wt)
    bp = jnp.zeros((1, 128), jnp.float32).at[0, :cout].set(b)
    return wp, bp


def _pack_fc(w, b):
    # torch Linear (out, in) -> (128, 128): [in, out], zero padded.
    out_f, in_f = w.shape
    wp = jnp.zeros((128, 128), jnp.float32).at[:in_f, :out_f].set(w.T)
    bp = jnp.zeros((1, 128), jnp.float32).at[0, :out_f].set(b)
    return wp, bp


# ----------------------------------------------------------------------------
# LeNet5 forward (single fused pallas_call)
# ----------------------------------------------------------------------------
def lenet5_forward(x, params):
    f32 = jnp.float32
    N = x.shape[0]

    cols1 = _im2col_conv1_parity(x.astype(f32))            # (N*784, 32)
    w1p, b1p = _pack_conv1(params["w1"], params["b1"])
    w2p, b2p = _pack_conv(params["w2"], params["b2"], 8)
    w3p, b3p = _pack_conv(params["w3"], params["b3"], 16)
    fc1wp, fc1bp = _pack_fc(params["fc1_w"], params["fc1_b"])
    fc2wp, fc2bp = _pack_fc(params["fc2_w"], params["fc2_b"])

    weight_bytes = (32 * 128 + 25 * 8 * 128 + 25 * 16 * 128
                    + 2 * 128 * 128 + 5 * 128) * 4
    cost = pl.CostEstimate(
        flops=int(2 * N * (4 * 196 * 32 * 128 + 25 * 140 * 8 * 128
                           + 25 * 16 * 128 + 2 * 128 * 128)),
        transcendentals=int(N * (4 * 196 + 140 + 2) * 128),
        bytes_accessed=int(N * 784 * 32 * 4 + weight_bytes + N * 8 * 128 * 4),
    )

    out = pl.pallas_call(
        _lenet5_kernel,
        out_shape=jax.ShapeDtypeStruct((N, 8, 128), f32),
        grid=(N,),
        in_specs=[
            pl.BlockSpec((784, 32), lambda n: (n, 0)),        # per-sample im2col
            pl.BlockSpec((32, 128), lambda n: (0, 0)),        # w1
            pl.BlockSpec((1, 128), lambda n: (0, 0)),         # b1
            pl.BlockSpec((25, 8, 128), lambda n: (0, 0, 0)),  # w2
            pl.BlockSpec((1, 128), lambda n: (0, 0)),         # b2
            pl.BlockSpec((25, 16, 128), lambda n: (0, 0, 0)), # w3
            pl.BlockSpec((1, 128), lambda n: (0, 0)),         # b3
            pl.BlockSpec((128, 128), lambda n: (0, 0)),       # fc1 w
            pl.BlockSpec((1, 128), lambda n: (0, 0)),         # fc1 b
            pl.BlockSpec((128, 128), lambda n: (0, 0)),       # fc2 w
            pl.BlockSpec((1, 128), lambda n: (0, 0)),         # fc2 b
        ],
        out_specs=pl.BlockSpec((1, 8, 128), lambda n: (n, 0, 0)),
        scratch_shapes=[
            pltpu.VMEM((200, 128), f32),   # pooled conv1 activations (+4 pad rows)
            pltpu.VMEM((140, 128), f32),   # conv2 activations (14-wide rows)
            pltpu.VMEM((128, 128), f32),   # pooled conv2 activations
        ],
        compiler_params=pltpu.CompilerParams(
            dimension_semantics=("parallel",)),
        cost_estimate=cost,
    )(cols1, w1p, b1p, w2p, b2p, w3p, b3p, fc1wp, fc1bp, fc2wp, fc2bp)

    return out[:, 0, :10]


# ----------------------------------------------------------------------------
# Params / reference
# ----------------------------------------------------------------------------
def init_params(key):
    """Deterministic init mimicking PyTorch default uniform(-1/sqrt(fan_in))."""
    def uni(k, shape, fan_in):
        bound = 1.0 / jnp.sqrt(jnp.float32(fan_in))
        return jax.random.uniform(k, shape, jnp.float32, -bound, bound)

    ks = jax.random.split(key, 10)
    return {
        "w1": uni(ks[0], (6, 1, 5, 5), 1 * 25),
        "b1": uni(ks[1], (6,), 1 * 25),
        "w2": uni(ks[2], (16, 6, 5, 5), 6 * 25),
        "b2": uni(ks[3], (16,), 6 * 25),
        "w3": uni(ks[4], (120, 16, 5, 5), 16 * 25),
        "b3": uni(ks[5], (120,), 16 * 25),
        "fc1_w": uni(ks[6], (84, 120), 120),
        "fc1_b": uni(ks[7], (84,), 120),
        "fc2_w": uni(ks[8], (10, 84), 84),
        "fc2_b": uni(ks[9], (10,), 84),
    }


def _reference_forward(x, p):
    """Pure-JAX reference (sanity check for the Pallas path)."""
    def conv(x, w, b):
        y = jax.lax.conv_general_dilated(
            x, w, window_strides=(1, 1), padding="VALID",
            dimension_numbers=("NCHW", "OIHW", "NCHW"))
        return y + b.reshape(1, -1, 1, 1)

    def pool(x):
        return jax.lax.reduce_window(
            x, -jnp.inf, jax.lax.max,
            window_dimensions=(1, 1, 2, 2), window_strides=(1, 1, 2, 2),
            padding="VALID")

    x = pool(jax.nn.sigmoid(conv(x, p["w1"], p["b1"])))
    x = pool(jax.nn.sigmoid(conv(x, p["w2"], p["b2"])))
    x = jax.nn.sigmoid(conv(x, p["w3"], p["b3"]))
    x = x.reshape(-1, 120)
    x = jax.nn.sigmoid(x @ p["fc1_w"].T + p["fc1_b"])
    return x @ p["fc2_w"].T + p["fc2_b"]


if __name__ == "__main__":
    key = jax.random.PRNGKey(0)
    k_params, k_x = jax.random.split(key)
    params = init_params(k_params)

    # LeNet5 geometry requires 32x32 single-channel input; batch = 2.
    x = jax.random.normal(k_x, (2, 1, 32, 32), jnp.float32)

    fwd = jax.jit(lenet5_forward)
    out = jax.block_until_ready(fwd(x, params))
    assert out.shape == (2, 10), out.shape

    ref = jax.block_until_ready(_reference_forward(x, params))
    assert jnp.allclose(out, ref, rtol=1e-4, atol=1e-4), \
        float(jnp.max(jnp.abs(out - ref)))

    print("KERNEL_OK")
</pallas_src>

<mosaic_0001>
module attributes {stable_mosaic.version = 11 : i64} {
  func.func @_lenet5_kernel(%arg0: i32, %arg1: memref<784x32xf32, #tpu.memory_space<vmem>>, %arg2: memref<32x128xf32, #tpu.memory_space<vmem>>, %arg3: memref<1x128xf32, #tpu.memory_space<vmem>>, %arg4: memref<25x8x128xf32, #tpu.memory_space<vmem>>, %arg5: memref<1x128xf32, #tpu.memory_space<vmem>>, %arg6: memref<25x16x128xf32, #tpu.memory_space<vmem>>, %arg7: memref<1x128xf32, #tpu.memory_space<vmem>>, %arg8: memref<128x128xf32, #tpu.memory_space<vmem>>, %arg9: memref<1x128xf32, #tpu.memory_space<vmem>>, %arg10: memref<128x128xf32, #tpu.memory_space<vmem>>, %arg11: memref<1x128xf32, #tpu.memory_space<vmem>>, %arg12: memref<1x8x128xf32, #tpu.memory_space<vmem>>, %arg13: memref<200x128xf32, #tpu.memory_space<vmem>>, %arg14: memref<140x128xf32, #tpu.memory_space<vmem>>, %arg15: memref<128x128xf32, #tpu.memory_space<vmem>>) attributes {dimension_semantics = [#tpu.dimension_semantics<parallel>], iteration_bounds = array<i64: 2>, scalar_prefetch = 0 : i64, scratch_operands = 3 : i64, tpu.core_type = #tpu.core_type<tc>, window_params = [{transform_indices = @transform_0, window_bounds = array<i64: 784, 32>}, {pipeline_mode = #tpu.pipeline_mode<synchronous>, transform_indices = @transform_1, window_bounds = array<i64: 32, 128>}, {pipeline_mode = #tpu.pipeline_mode<synchronous>, transform_indices = @transform_2, window_bounds = array<i64: 1, 128>}, {pipeline_mode = #tpu.pipeline_mode<synchronous>, transform_indices = @transform_3, window_bounds = array<i64: 25, 8, 128>}, {pipeline_mode = #tpu.pipeline_mode<synchronous>, transform_indices = @transform_4, window_bounds = array<i64: 1, 128>}, {pipeline_mode = #tpu.pipeline_mode<synchronous>, transform_indices = @transform_5, window_bounds = array<i64: 25, 16, 128>}, {pipeline_mode = #tpu.pipeline_mode<synchronous>, transform_indices = @transform_6, window_bounds = array<i64: 1, 128>}, {pipeline_mode = #tpu.pipeline_mode<synchronous>, transform_indices = @transform_7, window_bounds = array<i64: 128, 128>}, {pipeline_mode = #tpu.pipeline_mode<synchronous>, transform_indices = @transform_8, window_bounds = array<i64: 1, 128>}, {pipeline_mode = #tpu.pipeline_mode<synchronous>, transform_indices = @transform_9, window_bounds = array<i64: 128, 128>}, {pipeline_mode = #tpu.pipeline_mode<synchronous>, transform_indices = @transform_10, window_bounds = array<i64: 1, 128>}, {transform_indices = @transform_11, window_bounds = array<i64: 1, 8, 128>}]} {
    %c0 = arith.constant 0 : index
    %c0_0 = arith.constant 0 : index
    %0 = vector.load %arg2[%c0, %c0_0] : memref<32x128xf32, #tpu.memory_space<vmem>>, vector<32x128xf32>
    %c0_1 = arith.constant 0 : index
    %c0_2 = arith.constant 0 : index
    %1 = vector.load %arg3[%c0_1, %c0_2] : memref<1x128xf32, #tpu.memory_space<vmem>>, vector<1x128xf32>
    %c0_3 = arith.constant 0 : index
    %c0_4 = arith.constant 0 : index
    %2 = vector.load %arg1[%c0_3, %c0_4] : memref<784x32xf32, #tpu.memory_space<vmem>>, vector<196x32xf32>
    %cst = arith.constant dense<0.000000e+00> : vector<196x128xf32>
    %3 = tpu.matmul %2, %0, %cst {dimension_numbers = #tpu.dot_dimension_numbers<[1], [0], [0], [1], [0, 0, 1, 1], [], []>} : vector<196x32xf32>, vector<32x128xf32>, vector<196x128xf32> -> vector<196x128xf32>
    %4 = vector.broadcast %1 : vector<1x128xf32> to vector<196x128xf32>
    %5 = arith.addf %3, %4 : vector<196x128xf32>
    %6 = arith.negf %5 : vector<196x128xf32>
    %7 = math.exp %6 : vector<196x128xf32>
    %cst_5 = arith.constant 1.000000e+00 : f32
    %8 = vector.broadcast %cst_5 : f32 to vector<196x128xf32>
    %9 = arith.addf %8, %7 : vector<196x128xf32>
    %10 = arith.divf %8, %9 : vector<196x128xf32>
    %c196 = arith.constant 196 : index
    %c0_6 = arith.constant 0 : index
    %11 = vector.load %arg1[%c196, %c0_6] : memref<784x32xf32, #tpu.memory_space<vmem>>, vector<196x32xf32>
    %cst_7 = arith.constant dense<0.000000e+00> : vector<196x128xf32>
    %12 = tpu.matmul %11, %0, %cst_7 {dimension_numbers = #tpu.dot_dimension_numbers<[1], [0], [0], [1], [0, 0, 1, 1], [], []>} : vector<196x32xf32>, vector<32x128xf32>, vector<196x128xf32> -> vector<196x128xf32>
    %13 = vector.broadcast %1 : vector<1x128xf32> to vector<196x128xf32>
    %14 = arith.addf %12, %13 : vector<196x128xf32>
    %15 = arith.negf %14 : vector<196x128xf32>
    %16 = math.exp %15 : vector<196x128xf32>
    %cst_8 = arith.constant 1.000000e+00 : f32
    %17 = vector.broadcast %cst_8 : f32 to vector<196x128xf32>
    %18 = arith.addf %17, %16 : vector<196x128xf32>
    %19 = arith.divf %17, %18 : vector<196x128xf32>
    %20 = arith.maximumf %10, %19 : vector<196x128xf32>
    %c392 = arith.constant 392 : index
    %c0_9 = arith.constant 0 : index
    %21 = vector.load %arg1[%c392, %c0_9] : memref<784x32xf32, #tpu.memory_space<vmem>>, vector<196x32xf32>
    %cst_10 = arith.constant dense<0.000000e+00> : vector<196x128xf32>
    %22 = tpu.matmul %21, %0, %cst_10 {dimension_numbers = #tpu.dot_dimension_numbers<[1], [0], [0], [1], [0, 0, 1, 1], [], []>} : vector<196x32xf32>, vector<32x128xf32>, vector<196x128xf32> -> vector<196x128xf32>
    %23 = vector.broadcast %1 : vector<1x128xf32> to vector<196x128xf32>
    %24 = arith.addf %22, %23 : vector<196x128xf32>
    %25 = arith.negf %24 : vector<196x128xf32>
    %26 = math.exp %25 : vector<196x128xf32>
    %cst_11 = arith.constant 1.000000e+00 : f32
    %27 = vector.broadcast %cst_11 : f32 to vector<196x128xf32>
    %28 = arith.addf %27, %26 : vector<196x128xf32>
    %29 = arith.divf %27, %28 : vector<196x128xf32>
    %30 = arith.maximumf %20, %29 : vector<196x128xf32>
    %c588 = arith.constant 588 : index
    %c0_12 = arith.constant 0 : index
    %31 = vector.load %arg1[%c588, %c0_12] : memref<784x32xf32, #tpu.memory_space<vmem>>, vector<196x32xf32>
    %cst_13 = arith.constant dense<0.000000e+00> : vector<196x128xf32>
    %32 = tpu.matmul %31, %0, %cst_13 {dimension_numbers = #tpu.dot_dimension_numbers<[1], [0], [0], [1], [0, 0, 1, 1], [], []>} : vector<196x32xf32>, vector<32x128xf32>, vector<196x128xf32> -> vector<196x128xf32>
    %33 = vector.broadcast %1 : vector<1x128xf32> to vector<196x128xf32>
    %34 = arith.addf %32, %33 : vector<196x128xf32>
    %35 = arith.negf %34 : vector<196x128xf32>
    %36 = math.exp %35 : vector<196x128xf32>
    %cst_14 = arith.constant 1.000000e+00 : f32
    %37 = vector.broadcast %cst_14 : f32 to vector<196x128xf32>
    %38 = arith.addf %37, %36 : vector<196x128xf32>
    %39 = arith.divf %37, %38 : vector<196x128xf32>
    %40 = arith.maximumf %30, %39 : vector<196x128xf32>
    %c0_15 = arith.constant 0 : index
    %c0_16 = arith.constant 0 : index
    %41 = vector.load %arg13[%c0_15, %c0_16] : memref<200x128xf32, #tpu.memory_space<vmem>>, vector<196x128xf32>
    tpu.vector_store %arg13[%c0_15, %c0_16], %40 {strides = array<i32>} : memref<200x128xf32, #tpu.memory_space<vmem>>, vector<196x128xf32>,
    %cst_17 = arith.constant 0.000000e+00 : f32
    %42 = vector.broadcast %cst_17 : f32 to vector<4x128xf32>
    %c196_18 = arith.constant 196 : index
    %c0_19 = arith.constant 0 : index
    %43 = vector.load %arg13[%c196_18, %c0_19] : memref<200x128xf32, #tpu.memory_space<vmem>>, vector<4x128xf32>
    tpu.vector_store %arg13[%c196_18, %c0_19], %42 {strides = array<i32>} : memref<200x128xf32, #tpu.memory_space<vmem>>, vector<4x128xf32>,
    %c0_20 = arith.constant 0 : index
    %c0_21 = arith.constant 0 : index
    %44 = vector.load %arg5[%c0_20, %c0_21] : memref<1x128xf32, #tpu.memory_space<vmem>>, vector<1x128xf32>
    %45 = vector.shape_cast %44 : vector<1x128xf32> to vector<1x128xf32>
    %46 = vector.broadcast %45 : vector<1x128xf32> to vector<140x128xf32>
    %c0_22 = arith.constant 0 : index
    %c0_23 = arith.constant 0 : index
    %47 = vector.load %arg13[%c0_22, %c0_23] : memref<200x128xf32, #tpu.memory_space<vmem>>, vector<140x8xf32>
    %c0_24 = arith.constant 0 : index
    %c0_25 = arith.constant 0 : index
    %c0_26 = arith.constant 0 : index
    %48 = vector.load %arg4[%c0_24, %c0_25, %c0_26] : memref<25x8x128xf32, #tpu.memory_space<vmem>>, vector<1x8x128xf32>
    %49 = vector.shape_cast %48 : vector<1x8x128xf32> to vector<8x128xf32>
    %cst_27 = arith.constant dense<0.000000e+00> : vector<140x128xf32>
    %50 = tpu.matmul %47, %49, %cst_27 {dimension_numbers = #tpu.dot_dimension_numbers<[1], [0], [0], [1], [0, 0, 1, 1], [], []>} : vector<140x8xf32>, vector<8x128xf32>, vector<140x128xf32> -> vector<140x128xf32>
    %51 = arith.addf %46, %50 : vector<140x128xf32>
    %c1 = arith.constant 1 : index
    %c0_28 = arith.constant 0 : index
    %52 = vector.load %arg13[%c1, %c0_28] : memref<200x128xf32, #tpu.memory_space<vmem>>, vector<140x8xf32>
    %c1_29 = arith.constant 1 : index
    %c0_30 = arith.constant 0 : index
    %c0_31 = arith.constant 0 : index
    %53 = vector.load %arg4[%c1_29, %c0_30, %c0_31] : memref<25x8x128xf32, #tpu.memory_space<vmem>>, vector<1x8x128xf32>
    %54 = vector.shape_cast %53 : vector<1x8x128xf32> to vector<8x128xf32>
    %cst_32 = arith.constant dense<0.000000e+00> : vector<140x128xf32>
    %55 = tpu.matmul %52, %54, %cst_32 {dimension_numbers = #tpu.dot_dimension_numbers<[1], [0], [0], [1], [0, 0, 1, 1], [], []>} : vector<140x8xf32>, vector<8x128xf32>, vector<140x128xf32> -> vector<140x128xf32>
    %56 = arith.addf %51, %55 : vector<140x128xf32>
    %c2 = arith.constant 2 : index
    %c0_33 = arith.constant 0 : index
    %57 = vector.load %arg13[%c2, %c0_33] : memref<200x128xf32, #tpu.memory_space<vmem>>, vector<140x8xf32>
    %c2_34 = arith.constant 2 : index
    %c0_35 = arith.constant 0 : index
    %c0_36 = arith.constant 0 : index
    %58 = vector.load %arg4[%c2_34, %c0_35, %c0_36] : memref<25x8x128xf32, #tpu.memory_space<vmem>>, vector<1x8x128xf32>
    %59 = vector.shape_cast %58 : vector<1x8x128xf32> to vector<8x128xf32>
    %cst_37 = arith.constant dense<0.000000e+00> : vector<140x128xf32>
    %60 = tpu.matmul %57, %59, %cst_37 {dimension_numbers = #tpu.dot_dimension_numbers<[1], [0], [0], [1], [0, 0, 1, 1], [], []>} : vector<140x8xf32>, vector<8x128xf32>, vector<140x128xf32> -> vector<140x128xf32>
    %61 = arith.addf %56, %60 : vector<140x128xf32>
    %c3 = arith.constant 3 : index
    %c0_38 = arith.constant 0 : index
    %62 = vector.load %arg13[%c3, %c0_38] : memref<200x128xf32, #tpu.memory_space<vmem>>, vector<140x8xf32>
    %c3_39 = arith.constant 3 : index
    %c0_40 = arith.constant 0 : index
    %c0_41 = arith.constant 0 : index
    %63 = vector.load %arg4[%c3_39, %c0_40, %c0_41] : memref<25x8x128xf32, #tpu.memory_space<vmem>>, vector<1x8x128xf32>
    %64 = vector.shape_cast %63 : vector<1x8x128xf32> to vector<8x128xf32>
    %cst_42 = arith.constant dense<0.000000e+00> : vector<140x128xf32>
    %65 = tpu.matmul %62, %64, %cst_42 {dimension_numbers = #tpu.dot_dimension_numbers<[1], [0], [0], [1], [0, 0, 1, 1], [], []>} : vector<140x8xf32>, vector<8x128xf32>, vector<140x128xf32> -> vector<140x128xf32>
    %66 = arith.addf %61, %65 : vector<140x128xf32>
    %c4 = arith.constant 4 : index
    %c0_43 = arith.constant 0 : index
    %67 = vector.load %arg13[%c4, %c0_43] : memref<200x128xf32, #tpu.memory_space<vmem>>, vector<140x8xf32>
    %c4_44 = arith.constant 4 : index
    %c0_45 = arith.constant 0 : index
    %c0_46 = arith.constant 0 : index
    %68 = vector.load %arg4[%c4_44, %c0_45, %c0_46] : memref<25x8x128xf32, #tpu.memory_space<vmem>>, vector<1x8x128xf32>
    %69 = vector.shape_cast %68 : vector<1x8x128xf32> to vector<8x128xf32>
    %cst_47 = arith.constant dense<0.000000e+00> : vector<140x128xf32>
    %70 = tpu.matmul %67, %69, %cst_47 {dimension_numbers = #tpu.dot_dimension_numbers<[1], [0], [0], [1], [0, 0, 1, 1], [], []>} : vector<140x8xf32>, vector<8x128xf32>, vector<140x128xf32> -> vector<140x128xf32>
    %71 = arith.addf %66, %70 : vector<140x128xf32>
    %c14 = arith.constant 14 : index
    %c0_48 = arith.constant 0 : index
    %72 = vector.load %arg13[%c14, %c0_48] : memref<200x128xf32, #tpu.memory_space<vmem>>, vector<140x8xf32>
    %c5 = arith.constant 5 : index
    %c0_49 = arith.constant 0 : index
    %c0_50 = arith.constant 0 : index
    %73 = vector.load %arg4[%c5, %c0_49, %c0_50] : memref<25x8x128xf32, #tpu.memory_space<vmem>>, vector<1x8x128xf32>
    %74 = vector.shape_cast %73 : vector<1x8x128xf32> to vector<8x128xf32>
    %cst_51 = arith.constant dense<0.000000e+00> : vector<140x128xf32>
    %75 = tpu.matmul %72, %74, %cst_51 {dimension_numbers = #tpu.dot_dimension_numbers<[1], [0], [0], [1], [0, 0, 1, 1], [], []>} : vector<140x8xf32>, vector<8x128xf32>, vector<140x128xf32> -> vector<140x128xf32>
    %76 = arith.addf %71, %75 : vector<140x128xf32>
    %c15 = arith.constant 15 : index
    %c0_52 = arith.constant 0 : index
    %77 = vector.load %arg13[%c15, %c0_52] : memref<200x128xf32, #tpu.memory_space<vmem>>, vector<140x8xf32>
    %c6 = arith.constant 6 : index
    %c0_53 = arith.constant 0 : index
    %c0_54 = arith.constant 0 : index
    %78 = vector.load %arg4[%c6, %c0_53, %c0_54] : memref<25x8x128xf32, #tpu.memory_space<vmem>>, vector<1x8x128xf32>
    %79 = vector.shape_cast %78 : vector<1x8x128xf32> to vector<8x128xf32>
    %cst_55 = arith.constant dense<0.000000e+00> : vector<140x128xf32>
    %80 = tpu.matmul %77, %79, %cst_55 {dimension_numbers = #tpu.dot_dimension_numbers<[1], [0], [0], [1], [0, 0, 1, 1], [], []>} : vector<140x8xf32>, vector<8x128xf32>, vector<140x128xf32> -> vector<140x128xf32>
    %81 = arith.addf %76, %80 : vector<140x128xf32>
    %c16 = arith.constant 16 : index
    %c0_56 = arith.constant 0 : index
    %82 = vector.load %arg13[%c16, %c0_56] : memref<200x128xf32, #tpu.memory_space<vmem>>, vector<140x8xf32>
    %c7 = arith.constant 7 : index
    %c0_57 = arith.constant 0 : index
    %c0_58 = arith.constant 0 : index
    %83 = vector.load %arg4[%c7, %c0_57, %c0_58] : memref<25x8x128xf32, #tpu.memory_space<vmem>>, vector<1x8x128xf32>
    %84 = vector.shape_cast %83 : vector<1x8x128xf32> to vector<8x128xf32>
    %cst_59 = arith.constant dense<0.000000e+00> : vector<140x128xf32>
    %85 = tpu.matmul %82, %84, %cst_59 {dimension_numbers = #tpu.dot_dimension_numbers<[1], [0], [0], [1], [0, 0, 1, 1], [], []>} : vector<140x8xf32>, vector<8x128xf32>, vector<140x128xf32> -> vector<140x128xf32>
    %86 = arith.addf %81, %85 : vector<140x128xf32>
    %c17 = arith.constant 17 : index
    %c0_60 = arith.constant 0 : index
    %87 = vector.load %arg13[%c17, %c0_60] : memref<200x128xf32, #tpu.memory_space<vmem>>, vector<140x8xf32>
    %c8 = arith.constant 8 : index
    %c0_61 = arith.constant 0 : index
    %c0_62 = arith.constant 0 : index
    %88 = vector.load %arg4[%c8, %c0_61, %c0_62] : memref<25x8x128xf32, #tpu.memory_space<vmem>>, vector<1x8x128xf32>
    %89 = vector.shape_cast %88 : vector<1x8x128xf32> to vector<8x128xf32>
    %cst_63 = arith.constant dense<0.000000e+00> : vector<140x128xf32>
    %90 = tpu.matmul %87, %89, %cst_63 {dimension_numbers = #tpu.dot_dimension_numbers<[1], [0], [0], [1], [0, 0, 1, 1], [], []>} : vector<140x8xf32>, vector<8x128xf32>, vector<140x128xf32> -> vector<140x128xf32>
    %91 = arith.addf %86, %90 : vector<140x128xf32>
    %c18 = arith.constant 18 : index
    %c0_64 = arith.constant 0 : index
    %92 = vector.load %arg13[%c18, %c0_64] : memref<200x128xf32, #tpu.memory_space<vmem>>, vector<140x8xf32>
    %c9 = arith.constant 9 : index
    %c0_65 = arith.constant 0 : index
    %c0_66 = arith.constant 0 : index
    %93 = vector.load %arg4[%c9, %c0_65, %c0_66] : memref<25x8x128xf32, #tpu.memory_space<vmem>>, vector<1x8x128xf32>
    %94 = vector.shape_cast %93 : vector<1x8x128xf32> to vector<8x128xf32>
    %cst_67 = arith.constant dense<0.000000e+00> : vector<140x128xf32>
    %95 = tpu.matmul %92, %94, %cst_67 {dimension_numbers = #tpu.dot_dimension_numbers<[1], [0], [0], [1], [0, 0, 1, 1], [], []>} : vector<140x8xf32>, vector<8x128xf32>, vector<140x128xf32> -> vector<140x128xf32>
    %96 = arith.addf %91, %95 : vector<140x128xf32>
    %c28 = arith.constant 28 : index
    %c0_68 = arith.constant 0 : index
    %97 = vector.load %arg13[%c28, %c0_68] : memref<200x128xf32, #tpu.memory_space<vmem>>, vector<140x8xf32>
    %c10 = arith.constant 10 : index
    %c0_69 = arith.constant 0 : index
    %c0_70 = arith.constant 0 : index
    %98 = vector.load %arg4[%c10, %c0_69, %c0_70] : memref<25x8x128xf32, #tpu.memory_space<vmem>>, vector<1x8x128xf32>
    %99 = vector.shape_cast %98 : vector<1x8x128xf32> to vector<8x128xf32>
    %cst_71 = arith.constant dense<0.000000e+00> : vector<140x128xf32>
    %100 = tpu.matmul %97, %99, %cst_71 {dimension_numbers = #tpu.dot_dimension_numbers<[1], [0], [0], [1], [0, 0, 1, 1], [], []>} : vector<140x8xf32>, vector<8x128xf32>, vector<140x128xf32> -> vector<140x128xf32>
    %101 = arith.addf %96, %100 : vector<140x128xf32>
    %c29 = arith.constant 29 : index
    %c0_72 = arith.constant 0 : index
    %102 = vector.load %arg13[%c29, %c0_72] : memref<200x128xf32, #tpu.memory_space<vmem>>, vector<140x8xf32>
    %c11 = arith.constant 11 : index
    %c0_73 = arith.constant 0 : index
    %c0_74 = arith.constant 0 : index
    %103 = vector.load %arg4[%c11, %c0_73, %c0_74] : memref<25x8x128xf32, #tpu.memory_space<vmem>>, vector<1x8x128xf32>
    %104 = vector.shape_cast %103 : vector<1x8x128xf32> to vector<8x128xf32>
    %cst_75 = arith.constant dense<0.000000e+00> : vector<140x128xf32>
    %105 = tpu.matmul %102, %104, %cst_75 {dimension_numbers = #tpu.dot_dimension_numbers<[1], [0], [0], [1], [0, 0, 1, 1], [], []>} : vector<140x8xf32>, vector<8x128xf32>, vector<140x128xf32> -> vector<140x128xf32>
    %106 = arith.addf %101, %105 : vector<140x128xf32>
    %c30 = arith.constant 30 : index
    %c0_76 = arith.constant 0 : index
    %107 = vector.load %arg13[%c30, %c0_76] : memref<200x128xf32, #tpu.memory_space<vmem>>, vector<140x8xf32>
    %c12 = arith.constant 12 : index
    %c0_77 = arith.constant 0 : index
    %c0_78 = arith.constant 0 : index
    %108 = vector.load %arg4[%c12, %c0_77, %c0_78] : memref<25x8x128xf32, #tpu.memory_space<vmem>>, vector<1x8x128xf32>
    %109 = vector.shape_cast %108 : vector<1x8x128xf32> to vector<8x128xf32>
    %cst_79 = arith.constant dense<0.000000e+00> : vector<140x128xf32>
    %110 = tpu.matmul %107, %109, %cst_79 {dimension_numbers = #tpu.dot_dimension_numbers<[1], [0], [0], [1], [0, 0, 1, 1], [], []>} : vector<140x8xf32>, vector<8x128xf32>, vector<140x128xf32> -> vector<140x128xf32>
    %111 = arith.addf %106, %110 : vector<140x128xf32>
    %c31 = arith.constant 31 : index
    %c0_80 = arith.constant 0 : index
    %112 = vector.load %arg13[%c31, %c0_80] : memref<200x128xf32, #tpu.memory_space<vmem>>, vector<140x8xf32>
    %c13 = arith.constant 13 : index
    %c0_81 = arith.constant 0 : index
    %c0_82 = arith.constant 0 : index
    %113 = vector.load %arg4[%c13, %c0_81, %c0_82] : memref<25x8x128xf32, #tpu.memory_space<vmem>>, vector<1x8x128xf32>
    %114 = vector.shape_cast %113 : vector<1x8x128xf32> to vector<8x128xf32>
    %cst_83 = arith.constant dense<0.000000e+00> : vector<140x128xf32>
    %115 = tpu.matmul %112, %114, %cst_83 {dimension_numbers = #tpu.dot_dimension_numbers<[1], [0], [0], [1], [0, 0, 1, 1], [], []>} : vector<140x8xf32>, vector<8x128xf32>, vector<140x128xf32> -> vector<140x128xf32>
    %116 = arith.addf %111, %115 : vector<140x128xf32>
    %c32 = arith.constant 32 : index
    %c0_84 = arith.constant 0 : index
    %117 = vector.load %arg13[%c32, %c0_84] : memref<200x128xf32, #tpu.memory_space<vmem>>, vector<140x8xf32>
    %c14_85 = arith.constant 14 : index
    %c0_86 = arith.constant 0 : index
    %c0_87 = arith.constant 0 : index
    %118 = vector.load %arg4[%c14_85, %c0_86, %c0_87] : memref<25x8x128xf32, #tpu.memory_space<vmem>>, vector<1x8x128xf32>
    %119 = vector.shape_cast %118 : vector<1x8x128xf32> to vector<8x128xf32>
    %cst_88 = arith.constant dense<0.000000e+00> : vector<140x128xf32>
    %120 = tpu.matmul %117, %119, %cst_88 {dimension_numbers = #tpu.dot_dimension_numbers<[1], [0], [0], [1], [0, 0, 1, 1], [], []>} : vector<140x8xf32>, vector<8x128xf32>, vector<140x128xf32> -> vector<140x128xf32>
    %121 = arith.addf %116, %120 : vector<140x128xf32>
    %c42 = arith.constant 42 : index
    %c0_89 = arith.constant 0 : index
    %122 = vector.load %arg13[%c42, %c0_89] : memref<200x128xf32, #tpu.memory_space<vmem>>, vector<140x8xf32>
    %c15_90 = arith.constant 15 : index
    %c0_91 = arith.constant 0 : index
    %c0_92 = arith.constant 0 : index
    %123 = vector.load %arg4[%c15_90, %c0_91, %c0_92] : memref<25x8x128xf32, #tpu.memory_space<vmem>>, vector<1x8x128xf32>
    %124 = vector.shape_cast %123 : vector<1x8x128xf32> to vector<8x128xf32>
    %cst_93 = arith.constant dense<0.000000e+00> : vector<140x128xf32>
    %125 = tpu.matmul %122, %124, %cst_93 {dimension_numbers = #tpu.dot_dimension_numbers<[1], [0], [0], [1], [0, 0, 1, 1], [], []>} : vector<140x8xf32>, vector<8x128xf32>, vector<140x128xf32> -> vector<140x128xf32>
    %126 = arith.addf %121, %125 : vector<140x128xf32>
    %c43 = arith.constant 43 : index
    %c0_94 = arith.constant 0 : index
    %127 = vector.load %arg13[%c43, %c0_94] : memref<200x128xf32, #tpu.memory_space<vmem>>, vector<140x8xf32>
    %c16_95 = arith.constant 16 : index
    %c0_96 = arith.constant 0 : index
    %c0_97 = arith.constant 0 : index
    %128 = vector.load %arg4[%c16_95, %c0_96, %c0_97] : memref<25x8x128xf32, #tpu.memory_space<vmem>>, vector<1x8x128xf32>
    %129 = vector.shape_cast %128 : vector<1x8x128xf32> to vector<8x128xf32>
    %cst_98 = arith.constant dense<0.000000e+00> : vector<140x128xf32>
    %130 = tpu.matmul %127, %129, %cst_98 {dimension_numbers = #tpu.dot_dimension_numbers<[1], [0], [0], [1], [0, 0, 1, 1], [], []>} : vector<140x8xf32>, vector<8x128xf32>, vector<140x128xf32> -> vector<140x128xf32>
    %131 = arith.addf %126, %130 : vector<140x128xf32>
    %c44 = arith.constant 44 : index
    %c0_99 = arith.constant 0 : index
    %132 = vector.load %arg13[%c44, %c0_99] : memref<200x128xf32, #tpu.memory_space<vmem>>, vector<140x8xf32>
    %c17_100 = arith.constant 17 : index
    %c0_101 = arith.constant 0 : index
    %c0_102 = arith.constant 0 : index
    %133 = vector.load %arg4[%c17_100, %c0_101, %c0_102] : memref<25x8x128xf32, #tpu.memory_space<vmem>>, vector<1x8x128xf32>
    %134 = vector.shape_cast %133 : vector<1x8x128xf32> to vector<8x128xf32>
    %cst_103 = arith.constant dense<0.000000e+00> : vector<140x128xf32>
    %135 = tpu.matmul %132, %134, %cst_103 {dimension_numbers = #tpu.dot_dimension_numbers<[1], [0], [0], [1], [0, 0, 1, 1], [], []>} : vector<140x8xf32>, vector<8x128xf32>, vector<140x128xf32> -> vector<140x128xf32>
    %136 = arith.addf %131, %135 : vector<140x128xf32>
    %c45 = arith.constant 45 : index
    %c0_104 = arith.constant 0 : index
    %137 = vector.load %arg13[%c45, %c0_104] : memref<200x128xf32, #tpu.memory_space<vmem>>, vector<140x8xf32>
    %c18_105 = arith.constant 18 : index
    %c0_106 = arith.constant 0 : index
    %c0_107 = arith.constant 0 : index
    %138 = vector.load %arg4[%c18_105, %c0_106, %c0_107] : memref<25x8x128xf32, #tpu.memory_space<vmem>>, vector<1x8x128xf32>
    %139 = vector.shape_cast %138 : vector<1x8x128xf32> to vector<8x128xf32>
    %cst_108 = arith.constant dense<0.000000e+00> : vector<140x128xf32>
    %140 = tpu.matmul %137, %139, %cst_108 {dimension_numbers = #tpu.dot_dimension_numbers<[1], [0], [0], [1], [0, 0, 1, 1], [], []>} : vector<140x8xf32>, vector<8x128xf32>, vector<140x128xf32> -> vector<140x128xf32>
    %141 = arith.addf %136, %140 : vector<140x128xf32>
    %c46 = arith.constant 46 : index
    %c0_109 = arith.constant 0 : index
    %142 = vector.load %arg13[%c46, %c0_109] : memref<200x128xf32, #tpu.memory_space<vmem>>, vector<140x8xf32>
    %c19 = arith.constant 19 : index
    %c0_110 = arith.constant 0 : index
    %c0_111 = arith.constant 0 : index
    %143 = vector.load %arg4[%c19, %c0_110, %c0_111] : memref<25x8x128xf32, #tpu.memory_space<vmem>>, vector<1x8x128xf32>
    %144 = vector.shape_cast %143 : vector<1x8x128xf32> to vector<8x128xf32>
    %cst_112 = arith.constant dense<0.000000e+00> : vector<140x128xf32>
    %145 = tpu.matmul %142, %144, %cst_112 {dimension_numbers = #tpu.dot_dimension_numbers<[1], [0], [0], [1], [0, 0, 1, 1], [], []>} : vector<140x8xf32>, vector<8x128xf32>, vector<140x128xf32> -> vector<140x128xf32>
    %146 = arith.addf %141, %145 : vector<140x128xf32>
    %c56 = arith.constant 56 : index
    %c0_113 = arith.constant 0 : index
    %147 = vector.load %arg13[%c56, %c0_113] : memref<200x128xf32, #tpu.memory_space<vmem>>, vector<140x8xf32>
    %c20 = arith.constant 20 : index
    %c0_114 = arith.constant 0 : index
    %c0_115 = arith.constant 0 : index
    %148 = vector.load %arg4[%c20, %c0_114, %c0_115] : memref<25x8x128xf32, #tpu.memory_space<vmem>>, vector<1x8x128xf32>
    %149 = vector.shape_cast %148 : vector<1x8x128xf32> to vector<8x128xf32>
    %cst_116 = arith.constant dense<0.000000e+00> : vector<140x128xf32>
    %150 = tpu.matmul %147, %149, %cst_116 {dimension_numbers = #tpu.dot_dimension_numbers<[1], [0], [0], [1], [0, 0, 1, 1], [], []>} : vector<140x8xf32>, vector<8x128xf32>, vector<140x128xf32> -> vector<140x128xf32>
    %151 = arith.addf %146, %150 : vector<140x128xf32>
    %c57 = arith.constant 57 : index
    %c0_117 = arith.constant 0 : index
    %152 = vector.load %arg13[%c57, %c0_117] : memref<200x128xf32, #tpu.memory_space<vmem>>, vector<140x8xf32>
    %c21 = arith.constant 21 : index
    %c0_118 = arith.constant 0 : index
    %c0_119 = arith.constant 0 : index
    %153 = vector.load %arg4[%c21, %c0_118, %c0_119] : memref<25x8x128xf32, #tpu.memory_space<vmem>>, vector<1x8x128xf32>
    %154 = vector.shape_cast %153 : vector<1x8x128xf32> to vector<8x128xf32>
    %cst_120 = arith.constant dense<0.000000e+00> : vector<140x128xf32>
    %155 = tpu.matmul %152, %154, %cst_120 {dimension_numbers = #tpu.dot_dimension_numbers<[1], [0], [0], [1], [0, 0, 1, 1], [], []>} : vector<140x8xf32>, vector<8x128xf32>, vector<140x128xf32> -> vector<140x128xf32>
    %156 = arith.addf %151, %155 : vector<140x128xf32>
    %c58 = arith.constant 58 : index
    %c0_121 = arith.constant 0 : index
    %157 = vector.load %arg13[%c58, %c0_121] : memref<200x128xf32, #tpu.memory_space<vmem>>, vector<140x8xf32>
    %c22 = arith.constant 22 : index
    %c0_122 = arith.constant 0 : index
    %c0_123 = arith.constant 0 : index
    %158 = vector.load %arg4[%c22, %c0_122, %c0_123] : memref<25x8x128xf32, #tpu.memory_space<vmem>>, vector<1x8x128xf32>
    %159 = vector.shape_cast %158 : vector<1x8x128xf32> to vector<8x128xf32>
    %cst_124 = arith.constant dense<0.000000e+00> : vector<140x128xf32>
    %160 = tpu.matmul %157, %159, %cst_124 {dimension_numbers = #tpu.dot_dimension_numbers<[1], [0], [0], [1], [0, 0, 1, 1], [], []>} : vector<140x8xf32>, vector<8x128xf32>, vector<140x128xf32> -> vector<140x128xf32>
    %161 = arith.addf %156, %160 : vector<140x128xf32>
    %c59 = arith.constant 59 : index
    %c0_125 = arith.constant 0 : index
    %162 = vector.load %arg13[%c59, %c0_125] : memref<200x128xf32, #tpu.memory_space<vmem>>, vector<140x8xf32>
    %c23 = arith.constant 23 : index
    %c0_126 = arith.constant 0 : index
    %c0_127 = arith.constant 0 : index
    %163 = vector.load %arg4[%c23, %c0_126, %c0_127] : memref<25x8x128xf32, #tpu.memory_space<vmem>>, vector<1x8x128xf32>
    %164 = vector.shape_cast %163 : vector<1x8x128xf32> to vector<8x128xf32>
    %cst_128 = arith.constant dense<0.000000e+00> : vector<140x128xf32>
    %165 = tpu.matmul %162, %164, %cst_128 {dimension_numbers = #tpu.dot_dimension_numbers<[1], [0], [0], [1], [0, 0, 1, 1], [], []>} : vector<140x8xf32>, vector<8x128xf32>, vector<140x128xf32> -> vector<140x128xf32>
    %166 = arith.addf %161, %165 : vector<140x128xf32>
    %c60 = arith.constant 60 : index
    %c0_129 = arith.constant 0 : index
    %167 = vector.load %arg13[%c60, %c0_129] : memref<200x128xf32, #tpu.memory_space<vmem>>, vector<140x8xf32>
    %c24 = arith.constant 24 : index
    %c0_130 = arith.constant 0 : index
    %c0_131 = arith.constant 0 : index
    %168 = vector.load %arg4[%c24, %c0_130, %c0_131] : memref<25x8x128xf32, #tpu.memory_space<vmem>>, vector<1x8x128xf32>
    %169 = vector.shape_cast %168 : vector<1x8x128xf32> to vector<8x128xf32>
    %cst_132 = arith.constant dense<0.000000e+00> : vector<140x128xf32>
    %170 = tpu.matmul %167, %169, %cst_132 {dimension_numbers = #tpu.dot_dimension_numbers<[1], [0], [0], [1], [0, 0, 1, 1], [], []>} : vector<140x8xf32>, vector<8x128xf32>, vector<140x128xf32> -> vector<140x128xf32>
    %171 = arith.addf %166, %170 : vector<140x128xf32>
    %172 = arith.negf %171 : vector<140x128xf32>
    %173 = math.exp %172 : vector<140x128xf32>
    %cst_133 = arith.constant 1.000000e+00 : f32
    %174 = vector.broadcast %cst_133 : f32 to vector<140x128xf32>
    %175 = arith.addf %174, %173 : vector<140x128xf32>
    %176 = arith.divf %174, %175 : vector<140x128xf32>
    %c0_134 = arith.constant 0 : index
    %c0_135 = arith.constant 0 : index
    %177 = vector.load %arg14[%c0_134, %c0_135] : memref<140x128xf32, #tpu.memory_space<vmem>>, vector<140x128xf32>
    tpu.vector_store %arg14[%c0_134, %c0_135], %176 {strides = array<i32>} : memref<140x128xf32, #tpu.memory_space<vmem>>, vector<140x128xf32>,
    %c0_136 = arith.constant 0 : index
    %c0_137 = arith.constant 0 : index
    %178 = vector.load %arg14[%c0_136, %c0_137] : memref<140x128xf32, #tpu.memory_space<vmem>>, vector<125x128xf32>
    %c1_138 = arith.constant 1 : index
    %c0_139 = arith.constant 0 : index
    %179 = vector.load %arg14[%c1_138, %c0_139] : memref<140x128xf32, #tpu.memory_space<vmem>>, vector<125x128xf32>
    %180 = arith.maximumf %178, %179 : vector<125x128xf32>
    %c14_140 = arith.constant 14 : index
    %c0_141 = arith.constant 0 : index
    %181 = vector.load %arg14[%c14_140, %c0_141] : memref<140x128xf32, #tpu.memory_space<vmem>>, vector<125x128xf32>
    %c15_142 = arith.constant 15 : index
    %c0_143 = arith.constant 0 : index
    %182 = vector.load %arg14[%c15_142, %c0_143] : memref<140x128xf32, #tpu.memory_space<vmem>>, vector<125x128xf32>
    %183 = arith.maximumf %181, %182 : vector<125x128xf32>
    %184 = arith.maximumf %180, %183 : vector<125x128xf32>
    %c0_144 = arith.constant 0 : index
    %c0_145 = arith.constant 0 : index
    %185 = vector.load %arg15[%c0_144, %c0_145] : memref<128x128xf32, #tpu.memory_space<vmem>>, vector<125x128xf32>
    tpu.vector_store %arg15[%c0_144, %c0_145], %184 {strides = array<i32>} : memref<128x128xf32, #tpu.memory_space<vmem>>, vector<125x128xf32>,
    %c0_146 = arith.constant 0 : index
    %c0_147 = arith.constant 0 : index
    %186 = vector.load %arg7[%c0_146, %c0_147] : memref<1x128xf32, #tpu.memory_space<vmem>>, vector<1x128xf32>
    %c0_148 = arith.constant 0 : index
    %c0_149 = arith.constant 0 : index
    %187 = vector.load %arg15[%c0_148, %c0_149] : memref<128x128xf32, #tpu.memory_space<vmem>>, vector<1x16xf32>
    %c0_150 = arith.constant 0 : index
    %c0_151 = arith.constant 0 : index
    %c0_152 = arith.constant 0 : index
    %188 = vector.load %arg6[%c0_150, %c0_151, %c0_152] : memref<25x16x128xf32, #tpu.memory_space<vmem>>, vector<1x16x128xf32>
    %189 = vector.shape_cast %188 : vector<1x16x128xf32> to vector<16x128xf32>
    %cst_153 = arith.constant dense<0.000000e+00> : vector<1x128xf32>
    %190 = tpu.matmul %187, %189, %cst_153 {dimension_numbers = #tpu.dot_dimension_numbers<[1], [0], [0], [1], [0, 0, 1, 1], [], []>} : vector<1x16xf32>, vector<16x128xf32>, vector<1x128xf32> -> vector<1x128xf32>
    %191 = arith.addf %186, %190 : vector<1x128xf32>
    %c2_154 = arith.constant 2 : index
    %c0_155 = arith.constant 0 : index
    %192 = vector.load %arg15[%c2_154, %c0_155] : memref<128x128xf32, #tpu.memory_space<vmem>>, vector<1x16xf32>
    %c1_156 = arith.constant 1 : index
    %c0_157 = arith.constant 0 : index
    %c0_158 = arith.constant 0 : index
    %193 = vector.load %arg6[%c1_156, %c0_157, %c0_158] : memref<25x16x128xf32, #tpu.memory_space<vmem>>, vector<1x16x128xf32>
    %194 = vector.shape_cast %193 : vector<1x16x128xf32> to vector<16x128xf32>
    %cst_159 = arith.constant dense<0.000000e+00> : vector<1x128xf32>
    %195 = tpu.matmul %192, %194, %cst_159 {dimension_numbers = #tpu.dot_dimension_numbers<[1], [0], [0], [1], [0, 0, 1, 1], [], []>} : vector<1x16xf32>, vector<16x128xf32>, vector<1x128xf32> -> vector<1x128xf32>
    %196 = arith.addf %191, %195 : vector<1x128xf32>
    %c4_160 = arith.constant 4 : index
    %c0_161 = arith.constant 0 : index
    %197 = vector.load %arg15[%c4_160, %c0_161] : memref<128x128xf32, #tpu.memory_space<vmem>>, vector<1x16xf32>
    %c2_162 = arith.constant 2 : index
    %c0_163 = arith.constant 0 : index
    %c0_164 = arith.constant 0 : index
    %198 = vector.load %arg6[%c2_162, %c0_163, %c0_164] : memref<25x16x128xf32, #tpu.memory_space<vmem>>, vector<1x16x128xf32>
    %199 = vector.shape_cast %198 : vector<1x16x128xf32> to vector<16x128xf32>
    %cst_165 = arith.constant dense<0.000000e+00> : vector<1x128xf32>
    %200 = tpu.matmul %197, %199, %cst_165 {dimension_numbers = #tpu.dot_dimension_numbers<[1], [0], [0], [1], [0, 0, 1, 1], [], []>} : vector<1x16xf32>, vector<16x128xf32>, vector<1x128xf32> -> vector<1x128xf32>
    %201 = arith.addf %196, %200 : vector<1x128xf32>
    %c6_166 = arith.constant 6 : index
    %c0_167 = arith.constant 0 : index
    %202 = vector.load %arg15[%c6_166, %c0_167] : memref<128x128xf32, #tpu.memory_space<vmem>>, vector<1x16xf32>
    %c3_168 = arith.constant 3 : index
    %c0_169 = arith.constant 0 : index
    %c0_170 = arith.constant 0 : index
    %203 = vector.load %arg6[%c3_168, %c0_169, %c0_170] : memref<25x16x128xf32, #tpu.memory_space<vmem>>, vector<1x16x128xf32>
    %204 = vector.shape_cast %203 : vector<1x16x128xf32> to vector<16x128xf32>
    %cst_171 = arith.constant dense<0.000000e+00> : vector<1x128xf32>
    %205 = tpu.matmul %202, %204, %cst_171 {dimension_numbers = #tpu.dot_dimension_numbers<[1], [0], [0], [1], [0, 0, 1, 1], [], []>} : vector<1x16xf32>, vector<16x128xf32>, vector<1x128xf32> -> vector<1x128xf32>
    %206 = arith.addf %201, %205 : vector<1x128xf32>
    %c8_172 = arith.constant 8 : index
    %c0_173 = arith.constant 0 : index
    %207 = vector.load %arg15[%c8_172, %c0_173] : memref<128x128xf32, #tpu.memory_space<vmem>>, vector<1x16xf32>
    %c4_174 = arith.constant 4 : index
    %c0_175 = arith.constant 0 : index
    %c0_176 = arith.constant 0 : index
    %208 = vector.load %arg6[%c4_174, %c0_175, %c0_176] : memref<25x16x128xf32, #tpu.memory_space<vmem>>, vector<1x16x128xf32>
    %209 = vector.shape_cast %208 : vector<1x16x128xf32> to vector<16x128xf32>
    %cst_177 = arith.constant dense<0.000000e+00> : vector<1x128xf32>
    %210 = tpu.matmul %207, %209, %cst_177 {dimension_numbers = #tpu.dot_dimension_numbers<[1], [0], [0], [1], [0, 0, 1, 1], [], []>} : vector<1x16xf32>, vector<16x128xf32>, vector<1x128xf32> -> vector<1x128xf32>
    %211 = arith.addf %206, %210 : vector<1x128xf32>
    %c28_178 = arith.constant 28 : index
    %c0_179 = arith.constant 0 : index
    %212 = vector.load %arg15[%c28_178, %c0_179] : memref<128x128xf32, #tpu.memory_space<vmem>>, vector<1x16xf32>
    %c5_180 = arith.constant 5 : index
    %c0_181 = arith.constant 0 : index
    %c0_182 = arith.constant 0 : index
    %213 = vector.load %arg6[%c5_180, %c0_181, %c0_182] : memref<25x16x128xf32, #tpu.memory_space<vmem>>, vector<1x16x128xf32>
    %214 = vector.shape_cast %213 : vector<1x16x128xf32> to vector<16x128xf32>
    %cst_183 = arith.constant dense<0.000000e+00> : vector<1x128xf32>
    %215 = tpu.matmul %212, %214, %cst_183 {dimension_numbers = #tpu.dot_dimension_numbers<[1], [0], [0], [1], [0, 0, 1, 1], [], []>} : vector<1x16xf32>, vector<16x128xf32>, vector<1x128xf32> -> vector<1x128xf32>
    %216 = arith.addf %211, %215 : vector<1x128xf32>
    %c30_184 = arith.constant 30 : index
    %c0_185 = arith.constant 0 : index
    %217 = vector.load %arg15[%c30_184, %c0_185] : memref<128x128xf32, #tpu.memory_space<vmem>>, vector<1x16xf32>
    %c6_186 = arith.constant 6 : index
    %c0_187 = arith.constant 0 : index
    %c0_188 = arith.constant 0 : index
    %218 = vector.load %arg6[%c6_186, %c0_187, %c0_188] : memref<25x16x128xf32, #tpu.memory_space<vmem>>, vector<1x16x128xf32>
    %219 = vector.shape_cast %218 : vector<1x16x128xf32> to vector<16x128xf32>
    %cst_189 = arith.constant dense<0.000000e+00> : vector<1x128xf32>
    %220 = tpu.matmul %217, %219, %cst_189 {dimension_numbers = #tpu.dot_dimension_numbers<[1], [0], [0], [1], [0, 0, 1, 1], [], []>} : vector<1x16xf32>, vector<16x128xf32>, vector<1x128xf32> -> vector<1x128xf32>
    %221 = arith.addf %216, %220 : vector<1x128xf32>
    %c32_190 = arith.constant 32 : index
    %c0_191 = arith.constant 0 : index
    %222 = vector.load %arg15[%c32_190, %c0_191] : memref<128x128xf32, #tpu.memory_space<vmem>>, vector<1x16xf32>
    %c7_192 = arith.constant 7 : index
    %c0_193 = arith.constant 0 : index
    %c0_194 = arith.constant 0 : index
    %223 = vector.load %arg6[%c7_192, %c0_193, %c0_194] : memref<25x16x128xf32, #tpu.memory_space<vmem>>, vector<1x16x128xf32>
    %224 = vector.shape_cast %223 : vector<1x16x128xf32> to vector<16x128xf32>
    %cst_195 = arith.constant dense<0.000000e+00> : vector<1x128xf32>
    %225 = tpu.matmul %222, %224, %cst_195 {dimension_numbers = #tpu.dot_dimension_numbers<[1], [0], [0], [1], [0, 0, 1, 1], [], []>} : vector<1x16xf32>, vector<16x128xf32>, vector<1x128xf32> -> vector<1x128xf32>
    %226 = arith.addf %221, %225 : vector<1x128xf32>
    %c34 = arith.constant 34 : index
    %c0_196 = arith.constant 0 : index
    %227 = vector.load %arg15[%c34, %c0_196] : memref<128x128xf32, #tpu.memory_space<vmem>>, vector<1x16xf32>
    %c8_197 = arith.constant 8 : index
    %c0_198 = arith.constant 0 : index
    %c0_199 = arith.constant 0 : index
    %228 = vector.load %arg6[%c8_197, %c0_198, %c0_199] : memref<25x16x128xf32, #tpu.memory_space<vmem>>, vector<1x16x128xf32>
    %229 = vector.shape_cast %228 : vector<1x16x128xf32> to vector<16x128xf32>
    %cst_200 = arith.constant dense<0.000000e+00> : vector<1x128xf32>
    %230 = tpu.matmul %227, %229, %cst_200 {dimension_numbers = #tpu.dot_dimension_numbers<[1], [0], [0], [1], [0, 0, 1, 1], [], []>} : vector<1x16xf32>, vector<16x128xf32>, vector<1x128xf32> -> vector<1x128xf32>
    %231 = arith.addf %226, %230 : vector<1x128xf32>
    %c36 = arith.constant 36 : index
    %c0_201 = arith.constant 0 : index
    %232 = vector.load %arg15[%c36, %c0_201] : memref<128x128xf32, #tpu.memory_space<vmem>>, vector<1x16xf32>
    %c9_202 = arith.constant 9 : index
    %c0_203 = arith.constant 0 : index
    %c0_204 = arith.constant 0 : index
    %233 = vector.load %arg6[%c9_202, %c0_203, %c0_204] : memref<25x16x128xf32, #tpu.memory_space<vmem>>, vector<1x16x128xf32>
    %234 = vector.shape_cast %233 : vector<1x16x128xf32> to vector<16x128xf32>
    %cst_205 = arith.constant dense<0.000000e+00> : vector<1x128xf32>
    %235 = tpu.matmul %232, %234, %cst_205 {dimension_numbers = #tpu.dot_dimension_numbers<[1], [0], [0], [1], [0, 0, 1, 1], [], []>} : vector<1x16xf32>, vector<16x128xf32>, vector<1x128xf32> -> vector<1x128xf32>
    %236 = arith.addf %231, %235 : vector<1x128xf32>
    %c56_206 = arith.constant 56 : index
    %c0_207 = arith.constant 0 : index
    %237 = vector.load %arg15[%c56_206, %c0_207] : memref<128x128xf32, #tpu.memory_space<vmem>>, vector<1x16xf32>
    %c10_208 = arith.constant 10 : index
    %c0_209 = arith.constant 0 : index
    %c0_210 = arith.constant 0 : index
    %238 = vector.load %arg6[%c10_208, %c0_209, %c0_210] : memref<25x16x128xf32, #tpu.memory_space<vmem>>, vector<1x16x128xf32>
    %239 = vector.shape_cast %238 : vector<1x16x128xf32> to vector<16x128xf32>
    %cst_211 = arith.constant dense<0.000000e+00> : vector<1x128xf32>
    %240 = tpu.matmul %237, %239, %cst_211 {dimension_numbers = #tpu.dot_dimension_numbers<[1], [0], [0], [1], [0, 0, 1, 1], [], []>} : vector<1x16xf32>, vector<16x128xf32>, vector<1x128xf32> -> vector<1x128xf32>
    %241 = arith.addf %236, %240 : vector<1x128xf32>
    %c58_212 = arith.constant 58 : index
    %c0_213 = arith.constant 0 : index
    %242 = vector.load %arg15[%c58_212, %c0_213] : memref<128x128xf32, #tpu.memory_space<vmem>>, vector<1x16xf32>
    %c11_214 = arith.constant 11 : index
    %c0_215 = arith.constant 0 : index
    %c0_216 = arith.constant 0 : index
    %243 = vector.load %arg6[%c11_214, %c0_215, %c0_216] : memref<25x16x128xf32, #tpu.memory_space<vmem>>, vector<1x16x128xf32>
    %244 = vector.shape_cast %243 : vector<1x16x128xf32> to vector<16x128xf32>
    %cst_217 = arith.constant dense<0.000000e+00> : vector<1x128xf32>
    %245 = tpu.matmul %242, %244, %cst_217 {dimension_numbers = #tpu.dot_dimension_numbers<[1], [0], [0], [1], [0, 0, 1, 1], [], []>} : vector<1x16xf32>, vector<16x128xf32>, vector<1x128xf32> -> vector<1x128xf32>
    %246 = arith.addf %241, %245 : vector<1x128xf32>
    %c60_218 = arith.constant 60 : index
    %c0_219 = arith.constant 0 : index
    %247 = vector.load %arg15[%c60_218, %c0_219] : memref<128x128xf32, #tpu.memory_space<vmem>>, vector<1x16xf32>
    %c12_220 = arith.constant 12 : index
    %c0_221 = arith.constant 0 : index
    %c0_222 = arith.constant 0 : index
    %248 = vector.load %arg6[%c12_220, %c0_221, %c0_222] : memref<25x16x128xf32, #tpu.memory_space<vmem>>, vector<1x16x128xf32>
    %249 = vector.shape_cast %248 : vector<1x16x128xf32> to vector<16x128xf32>
    %cst_223 = arith.constant dense<0.000000e+00> : vector<1x128xf32>
    %250 = tpu.matmul %247, %249, %cst_223 {dimension_numbers = #tpu.dot_dimension_numbers<[1], [0], [0], [1], [0, 0, 1, 1], [], []>} : vector<1x16xf32>, vector<16x128xf32>, vector<1x128xf32> -> vector<1x128xf32>
    %251 = arith.addf %246, %250 : vector<1x128xf32>
    %c62 = arith.constant 62 : index
    %c0_224 = arith.constant 0 : index
    %252 = vector.load %arg15[%c62, %c0_224] : memref<128x128xf32, #tpu.memory_space<vmem>>, vector<1x16xf32>
    %c13_225 = arith.constant 13 : index
    %c0_226 = arith.constant 0 : index
    %c0_227 = arith.constant 0 : index
    %253 = vector.load %arg6[%c13_225, %c0_226, %c0_227] : memref<25x16x128xf32, #tpu.memory_space<vmem>>, vector<1x16x128xf32>
    %254 = vector.shape_cast %253 : vector<1x16x128xf32> to vector<16x128xf32>
    %cst_228 = arith.constant dense<0.000000e+00> : vector<1x128xf32>
    %255 = tpu.matmul %252, %254, %cst_228 {dimension_numbers = #tpu.dot_dimension_numbers<[1], [0], [0], [1], [0, 0, 1, 1], [], []>} : vector<1x16xf32>, vector<16x128xf32>, vector<1x128xf32> -> vector<1x128xf32>
    %256 = arith.addf %251, %255 : vector<1x128xf32>
    %c64 = arith.constant 64 : index
    %c0_229 = arith.constant 0 : index
    %257 = vector.load %arg15[%c64, %c0_229] : memref<128x128xf32, #tpu.memory_space<vmem>>, vector<1x16xf32>
    %c14_230 = arith.constant 14 : index
    %c0_231 = arith.constant 0 : index
    %c0_232 = arith.constant 0 : index
    %258 = vector.load %arg6[%c14_230, %c0_231, %c0_232] : memref<25x16x128xf32, #tpu.memory_space<vmem>>, vector<1x16x128xf32>
    %259 = vector.shape_cast %258 : vector<1x16x128xf32> to vector<16x128xf32>
    %cst_233 = arith.constant dense<0.000000e+00> : vector<1x128xf32>
    %260 = tpu.matmul %257, %259, %cst_233 {dimension_numbers = #tpu.dot_dimension_numbers<[1], [0], [0], [1], [0, 0, 1, 1], [], []>} : vector<1x16xf32>, vector<16x128xf32>, vector<1x128xf32> -> vector<1x128xf32>
    %261 = arith.addf %256, %260 : vector<1x128xf32>
    %c84 = arith.constant 84 : index
    %c0_234 = arith.constant 0 : index
    %262 = vector.load %arg15[%c84, %c0_234] : memref<128x128xf32, #tpu.memory_space<vmem>>, vector<1x16xf32>
    %c15_235 = arith.constant 15 : index
    %c0_236 = arith.constant 0 : index
    %c0_237 = arith.constant 0 : index
    %263 = vector.load %arg6[%c15_235, %c0_236, %c0_237] : memref<25x16x128xf32, #tpu.memory_space<vmem>>, vector<1x16x128xf32>
    %264 = vector.shape_cast %263 : vector<1x16x128xf32> to vector<16x128xf32>
    %cst_238 = arith.constant dense<0.000000e+00> : vector<1x128xf32>
    %265 = tpu.matmul %262, %264, %cst_238 {dimension_numbers = #tpu.dot_dimension_numbers<[1], [0], [0], [1], [0, 0, 1, 1], [], []>} : vector<1x16xf32>, vector<16x128xf32>, vector<1x128xf32> -> vector<1x128xf32>
    %266 = arith.addf %261, %265 : vector<1x128xf32>
    %c86 = arith.constant 86 : index
    %c0_239 = arith.constant 0 : index
    %267 = vector.load %arg15[%c86, %c0_239] : memref<128x128xf32, #tpu.memory_space<vmem>>, vector<1x16xf32>
    %c16_240 = arith.constant 16 : index
    %c0_241 = arith.constant 0 : index
    %c0_242 = arith.constant 0 : index
    %268 = vector.load %arg6[%c16_240, %c0_241, %c0_242] : memref<25x16x128xf32, #tpu.memory_space<vmem>>, vector<1x16x128xf32>
    %269 = vector.shape_cast %268 : vector<1x16x128xf32> to vector<16x128xf32>
    %cst_243 = arith.constant dense<0.000000e+00> : vector<1x128xf32>
    %270 = tpu.matmul %267, %269, %cst_243 {dimension_numbers = #tpu.dot_dimension_numbers<[1], [0], [0], [1], [0, 0, 1, 1], [], []>} : vector<1x16xf32>, vector<16x128xf32>, vector<1x128xf32> -> vector<1x128xf32>
    %271 = arith.addf %266, %270 : vector<1x128xf32>
    %c88 = arith.constant 88 : index
    %c0_244 = arith.constant 0 : index
    %272 = vector.load %arg15[%c88, %c0_244] : memref<128x128xf32, #tpu.memory_space<vmem>>, vector<1x16xf32>
    %c17_245 = arith.constant 17 : index
    %c0_246 = arith.constant 0 : index
    %c0_247 = arith.constant 0 : index
    %273 = vector.load %arg6[%c17_245, %c0_246, %c0_247] : memref<25x16x128xf32, #tpu.memory_space<vmem>>, vector<1x16x128xf32>
    %274 = vector.shape_cast %273 : vector<1x16x128xf32> to vector<16x128xf32>
    %cst_248 = arith.constant dense<0.000000e+00> : vector<1x128xf32>
    %275 = tpu.matmul %272, %274, %cst_248 {dimension_numbers = #tpu.dot_dimension_numbers<[1], [0], [0], [1], [0, 0, 1, 1], [], []>} : vector<1x16xf32>, vector<16x128xf32>, vector<1x128xf32> -> vector<1x128xf32>
    %276 = arith.addf %271, %275 : vector<1x128xf32>
    %c90 = arith.constant 90 : index
    %c0_249 = arith.constant 0 : index
    %277 = vector.load %arg15[%c90, %c0_249] : memref<128x128xf32, #tpu.memory_space<vmem>>, vector<1x16xf32>
    %c18_250 = arith.constant 18 : index
    %c0_251 = arith.constant 0 : index
    %c0_252 = arith.constant 0 : index
    %278 = vector.load %arg6[%c18_250, %c0_251, %c0_252] : memref<25x16x128xf32, #tpu.memory_space<vmem>>, vector<1x16x128xf32>
    %279 = vector.shape_cast %278 : vector<1x16x128xf32> to vector<16x128xf32>
    %cst_253 = arith.constant dense<0.000000e+00> : vector<1x128xf32>
    %280 = tpu.matmul %277, %279, %cst_253 {dimension_numbers = #tpu.dot_dimension_numbers<[1], [0], [0], [1], [0, 0, 1, 1], [], []>} : vector<1x16xf32>, vector<16x128xf32>, vector<1x128xf32> -> vector<1x128xf32>
    %281 = arith.addf %276, %280 : vector<1x128xf32>
    %c92 = arith.constant 92 : index
    %c0_254 = arith.constant 0 : index
    %282 = vector.load %arg15[%c92, %c0_254] : memref<128x128xf32, #tpu.memory_space<vmem>>, vector<1x16xf32>
    %c19_255 = arith.constant 19 : index
    %c0_256 = arith.constant 0 : index
    %c0_257 = arith.constant 0 : index
    %283 = vector.load %arg6[%c19_255, %c0_256, %c0_257] : memref<25x16x128xf32, #tpu.memory_space<vmem>>, vector<1x16x128xf32>
    %284 = vector.shape_cast %283 : vector<1x16x128xf32> to vector<16x128xf32>
    %cst_258 = arith.constant dense<0.000000e+00> : vector<1x128xf32>
    %285 = tpu.matmul %282, %284, %cst_258 {dimension_numbers = #tpu.dot_dimension_numbers<[1], [0], [0], [1], [0, 0, 1, 1], [], []>} : vector<1x16xf32>, vector<16x128xf32>, vector<1x128xf32> -> vector<1x128xf32>
    %286 = arith.addf %281, %285 : vector<1x128xf32>
    %c112 = arith.constant 112 : index
    %c0_259 = arith.constant 0 : index
    %287 = vector.load %arg15[%c112, %c0_259] : memref<128x128xf32, #tpu.memory_space<vmem>>, vector<1x16xf32>
    %c20_260 = arith.constant 20 : index
    %c0_261 = arith.constant 0 : index
    %c0_262 = arith.constant 0 : index
    %288 = vector.load %arg6[%c20_260, %c0_261, %c0_262] : memref<25x16x128xf32, #tpu.memory_space<vmem>>, vector<1x16x128xf32>
    %289 = vector.shape_cast %288 : vector<1x16x128xf32> to vector<16x128xf32>
    %cst_263 = arith.constant dense<0.000000e+00> : vector<1x128xf32>
    %290 = tpu.matmul %287, %289, %cst_263 {dimension_numbers = #tpu.dot_dimension_numbers<[1], [0], [0], [1], [0, 0, 1, 1], [], []>} : vector<1x16xf32>, vector<16x128xf32>, vector<1x128xf32> -> vector<1x128xf32>
    %291 = arith.addf %286, %290 : vector<1x128xf32>
    %c114 = arith.constant 114 : index
    %c0_264 = arith.constant 0 : index
    %292 = vector.load %arg15[%c114, %c0_264] : memref<128x128xf32, #tpu.memory_space<vmem>>, vector<1x16xf32>
    %c21_265 = arith.constant 21 : index
    %c0_266 = arith.constant 0 : index
    %c0_267 = arith.constant 0 : index
    %293 = vector.load %arg6[%c21_265, %c0_266, %c0_267] : memref<25x16x128xf32, #tpu.memory_space<vmem>>, vector<1x16x128xf32>
    %294 = vector.shape_cast %293 : vector<1x16x128xf32> to vector<16x128xf32>
    %cst_268 = arith.constant dense<0.000000e+00> : vector<1x128xf32>
    %295 = tpu.matmul %292, %294, %cst_268 {dimension_numbers = #tpu.dot_dimension_numbers<[1], [0], [0], [1], [0, 0, 1, 1], [], []>} : vector<1x16xf32>, vector<16x128xf32>, vector<1x128xf32> -> vector<1x128xf32>
    %296 = arith.addf %291, %295 : vector<1x128xf32>
    %c116 = arith.constant 116 : index
    %c0_269 = arith.constant 0 : index
    %297 = vector.load %arg15[%c116, %c0_269] : memref<128x128xf32, #tpu.memory_space<vmem>>, vector<1x16xf32>
    %c22_270 = arith.constant 22 : index
    %c0_271 = arith.constant 0 : index
    %c0_272 = arith.constant 0 : index
    %298 = vector.load %arg6[%c22_270, %c0_271, %c0_272] : memref<25x16x128xf32, #tpu.memory_space<vmem>>, vector<1x16x128xf32>
    %299 = vector.shape_cast %298 : vector<1x16x128xf32> to vector<16x128xf32>
    %cst_273 = arith.constant dense<0.000000e+00> : vector<1x128xf32>
    %300 = tpu.matmul %297, %299, %cst_273 {dimension_numbers = #tpu.dot_dimension_numbers<[1], [0], [0], [1], [0, 0, 1, 1], [], []>} : vector<1x16xf32>, vector<16x128xf32>, vector<1x128xf32> -> vector<1x128xf32>
    %301 = arith.addf %296, %300 : vector<1x128xf32>
    %c118 = arith.constant 118 : index
    %c0_274 = arith.constant 0 : index
    %302 = vector.load %arg15[%c118, %c0_274] : memref<128x128xf32, #tpu.memory_space<vmem>>, vector<1x16xf32>
    %c23_275 = arith.constant 23 : index
    %c0_276 = arith.constant 0 : index
    %c0_277 = arith.constant 0 : index
    %303 = vector.load %arg6[%c23_275, %c0_276, %c0_277] : memref<25x16x128xf32, #tpu.memory_space<vmem>>, vector<1x16x128xf32>
    %304 = vector.shape_cast %303 : vector<1x16x128xf32> to vector<16x128xf32>
    %cst_278 = arith.constant dense<0.000000e+00> : vector<1x128xf32>
    %305 = tpu.matmul %302, %304, %cst_278 {dimension_numbers = #tpu.dot_dimension_numbers<[1], [0], [0], [1], [0, 0, 1, 1], [], []>} : vector<1x16xf32>, vector<16x128xf32>, vector<1x128xf32> -> vector<1x128xf32>
    %306 = arith.addf %301, %305 : vector<1x128xf32>
    %c120 = arith.constant 120 : index
    %c0_279 = arith.constant 0 : index
    %307 = vector.load %arg15[%c120, %c0_279] : memref<128x128xf32, #tpu.memory_space<vmem>>, vector<1x16xf32>
    %c24_280 = arith.constant 24 : index
    %c0_281 = arith.constant 0 : index
    %c0_282 = arith.constant 0 : index
    %308 = vector.load %arg6[%c24_280, %c0_281, %c0_282] : memref<25x16x128xf32, #tpu.memory_space<vmem>>, vector<1x16x128xf32>
    %309 = vector.shape_cast %308 : vector<1x16x128xf32> to vector<16x128xf32>
    %cst_283 = arith.constant dense<0.000000e+00> : vector<1x128xf32>
    %310 = tpu.matmul %307, %309, %cst_283 {dimension_numbers = #tpu.dot_dimension_numbers<[1], [0], [0], [1], [0, 0, 1, 1], [], []>} : vector<1x16xf32>, vector<16x128xf32>, vector<1x128xf32> -> vector<1x128xf32>
    %311 = arith.addf %306, %310 : vector<1x128xf32>
    %312 = arith.negf %311 : vector<1x128xf32>
    %313 = math.exp %312 : vector<1x128xf32>
    %cst_284 = arith.constant 1.000000e+00 : f32
    %314 = vector.broadcast %cst_284 : f32 to vector<1x128xf32>
    %315 = arith.addf %314, %313 : vector<1x128xf32>
    %316 = arith.divf %314, %315 : vector<1x128xf32>
    %c0_285 = arith.constant 0 : index
    %c0_286 = arith.constant 0 : index
    %317 = vector.load %arg8[%c0_285, %c0_286] : memref<128x128xf32, #tpu.memory_space<vmem>>, vector<128x128xf32>
    %cst_287 = arith.constant dense<0.000000e+00> : vector<1x128xf32>
    %318 = tpu.matmul %316, %317, %cst_287 {dimension_numbers = #tpu.dot_dimension_numbers<[1], [0], [0], [1], [0, 0, 1, 1], [], []>} : vector<1x128xf32>, vector<128x128xf32>, vector<1x128xf32> -> vector<1x128xf32>
    %c0_288 = arith.constant 0 : index
    %c0_289 = arith.constant 0 : index
    %319 = vector.load %arg9[%c0_288, %c0_289] : memref<1x128xf32, #tpu.memory_space<vmem>>, vector<1x128xf32>
    %320 = arith.addf %318, %319 : vector<1x128xf32>
    %321 = arith.negf %320 : vector<1x128xf32>
    %322 = math.exp %321 : vector<1x128xf32>
    %cst_290 = arith.constant 1.000000e+00 : f32
    %323 = vector.broadcast %cst_290 : f32 to vector<1x128xf32>
    %324 = arith.addf %323, %322 : vector<1x128xf32>
    %325 = arith.divf %323, %324 : vector<1x128xf32>
    %c0_291 = arith.constant 0 : index
    %c0_292 = arith.constant 0 : index
    %326 = vector.load %arg10[%c0_291, %c0_292] : memref<128x128xf32, #tpu.memory_space<vmem>>, vector<128x128xf32>
    %cst_293 = arith.constant dense<0.000000e+00> : vector<1x128xf32>
    %327 = tpu.matmul %325, %326, %cst_293 {dimension_numbers = #tpu.dot_dimension_numbers<[1], [0], [0], [1], [0, 0, 1, 1], [], []>} : vector<1x128xf32>, vector<128x128xf32>, vector<1x128xf32> -> vector<1x128xf32>
    %c0_294 = arith.constant 0 : index
    %c0_295 = arith.constant 0 : index
    %328 = vector.load %arg11[%c0_294, %c0_295] : memref<1x128xf32, #tpu.memory_space<vmem>>, vector<1x128xf32>
    %329 = arith.addf %327, %328 : vector<1x128xf32>
    %330 = vector.shape_cast %329 : vector<1x128xf32> to vector<1x128xf32>
    %331 = vector.broadcast %330 : vector<1x128xf32> to vector<8x128xf32>
    %c0_296 = arith.constant 0 : index
    %c0_297 = arith.constant 0 : index
    %c0_298 = arith.constant 0 : index
    %332 = vector.load %arg12[%c0_296, %c0_297, %c0_298] : memref<1x8x128xf32, #tpu.memory_space<vmem>>, vector<1x8x128xf32>
    %333 = vector.shape_cast %332 : vector<1x8x128xf32> to vector<8x128xf32>
    %334 = vector.shape_cast %331 : vector<8x128xf32> to vector<1x8x128xf32>
    tpu.vector_store %arg12[%c0_296, %c0_297, %c0_298], %334 {strides = array<i32>} : memref<1x8x128xf32, #tpu.memory_space<vmem>>, vector<1x8x128xf32>,
    return
  }
  func.func @transform_0(%arg0: i32) -> (i32, i32) {
    %c0_i32 = arith.constant 0 : i32
    %c0_i32_0 = arith.constant 0 : i32
    return %arg0, %c0_i32 : i32, i32
  }
  func.func @transform_1(%arg0: i32) -> (i32, i32) {
    %c0_i32 = arith.constant 0 : i32
    %c0_i32_0 = arith.constant 0 : i32
    %c0_i32_1 = arith.constant 0 : i32
    return %c0_i32, %c0_i32_0 : i32, i32
  }
  func.func @transform_2(%arg0: i32) -> (i32, i32) {
    %c0_i32 = arith.constant 0 : i32
    %c0_i32_0 = arith.constant 0 : i32
    %c0_i32_1 = arith.constant 0 : i32
    return %c0_i32, %c0_i32_0 : i32, i32
  }
  func.func @transform_3(%arg0: i32) -> (i32, i32, i32) {
    %c0_i32 = arith.constant 0 : i32
    %c0_i32_0 = arith.constant 0 : i32
    %c0_i32_1 = arith.constant 0 : i32
    %c0_i32_2 = arith.constant 0 : i32
    return %c0_i32, %c0_i32_0, %c0_i32_1 : i32, i32, i32
  }
  func.func @transform_4(%arg0: i32) -> (i32, i32) {
    %c0_i32 = arith.constant 0 : i32
    %c0_i32_0 = arith.constant 0 : i32
    %c0_i32_1 = arith.constant 0 : i32
    return %c0_i32, %c0_i32_0 : i32, i32
  }
  func.func @transform_5(%arg0: i32) -> (i32, i32, i32) {
    %c0_i32 = arith.constant 0 : i32
    %c0_i32_0 = arith.constant 0 : i32
    %c0_i32_1 = arith.constant 0 : i32
    %c0_i32_2 = arith.constant 0 : i32
    return %c0_i32, %c0_i32_0, %c0_i32_1 : i32, i32, i32
  }
  func.func @transform_6(%arg0: i32) -> (i32, i32) {
    %c0_i32 = arith.constant 0 : i32
    %c0_i32_0 = arith.constant 0 : i32
    %c0_i32_1 = arith.constant 0 : i32
    return %c0_i32, %c0_i32_0 : i32, i32
  }
  func.func @transform_7(%arg0: i32) -> (i32, i32) {
    %c0_i32 = arith.constant 0 : i32
    %c0_i32_0 = arith.constant 0 : i32
    %c0_i32_1 = arith.constant 0 : i32
    return %c0_i32, %c0_i32_0 : i32, i32
  }
  func.func @transform_8(%arg0: i32) -> (i32, i32) {
    %c0_i32 = arith.constant 0 : i32
    %c0_i32_0 = arith.constant 0 : i32
    %c0_i32_1 = arith.constant 0 : i32
    return %c0_i32, %c0_i32_0 : i32, i32
  }
  func.func @transform_9(%arg0: i32) -> (i32, i32) {
    %c0_i32 = arith.constant 0 : i32
    %c0_i32_0 = arith.constant 0 : i32
    %c0_i32_1 = arith.constant 0 : i32
    return %c0_i32, %c0_i32_0 : i32, i32
  }
  func.func @transform_10(%arg0: i32) -> (i32, i32) {
    %c0_i32 = arith.constant 0 : i32
    %c0_i32_0 = arith.constant 0 : i32
    %c0_i32_1 = arith.constant 0 : i32
    return %c0_i32, %c0_i32_0 : i32, i32
  }
  func.func @transform_11(%arg0: i32) -> (i32, i32, i32) {
    %c0_i32 = arith.constant 0 : i32
    %c0_i32_0 = arith.constant 0 : i32
    %c0_i32_1 = arith.constant 0 : i32
    return %arg0, %c0_i32, %c0_i32_0 : i32, i32, i32
  }
}

</mosaic_0001>

<llo_original>
// kernel: lenet5_forward.1
$region0: #{lenet5_forward.1}
  #allocation0 [shape = 'u32[]', space=smem, size = 0x4, offset = 0x4, fixed_abs, tag = 'smem constant byte address 0x4 - core index']
  #allocation1 [shape = 'u32[144,128]{1,0:T(1,128)}', space=vmem, size = 0x12000, scoped, tag = 'internal scratch']
  #allocation2 [shape = 'f32[200,128]{1,0:T(8,128)}', space=vmem, size = 0x19000, scoped, tag = 'scratch operand']
  #allocation3 [shape = 'f32[140,128]{1,0:T(8,128)}', space=vmem, size = 0x12000, scoped, tag = 'scratch operand']
  #allocation4 [shape = 'f32[128,128]{1,0:T(8,128)}', space=vmem, size = 0x10000, scoped, tag = 'scratch operand']
  %s0 = inlined_call_operand.vmem [shape: f32[1568,32], index: 0, kind: input, shape index: {}]
  %s1 = inlined_call_operand.vmem [shape: f32[32,128], index: 1, kind: input, shape index: {}]
  %s2 = inlined_call_operand.vmem [shape: f32[1,128], index: 2, kind: input, shape index: {}]
  %s3 = inlined_call_operand.vmem [shape: f32[25,8,128], index: 3, kind: input, shape index: {}]
  %s4 = inlined_call_operand.vmem [shape: f32[1,128], index: 4, kind: input, shape index: {}]
  %s5 = inlined_call_operand.vmem [shape: f32[25,16,128], index: 5, kind: input, shape index: {}]
  %s6 = inlined_call_operand.vmem [shape: f32[1,128], index: 6, kind: input, shape index: {}]
  %s7 = inlined_call_operand.vmem [shape: f32[128,128], index: 7, kind: input, shape index: {}]
  %s8 = inlined_call_operand.vmem [shape: f32[1,128], index: 8, kind: input, shape index: {}]
  %s9 = inlined_call_operand.vmem [shape: f32[128,128], index: 9, kind: input, shape index: {}]
  %s10 = inlined_call_operand.vmem [shape: f32[1,128], index: 10, kind: input, shape index: {}]
  %s11 = inlined_call_operand.vmem [shape: f32[2,8,128], index: 11, kind: output, shape index: {}]
  %s12 = sld [smem:[#allocation0]]
  $region77: #{lenet5_forward.1} parent=0
    _
  %s14 = ssub.s32 1, %s12
  %s15 = scalar_select 0, %s14, %s12
  loop: start=0, step=1, limit=4
  $region2: #{lenet5_forward.1} parent=0 // loop_pre_header
    _
  $region3: #{lenet5_forward.1} parent=0 // loop_header
    %s17 = sphi 0, %s21
    %p18 = scmp.ge.s32.totalorder %s17, 4
    %s27 = sphi 0, %s29
    %s30 = sphi 0, %s27
    %s31 = sphi 0, %s30
    %s47 = sphi 0, %s31
    %s51 = sphi 0, %s51
    %s53 = sphi 0, %s51
    %s54 = sphi 0, %s53
    %s68 = sphi 0, %s54
    %s72 = sphi 0, %s72
    %s74 = sphi 0, %s72
    %s75 = sphi 0, %s74
    %s89 = sphi 0, %s75
    %s93 = sphi 0, %s93
    %s95 = sphi 0, %s93
    %s96 = sphi 0, %s95
    %s110 = sphi 0, %s96
    %s114 = sphi 0, %s114
    %s116 = sphi 0, %s114
    %s117 = sphi 0, %s116
    %s131 = sphi 0, %s117
    %s135 = sphi 0, %s135
    %s137 = sphi 0, %s135
    %s138 = sphi 0, %s137
    %s152 = sphi 0, %s138
    %s156 = sphi 0, %s156
    %s158 = sphi 0, %s156
    %s159 = sphi 0, %s158
    %s173 = sphi 0, %s159
    %s177 = sphi 0, %s177
    %s179 = sphi 0, %s177
    %s180 = sphi 0, %s179
    %s194 = sphi 0, %s180
    %s198 = sphi 0, %s198
    %s200 = sphi 0, %s198
    %s201 = sphi 0, %s200
    %s215 = sphi 0, %s201
    %s219 = sphi 0, %s219
    %s221 = sphi 0, %s219
    %s222 = sphi 0, %s221
    %s236 = sphi 0, %s222
    %s240 = sphi 0, %s240
    %s242 = sphi 0, %s240
    %s243 = sphi 0, %s242
    %s257 = sphi 0, %s243
    %s263 = sphi 0, %s265
    %s266 = sphi 0, %s263
    %s267 = sphi 0, %s266
    %s283 = sphi 0, %s267
  $region4: #{lenet5_forward.1} parent=0 // loop_header_branch
    %20 = sbr.rel (%p18) target = $region8
  $region5: #{lenet5_forward.1} parent=0 // loop_body
    %s22 = ssub.s32 %s17, 1
    %s23 = ssub.s32 %s17, 2
    %s24 = sadd.s32 %s17, 1
    %s25 = ssub.s32 %s17, %s24
    %p26 = scmp.eq.s32.totalorder %s25, 0
    %s28 = sadd.s32 %s27, 1
    %s29 = scalar_select %p26, %s27, %s28
    %p32 = pneg %p26
    %p33 = scmp.eq.s32.totalorder %s17, 1
    %p34 = por %p32, %p33
    %p35 = scmp.ne.s32.totalorder %s27, %s30
    %p36 = scmp.eq.s32.totalorder %s17, 0
    %p37 = por %p35, %p36
    %p38 = scmp.ne.s32.totalorder %s27, %s30
    %p39 = scmp.eq.s32.totalorder %s22, 1
    %p40 = por %p38, %p39
    %p41 = scmp.ne.s32.totalorder %s30, %s31
    %p42 = scmp.eq.s32.totalorder %s22, 0
    %p43 = por %p41, %p42
    %p44 = scmp.ne.s32.totalorder %s30, %s31
    %p45 = scmp.eq.s32.totalorder %s23, 1
    %p46 = por %p44, %p45
    %p48 = scmp.ne.s32.totalorder %s31, %s47
    %p49 = scmp.eq.s32.totalorder %s23, 0
    %p50 = por %p48, %p49
    %s52 = sadd.s32 %s51, 1
    %p55 = scmp.eq.s32.totalorder %s17, 1
    %p56 = scmp.ne.s32.totalorder %s51, %s53
    %p57 = scmp.eq.s32.totalorder %s17, 0
    %p58 = por %p56, %p57
    %p59 = scmp.ne.s32.totalorder %s51, %s53
    %p60 = scmp.eq.s32.totalorder %s22, 1
    %p61 = por %p59, %p60
    %p62 = scmp.ne.s32.totalorder %s53, %s54
    %p63 = scmp.eq.s32.totalorder %s22, 0
    %p64 = por %p62, %p63
    %p65 = scmp.ne.s32.totalorder %s53, %s54
    %p66 = scmp.eq.s32.totalorder %s23, 1
    %p67 = por %p65, %p66
    %p69 = scmp.ne.s32.totalorder %s54, %s68
    %p70 = scmp.eq.s32.totalorder %s23, 0
    %p71 = por %p69, %p70
    %s73 = sadd.s32 %s72, 1
    %p76 = scmp.eq.s32.totalorder %s17, 1
    %p77 = scmp.ne.s32.totalorder %s72, %s74
    %p78 = scmp.eq.s32.totalorder %s17, 0
    %p79 = por %p77, %p78
    %p80 = scmp.ne.s32.totalorder %s72, %s74
    %p81 = scmp.eq.s32.totalorder %s22, 1
    %p82 = por %p80, %p81
    %p83 = scmp.ne.s32.totalorder %s74, %s75
    %p84 = scmp.eq.s32.totalorder %s22, 0
    %p85 = por %p83, %p84
    %p86 = scmp.ne.s32.totalorder %s74, %s75
    %p87 = scmp.eq.s32.totalorder %s23, 1
    %p88 = por %p86, %p87
    %p90 = scmp.ne.s32.totalorder %s75, %s89
    %p91 = scmp.eq.s32.totalorder %s23, 0
    %p92 = por %p90, %p91
    %s94 = sadd.s32 %s93, 1
    %p97 = scmp.eq.s32.totalorder %s17, 1
    %p98 = scmp.ne.s32.totalorder %s93, %s95
    %p99 = scmp.eq.s32.totalorder %s17, 0
    %p100 = por %p98, %p99
    %p101 = scmp.ne.s32.totalorder %s93, %s95
    %p102 = scmp.eq.s32.totalorder %s22, 1
    %p103 = por %p101, %p102
    %p104 = scmp.ne.s32.totalorder %s95, %s96
    %p105 = scmp.eq.s32.totalorder %s22, 0
    %p106 = por %p104, %p105
    %p107 = scmp.ne.s32.totalorder %s95, %s96
    %p108 = scmp.eq.s32.totalorder %s23, 1
    %p109 = por %p107, %p108
    %p111 = scmp.ne.s32.totalorder %s96, %s110
    %p112 = scmp.eq.s32.totalorder %s23, 0
    %p113 = por %p111, %p112
    %s115 = sadd.s32 %s114, 1
    %p118 = scmp.eq.s32.totalorder %s17, 1
    %p119 = scmp.ne.s32.totalorder %s114, %s116
    %p120 = scmp.eq.s32.totalorder %s17, 0
    %p121 = por %p119, %p120
    %p122 = scmp.ne.s32.totalorder %s114, %s116
    %p123 = scmp.eq.s32.totalorder %s22, 1
    %p124 = por %p122, %p123
    %p125 = scmp.ne.s32.totalorder %s116, %s117
    %p126 = scmp.eq.s32.totalorder %s22, 0
    %p127 = por %p125, %p126
    %p128 = scmp.ne.s32.totalorder %s116, %s117
    %p129 = scmp.eq.s32.totalorder %s23, 1
    %p130 = por %p128, %p129
    %p132 = scmp.ne.s32.totalorder %s117, %s131
    %p133 = scmp.eq.s32.totalorder %s23, 0
    %p134 = por %p132, %p133
    %s136 = sadd.s32 %s135, 1
    %p139 = scmp.eq.s32.totalorder %s17, 1
    %p140 = scmp.ne.s32.totalorder %s135, %s137
    %p141 = scmp.eq.s32.totalorder %s17, 0
    %p142 = por %p140, %p141
    %p143 = scmp.ne.s32.totalorder %s135, %s137
    %p144 = scmp.eq.s32.totalorder %s22, 1
    %p145 = por %p143, %p144
    %p146 = scmp.ne.s32.totalorder %s137, %s138
    %p147 = scmp.eq.s32.totalorder %s22, 0
    %p148 = por %p146, %p147
    %p149 = scmp.ne.s32.totalorder %s137, %s138
    %p150 = scmp.eq.s32.totalorder %s23, 1
    %p151 = por %p149, %p150
    %p153 = scmp.ne.s32.totalorder %s138, %s152
    %p154 = scmp.eq.s32.totalorder %s23, 0
    %p155 = por %p153, %p154
    %s157 = sadd.s32 %s156, 1
    %p160 = scmp.eq.s32.totalorder %s17, 1
    %p161 = scmp.ne.s32.totalorder %s156, %s158
    %p162 = scmp.eq.s32.totalorder %s17, 0
    %p163 = por %p161, %p162
    %p164 = scmp.ne.s32.totalorder %s156, %s158
    %p165 = scmp.eq.s32.totalorder %s22, 1
    %p166 = por %p164, %p165
    %p167 = scmp.ne.s32.totalorder %s158, %s159
    %p168 = scmp.eq.s32.totalorder %s22, 0
    %p169 = por %p167, %p168
    %p170 = scmp.ne.s32.totalorder %s158, %s159
    %p171 = scmp.eq.s32.totalorder %s23, 1
    %p172 = por %p170, %p171
    %p174 = scmp.ne.s32.totalorder %s159, %s173
    %p175 = scmp.eq.s32.totalorder %s23, 0
    %p176 = por %p174, %p175
    %s178 = sadd.s32 %s177, 1
    %p181 = scmp.eq.s32.totalorder %s17, 1
    %p182 = scmp.ne.s32.totalorder %s177, %s179
    %p183 = scmp.eq.s32.totalorder %s17, 0
    %p184 = por %p182, %p183
    %p185 = scmp.ne.s32.totalorder %s177, %s179
    %p186 = scmp.eq.s32.totalorder %s22, 1
    %p187 = por %p185, %p186
    %p188 = scmp.ne.s32.totalorder %s179, %s180
    %p189 = scmp.eq.s32.totalorder %s22, 0
    %p190 = por %p188, %p189
    %p191 = scmp.ne.s32.totalorder %s179, %s180
    %p192 = scmp.eq.s32.totalorder %s23, 1
    %p193 = por %p191, %p192
    %p195 = scmp.ne.s32.totalorder %s180, %s194
    %p196 = scmp.eq.s32.totalorder %s23, 0
    %p197 = por %p195, %p196
    %s199 = sadd.s32 %s198, 1
    %p202 = scmp.eq.s32.totalorder %s17, 1
    %p203 = scmp.ne.s32.totalorder %s198, %s200
    %p204 = scmp.eq.s32.totalorder %s17, 0
    %p205 = por %p203, %p204
    %p206 = scmp.ne.s32.totalorder %s198, %s200
    %p207 = scmp.eq.s32.totalorder %s22, 1
    %p208 = por %p206, %p207
    %p209 = scmp.ne.s32.totalorder %s200, %s201
    %p210 = scmp.eq.s32.totalorder %s22, 0
    %p211 = por %p209, %p210
    %p212 = scmp.ne.s32.totalorder %s200, %s201
    %p213 = scmp.eq.s32.totalorder %s23, 1
    %p214 = por %p212, %p213
    %p216 = scmp.ne.s32.totalorder %s201, %s215
    %p217 = scmp.eq.s32.totalorder %s23, 0
    %p218 = por %p216, %p217
    %s220 = sadd.s32 %s219, 1
    %p223 = scmp.eq.s32.totalorder %s17, 1
    %p224 = scmp.ne.s32.totalorder %s219, %s221
    %p225 = scmp.eq.s32.totalorder %s17, 0
    %p226 = por %p224, %p225
    %p227 = scmp.ne.s32.totalorder %s219, %s221
    %p228 = scmp.eq.s32.totalorder %s22, 1
    %p229 = por %p227, %p228
    %p230 = scmp.ne.s32.totalorder %s221, %s222
    %p231 = scmp.eq.s32.totalorder %s22, 0
    %p232 = por %p230, %p231
    %p233 = scmp.ne.s32.totalorder %s221, %s222
    %p234 = scmp.eq.s32.totalorder %s23, 1
    %p235 = por %p233, %p234
    %p237 = scmp.ne.s32.totalorder %s222, %s236
    %p238 = scmp.eq.s32.totalorder %s23, 0
    %p239 = por %p237, %p238
    %s241 = sadd.s32 %s240, 1
    %p244 = scmp.eq.s32.totalorder %s17, 1
    %p245 = scmp.ne.s32.totalorder %s240, %s242
    %p246 = scmp.eq.s32.totalorder %s17, 0
    %p247 = por %p245, %p246
    %p248 = scmp.ne.s32.totalorder %s240, %s242
    %p249 = scmp.eq.s32.totalorder %s22, 1
    %p250 = por %p248, %p249
    %p251 = scmp.ne.s32.totalorder %s242, %s243
    %p252 = scmp.eq.s32.totalorder %s22, 0
    %p253 = por %p251, %p252
    %p254 = scmp.ne.s32.totalorder %s242, %s243
    %p255 = scmp.eq.s32.totalorder %s23, 1
    %p256 = por %p254, %p255
    %p258 = scmp.ne.s32.totalorder %s243, %s257
    %p259 = scmp.eq.s32.totalorder %s23, 0
    %p260 = por %p258, %p259
    %s261 = ssub.s32 %s17, %s24
    %p262 = scmp.eq.s32.totalorder %s261, 0
    %s264 = sadd.s32 %s263, 1
    %s265 = scalar_select %p262, %s263, %s264
    %p268 = pneg %p262
    %p269 = scmp.eq.s32.totalorder %s17, 1
    %p270 = por %p268, %p269
    %p271 = scmp.ne.s32.totalorder %s263, %s266
    %p272 = scmp.eq.s32.totalorder %s17, 0
    %p273 = por %p271, %p272
    %p274 = scmp.ne.s32.totalorder %s263, %s266
    %p275 = scmp.eq.s32.totalorder %s22, 1
    %p276 = por %p274, %p275
    %p277 = scmp.ne.s32.totalorder %s266, %s267
    %p278 = scmp.eq.s32.totalorder %s22, 0
    %p279 = por %p277, %p278
    %p280 = scmp.ne.s32.totalorder %s266, %s267
    %p281 = scmp.eq.s32.totalorder %s23, 1
    %p282 = por %p280, %p281
    %p284 = scmp.ne.s32.totalorder %s267, %s283
    %p285 = scmp.eq.s32.totalorder %s23, 0
    %p286 = por %p284, %p285
    %p287 = scmp.le.s32.totalorder 1, %s17
    %p288 = scmp.lt.s32.totalorder %s17, 3
    %p289 = pnand %p287, %p288
    %p290 = pneg %p289
    // Predicated region
    $region9: #{lenet5_forward.1} parent=5 // pred_check
      _
    $region10: #{lenet5_forward.1} parent=5 // pred_check_branch
      %292 = sbr.rel (%p289) target = $region12
    $region11: #{lenet5_forward.1} parent=5 // pred_region
      %s293 = ssub.s32 %s17, 1
      // Predicated region
      $region13: #{lenet5_forward.1} parent=11 // pred_check
        %p294 = pneg %p64
      $region14: #{lenet5_forward.1} parent=11 // pred_check_branch
        %296 = sbr.rel (%p294) target = $region16
      $region15: #{lenet5_forward.1} parent=11 // pred_region
        _
      $region16: #{lenet5_forward.1} parent=11 // pred_fallthru
        _
      // Predicated region
      $region17: #{lenet5_forward.1} parent=11 // pred_check
        %p297 = pneg %p85
      $region18: #{lenet5_forward.1} parent=11 // pred_check_branch
        %299 = sbr.rel (%p297) target = $region20
      $region19: #{lenet5_forward.1} parent=11 // pred_region
        _
      $region20: #{lenet5_forward.1} parent=11 // pred_fallthru
        _
      // Predicated region
      $region21: #{lenet5_forward.1} parent=11 // pred_check
        %p300 = pneg %p106
      $region22: #{lenet5_forward.1} parent=11 // pred_check_branch
        %302 = sbr.rel (%p300) target = $region24
      $region23: #{lenet5_forward.1} parent=11 // pred_region
        _
      $region24: #{lenet5_forward.1} parent=11 // pred_fallthru
        _
      // Predicated region
      $region25: #{lenet5_forward.1} parent=11 // pred_check
        %p303 = pneg %p127
      $region26: #{lenet5_forward.1} parent=11 // pred_check_branch
        %305 = sbr.rel (%p303) target = $region28
      $region27: #{lenet5_forward.1} parent=11 // pred_region
        _
      $region28: #{lenet5_forward.1} parent=11 // pred_fallthru
        _
      // Predicated region
      $region29: #{lenet5_forward.1} parent=11 // pred_check
        %p306 = pneg %p148
      $region30: #{lenet5_forward.1} parent=11 // pred_check_branch
        %308 = sbr.rel (%p306) target = $region32
      $region31: #{lenet5_forward.1} parent=11 // pred_region
        _
      $region32: #{lenet5_forward.1} parent=11 // pred_fallthru
        _
      // Predicated region
      $region33: #{lenet5_forward.1} parent=11 // pred_check
        %p309 = pneg %p169
      $region34: #{lenet5_forward.1} parent=11 // pred_check_branch
        %311 = sbr.rel (%p309) target = $region36
      $region35: #{lenet5_forward.1} parent=11 // pred_region
        _
      $region36: #{lenet5_forward.1} parent=11 // pred_fallthru
        _
      // Predicated region
      $region37: #{lenet5_forward.1} parent=11 // pred_check
        %p312 = pneg %p190
      $region38: #{lenet5_forward.1} parent=11 // pred_check_branch
        %314 = sbr.rel (%p312) target = $region40
      $region39: #{lenet5_forward.1} parent=11 // pred_region
        _
      $region40: #{lenet5_forward.1} parent=11 // pred_fallthru
        _
      // Predicated region
      $region41: #{lenet5_forward.1} parent=11 // pred_check
        %p315 = pneg %p211
      $region42: #{lenet5_forward.1} parent=11 // pred_check_branch
        %317 = sbr.rel (%p315) target = $region44
      $region43: #{lenet5_forward.1} parent=11 // pred_region
        _
      $region44: #{lenet5_forward.1} parent=11 // pred_fallthru
        _
      // Predicated region
      $region45: #{lenet5_forward.1} parent=11 // pred_check
        %p318 = pneg %p232
      $region46: #{lenet5_forward.1} parent=11 // pred_check_branch
        %320 = sbr.rel (%p318) target = $region48
      $region47: #{lenet5_forward.1} parent=11 // pred_region
        _
      $region48: #{lenet5_forward.1} parent=11 // pred_fallthru
        _
      // Predicated region
      $region49: #{lenet5_forward.1} parent=11 // pred_check
        %p321 = pneg %p253
      $region50: #{lenet5_forward.1} parent=11 // pred_check_branch
        %323 = sbr.rel (%p321) target = $region52
      $region51: #{lenet5_forward.1} parent=11 // pred_region
        _
      $region52: #{lenet5_forward.1} parent=11 // pred_fallthru
        _
    $region12: #{lenet5_forward.1} parent=5 // pred_fallthru
      _
    %p324 = scmp.lt.s32.totalorder %s17, 2
    // Predicated region
    $region53: #{lenet5_forward.1} parent=5 // pred_check
      %p325 = pneg %p324
    $region54: #{lenet5_forward.1} parent=5 // pred_check_branch
      %327 = sbr.rel (%p325) target = $region56
    $region55: #{lenet5_forward.1} parent=5 // pred_region
      // Predicated region
      $region57: #{lenet5_forward.1} parent=55 // pred_check
        %p328 = pneg %p37
      $region58: #{lenet5_forward.1} parent=55 // pred_check_branch
        %330 = sbr.rel (%p328) target = $region60
      $region59: #{lenet5_forward.1} parent=55 // pred_region
        %s331 = smul.u32 98, %s17
        %p332 = scmp.lt.s32.totalorder %s331, 195
        %s333 = scalar_select %p332, %s331, 195
        %s334 = smul.addr %s333, 8
        %s335 = scalar_lea.vmem %s0, %s334
        %s336 = smul.u32 98, %s17
      $region60: #{lenet5_forward.1} parent=55 // pred_fallthru
        _
    $region56: #{lenet5_forward.1} parent=5 // pred_fallthru
      _
    %p337 = scmp.le.s32.totalorder 1, %s17
    %p338 = scmp.lt.s32.totalorder %s17, 3
    %p339 = pnand %p337, %p338
    %p340 = pneg %p339
    // Predicated region
    $region61: #{lenet5_forward.1} parent=5 // pred_check
      _
    $region62: #{lenet5_forward.1} parent=5 // pred_check_branch
      %342 = sbr.rel (%p339) target = $region64
    $region63: #{lenet5_forward.1} parent=5 // pred_region
      %s343 = ssub.s32 %s17, 1
      %s344 = smul.u32 98, %s22
      %p345 = scmp.lt.s32.totalorder %s344, 195
      %s346 = scalar_select %p345, %s344, 195
      %s347 = smul.addr %s346, 8
      %s348 = scalar_lea.vmem %s0, %s347
      %p349 = pneg %p43
      %p350 = pneg %p40
      %p351 = pneg %p64
      %p352 = pneg %p61
      %p353 = pneg %p85
      %p354 = pneg %p82
      %p355 = pneg %p106
      %p356 = pneg %p103
      %p357 = pneg %p127
      %p358 = pneg %p124
      %p359 = pneg %p148
      %p360 = pneg %p145
      %p361 = pneg %p169
      %p362 = pneg %p166
      %p363 = pneg %p190
      %p364 = pneg %p187
      %p365 = pneg %p211
      %p366 = pneg %p208
      %p367 = pneg %p232
      %p368 = pneg %p229
      %p369 = pneg %p253
      %p370 = pneg %p250
      %p371 = pneg %p279
      %p372 = pneg %p276
      %p373 = scmp.lt.s32.totalorder %s22, 1
      %s374 = scalar_select %p373, %s22, 1
      %s375 = smul.addr %s374, 8
      %s376 = scalar_lea.vmem %s11, %s375
      %s377 = smul.u32 98, %s22
      %p378 = scmp.lt.s32.totalorder %s377, 195
      %s379 = scalar_select %p378, %s377, 195
      %s380 = smul.addr %s379, 8
      %s381 = scalar_lea.vmem %s0, %s380
      %s382 = smul.u32 98, %s22
      %p383 = scmp.lt.s32.totalorder %s22, 1
      %s384 = scalar_select %p383, %s22, 1
      %s385 = smul.addr %s384, 8
      %s386 = scalar_lea.vmem %s11, %s385
      %v387 = vld [vmem:[%s1] sm:$0xff]
      %v388 = vld [vmem:[%s1 + $0x8] sm:$0xff]
      %v389 = vld [vmem:[%s1 + $0x10] sm:$0xff]
      %v390 = vld [vmem:[%s1 + $0x18] sm:$0xff]
      %v391 = vld [vmem:[%s2] sm:$0x1]
      %v392 = vld [vmem:[%s381] sm:$0xff]
      %v393 = vld [vmem:[%s381 + $0x8] sm:$0xff]
      %v394 = vld [vmem:[%s381 + $0x10] sm:$0xff]
      %v395 = vld [vmem:[%s381 + $0x18] sm:$0xff]
      %v396 = vld [vmem:[%s381 + $0x20] sm:$0xff]
      %v397 = vld [vmem:[%s381 + $0x28] sm:$0xff]
      %v398 = vld [vmem:[%s381 + $0x30] sm:$0xff]
      %v399 = vld [vmem:[%s381 + $0x38] sm:$0xff]
      %v400 = vld [vmem:[%s381 + $0x40] sm:$0xff]
      %v401 = vld [vmem:[%s381 + $0x48] sm:$0xff]
      %v402 = vld [vmem:[%s381 + $0x50] sm:$0xff]
      %v403 = vld [vmem:[%s381 + $0x58] sm:$0xff]
      %v404 = vld [vmem:[%s381 + $0x60] sm:$0xff]
      %v405 = vld [vmem:[%s381 + $0x68] sm:$0xff]
      %v406 = vld [vmem:[%s381 + $0x70] sm:$0xff]
      %v407 = vld [vmem:[%s381 + $0x78] sm:$0xff]
      %v408 = vld [vmem:[%s381 + $0x80] sm:$0xff]
      %v409 = vld [vmem:[%s381 + $0x88] sm:$0xff]
      %v410 = vld [vmem:[%s381 + $0x90] sm:$0xff]
      %v411 = vld [vmem:[%s381 + $0x98] sm:$0xff]
      %v412 = vld [vmem:[%s381 + $0xa0] sm:$0xff]
      %v413 = vld [vmem:[%s381 + $0xa8] sm:$0xff]
      %v414 = vld [vmem:[%s381 + $0xb0] sm:$0xff]
      %v415 = vld [vmem:[%s381 + $0xb8] sm:$0xff]
      %v416 = vld [vmem:[%s381 + $0xc0] sm:$0xf]
      %v418 = vlaneseq
      %v419 = vshrl.u32 %v418, 7
      %v420 = vsub.s32 0, %v419
      %v421 = vrot.slane %v391, %v420
      %vm423 = vcmask 261120
      %v425 = vsel %vm423, %v392, 0
      %v428 = vsel %vm423, %v393, 0
      %v431 = vsel %vm423, %v394, 0
      %v434 = vsel %vm423, %v395, 0
      %v437 = vsel %vm423, %v396, 0
      %v440 = vsel %vm423, %v397, 0
      %v443 = vsel %vm423, %v398, 0
      %v446 = vsel %vm423, %v399, 0
      %v449 = vsel %vm423, %v400, 0
      %v452 = vsel %vm423, %v401, 0
      %v455 = vsel %vm423, %v402, 0
      %v458 = vsel %vm423, %v403, 0
      %v461 = vsel %vm423, %v404, 0
      %v464 = vsel %vm423, %v405, 0
      %v467 = vsel %vm423, %v406, 0
      %v470 = vsel %vm423, %v407, 0
      %v473 = vsel %vm423, %v408, 0
      %v476 = vsel %vm423, %v409, 0
      %v479 = vsel %vm423, %v410, 0
      %v482 = vsel %vm423, %v411, 0
      %v485 = vsel %vm423, %v412, 0
      %v488 = vsel %vm423, %v413, 0
      %v491 = vsel %vm423, %v414, 0
      %v494 = vsel %vm423, %v415, 0
      %v497 = vsel %vm423, %v416, 0
      %499 = vmatprep.subr.mxu0 0.0
      %500 = vmatpush1.msra.mxu0 %v387
      %501 = vmatprep.subr.mxu0 0.0
      %502 = vmatpush1.msra.mxu0 %v388
      %503 = vmatprep.subr.mxu0 0.0
      %504 = vmatpush1.msra.mxu0 %v389
      %505 = vmatprep.subr.mxu0 0.0
      %506 = vmatpush1.msra.mxu0 %v390
      %507 = vmatprep.subr.mxu0 0.0
      %508 = vmatpush1.msra.mxu0 0.0
      %509 = vmatprep.subr.mxu0 0.0
      %510 = vmatpush1.msra.mxu0 0.0
      %511 = vmatprep.subr.mxu0 0.0
      %512 = vmatpush1.msra.mxu0 0.0
      %513 = vmatprep.subr.mxu0 0.0
      %514 = vmatpush1.msra.mxu0 0.0
      %515 = vmatprep.subr.mxu0 0.0
      %516 = vmatpush1.msra.mxu0 0.0
      %517 = vmatprep.subr.mxu0 0.0
      %518 = vmatpush1.msra.mxu0 0.0
      %519 = vmatprep.subr.mxu0 0.0
      %520 = vmatpush1.msra.mxu0 0.0
      %521 = vmatprep.subr.mxu0 0.0
      %522 = vmatpush1.msra.mxu0 0.0
      %523 = vmatprep.subr.mxu0 0.0
      %524 = vmatpush1.msra.mxu0 0.0
      %525 = vmatprep.subr.mxu0 0.0
      %526 = vmatpush1.msra.mxu0 0.0
      %527 = vmatprep.subr.mxu0 0.0
      %528 = vmatpush1.msra.mxu0 0.0
      %529 = vmatprep.subr.mxu0 0.0
      %530 = vmatpush1.msra.mxu0 0.0
      %531 = vmatprep.subr.mxu0 0.0
      %532 = vmatpush1.msra.mxu0 0.0
      %533 = vmatprep.subr.mxu0 0.0
      %534 = vmatpush1.msra.mxu0 0.0
      %535 = vmatprep.subr.mxu0 0.0
      %536 = vmatpush1.msra.mxu0 0.0
      %537 = vmatprep.subr.mxu0 0.0
      %538 = vmatpush1.msra.mxu0 0.0
      %539 = vmatprep.subr.mxu0 0.0
      %540 = vmatpush1.msra.mxu0 0.0
      %541 = vmatprep.subr.mxu0 0.0
      %542 = vmatpush1.msra.mxu0 0.0
      %543 = vmatprep.subr.mxu0 0.0
      %544 = vmatpush1.msra.mxu0 0.0
      %545 = vmatprep.subr.mxu0 0.0
      %546 = vmatpush1.msra.mxu0 0.0
      %547 = vmatprep.subr.mxu0 0.0
      %548 = vmatpush1.msra.mxu0 0.0
      %549 = vmatprep.subr.mxu0 0.0
      %550 = vmatpush1.msra.mxu0 0.0
      %551 = vmatprep.subr.mxu0 0.0
      %552 = vmatpush1.msra.mxu0 0.0
      %553 = vmatprep.subr.mxu0 0.0
      %554 = vmatpush1.msra.mxu0 0.0
      %555 = vmatprep.subr.mxu0 0.0
      %556 = vmatpush1.msra.mxu0 0.0
      %557 = vmatprep.subr.mxu0 0.0
      %558 = vmatpush1.msra.mxu0 0.0
      %559 = vmatprep.subr.mxu0 0.0
      %560 = vmatpush1.msra.mxu0 0.0
      %561 = vmatprep.subr.mxu0 0.0
      %562 = vmatpush1.msra.mxu0 0.0
      %563 = vmatprep.mubr.f32.mxu0 0.0
      %564 = vmatmul.mubr.f32.gmra.mrb[0].mxu0 %v425
      %v565 = vpop.f32.mrb[0].mxu0
      %v566 = vadd.f32 %v421, %v565
      %v567 = vpop.f32.mrb[0].mxu0
      %568 = vmatprep.mubr.f32.mxu0 0.0
      %569 = vmatmul.mubr.f32.gmra.mrb[0].mxu0 %v428
      %v570 = vpop.f32.mrb[0].mxu0
      %v571 = vadd.f32 %v421, %v570
      %v572 = vpop.f32.mrb[0].mxu0
      %573 = vmatprep.mubr.f32.mxu0 0.0
      %574 = vmatmul.mubr.f32.gmra.mrb[0].mxu0 %v431
      %v575 = vpop.f32.mrb[0].mxu0
      %v576 = vadd.f32 %v421, %v575
      %v577 = vpop.f32.mrb[0].mxu0
      %578 = vmatprep.mubr.f32.mxu0 0.0
      %579 = vmatmul.mubr.f32.gmra.mrb[0].mxu0 %v434
      %v580 = vpop.f32.mrb[0].mxu0
      %v581 = vadd.f32 %v421, %v580
      %v582 = vpop.f32.mrb[0].mxu0
      %583 = vmatprep.mubr.f32.mxu0 0.0
      %584 = vmatmul.mubr.f32.gmra.mrb[0].mxu0 %v437
      %v585 = vpop.f32.mrb[0].mxu0
      %v586 = vadd.f32 %v421, %v585
      %v587 = vpop.f32.mrb[0].mxu0
      %588 = vmatprep.mubr.f32.mxu0 0.0
      %589 = vmatmul.mubr.f32.gmra.mrb[0].mxu0 %v440
      %v590 = vpop.f32.mrb[0].mxu0
      %v591 = vadd.f32 %v421, %v590
      %v592 = vpop.f32.mrb[0].mxu0
      %593 = vmatprep.mubr.f32.mxu0 0.0
      %594 = vmatmul.mubr.f32.gmra.mrb[0].mxu0 %v443
      %v595 = vpop.f32.mrb[0].mxu0
      %v596 = vadd.f32 %v421, %v595
      %v597 = vpop.f32.mrb[0].mxu0
      %598 = vmatprep.mubr.f32.mxu0 0.0
      %599 = vmatmul.mubr.f32.gmra.mrb[0].mxu0 %v446
      %v600 = vpop.f32.mrb[0].mxu0
      %v601 = vadd.f32 %v421, %v600
      %v602 = vpop.f32.mrb[0].mxu0
      %603 = vmatprep.mubr.f32.mxu0 0.0
      %604 = vmatmul.mubr.f32.gmra.mrb[0].mxu0 %v449
      %v605 = vpop.f32.mrb[0].mxu0
      %v606 = vadd.f32 %v421, %v605
      %v607 = vpop.f32.mrb[0].mxu0
      %608 = vmatprep.mubr.f32.mxu0 0.0
      %609 = vmatmul.mubr.f32.gmra.mrb[0].mxu0 %v452
      %v610 = vpop.f32.mrb[0].mxu0
      %v611 = vadd.f32 %v421, %v610
      %v612 = vpop.f32.mrb[0].mxu0
      %613 = vmatprep.mubr.f32.mxu0 0.0
      %614 = vmatmul.mubr.f32.gmra.mrb[0].mxu0 %v455
      %v615 = vpop.f32.mrb[0].mxu0
      %v616 = vadd.f32 %v421, %v615
      %v617 = vpop.f32.mrb[0].mxu0
      %618 = vmatprep.mubr.f32.mxu0 0.0
      %619 = vmatmul.mubr.f32.gmra.mrb[0].mxu0 %v458
      %v620 = vpop.f32.mrb[0].mxu0
      %v621 = vadd.f32 %v421, %v620
      %v622 = vpop.f32.mrb[0].mxu0
      %623 = vmatprep.mubr.f32.mxu0 0.0
      %624 = vmatmul.mubr.f32.gmra.mrb[0].mxu0 %v461
      %v625 = vpop.f32.mrb[0].mxu0
      %v626 = vadd.f32 %v421, %v625
      %v627 = vpop.f32.mrb[0].mxu0
      %628 = vmatprep.mubr.f32.mxu0 0.0
      %629 = vmatmul.mubr.f32.gmra.mrb[0].mxu0 %v464
      %v630 = vpop.f32.mrb[0].mxu0
      %v631 = vadd.f32 %v421, %v630
      %v632 = vpop.f32.mrb[0].mxu0
      %633 = vmatprep.mubr.f32.mxu0 0.0
      %634 = vmatmul.mubr.f32.gmra.mrb[0].mxu0 %v467
      %v635 = vpop.f32.mrb[0].mxu0
      %v636 = vadd.f32 %v421, %v635
      %v637 = vpop.f32.mrb[0].mxu0
      %638 = vmatprep.mubr.f32.mxu0 0.0
      %639 = vmatmul.mubr.f32.gmra.mrb[0].mxu0 %v470
      %v640 = vpop.f32.mrb[0].mxu0
      %v641 = vadd.f32 %v421, %v640
      %v642 = vpop.f32.mrb[0].mxu0
      %643 = vmatprep.mubr.f32.mxu0 0.0
      %644 = vmatmul.mubr.f32.gmra.mrb[0].mxu0 %v473
      %v645 = vpop.f32.mrb[0].mxu0
      %v646 = vadd.f32 %v421, %v645
      %v647 = vpop.f32.mrb[0].mxu0
      %648 = vmatprep.mubr.f32.mxu0 0.0
      %649 = vmatmul.mubr.f32.gmra.mrb[0].mxu0 %v476
      %v650 = vpop.f32.mrb[0].mxu0
      %v651 = vadd.f32 %v421, %v650
      %v652 = vpop.f32.mrb[0].mxu0
      %653 = vmatprep.mubr.f32.mxu0 0.0
      %654 = vmatmul.mubr.f32.gmra.mrb[0].mxu0 %v479
      %v655 = vpop.f32.mrb[0].mxu0
      %v656 = vadd.f32 %v421, %v655
      %v657 = vpop.f32.mrb[0].mxu0
      %658 = vmatprep.mubr.f32.mxu0 0.0
      %659 = vmatmul.mubr.f32.gmra.mrb[0].mxu0 %v482
      %v660 = vpop.f32.mrb[0].mxu0
      %v661 = vadd.f32 %v421, %v660
      %v662 = vpop.f32.mrb[0].mxu0
      %663 = vmatprep.mubr.f32.mxu0 0.0
      %664 = vmatmul.mubr.f32.gmra.mrb[0].mxu0 %v485
      %v665 = vpop.f32.mrb[0].mxu0
      %v666 = vadd.f32 %v421, %v665
      %v667 = vpop.f32.mrb[0].mxu0
      %668 = vmatprep.mubr.f32.mxu0 0.0
      %669 = vmatmul.mubr.f32.gmra.mrb[0].mxu0 %v488
      %v670 = vpop.f32.mrb[0].mxu0
      %v671 = vadd.f32 %v421, %v670
      %v672 = vpop.f32.mrb[0].mxu0
      %673 = vmatprep.mubr.f32.mxu0 0.0
      %674 = vmatmul.mubr.f32.gmra.mrb[0].mxu0 %v491
      %v675 = vpop.f32.mrb[0].mxu0
      %v676 = vadd.f32 %v421, %v675
      %v677 = vpop.f32.mrb[0].mxu0
      %678 = vmatprep.mubr.f32.mxu0 0.0
      %679 = vmatmul.mubr.f32.gmra.mrb[0].mxu0 %v494
      %v680 = vpop.f32.mrb[0].mxu0
      %v681 = vadd.f32 %v421, %v680
      %v682 = vpop.f32.mrb[0].mxu0
      %683 = vmatprep.mubr.f32.mxu0 0.0
      %684 = vmatmul.mubr.f32.gmra.mrb[0].mxu0 %v497
      %v685 = vpop.f32.mrb[0].mxu0
      %v686 = vadd.f32 %v421, %v685
      %v687 = vpop.f32.mrb[0].mxu0
      %688 = vdwg.mxu0
      %v689 = vxor.u32 %v566, 2147483648
      %v690 = vxor.u32 %v571, 2147483648
      %v691 = vxor.u32 %v576, 2147483648
      %v692 = vxor.u32 %v581, 2147483648
      %v693 = vxor.u32 %v586, 2147483648
      %v694 = vxor.u32 %v591, 2147483648
      %v695 = vxor.u32 %v596, 2147483648
      %v696 = vxor.u32 %v601, 2147483648
      %v697 = vxor.u32 %v606, 2147483648
      %v698 = vxor.u32 %v611, 2147483648
      %v699 = vxor.u32 %v616, 2147483648
      %v700 = vxor.u32 %v621, 2147483648
      %v701 = vxor.u32 %v626, 2147483648
      %v702 = vxor.u32 %v631, 2147483648
      %v703 = vxor.u32 %v636, 2147483648
      %v704 = vxor.u32 %v641, 2147483648
      %v705 = vxor.u32 %v646, 2147483648
      %v706 = vxor.u32 %v651, 2147483648
      %v707 = vxor.u32 %v656, 2147483648
      %v708 = vxor.u32 %v661, 2147483648
      %v709 = vxor.u32 %v666, 2147483648
      %v710 = vxor.u32 %v671, 2147483648
      %v711 = vxor.u32 %v676, 2147483648
      %v712 = vxor.u32 %v681, 2147483648
      %v713 = vxor.u32 %v686, 2147483648
      %v714 = vmul.f32 %v689, 1.442695
      %v715 = vpow.pop %v714
      %v716 = vmul.f32 %v690, 1.442695
      %v717 = vpow.pop %v716
      %v718 = vmul.f32 %v691, 1.442695
      %v719 = vpow.pop %v718
      %v720 = vmul.f32 %v692, 1.442695
      %v721 = vpow.pop %v720
      %v722 = vmul.f32 %v693, 1.442695
      %v723 = vpow.pop %v722
      %v724 = vmul.f32 %v694, 1.442695
      %v725 = vpow.pop %v724
      %v726 = vmul.f32 %v695, 1.442695
      %v727 = vpow.pop %v726
      %v728 = vmul.f32 %v696, 1.442695
      %v729 = vpow.pop %v728
      %v730 = vmul.f32 %v697, 1.442695
      %v731 = vpow.pop %v730
      %v732 = vmul.f32 %v698, 1.442695
      %v733 = vpow.pop %v732
      %v734 = vmul.f32 %v699, 1.442695
      %v735 = vpow.pop %v734
      %v736 = vmul.f32 %v700, 1.442695
      %v737 = vpow.pop %v736
      %v738 = vmul.f32 %v701, 1.442695
      %v739 = vpow.pop %v738
      %v740 = vmul.f32 %v702, 1.442695
      %v741 = vpow.pop %v740
      %v742 = vmul.f32 %v703, 1.442695
      %v743 = vpow.pop %v742
      %v744 = vmul.f32 %v704, 1.442695
      %v745 = vpow.pop %v744
      %v746 = vmul.f32 %v705, 1.442695
      %v747 = vpow.pop %v746
      %v748 = vmul.f32 %v706, 1.442695
      %v749 = vpow.pop %v748
      %v750 = vmul.f32 %v707, 1.442695
      %v751 = vpow.pop %v750
      %v752 = vmul.f32 %v708, 1.442695
      %v753 = vpow.pop %v752
      %v754 = vmul.f32 %v709, 1.442695
      %v755 = vpow.pop %v754
      %v756 = vmul.f32 %v710, 1.442695
      %v757 = vpow.pop %v756
      %v758 = vmul.f32 %v711, 1.442695
      %v759 = vpow.pop %v758
      %v760 = vmul.f32 %v712, 1.442695
      %v761 = vpow.pop %v760
      %v762 = vmul.f32 %v713, 1.442695
      %v763 = vpow.pop %v762
      %v764 = vadd.f32 %v715, 1.0
      %v765 = vadd.f32 %v717, 1.0
      %v766 = vadd.f32 %v719, 1.0
      %v767 = vadd.f32 %v721, 1.0
      %v768 = vadd.f32 %v723, 1.0
      %v769 = vadd.f32 %v725, 1.0
      %v770 = vadd.f32 %v727, 1.0
      %v771 = vadd.f32 %v729, 1.0
      %v772 = vadd.f32 %v731, 1.0
      %v773 = vadd.f32 %v733, 1.0
      %v774 = vadd.f32 %v735, 1.0
      %v775 = vadd.f32 %v737, 1.0
      %v776 = vadd.f32 %v739, 1.0
      %v777 = vadd.f32 %v741, 1.0
      %v778 = vadd.f32 %v743, 1.0
      %v779 = vadd.f32 %v745, 1.0
      %v780 = vadd.f32 %v747, 1.0
      %v781 = vadd.f32 %v749, 1.0
      %v782 = vadd.f32 %v751, 1.0
      %v783 = vadd.f32 %v753, 1.0
      %v784 = vadd.f32 %v755, 1.0
      %v785 = vadd.f32 %v757, 1.0
      %v786 = vadd.f32 %v759, 1.0
      %v787 = vadd.f32 %v761, 1.0
      %v788 = vadd.f32 %v763, 1.0
      %v789 = vrcp.pop %v764
      %v790 = vmul.f32 1.0, %v789
      %v791 = vrcp.pop %v765
      %v792 = vmul.f32 1.0, %v791
      %v793 = vrcp.pop %v766
      %v794 = vmul.f32 1.0, %v793
      %v795 = vrcp.pop %v767
      %v796 = vmul.f32 1.0, %v795
      %v797 = vrcp.pop %v768
      %v798 = vmul.f32 1.0, %v797
      %v799 = vrcp.pop %v769
      %v800 = vmul.f32 1.0, %v799
      %v801 = vrcp.pop %v770
      %v802 = vmul.f32 1.0, %v801
      %v803 = vrcp.pop %v771
      %v804 = vmul.f32 1.0, %v803
      %v805 = vrcp.pop %v772
      %v806 = vmul.f32 1.0, %v805
      %v807 = vrcp.pop %v773
      %v808 = vmul.f32 1.0, %v807
      %v809 = vrcp.pop %v774
      %v810 = vmul.f32 1.0, %v809
      %v811 = vrcp.pop %v775
      %v812 = vmul.f32 1.0, %v811
      %v813 = vrcp.pop %v776
      %v814 = vmul.f32 1.0, %v813
      %v815 = vrcp.pop %v777
      %v816 = vmul.f32 1.0, %v815
      %v817 = vrcp.pop %v778
      %v818 = vmul.f32 1.0, %v817
      %v819 = vrcp.pop %v779
      %v820 = vmul.f32 1.0, %v819
      %v821 = vrcp.pop %v780
      %v822 = vmul.f32 1.0, %v821
      %v823 = vrcp.pop %v781
      %v824 = vmul.f32 1.0, %v823
      %v825 = vrcp.pop %v782
      %v826 = vmul.f32 1.0, %v825
      %v827 = vrcp.pop %v783
      %v828 = vmul.f32 1.0, %v827
      %v829 = vrcp.pop %v784
      %v830 = vmul.f32 1.0, %v829
      %v831 = vrcp.pop %v785
      %v832 = vmul.f32 1.0, %v831
      %v833 = vrcp.pop %v786
      %v834 = vmul.f32 1.0, %v833
      %v835 = vrcp.pop %v787
      %v836 = vmul.f32 1.0, %v835
      %v837 = vrcp.pop %v788
      %v838 = vmul.f32 1.0, %v837
      %v839 = vld [vmem:[%s381 + $0xc4] sm:$0xff]
      %v840 = vld [vmem:[%s381 + $0xcc] sm:$0xff]
      %v841 = vld [vmem:[%s381 + $0xd4] sm:$0xff]
      %v842 = vld [vmem:[%s381 + $0xdc] sm:$0xff]
      %v843 = vld [vmem:[%s381 + $0xe4] sm:$0xff]
      %v844 = vld [vmem:[%s381 + $0xec] sm:$0xff]
      %v845 = vld [vmem:[%s381 + $0xf4] sm:$0xff]
      %v846 = vld [vmem:[%s381 + $0xfc] sm:$0xff]
      %v847 = vld [vmem:[%s381 + $0x104] sm:$0xff]
      %v848 = vld [vmem:[%s381 + $0x10c] sm:$0xff]
      %v849 = vld [vmem:[%s381 + $0x114] sm:$0xff]
      %v850 = vld [vmem:[%s381 + $0x11c] sm:$0xff]
      %v851 = vld [vmem:[%s381 + $0x124] sm:$0xff]
      %v852 = vld [vmem:[%s381 + $0x12c] sm:$0xff]
      %v853 = vld [vmem:[%s381 + $0x134] sm:$0xff]
      %v854 = vld [vmem:[%s381 + $0x13c] sm:$0xff]
      %v855 = vld [vmem:[%s381 + $0x144] sm:$0xff]
      %v856 = vld [vmem:[%s381 + $0x14c] sm:$0xff]
      %v857 = vld [vmem:[%s381 + $0x154] sm:$0xff]
      %v858 = vld [vmem:[%s381 + $0x15c] sm:$0xff]
      %v859 = vld [vmem:[%s381 + $0x164] sm:$0xff]
      %v860 = vld [vmem:[%s381 + $0x16c] sm:$0xff]
      %v861 = vld [vmem:[%s381 + $0x174] sm:$0xff]
      %v862 = vld [vmem:[%s381 + $0x17c] sm:$0xff]
      %v863 = vld [vmem:[%s381 + $0x184] sm:$0xf]
      %v865 = vsel %vm423, %v839, 0
      %v868 = vsel %vm423, %v840, 0
      %v871 = vsel %vm423, %v841, 0
      %v874 = vsel %vm423, %v842, 0
      %v877 = vsel %vm423, %v843, 0
      %v880 = vsel %vm423, %v844, 0
      %v883 = vsel %vm423, %v845, 0
      %v886 = vsel %vm423, %v846, 0
      %v889 = vsel %vm423, %v847, 0
      %v892 = vsel %vm423, %v848, 0
      %v895 = vsel %vm423, %v849, 0
      %v898 = vsel %vm423, %v850, 0
      %v901 = vsel %vm423, %v851, 0
      %v904 = vsel %vm423, %v852, 0
      %v907 = vsel %vm423, %v853, 0
      %v910 = vsel %vm423, %v854, 0
      %v913 = vsel %vm423, %v855, 0
      %v916 = vsel %vm423, %v856, 0
      %v919 = vsel %vm423, %v857, 0
      %v922 = vsel %vm423, %v858, 0
      %v925 = vsel %vm423, %v859, 0
      %v928 = vsel %vm423, %v860, 0
      %v931 = vsel %vm423, %v861, 0
      %v934 = vsel %vm423, %v862, 0
      %v937 = vsel %vm423, %v863, 0
      %939 = vmatprep.subr.mxu0 0.0
      %940 = vmatpush1.msra.mxu0 %v387
      %941 = vmatprep.subr.mxu0 0.0
      %942 = vmatpush1.msra.mxu0 %v388
      %943 = vmatprep.subr.mxu0 0.0
      %944 = vmatpush1.msra.mxu0 %v389
      %945 = vmatprep.subr.mxu0 0.0
      %946 = vmatpush1.msra.mxu0 %v390
      %947 = vmatprep.subr.mxu0 0.0
      %948 = vmatpush1.msra.mxu0 0.0
      %949 = vmatprep.subr.mxu0 0.0
      %950 = vmatpush1.msra.mxu0 0.0
      %951 = vmatprep.subr.mxu0 0.0
      %952 = vmatpush1.msra.mxu0 0.0
      %953 = vmatprep.subr.mxu0 0.0
      %954 = vmatpush1.msra.mxu0 0.0
      %955 = vmatprep.subr.mxu0 0.0
      %956 = vmatpush1.msra.mxu0 0.0
      %957 = vmatprep.subr.mxu0 0.0
      %958 = vmatpush1.msra.mxu0 0.0
      %959 = vmatprep.subr.mxu0 0.0
      %960 = vmatpush1.msra.mxu0 0.0
      %961 = vmatprep.subr.mxu0 0.0
      %962 = vmatpush1.msra.mxu0 0.0
      %963 = vmatprep.subr.mxu0 0.0
      %964 = vmatpush1.msra.mxu0 0.0
      %965 = vmatprep.subr.mxu0 0.0
      %966 = vmatpush1.msra.mxu0 0.0
      %967 = vmatprep.subr.mxu0 0.0
      %968 = vmatpush1.msra.mxu0 0.0
      %969 = vmatprep.subr.mxu0 0.0
      %970 = vmatpush1.msra.mxu0 0.0
      %971 = vmatprep.subr.mxu0 0.0
      %972 = vmatpush1.msra.mxu0 0.0
      %973 = vmatprep.subr.mxu0 0.0
      %974 = vmatpush1.msra.mxu0 0.0
      %975 = vmatprep.subr.mxu0 0.0
      %976 = vmatpush1.msra.mxu0 0.0
      %977 = vmatprep.subr.mxu0 0.0
      %978 = vmatpush1.msra.mxu0 0.0
      %979 = vmatprep.subr.mxu0 0.0
      %980 = vmatpush1.msra.mxu0 0.0
      %981 = vmatprep.subr.mxu0 0.0
      %982 = vmatpush1.msra.mxu0 0.0
      %983 = vmatprep.subr.mxu0 0.0
      %984 = vmatpush1.msra.mxu0 0.0
      %985 = vmatprep.subr.mxu0 0.0
      %986 = vmatpush1.msra.mxu0 0.0
      %987 = vmatprep.subr.mxu0 0.0
      %988 = vmatpush1.msra.mxu0 0.0
      %989 = vmatprep.subr.mxu0 0.0
      %990 = vmatpush1.msra.mxu0 0.0
      %991 = vmatprep.subr.mxu0 0.0
      %992 = vmatpush1.msra.mxu0 0.0
      %993 = vmatprep.subr.mxu0 0.0
      %994 = vmatpush1.msra.mxu0 0.0
      %995 = vmatprep.subr.mxu0 0.0
      %996 = vmatpush1.msra.mxu0 0.0
      %997 = vmatprep.subr.mxu0 0.0
      %998 = vmatpush1.msra.mxu0 0.0
      %999 = vmatprep.subr.mxu0 0.0
      %1000 = vmatpush1.msra.mxu0 0.0
      %1001 = vmatprep.subr.mxu0 0.0
      %1002 = vmatpush1.msra.mxu0 0.0
      %1003 = vmatprep.mubr.f32.mxu0 0.0
      %1004 = vmatmul.mubr.f32.gmra.mrb[0].mxu0 %v865
      %v1005 = vpop.f32.mrb[0].mxu0
      %v1006 = vadd.f32 %v421, %v1005
      %v1007 = vpop.f32.mrb[0].mxu0
      %1008 = vmatprep.mubr.f32.mxu0 0.0
      %1009 = vmatmul.mubr.f32.gmra.mrb[0].mxu0 %v868
      %v1010 = vpop.f32.mrb[0].mxu0
      %v1011 = vadd.f32 %v421, %v1010
      %v1012 = vpop.f32.mrb[0].mxu0
      %1013 = vmatprep.mubr.f32.mxu0 0.0
      %1014 = vmatmul.mubr.f32.gmra.mrb[0].mxu0 %v871
      %v1015 = vpop.f32.mrb[0].mxu0
      %v1016 = vadd.f32 %v421, %v1015
      %v1017 = vpop.f32.mrb[0].mxu0
      %1018 = vmatprep.mubr.f32.mxu0 0.0
      %1019 = vmatmul.mubr.f32.gmra.mrb[0].mxu0 %v874
      %v1020 = vpop.f32.mrb[0].mxu0
      %v1021 = vadd.f32 %v421, %v1020
      %v1022 = vpop.f32.mrb[0].mxu0
      %1023 = vmatprep.mubr.f32.mxu0 0.0
      %1024 = vmatmul.mubr.f32.gmra.mrb[0].mxu0 %v877
      %v1025 = vpop.f32.mrb[0].mxu0
      %v1026 = vadd.f32 %v421, %v1025
      %v1027 = vpop.f32.mrb[0].mxu0
      %1028 = vmatprep.mubr.f32.mxu0 0.0
      %1029 = vmatmul.mubr.f32.gmra.mrb[0].mxu0 %v880
      %v1030 = vpop.f32.mrb[0].mxu0
      %v1031 = vadd.f32 %v421, %v1030
      %v1032 = vpop.f32.mrb[0].mxu0
      %1033 = vmatprep.mubr.f32.mxu0 0.0
      %1034 = vmatmul.mubr.f32.gmra.mrb[0].mxu0 %v883
      %v1035 = vpop.f32.mrb[0].mxu0
      %v1036 = vadd.f32 %v421, %v1035
      %v1037 = vpop.f32.mrb[0].mxu0
      %1038 = vmatprep.mubr.f32.mxu0 0.0
      %1039 = vmatmul.mubr.f32.gmra.mrb[0].mxu0 %v886
      %v1040 = vpop.f32.mrb[0].mxu0
      %v1041 = vadd.f32 %v421, %v1040
      %v1042 = vpop.f32.mrb[0].mxu0
      %1043 = vmatprep.mubr.f32.mxu0 0.0
      %1044 = vmatmul.mubr.f32.gmra.mrb[0].mxu0 %v889
      %v1045 = vpop.f32.mrb[0].mxu0
      %v1046 = vadd.f32 %v421, %v1045
      %v1047 = vpop.f32.mrb[0].mxu0
      %1048 = vmatprep.mubr.f32.mxu0 0.0
      %1049 = vmatmul.mubr.f32.gmra.mrb[0].mxu0 %v892
      %v1050 = vpop.f32.mrb[0].mxu0
      %v1051 = vadd.f32 %v421, %v1050
      %v1052 = vpop.f32.mrb[0].mxu0
      %1053 = vmatprep.mubr.f32.mxu0 0.0
      %1054 = vmatmul.mubr.f32.gmra.mrb[0].mxu0 %v895
      %v1055 = vpop.f32.mrb[0].mxu0
      %v1056 = vadd.f32 %v421, %v1055
      %v1057 = vpop.f32.mrb[0].mxu0
      %1058 = vmatprep.mubr.f32.mxu0 0.0
      %1059 = vmatmul.mubr.f32.gmra.mrb[0].mxu0 %v898
      %v1060 = vpop.f32.mrb[0].mxu0
      %v1061 = vadd.f32 %v421, %v1060
      %v1062 = vpop.f32.mrb[0].mxu0
      %1063 = vmatprep.mubr.f32.mxu0 0.0
      %1064 = vmatmul.mubr.f32.gmra.mrb[0].mxu0 %v901
      %v1065 = vpop.f32.mrb[0].mxu0
      %v1066 = vadd.f32 %v421, %v1065
      %v1067 = vpop.f32.mrb[0].mxu0
      %1068 = vmatprep.mubr.f32.mxu0 0.0
      %1069 = vmatmul.mubr.f32.gmra.mrb[0].mxu0 %v904
      %v1070 = vpop.f32.mrb[0].mxu0
      %v1071 = vadd.f32 %v421, %v1070
      %v1072 = vpop.f32.mrb[0].mxu0
      %1073 = vmatprep.mubr.f32.mxu0 0.0
      %1074 = vmatmul.mubr.f32.gmra.mrb[0].mxu0 %v907
      %v1075 = vpop.f32.mrb[0].mxu0
      %v1076 = vadd.f32 %v421, %v1075
      %v1077 = vpop.f32.mrb[0].mxu0
      %1078 = vmatprep.mubr.f32.mxu0 0.0
      %1079 = vmatmul.mubr.f32.gmra.mrb[0].mxu0 %v910
      %v1080 = vpop.f32.mrb[0].mxu0
      %v1081 = vadd.f32 %v421, %v1080
      %v1082 = vpop.f32.mrb[0].mxu0
      %1083 = vmatprep.mubr.f32.mxu0 0.0
      %1084 = vmatmul.mubr.f32.gmra.mrb[0].mxu0 %v913
      %v1085 = vpop.f32.mrb[0].mxu0
      %v1086 = vadd.f32 %v421, %v1085
      %v1087 = vpop.f32.mrb[0].mxu0
      %1088 = vmatprep.mubr.f32.mxu0 0.0
      %1089 = vmatmul.mubr.f32.gmra.mrb[0].mxu0 %v916
      %v1090 = vpop.f32.mrb[0].mxu0
      %v1091 = vadd.f32 %v421, %v1090
      %v1092 = vpop.f32.mrb[0].mxu0
      %1093 = vmatprep.mubr.f32.mxu0 0.0
      %1094 = vmatmul.mubr.f32.gmra.mrb[0].mxu0 %v919
      %v1095 = vpop.f32.mrb[0].mxu0
      %v1096 = vadd.f32 %v421, %v1095
      %v1097 = vpop.f32.mrb[0].mxu0
      %1098 = vmatprep.mubr.f32.mxu0 0.0
      %1099 = vmatmul.mubr.f32.gmra.mrb[0].mxu0 %v922
      %v1100 = vpop.f32.mrb[0].mxu0
      %v1101 = vadd.f32 %v421, %v1100
      %v1102 = vpop.f32.mrb[0].mxu0
      %1103 = vmatprep.mubr.f32.mxu0 0.0
      %1104 = vmatmul.mubr.f32.gmra.mrb[0].mxu0 %v925
      %v1105 = vpop.f32.mrb[0].mxu0
      %v1106 = vadd.f32 %v421, %v1105
      %v1107 = vpop.f32.mrb[0].mxu0
      %1108 = vmatprep.mubr.f32.mxu0 0.0
      %1109 = vmatmul.mubr.f32.gmra.mrb[0].mxu0 %v928
      %v1110 = vpop.f32.mrb[0].mxu0
      %v1111 = vadd.f32 %v421, %v1110
      %v1112 = vpop.f32.mrb[0].mxu0
      %1113 = vmatprep.mubr.f32.mxu0 0.0
      %1114 = vmatmul.mubr.f32.gmra.mrb[0].mxu0 %v931
      %v1115 = vpop.f32.mrb[0].mxu0
      %v1116 = vadd.f32 %v421, %v1115
      %v1117 = vpop.f32.mrb[0].mxu0
      %1118 = vmatprep.mubr.f32.mxu0 0.0
      %1119 = vmatmul.mubr.f32.gmra.mrb[0].mxu0 %v934
      %v1120 = vpop.f32.mrb[0].mxu0
      %v1121 = vadd.f32 %v421, %v1120
      %v1122 = vpop.f32.mrb[0].mxu0
      %1123 = vmatprep.mubr.f32.mxu0 0.0
      %1124 = vmatmul.mubr.f32.gmra.mrb[0].mxu0 %v937
      %v1125 = vpop.f32.mrb[0].mxu0
      %v1126 = vadd.f32 %v421, %v1125
      %v1127 = vpop.f32.mrb[0].mxu0
      %1128 = vdwg.mxu0
      %v1129 = vxor.u32 %v1006, 2147483648
      %v1130 = vxor.u32 %v1011, 2147483648
      %v1131 = vxor.u32 %v1016, 2147483648
      %v1132 = vxor.u32 %v1021, 2147483648
      %v1133 = vxor.u32 %v1026, 2147483648
      %v1134 = vxor.u32 %v1031, 2147483648
      %v1135 = vxor.u32 %v1036, 2147483648
      %v1136 = vxor.u32 %v1041, 2147483648
      %v1137 = vxor.u32 %v1046, 2147483648
      %v1138 = vxor.u32 %v1051, 2147483648
      %v1139 = vxor.u32 %v1056, 2147483648
      %v1140 = vxor.u32 %v1061, 2147483648
      %v1141 = vxor.u32 %v1066, 2147483648
      %v1142 = vxor.u32 %v1071, 2147483648
      %v1143 = vxor.u32 %v1076, 2147483648
      %v1144 = vxor.u32 %v1081, 2147483648
      %v1145 = vxor.u32 %v1086, 2147483648
      %v1146 = vxor.u32 %v1091, 2147483648
      %v1147 = vxor.u32 %v1096, 2147483648
      %v1148 = vxor.u32 %v1101, 2147483648
      %v1149 = vxor.u32 %v1106, 2147483648
      %v1150 = vxor.u32 %v1111, 2147483648
      %v1151 = vxor.u32 %v1116, 2147483648
      %v1152 = vxor.u32 %v1121, 2147483648
      %v1153 = vxor.u32 %v1126, 2147483648
      %v1154 = vmul.f32 %v1129, 1.442695
      %v1155 = vpow.pop %v1154
      %v1156 = vmul.f32 %v1130, 1.442695
      %v1157 = vpow.pop %v1156
      %v1158 = vmul.f32 %v1131, 1.442695
      %v1159 = vpow.pop %v1158
      %v1160 = vmul.f32 %v1132, 1.442695
      %v1161 = vpow.pop %v1160
      %v1162 = vmul.f32 %v1133, 1.442695
      %v1163 = vpow.pop %v1162
      %v1164 = vmul.f32 %v1134, 1.442695
      %v1165 = vpow.pop %v1164
      %v1166 = vmul.f32 %v1135, 1.442695
      %v1167 = vpow.pop %v1166
      %v1168 = vmul.f32 %v1136, 1.442695
      %v1169 = vpow.pop %v1168
      %v1170 = vmul.f32 %v1137, 1.442695
      %v1171 = vpow.pop %v1170
      %v1172 = vmul.f32 %v1138, 1.442695
      %v1173 = vpow.pop %v1172
      %v1174 = vmul.f32 %v1139, 1.442695
      %v1175 = vpow.pop %v1174
      %v1176 = vmul.f32 %v1140, 1.442695
      %v1177 = vpow.pop %v1176
      %v1178 = vmul.f32 %v1141, 1.442695
      %v1179 = vpow.pop %v1178
      %v1180 = vmul.f32 %v1142, 1.442695
      %v1181 = vpow.pop %v1180
      %v1182 = vmul.f32 %v1143, 1.442695
      %v1183 = vpow.pop %v1182
      %v1184 = vmul.f32 %v1144, 1.442695
      %v1185 = vpow.pop %v1184
      %v1186 = vmul.f32 %v1145, 1.442695
      %v1187 = vpow.pop %v1186
      %v1188 = vmul.f32 %v1146, 1.442695
      %v1189 = vpow.pop %v1188
      %v1190 = vmul.f32 %v1147, 1.442695
      %v1191 = vpow.pop %v1190
      %v1192 = vmul.f32 %v1148, 1.442695
      %v1193 = vpow.pop %v1192
      %v1194 = vmul.f32 %v1149, 1.442695
      %v1195 = vpow.pop %v1194
      %v1196 = vmul.f32 %v1150, 1.442695
      %v1197 = vpow.pop %v1196
      %v1198 = vmul.f32 %v1151, 1.442695
      %v1199 = vpow.pop %v1198
      %v1200 = vmul.f32 %v1152, 1.442695
      %v1201 = vpow.pop %v1200
      %v1202 = vmul.f32 %v1153, 1.442695
      %v1203 = vpow.pop %v1202
      %v1204 = vadd.f32 %v1155, 1.0
      %v1205 = vadd.f32 %v1157, 1.0
      %v1206 = vadd.f32 %v1159, 1.0
      %v1207 = vadd.f32 %v1161, 1.0
      %v1208 = vadd.f32 %v1163, 1.0
      %v1209 = vadd.f32 %v1165, 1.0
      %v1210 = vadd.f32 %v1167, 1.0
      %v1211 = vadd.f32 %v1169, 1.0
      %v1212 = vadd.f32 %v1171, 1.0
      %v1213 = vadd.f32 %v1173, 1.0
      %v1214 = vadd.f32 %v1175, 1.0
      %v1215 = vadd.f32 %v1177, 1.0
      %v1216 = vadd.f32 %v1179, 1.0
      %v1217 = vadd.f32 %v1181, 1.0
      %v1218 = vadd.f32 %v1183, 1.0
      %v1219 = vadd.f32 %v1185, 1.0
      %v1220 = vadd.f32 %v1187, 1.0
      %v1221 = vadd.f32 %v1189, 1.0
      %v1222 = vadd.f32 %v1191, 1.0
      %v1223 = vadd.f32 %v1193, 1.0
      %v1224 = vadd.f32 %v1195, 1.0
      %v1225 = vadd.f32 %v1197, 1.0
      %v1226 = vadd.f32 %v1199, 1.0
      %v1227 = vadd.f32 %v1201, 1.0
      %v1228 = vadd.f32 %v1203, 1.0
      %v1229 = vrcp.pop %v1204
      %v1230 = vmul.f32 1.0, %v1229
      %v1231 = vrcp.pop %v1205
      %v1232 = vmul.f32 1.0, %v1231
      %v1233 = vrcp.pop %v1206
      %v1234 = vmul.f32 1.0, %v1233
      %v1235 = vrcp.pop %v1207
      %v1236 = vmul.f32 1.0, %v1235
      %v1237 = vrcp.pop %v1208
      %v1238 = vmul.f32 1.0, %v1237
      %v1239 = vrcp.pop %v1209
      %v1240 = vmul.f32 1.0, %v1239
      %v1241 = vrcp.pop %v1210
      %v1242 = vmul.f32 1.0, %v1241
      %v1243 = vrcp.pop %v1211
      %v1244 = vmul.f32 1.0, %v1243
      %v1245 = vrcp.pop %v1212
      %v1246 = vmul.f32 1.0, %v1245
      %v1247 = vrcp.pop %v1213
      %v1248 = vmul.f32 1.0, %v1247
      %v1249 = vrcp.pop %v1214
      %v1250 = vmul.f32 1.0, %v1249
      %v1251 = vrcp.pop %v1215
      %v1252 = vmul.f32 1.0, %v1251
      %v1253 = vrcp.pop %v1216
      %v1254 = vmul.f32 1.0, %v1253
      %v1255 = vrcp.pop %v1217
      %v1256 = vmul.f32 1.0, %v1255
      %v1257 = vrcp.pop %v1218
      %v1258 = vmul.f32 1.0, %v1257
      %v1259 = vrcp.pop %v1219
      %v1260 = vmul.f32 1.0, %v1259
      %v1261 = vrcp.pop %v1220
      %v1262 = vmul.f32 1.0, %v1261
      %v1263 = vrcp.pop %v1221
      %v1264 = vmul.f32 1.0, %v1263
      %v1265 = vrcp.pop %v1222
      %v1266 = vmul.f32 1.0, %v1265
      %v1267 = vrcp.pop %v1223
      %v1268 = vmul.f32 1.0, %v1267
      %v1269 = vrcp.pop %v1224
      %v1270 = vmul.f32 1.0, %v1269
      %v1271 = vrcp.pop %v1225
      %v1272 = vmul.f32 1.0, %v1271
      %v1273 = vrcp.pop %v1226
      %v1274 = vmul.f32 1.0, %v1273
      %v1275 = vrcp.pop %v1227
      %v1276 = vmul.f32 1.0, %v1275
      %v1277 = vrcp.pop %v1228
      %v1278 = vmul.f32 1.0, %v1277
      %v1279 = vmax.f32 %v790, %v1230
      %v1280 = vmax.f32 %v792, %v1232
      %v1281 = vmax.f32 %v794, %v1234
      %v1282 = vmax.f32 %v796, %v1236
      %v1283 = vmax.f32 %v798, %v1238
      %v1284 = vmax.f32 %v800, %v1240
      %v1285 = vmax.f32 %v802, %v1242
      %v1286 = vmax.f32 %v804, %v1244
      %v1287 = vmax.f32 %v806, %v1246
      %v1288 = vmax.f32 %v808, %v1248
      %v1289 = vmax.f32 %v810, %v1250
      %v1290 = vmax.f32 %v812, %v1252
      %v1291 = vmax.f32 %v814, %v1254
      %v1292 = vmax.f32 %v816, %v1256
      %v1293 = vmax.f32 %v818, %v1258
      %v1294 = vmax.f32 %v820, %v1260
      %v1295 = vmax.f32 %v822, %v1262
      %v1296 = vmax.f32 %v824, %v1264
      %v1297 = vmax.f32 %v826, %v1266
      %v1298 = vmax.f32 %v828, %v1268
      %v1299 = vmax.f32 %v830, %v1270
      %v1300 = vmax.f32 %v832, %v1272
      %v1301 = vmax.f32 %v834, %v1274
      %v1302 = vmax.f32 %v836, %v1276
      %v1303 = vmax.f32 %v838, %v1278
      %v1304 = vld [vmem:[%s381 + $0x188] sm:$0xff]
      %v1305 = vld [vmem:[%s381 + $0x190] sm:$0xff]
      %v1306 = vld [vmem:[%s381 + $0x198] sm:$0xff]
      %v1307 = vld [vmem:[%s381 + $0x1a0] sm:$0xff]
      %v1308 = vld [vmem:[%s381 + $0x1a8] sm:$0xff]
      %v1309 = vld [vmem:[%s381 + $0x1b0] sm:$0xff]
      %v1310 = vld [vmem:[%s381 + $0x1b8] sm:$0xff]
      %v1311 = vld [vmem:[%s381 + $0x1c0] sm:$0xff]
      %v1312 = vld [vmem:[%s381 + $0x1c8] sm:$0xff]
      %v1313 = vld [vmem:[%s381 + $0x1d0] sm:$0xff]
      %v1314 = vld [vmem:[%s381 + $0x1d8] sm:$0xff]
      %v1315 = vld [vmem:[%s381 + $0x1e0] sm:$0xff]
      %v1316 = vld [vmem:[%s381 + $0x1e8] sm:$0xff]
      %v1317 = vld [vmem:[%s381 + $0x1f0] sm:$0xff]
      %v1318 = vld [vmem:[%s381 + $0x1f8] sm:$0xff]
      %v1319 = vld [vmem:[%s381 + $0x200] sm:$0xff]
      %v1320 = vld [vmem:[%s381 + $0x208] sm:$0xff]
      %v1321 = vld [vmem:[%s381 + $0x210] sm:$0xff]
      %v1322 = vld [vmem:[%s381 + $0x218] sm:$0xff]
      %v1323 = vld [vmem:[%s381 + $0x220] sm:$0xff]
      %v1324 = vld [vmem:[%s381 + $0x228] sm:$0xff]
      %v1325 = vld [vmem:[%s381 + $0x230] sm:$0xff]
      %v1326 = vld [vmem:[%s381 + $0x238] sm:$0xff]
      %v1327 = vld [vmem:[%s381 + $0x240] sm:$0xff]
      %v1328 = vld [vmem:[%s381 + $0x248] sm:$0xf]
      %v1330 = vsel %vm423, %v1304, 0
      %v1333 = vsel %vm423, %v1305, 0
      %v1336 = vsel %vm423, %v1306, 0
      %v1339 = vsel %vm423, %v1307, 0
      %v1342 = vsel %vm423, %v1308, 0
      %v1345 = vsel %vm423, %v1309, 0
      %v1348 = vsel %vm423, %v1310, 0
      %v1351 = vsel %vm423, %v1311, 0
      %v1354 = vsel %vm423, %v1312, 0
      %v1357 = vsel %vm423, %v1313, 0
      %v1360 = vsel %vm423, %v1314, 0
      %v1363 = vsel %vm423, %v1315, 0
      %v1366 = vsel %vm423, %v1316, 0
      %v1369 = vsel %vm423, %v1317, 0
      %v1372 = vsel %vm423, %v1318, 0
      %v1375 = vsel %vm423, %v1319, 0
      %v1378 = vsel %vm423, %v1320, 0
      %v1381 = vsel %vm423, %v1321, 0
      %v1384 = vsel %vm423, %v1322, 0
      %v1387 = vsel %vm423, %v1323, 0
      %v1390 = vsel %vm423, %v1324, 0
      %v1393 = vsel %vm423, %v1325, 0
      %v1396 = vsel %vm423, %v1326, 0
      %v1399 = vsel %vm423, %v1327, 0
      %v1402 = vsel %vm423, %v1328, 0
      %1404 = vmatprep.subr.mxu0 0.0
      %1405 = vmatpush1.msra.mxu0 %v387
      %1406 = vmatprep.subr.mxu0 0.0
      %1407 = vmatpush1.msra.mxu0 %v388
      %1408 = vmatprep.subr.mxu0 0.0
      %1409 = vmatpush1.msra.mxu0 %v389
      %1410 = vmatprep.subr.mxu0 0.0
      %1411 = vmatpush1.msra.mxu0 %v390
      %1412 = vmatprep.subr.mxu0 0.0
      %1413 = vmatpush1.msra.mxu0 0.0
      %1414 = vmatprep.subr.mxu0 0.0
      %1415 = vmatpush1.msra.mxu0 0.0
      %1416 = vmatprep.subr.mxu0 0.0
      %1417 = vmatpush1.msra.mxu0 0.0
      %1418 = vmatprep.subr.mxu0 0.0
      %1419 = vmatpush1.msra.mxu0 0.0
      %1420 = vmatprep.subr.mxu0 0.0
      %1421 = vmatpush1.msra.mxu0 0.0
      %1422 = vmatprep.subr.mxu0 0.0
      %1423 = vmatpush1.msra.mxu0 0.0
      %1424 = vmatprep.subr.mxu0 0.0
      %1425 = vmatpush1.msra.mxu0 0.0
      %1426 = vmatprep.subr.mxu0 0.0
      %1427 = vmatpush1.msra.mxu0 0.0
      %1428 = vmatprep.subr.mxu0 0.0
      %1429 = vmatpush1.msra.mxu0 0.0
      %1430 = vmatprep.subr.mxu0 0.0
      %1431 = vmatpush1.msra.mxu0 0.0
      %1432 = vmatprep.subr.mxu0 0.0
      %1433 = vmatpush1.msra.mxu0 0.0
      %1434 = vmatprep.subr.mxu0 0.0
      %1435 = vmatpush1.msra.mxu0 0.0
      %1436 = vmatprep.subr.mxu0 0.0
      %1437 = vmatpush1.msra.mxu0 0.0
      %1438 = vmatprep.subr.mxu0 0.0
      %1439 = vmatpush1.msra.mxu0 0.0
      %1440 = vmatprep.subr.mxu0 0.0
      %1441 = vmatpush1.msra.mxu0 0.0
      %1442 = vmatprep.subr.mxu0 0.0
      %1443 = vmatpush1.msra.mxu0 0.0
      %1444 = vmatprep.subr.mxu0 0.0
      %1445 = vmatpush1.msra.mxu0 0.0
      %1446 = vmatprep.subr.mxu0 0.0
      %1447 = vmatpush1.msra.mxu0 0.0
      %1448 = vmatprep.subr.mxu0 0.0
      %1449 = vmatpush1.msra.mxu0 0.0
      %1450 = vmatprep.subr.mxu0 0.0
      %1451 = vmatpush1.msra.mxu0 0.0
      %1452 = vmatprep.subr.mxu0 0.0
      %1453 = vmatpush1.msra.mxu0 0.0
      %1454 = vmatprep.subr.mxu0 0.0
      %1455 = vmatpush1.msra.mxu0 0.0
      %1456 = vmatprep.subr.mxu0 0.0
      %1457 = vmatpush1.msra.mxu0 0.0
      %1458 = vmatprep.subr.mxu0 0.0
      %1459 = vmatpush1.msra.mxu0 0.0
      %1460 = vmatprep.subr.mxu0 0.0
      %1461 = vmatpush1.msra.mxu0 0.0
      %1462 = vmatprep.subr.mxu0 0.0
      %1463 = vmatpush1.msra.mxu0 0.0
      %1464 = vmatprep.subr.mxu0 0.0
      %1465 = vmatpush1.msra.mxu0 0.0
      %1466 = vmatprep.subr.mxu0 0.0
      %1467 = vmatpush1.msra.mxu0 0.0
      %1468 = vmatprep.mubr.f32.mxu0 0.0
      %1469 = vmatmul.mubr.f32.gmra.mrb[0].mxu0 %v1330
      %v1470 = vpop.f32.mrb[0].mxu0
      %v1471 = vadd.f32 %v421, %v1470
      %v1472 = vpop.f32.mrb[0].mxu0
      %1473 = vmatprep.mubr.f32.mxu0 0.0
      %1474 = vmatmul.mubr.f32.gmra.mrb[0].mxu0 %v1333
      %v1475 = vpop.f32.mrb[0].mxu0
      %v1476 = vadd.f32 %v421, %v1475
      %v1477 = vpop.f32.mrb[0].mxu0
      %1478 = vmatprep.mubr.f32.mxu0 0.0
      %1479 = vmatmul.mubr.f32.gmra.mrb[0].mxu0 %v1336
      %v1480 = vpop.f32.mrb[0].mxu0
      %v1481 = vadd.f32 %v421, %v1480
      %v1482 = vpop.f32.mrb[0].mxu0
      %1483 = vmatprep.mubr.f32.mxu0 0.0
      %1484 = vmatmul.mubr.f32.gmra.mrb[0].mxu0 %v1339
      %v1485 = vpop.f32.mrb[0].mxu0
      %v1486 = vadd.f32 %v421, %v1485
      %v1487 = vpop.f32.mrb[0].mxu0
      %1488 = vmatprep.mubr.f32.mxu0 0.0
      %1489 = vmatmul.mubr.f32.gmra.mrb[0].mxu0 %v1342
      %v1490 = vpop.f32.mrb[0].mxu0
      %v1491 = vadd.f32 %v421, %v1490
      %v1492 = vpop.f32.mrb[0].mxu0
      %1493 = vmatprep.mubr.f32.mxu0 0.0
      %1494 = vmatmul.mubr.f32.gmra.mrb[0].mxu0 %v1345
      %v1495 = vpop.f32.mrb[0].mxu0
      %v1496 = vadd.f32 %v421, %v1495
      %v1497 = vpop.f32.mrb[0].mxu0
      %1498 = vmatprep.mubr.f32.mxu0 0.0
      %1499 = vmatmul.mubr.f32.gmra.mrb[0].mxu0 %v1348
      %v1500 = vpop.f32.mrb[0].mxu0
      %v1501 = vadd.f32 %v421, %v1500
      %v1502 = vpop.f32.mrb[0].mxu0
      %1503 = vmatprep.mubr.f32.mxu0 0.0
      %1504 = vmatmul.mubr.f32.gmra.mrb[0].mxu0 %v1351
      %v1505 = vpop.f32.mrb[0].mxu0
      %v1506 = vadd.f32 %v421, %v1505
      %v1507 = vpop.f32.mrb[0].mxu0
      %1508 = vmatprep.mubr.f32.mxu0 0.0
      %1509 = vmatmul.mubr.f32.gmra.mrb[0].mxu0 %v1354
      %v1510 = vpop.f32.mrb[0].mxu0
      %v1511 = vadd.f32 %v421, %v1510
      %v1512 = vpop.f32.mrb[0].mxu0
      %1513 = vmatprep.mubr.f32.mxu0 0.0
      %1514 = vmatmul.mubr.f32.gmra.mrb[0].mxu0 %v1357
      %v1515 = vpop.f32.mrb[0].mxu0
      %v1516 = vadd.f32 %v421, %v1515
      %v1517 = vpop.f32.mrb[0].mxu0
      %1518 = vmatprep.mubr.f32.mxu0 0.0
      %1519 = vmatmul.mubr.f32.gmra.mrb[0].mxu0 %v1360
      %v1520 = vpop.f32.mrb[0].mxu0
      %v1521 = vadd.f32 %v421, %v1520
      %v1522 = vpop.f32.mrb[0].mxu0
      %1523 = vmatprep.mubr.f32.mxu0 0.0
      %1524 = vmatmul.mubr.f32.gmra.mrb[0].mxu0 %v1363
      %v1525 = vpop.f32.mrb[0].mxu0
      %v1526 = vadd.f32 %v421, %v1525
      %v1527 = vpop.f32.mrb[0].mxu0
      %1528 = vmatprep.mubr.f32.mxu0 0.0
      %1529 = vmatmul.mubr.f32.gmra.mrb[0].mxu0 %v1366
      %v1530 = vpop.f32.mrb[0].mxu0
      %v1531 = vadd.f32 %v421, %v1530
      %v1532 = vpop.f32.mrb[0].mxu0
      %1533 = vmatprep.mubr.f32.mxu0 0.0
      %1534 = vmatmul.mubr.f32.gmra.mrb[0].mxu0 %v1369
      %v1535 = vpop.f32.mrb[0].mxu0
      %v1536 = vadd.f32 %v421, %v1535
      %v1537 = vpop.f32.mrb[0].mxu0
      %1538 = vmatprep.mubr.f32.mxu0 0.0
      %1539 = vmatmul.mubr.f32.gmra.mrb[0].mxu0 %v1372
      %v1540 = vpop.f32.mrb[0].mxu0
      %v1541 = vadd.f32 %v421, %v1540
      %v1542 = vpop.f32.mrb[0].mxu0
      %1543 = vmatprep.mubr.f32.mxu0 0.0
      %1544 = vmatmul.mubr.f32.gmra.mrb[0].mxu0 %v1375
      %v1545 = vpop.f32.mrb[0].mxu0
      %v1546 = vadd.f32 %v421, %v1545
      %v1547 = vpop.f32.mrb[0].mxu0
      %1548 = vmatprep.mubr.f32.mxu0 0.0
      %1549 = vmatmul.mubr.f32.gmra.mrb[0].mxu0 %v1378
      %v1550 = vpop.f32.mrb[0].mxu0
      %v1551 = vadd.f32 %v421, %v1550
      %v1552 = vpop.f32.mrb[0].mxu0
      %1553 = vmatprep.mubr.f32.mxu0 0.0
      %1554 = vmatmul.mubr.f32.gmra.mrb[0].mxu0 %v1381
      %v1555 = vpop.f32.mrb[0].mxu0
      %v1556 = vadd.f32 %v421, %v1555
      %v1557 = vpop.f32.mrb[0].mxu0
      %1558 = vmatprep.mubr.f32.mxu0 0.0
      %1559 = vmatmul.mubr.f32.gmra.mrb[0].mxu0 %v1384
      %v1560 = vpop.f32.mrb[0].mxu0
      %v1561 = vadd.f32 %v421, %v1560
      %v1562 = vpop.f32.mrb[0].mxu0
      %1563 = vmatprep.mubr.f32.mxu0 0.0
      %1564 = vmatmul.mubr.f32.gmra.mrb[0].mxu0 %v1387
      %v1565 = vpop.f32.mrb[0].mxu0
      %v1566 = vadd.f32 %v421, %v1565
      %v1567 = vpop.f32.mrb[0].mxu0
      %1568 = vmatprep.mubr.f32.mxu0 0.0
      %1569 = vmatmul.mubr.f32.gmra.mrb[0].mxu0 %v1390
      %v1570 = vpop.f32.mrb[0].mxu0
      %v1571 = vadd.f32 %v421, %v1570
      %v1572 = vpop.f32.mrb[0].mxu0
      %1573 = vmatprep.mubr.f32.mxu0 0.0
      %1574 = vmatmul.mubr.f32.gmra.mrb[0].mxu0 %v1393
      %v1575 = vpop.f32.mrb[0].mxu0
      %v1576 = vadd.f32 %v421, %v1575
      %v1577 = vpop.f32.mrb[0].mxu0
      %1578 = vmatprep.mubr.f32.mxu0 0.0
      %1579 = vmatmul.mubr.f32.gmra.mrb[0].mxu0 %v1396
      %v1580 = vpop.f32.mrb[0].mxu0
      %v1581 = vadd.f32 %v421, %v1580
      %v1582 = vpop.f32.mrb[0].mxu0
      %1583 = vmatprep.mubr.f32.mxu0 0.0
      %1584 = vmatmul.mubr.f32.gmra.mrb[0].mxu0 %v1399
      %v1585 = vpop.f32.mrb[0].mxu0
      %v1586 = vadd.f32 %v421, %v1585
      %v1587 = vpop.f32.mrb[0].mxu0
      %1588 = vmatprep.mubr.f32.mxu0 0.0
      %1589 = vmatmul.mubr.f32.gmra.mrb[0].mxu0 %v1402
      %v1590 = vpop.f32.mrb[0].mxu0
      %v1591 = vadd.f32 %v421, %v1590
      %v1592 = vpop.f32.mrb[0].mxu0
      %1593 = vdwg.mxu0
      %v1594 = vxor.u32 %v1471, 2147483648
      %v1595 = vxor.u32 %v1476, 2147483648
      %v1596 = vxor.u32 %v1481, 2147483648
      %v1597 = vxor.u32 %v1486, 2147483648
      %v1598 = vxor.u32 %v1491, 2147483648
      %v1599 = vxor.u32 %v1496, 2147483648
      %v1600 = vxor.u32 %v1501, 2147483648
      %v1601 = vxor.u32 %v1506, 2147483648
      %v1602 = vxor.u32 %v1511, 2147483648
      %v1603 = vxor.u32 %v1516, 2147483648
      %v1604 = vxor.u32 %v1521, 2147483648
      %v1605 = vxor.u32 %v1526, 2147483648
      %v1606 = vxor.u32 %v1531, 2147483648
      %v1607 = vxor.u32 %v1536, 2147483648
      %v1608 = vxor.u32 %v1541, 2147483648
      %v1609 = vxor.u32 %v1546, 2147483648
      %v1610 = vxor.u32 %v1551, 2147483648
      %v1611 = vxor.u32 %v1556, 2147483648
      %v1612 = vxor.u32 %v1561, 2147483648
      %v1613 = vxor.u32 %v1566, 2147483648
      %v1614 = vxor.u32 %v1571, 2147483648
      %v1615 = vxor.u32 %v1576, 2147483648
      %v1616 = vxor.u32 %v1581, 2147483648
      %v1617 = vxor.u32 %v1586, 2147483648
      %v1618 = vxor.u32 %v1591, 2147483648
      %v1619 = vmul.f32 %v1594, 1.442695
      %v1620 = vpow.pop %v1619
      %v1621 = vmul.f32 %v1595, 1.442695
      %v1622 = vpow.pop %v1621
      %v1623 = vmul.f32 %v1596, 1.442695
      %v1624 = vpow.pop %v1623
      %v1625 = vmul.f32 %v1597, 1.442695
      %v1626 = vpow.pop %v1625
      %v1627 = vmul.f32 %v1598, 1.442695
      %v1628 = vpow.pop %v1627
      %v1629 = vmul.f32 %v1599, 1.442695
      %v1630 = vpow.pop %v1629
      %v1631 = vmul.f32 %v1600, 1.442695
      %v1632 = vpow.pop %v1631
      %v1633 = vmul.f32 %v1601, 1.442695
      %v1634 = vpow.pop %v1633
      %v1635 = vmul.f32 %v1602, 1.442695
      %v1636 = vpow.pop %v1635
      %v1637 = vmul.f32 %v1603, 1.442695
      %v1638 = vpow.pop %v1637
      %v1639 = vmul.f32 %v1604, 1.442695
      %v1640 = vpow.pop %v1639
      %v1641 = vmul.f32 %v1605, 1.442695
      %v1642 = vpow.pop %v1641
      %v1643 = vmul.f32 %v1606, 1.442695
      %v1644 = vpow.pop %v1643
      %v1645 = vmul.f32 %v1607, 1.442695
      %v1646 = vpow.pop %v1645
      %v1647 = vmul.f32 %v1608, 1.442695
      %v1648 = vpow.pop %v1647
      %v1649 = vmul.f32 %v1609, 1.442695
      %v1650 = vpow.pop %v1649
      %v1651 = vmul.f32 %v1610, 1.442695
      %v1652 = vpow.pop %v1651
      %v1653 = vmul.f32 %v1611, 1.442695
      %v1654 = vpow.pop %v1653
      %v1655 = vmul.f32 %v1612, 1.442695
      %v1656 = vpow.pop %v1655
      %v1657 = vmul.f32 %v1613, 1.442695
      %v1658 = vpow.pop %v1657
      %v1659 = vmul.f32 %v1614, 1.442695
      %v1660 = vpow.pop %v1659
      %v1661 = vmul.f32 %v1615, 1.442695
      %v1662 = vpow.pop %v1661
      %v1663 = vmul.f32 %v1616, 1.442695
      %v1664 = vpow.pop %v1663
      %v1665 = vmul.f32 %v1617, 1.442695
      %v1666 = vpow.pop %v1665
      %v1667 = vmul.f32 %v1618, 1.442695
      %v1668 = vpow.pop %v1667
      %v1669 = vadd.f32 %v1620, 1.0
      %v1670 = vadd.f32 %v1622, 1.0
      %v1671 = vadd.f32 %v1624, 1.0
      %v1672 = vadd.f32 %v1626, 1.0
      %v1673 = vadd.f32 %v1628, 1.0
      %v1674 = vadd.f32 %v1630, 1.0
      %v1675 = vadd.f32 %v1632, 1.0
      %v1676 = vadd.f32 %v1634, 1.0
      %v1677 = vadd.f32 %v1636, 1.0
      %v1678 = vadd.f32 %v1638, 1.0
      %v1679 = vadd.f32 %v1640, 1.0
      %v1680 = vadd.f32 %v1642, 1.0
      %v1681 = vadd.f32 %v1644, 1.0
      %v1682 = vadd.f32 %v1646, 1.0
      %v1683 = vadd.f32 %v1648, 1.0
      %v1684 = vadd.f32 %v1650, 1.0
      %v1685 = vadd.f32 %v1652, 1.0
      %v1686 = vadd.f32 %v1654, 1.0
      %v1687 = vadd.f32 %v1656, 1.0
      %v1688 = vadd.f32 %v1658, 1.0
      %v1689 = vadd.f32 %v1660, 1.0
      %v1690 = vadd.f32 %v1662, 1.0
      %v1691 = vadd.f32 %v1664, 1.0
      %v1692 = vadd.f32 %v1666, 1.0
      %v1693 = vadd.f32 %v1668, 1.0
      %v1694 = vrcp.pop %v1669
      %v1695 = vmul.f32 1.0, %v1694
      %v1696 = vrcp.pop %v1670
      %v1697 = vmul.f32 1.0, %v1696
      %v1698 = vrcp.pop %v1671
      %v1699 = vmul.f32 1.0, %v1698
      %v1700 = vrcp.pop %v1672
      %v1701 = vmul.f32 1.0, %v1700
      %v1702 = vrcp.pop %v1673
      %v1703 = vmul.f32 1.0, %v1702
      %v1704 = vrcp.pop %v1674
      %v1705 = vmul.f32 1.0, %v1704
      %v1706 = vrcp.pop %v1675
      %v1707 = vmul.f32 1.0, %v1706
      %v1708 = vrcp.pop %v1676
      %v1709 = vmul.f32 1.0, %v1708
      %v1710 = vrcp.pop %v1677
      %v1711 = vmul.f32 1.0, %v1710
      %v1712 = vrcp.pop %v1678
      %v1713 = vmul.f32 1.0, %v1712
      %v1714 = vrcp.pop %v1679
      %v1715 = vmul.f32 1.0, %v1714
      %v1716 = vrcp.pop %v1680
      %v1717 = vmul.f32 1.0, %v1716
      %v1718 = vrcp.pop %v1681
      %v1719 = vmul.f32 1.0, %v1718
      %v1720 = vrcp.pop %v1682
      %v1721 = vmul.f32 1.0, %v1720
      %v1722 = vrcp.pop %v1683
      %v1723 = vmul.f32 1.0, %v1722
      %v1724 = vrcp.pop %v1684
      %v1725 = vmul.f32 1.0, %v1724
      %v1726 = vrcp.pop %v1685
      %v1727 = vmul.f32 1.0, %v1726
      %v1728 = vrcp.pop %v1686
      %v1729 = vmul.f32 1.0, %v1728
      %v1730 = vrcp.pop %v1687
      %v1731 = vmul.f32 1.0, %v1730
      %v1732 = vrcp.pop %v1688
      %v1733 = vmul.f32 1.0, %v1732
      %v1734 = vrcp.pop %v1689
      %v1735 = vmul.f32 1.0, %v1734
      %v1736 = vrcp.pop %v1690
      %v1737 = vmul.f32 1.0, %v1736
      %v1738 = vrcp.pop %v1691
      %v1739 = vmul.f32 1.0, %v1738
      %v1740 = vrcp.pop %v1692
      %v1741 = vmul.f32 1.0, %v1740
      %v1742 = vrcp.pop %v1693
      %v1743 = vmul.f32 1.0, %v1742
      %v1744 = vmax.f32 %v1279, %v1695
      %v1745 = vmax.f32 %v1280, %v1697
      %v1746 = vmax.f32 %v1281, %v1699
      %v1747 = vmax.f32 %v1282, %v1701
      %v1748 = vmax.f32 %v1283, %v1703
      %v1749 = vmax.f32 %v1284, %v1705
      %v1750 = vmax.f32 %v1285, %v1707
      %v1751 = vmax.f32 %v1286, %v1709
      %v1752 = vmax.f32 %v1287, %v1711
      %v1753 = vmax.f32 %v1288, %v1713
      %v1754 = vmax.f32 %v1289, %v1715
      %v1755 = vmax.f32 %v1290, %v1717
      %v1756 = vmax.f32 %v1291, %v1719
      %v1757 = vmax.f32 %v1292, %v1721
      %v1758 = vmax.f32 %v1293, %v1723
      %v1759 = vmax.f32 %v1294, %v1725
      %v1760 = vmax.f32 %v1295, %v1727
      %v1761 = vmax.f32 %v1296, %v1729
      %v1762 = vmax.f32 %v1297, %v1731
      %v1763 = vmax.f32 %v1298, %v1733
      %v1764 = vmax.f32 %v1299, %v1735
      %v1765 = vmax.f32 %v1300, %v1737
      %v1766 = vmax.f32 %v1301, %v1739
      %v1767 = vmax.f32 %v1302, %v1741
      %v1768 = vmax.f32 %v1303, %v1743
      %v1769 = vld [vmem:[%s381 + $0x24c] sm:$0xff]
      %v1770 = vld [vmem:[%s381 + $0x254] sm:$0xff]
      %v1771 = vld [vmem:[%s381 + $0x25c] sm:$0xff]
      %v1772 = vld [vmem:[%s381 + $0x264] sm:$0xff]
      %v1773 = vld [vmem:[%s381 + $0x26c] sm:$0xff]
      %v1774 = vld [vmem:[%s381 + $0x274] sm:$0xff]
      %v1775 = vld [vmem:[%s381 + $0x27c] sm:$0xff]
      %v1776 = vld [vmem:[%s381 + $0x284] sm:$0xff]
      %v1777 = vld [vmem:[%s381 + $0x28c] sm:$0xff]
      %v1778 = vld [vmem:[%s381 + $0x294] sm:$0xff]
      %v1779 = vld [vmem:[%s381 + $0x29c] sm:$0xff]
      %v1780 = vld [vmem:[%s381 + $0x2a4] sm:$0xff]
      %v1781 = vld [vmem:[%s381 + $0x2ac] sm:$0xff]
      %v1782 = vld [vmem:[%s381 + $0x2b4] sm:$0xff]
      %v1783 = vld [vmem:[%s381 + $0x2bc] sm:$0xff]
      %v1784 = vld [vmem:[%s381 + $0x2c4] sm:$0xff]
      %v1785 = vld [vmem:[%s381 + $0x2cc] sm:$0xff]
      %v1786 = vld [vmem:[%s381 + $0x2d4] sm:$0xff]
      %v1787 = vld [vmem:[%s381 + $0x2dc] sm:$0xff]
      %v1788 = vld [vmem:[%s381 + $0x2e4] sm:$0xff]
      %v1789 = vld [vmem:[%s381 + $0x2ec] sm:$0xff]
      %v1790 = vld [vmem:[%s381 + $0x2f4] sm:$0xff]
      %v1791 = vld [vmem:[%s381 + $0x2fc] sm:$0xff]
      %v1792 = vld [vmem:[%s381 + $0x304] sm:$0xff]
      %v1793 = vld [vmem:[%s381 + $0x30c] sm:$0xf]
      %v1795 = vsel %vm423, %v1769, 0
      %v1798 = vsel %vm423, %v1770, 0
      %v1801 = vsel %vm423, %v1771, 0
      %v1804 = vsel %vm423, %v1772, 0
      %v1807 = vsel %vm423, %v1773, 0
      %v1810 = vsel %vm423, %v1774, 0
      %v1813 = vsel %vm423, %v1775, 0
      %v1816 = vsel %vm423, %v1776, 0
      %v1819 = vsel %vm423, %v1777, 0
      %v1822 = vsel %vm423, %v1778, 0
      %v1825 = vsel %vm423, %v1779, 0
      %v1828 = vsel %vm423, %v1780, 0
      %v1831 = vsel %vm423, %v1781, 0
      %v1834 = vsel %vm423, %v1782, 0
      %v1837 = vsel %vm423, %v1783, 0
      %v1840 = vsel %vm423, %v1784, 0
      %v1843 = vsel %vm423, %v1785, 0
      %v1846 = vsel %vm423, %v1786, 0
      %v1849 = vsel %vm423, %v1787, 0
      %v1852 = vsel %vm423, %v1788, 0
      %v1855 = vsel %vm423, %v1789, 0
      %v1858 = vsel %vm423, %v1790, 0
      %v1861 = vsel %vm423, %v1791, 0
      %v1864 = vsel %vm423, %v1792, 0
      %v1867 = vsel %vm423, %v1793, 0
      %1869 = vmatprep.subr.mxu0 0.0
      %1870 = vmatpush1.msra.mxu0 %v387
      %1871 = vmatprep.subr.mxu0 0.0
      %1872 = vmatpush1.msra.mxu0 %v388
      %1873 = vmatprep.subr.mxu0 0.0
      %1874 = vmatpush1.msra.mxu0 %v389
      %1875 = vmatprep.subr.mxu0 0.0
      %1876 = vmatpush1.msra.mxu0 %v390
      %1877 = vmatprep.subr.mxu0 0.0
      %1878 = vmatpush1.msra.mxu0 0.0
      %1879 = vmatprep.subr.mxu0 0.0
      %1880 = vmatpush1.msra.mxu0 0.0
      %1881 = vmatprep.subr.mxu0 0.0
      %1882 = vmatpush1.msra.mxu0 0.0
      %1883 = vmatprep.subr.mxu0 0.0
      %1884 = vmatpush1.msra.mxu0 0.0
      %1885 = vmatprep.subr.mxu0 0.0
      %1886 = vmatpush1.msra.mxu0 0.0
      %1887 = vmatprep.subr.mxu0 0.0
      %1888 = vmatpush1.msra.mxu0 0.0
      %1889 = vmatprep.subr.mxu0 0.0
      %1890 = vmatpush1.msra.mxu0 0.0
      %1891 = vmatprep.subr.mxu0 0.0
      %1892 = vmatpush1.msra.mxu0 0.0
      %1893 = vmatprep.subr.mxu0 0.0
      %1894 = vmatpush1.msra.mxu0 0.0
      %1895 = vmatprep.subr.mxu0 0.0
      %1896 = vmatpush1.msra.mxu0 0.0
      %1897 = vmatprep.subr.mxu0 0.0
      %1898 = vmatpush1.msra.mxu0 0.0
      %1899 = vmatprep.subr.mxu0 0.0
      %1900 = vmatpush1.msra.mxu0 0.0
      %1901 = vmatprep.subr.mxu0 0.0
      %1902 = vmatpush1.msra.mxu0 0.0
      %1903 = vmatprep.subr.mxu0 0.0
      %1904 = vmatpush1.msra.mxu0 0.0
      %1905 = vmatprep.subr.mxu0 0.0
      %1906 = vmatpush1.msra.mxu0 0.0
      %1907 = vmatprep.subr.mxu0 0.0
      %1908 = vmatpush1.msra.mxu0 0.0
      %1909 = vmatprep.subr.mxu0 0.0
      %1910 = vmatpush1.msra.mxu0 0.0
      %1911 = vmatprep.subr.mxu0 0.0
      %1912 = vmatpush1.msra.mxu0 0.0
      %1913 = vmatprep.subr.mxu0 0.0
      %1914 = vmatpush1.msra.mxu0 0.0
      %1915 = vmatprep.subr.mxu0 0.0
      %1916 = vmatpush1.msra.mxu0 0.0
      %1917 = vmatprep.subr.mxu0 0.0
      %1918 = vmatpush1.msra.mxu0 0.0
      %1919 = vmatprep.subr.mxu0 0.0
      %1920 = vmatpush1.msra.mxu0 0.0
      %1921 = vmatprep.subr.mxu0 0.0
      %1922 = vmatpush1.msra.mxu0 0.0
      %1923 = vmatprep.subr.mxu0 0.0
      %1924 = vmatpush1.msra.mxu0 0.0
      %1925 = vmatprep.subr.mxu0 0.0
      %1926 = vmatpush1.msra.mxu0 0.0
      %1927 = vmatprep.subr.mxu0 0.0
      %1928 = vmatpush1.msra.mxu0 0.0
      %1929 = vmatprep.subr.mxu0 0.0
      %1930 = vmatpush1.msra.mxu0 0.0
      %1931 = vmatprep.subr.mxu0 0.0
      %1932 = vmatpush1.msra.mxu0 0.0
      %1933 = vmatprep.mubr.f32.mxu0 0.0
      %1934 = vmatmul.mubr.f32.gmra.mrb[0].mxu0 %v1795
      %v1935 = vpop.f32.mrb[0].mxu0
      %v1936 = vadd.f32 %v421, %v1935
      %v1937 = vpop.f32.mrb[0].mxu0
      %1938 = vmatprep.mubr.f32.mxu0 0.0
      %1939 = vmatmul.mubr.f32.gmra.mrb[0].mxu0 %v1798
      %v1940 = vpop.f32.mrb[0].mxu0
      %v1941 = vadd.f32 %v421, %v1940
      %v1942 = vpop.f32.mrb[0].mxu0
      %1943 = vmatprep.mubr.f32.mxu0 0.0
      %1944 = vmatmul.mubr.f32.gmra.mrb[0].mxu0 %v1801
      %v1945 = vpop.f32.mrb[0].mxu0
      %v1946 = vadd.f32 %v421, %v1945
      %v1947 = vpop.f32.mrb[0].mxu0
      %1948 = vmatprep.mubr.f32.mxu0 0.0
      %1949 = vmatmul.mubr.f32.gmra.mrb[0].mxu0 %v1804
      %v1950 = vpop.f32.mrb[0].mxu0
      %v1951 = vadd.f32 %v421, %v1950
      %v1952 = vpop.f32.mrb[0].mxu0
      %1953 = vmatprep.mubr.f32.mxu0 0.0
      %1954 = vmatmul.mubr.f32.gmra.mrb[0].mxu0 %v1807
      %v1955 = vpop.f32.mrb[0].mxu0
      %v1956 = vadd.f32 %v421, %v1955
      %v1957 = vpop.f32.mrb[0].mxu0
      %1958 = vmatprep.mubr.f32.mxu0 0.0
      %1959 = vmatmul.mubr.f32.gmra.mrb[0].mxu0 %v1810
      %v1960 = vpop.f32.mrb[0].mxu0
      %v1961 = vadd.f32 %v421, %v1960
      %v1962 = vpop.f32.mrb[0].mxu0
      %1963 = vmatprep.mubr.f32.mxu0 0.0
      %1964 = vmatmul.mubr.f32.gmra.mrb[0].mxu0 %v1813
      %v1965 = vpop.f32.mrb[0].mxu0
      %v1966 = vadd.f32 %v421, %v1965
      %v1967 = vpop.f32.mrb[0].mxu0
      %1968 = vmatprep.mubr.f32.mxu0 0.0
      %1969 = vmatmul.mubr.f32.gmra.mrb[0].mxu0 %v1816
      %v1970 = vpop.f32.mrb[0].mxu0
      %v1971 = vadd.f32 %v421, %v1970
      %v1972 = vpop.f32.mrb[0].mxu0
      %1973 = vmatprep.mubr.f32.mxu0 0.0
      %1974 = vmatmul.mubr.f32.gmra.mrb[0].mxu0 %v1819
      %v1975 = vpop.f32.mrb[0].mxu0
      %v1976 = vadd.f32 %v421, %v1975
      %v1977 = vpop.f32.mrb[0].mxu0
      %1978 = vmatprep.mubr.f32.mxu0 0.0
      %1979 = vmatmul.mubr.f32.gmra.mrb[0].mxu0 %v1822
      %v1980 = vpop.f32.mrb[0].mxu0
      %v1981 = vadd.f32 %v421, %v1980
      %v1982 = vpop.f32.mrb[0].mxu0
      %1983 = vmatprep.mubr.f32.mxu0 0.0
      %1984 = vmatmul.mubr.f32.gmra.mrb[0].mxu0 %v1825
      %v1985 = vpop.f32.mrb[0].mxu0
      %v1986 = vadd.f32 %v421, %v1985
      %v1987 = vpop.f32.mrb[0].mxu0
      %1988 = vmatprep.mubr.f32.mxu0 0.0
      %1989 = vmatmul.mubr.f32.gmra.mrb[0].mxu0 %v1828
      %v1990 = vpop.f32.mrb[0].mxu0
      %v1991 = vadd.f32 %v421, %v1990
      %v1992 = vpop.f32.mrb[0].mxu0
      %1993 = vmatprep.mubr.f32.mxu0 0.0
      %1994 = vmatmul.mubr.f32.gmra.mrb[0].mxu0 %v1831
      %v1995 = vpop.f32.mrb[0].mxu0
      %v1996 = vadd.f32 %v421, %v1995
      %v1997 = vpop.f32.mrb[0].mxu0
      %1998 = vmatprep.mubr.f32.mxu0 0.0
      %1999 = vmatmul.mubr.f32.gmra.mrb[0].mxu0 %v1834
      %v2000 = vpop.f32.mrb[0].mxu0
      %v2001 = vadd.f32 %v421, %v2000
      %v2002 = vpop.f32.mrb[0].mxu0
      %2003 = vmatprep.mubr.f32.mxu0 0.0
      %2004 = vmatmul.mubr.f32.gmra.mrb[0].mxu0 %v1837
      %v2005 = vpop.f32.mrb[0].mxu0
      %v2006 = vadd.f32 %v421, %v2005
      %v2007 = vpop.f32.mrb[0].mxu0
      %2008 = vmatprep.mubr.f32.mxu0 0.0
      %2009 = vmatmul.mubr.f32.gmra.mrb[0].mxu0 %v1840
      %v2010 = vpop.f32.mrb[0].mxu0
      %v2011 = vadd.f32 %v421, %v2010
      %v2012 = vpop.f32.mrb[0].mxu0
      %2013 = vmatprep.mubr.f32.mxu0 0.0
      %2014 = vmatmul.mubr.f32.gmra.mrb[0].mxu0 %v1843
      %v2015 = vpop.f32.mrb[0].mxu0
      %v2016 = vadd.f32 %v421, %v2015
      %v2017 = vpop.f32.mrb[0].mxu0
      %2018 = vmatprep.mubr.f32.mxu0 0.0
      %2019 = vmatmul.mubr.f32.gmra.mrb[0].mxu0 %v1846
      %v2020 = vpop.f32.mrb[0].mxu0
      %v2021 = vadd.f32 %v421, %v2020
      %v2022 = vpop.f32.mrb[0].mxu0
      %2023 = vmatprep.mubr.f32.mxu0 0.0
      %2024 = vmatmul.mubr.f32.gmra.mrb[0].mxu0 %v1849
      %v2025 = vpop.f32.mrb[0].mxu0
      %v2026 = vadd.f32 %v421, %v2025
      %v2027 = vpop.f32.mrb[0].mxu0
      %2028 = vmatprep.mubr.f32.mxu0 0.0
      %2029 = vmatmul.mubr.f32.gmra.mrb[0].mxu0 %v1852
      %v2030 = vpop.f32.mrb[0].mxu0
      %v2031 = vadd.f32 %v421, %v2030
      %v2032 = vpop.f32.mrb[0].mxu0
      %2033 = vmatprep.mubr.f32.mxu0 0.0
      %2034 = vmatmul.mubr.f32.gmra.mrb[0].mxu0 %v1855
      %v2035 = vpop.f32.mrb[0].mxu0
      %v2036 = vadd.f32 %v421, %v2035
      %v2037 = vpop.f32.mrb[0].mxu0
      %2038 = vmatprep.mubr.f32.mxu0 0.0
      %2039 = vmatmul.mubr.f32.gmra.mrb[0].mxu0 %v1858
      %v2040 = vpop.f32.mrb[0].mxu0
      %v2041 = vadd.f32 %v421, %v2040
      %v2042 = vpop.f32.mrb[0].mxu0
      %2043 = vmatprep.mubr.f32.mxu0 0.0
      %2044 = vmatmul.mubr.f32.gmra.mrb[0].mxu0 %v1861
      %v2045 = vpop.f32.mrb[0].mxu0
      %v2046 = vadd.f32 %v421, %v2045
      %v2047 = vpop.f32.mrb[0].mxu0
      %2048 = vmatprep.mubr.f32.mxu0 0.0
      %2049 = vmatmul.mubr.f32.gmra.mrb[0].mxu0 %v1864
      %v2050 = vpop.f32.mrb[0].mxu0
      %v2051 = vadd.f32 %v421, %v2050
      %v2052 = vpop.f32.mrb[0].mxu0
      %2053 = vmatprep.mubr.f32.mxu0 0.0
      %2054 = vmatmul.mubr.f32.gmra.mrb[0].mxu0 %v1867
      %v2055 = vpop.f32.mrb[0].mxu0
      %v2056 = vadd.f32 %v421, %v2055
      %v2057 = vpop.f32.mrb[0].mxu0
      %2058 = vdwg.mxu0
      %v2059 = vxor.u32 %v1936, 2147483648
      %v2060 = vxor.u32 %v1941, 2147483648
      %v2061 = vxor.u32 %v1946, 2147483648
      %v2062 = vxor.u32 %v1951, 2147483648
      %v2063 = vxor.u32 %v1956, 2147483648
      %v2064 = vxor.u32 %v1961, 2147483648
      %v2065 = vxor.u32 %v1966, 2147483648
      %v2066 = vxor.u32 %v1971, 2147483648
      %v2067 = vxor.u32 %v1976, 2147483648
      %v2068 = vxor.u32 %v1981, 2147483648
      %v2069 = vxor.u32 %v1986, 2147483648
      %v2070 = vxor.u32 %v1991, 2147483648
      %v2071 = vxor.u32 %v1996, 2147483648
      %v2072 = vxor.u32 %v2001, 2147483648
      %v2073 = vxor.u32 %v2006, 2147483648
      %v2074 = vxor.u32 %v2011, 2147483648
      %v2075 = vxor.u32 %v2016, 2147483648
      %v2076 = vxor.u32 %v2021, 2147483648
      %v2077 = vxor.u32 %v2026, 2147483648
      %v2078 = vxor.u32 %v2031, 2147483648
      %v2079 = vxor.u32 %v2036, 2147483648
      %v2080 = vxor.u32 %v2041, 2147483648
      %v2081 = vxor.u32 %v2046, 2147483648
      %v2082 = vxor.u32 %v2051, 2147483648
      %v2083 = vxor.u32 %v2056, 2147483648
      %v2084 = vmul.f32 %v2059, 1.442695
      %v2085 = vpow.pop %v2084
      %v2086 = vmul.f32 %v2060, 1.442695
      %v2087 = vpow.pop %v2086
      %v2088 = vmul.f32 %v2061, 1.442695
      %v2089 = vpow.pop %v2088
      %v2090 = vmul.f32 %v2062, 1.442695
      %v2091 = vpow.pop %v2090
      %v2092 = vmul.f32 %v2063, 1.442695
      %v2093 = vpow.pop %v2092
      %v2094 = vmul.f32 %v2064, 1.442695
      %v2095 = vpow.pop %v2094
      %v2096 = vmul.f32 %v2065, 1.442695
      %v2097 = vpow.pop %v2096
      %v2098 = vmul.f32 %v2066, 1.442695
      %v2099 = vpow.pop %v2098
      %v2100 = vmul.f32 %v2067, 1.442695
      %v2101 = vpow.pop %v2100
      %v2102 = vmul.f32 %v2068, 1.442695
      %v2103 = vpow.pop %v2102
      %v2104 = vmul.f32 %v2069, 1.442695
      %v2105 = vpow.pop %v2104
      %v2106 = vmul.f32 %v2070, 1.442695
      %v2107 = vpow.pop %v2106
      %v2108 = vmul.f32 %v2071, 1.442695
      %v2109 = vpow.pop %v2108
      %v2110 = vmul.f32 %v2072, 1.442695
      %v2111 = vpow.pop %v2110
      %v2112 = vmul.f32 %v2073, 1.442695
      %v2113 = vpow.pop %v2112
      %v2114 = vmul.f32 %v2074, 1.442695
      %v2115 = vpow.pop %v2114
      %v2116 = vmul.f32 %v2075, 1.442695
      %v2117 = vpow.pop %v2116
      %v2118 = vmul.f32 %v2076, 1.442695
      %v2119 = vpow.pop %v2118
      %v2120 = vmul.f32 %v2077, 1.442695
      %v2121 = vpow.pop %v2120
      %v2122 = vmul.f32 %v2078, 1.442695
      %v2123 = vpow.pop %v2122
      %v2124 = vmul.f32 %v2079, 1.442695
      %v2125 = vpow.pop %v2124
      %v2126 = vmul.f32 %v2080, 1.442695
      %v2127 = vpow.pop %v2126
      %v2128 = vmul.f32 %v2081, 1.442695
      %v2129 = vpow.pop %v2128
      %v2130 = vmul.f32 %v2082, 1.442695
      %v2131 = vpow.pop %v2130
      %v2132 = vmul.f32 %v2083, 1.442695
      %v2133 = vpow.pop %v2132
      %v2134 = vadd.f32 %v2085, 1.0
      %v2135 = vadd.f32 %v2087, 1.0
      %v2136 = vadd.f32 %v2089, 1.0
      %v2137 = vadd.f32 %v2091, 1.0
      %v2138 = vadd.f32 %v2093, 1.0
      %v2139 = vadd.f32 %v2095, 1.0
      %v2140 = vadd.f32 %v2097, 1.0
      %v2141 = vadd.f32 %v2099, 1.0
      %v2142 = vadd.f32 %v2101, 1.0
      %v2143 = vadd.f32 %v2103, 1.0
      %v2144 = vadd.f32 %v2105, 1.0
      %v2145 = vadd.f32 %v2107, 1.0
      %v2146 = vadd.f32 %v2109, 1.0
      %v2147 = vadd.f32 %v2111, 1.0
      %v2148 = vadd.f32 %v2113, 1.0
      %v2149 = vadd.f32 %v2115, 1.0
      %v2150 = vadd.f32 %v2117, 1.0
      %v2151 = vadd.f32 %v2119, 1.0
      %v2152 = vadd.f32 %v2121, 1.0
      %v2153 = vadd.f32 %v2123, 1.0
      %v2154 = vadd.f32 %v2125, 1.0
      %v2155 = vadd.f32 %v2127, 1.0
      %v2156 = vadd.f32 %v2129, 1.0
      %v2157 = vadd.f32 %v2131, 1.0
      %v2158 = vadd.f32 %v2133, 1.0
      %v2159 = vrcp.pop %v2134
      %v2160 = vmul.f32 1.0, %v2159
      %v2161 = vrcp.pop %v2135
      %v2162 = vmul.f32 1.0, %v2161
      %v2163 = vrcp.pop %v2136
      %v2164 = vmul.f32 1.0, %v2163
      %v2165 = vrcp.pop %v2137
      %v2166 = vmul.f32 1.0, %v2165
      %v2167 = vrcp.pop %v2138
      %v2168 = vmul.f32 1.0, %v2167
      %v2169 = vrcp.pop %v2139
      %v2170 = vmul.f32 1.0, %v2169
      %v2171 = vrcp.pop %v2140
      %v2172 = vmul.f32 1.0, %v2171
      %v2173 = vrcp.pop %v2141
      %v2174 = vmul.f32 1.0, %v2173
      %v2175 = vrcp.pop %v2142
      %v2176 = vmul.f32 1.0, %v2175
      %v2177 = vrcp.pop %v2143
      %v2178 = vmul.f32 1.0, %v2177
      %v2179 = vrcp.pop %v2144
      %v2180 = vmul.f32 1.0, %v2179
      %v2181 = vrcp.pop %v2145
      %v2182 = vmul.f32 1.0, %v2181
      %v2183 = vrcp.pop %v2146
      %v2184 = vmul.f32 1.0, %v2183
      %v2185 = vrcp.pop %v2147
      %v2186 = vmul.f32 1.0, %v2185
      %v2187 = vrcp.pop %v2148
      %v2188 = vmul.f32 1.0, %v2187
      %v2189 = vrcp.pop %v2149
      %v2190 = vmul.f32 1.0, %v2189
      %v2191 = vrcp.pop %v2150
      %v2192 = vmul.f32 1.0, %v2191
      %v2193 = vrcp.pop %v2151
      %v2194 = vmul.f32 1.0, %v2193
      %v2195 = vrcp.pop %v2152
      %v2196 = vmul.f32 1.0, %v2195
      %v2197 = vrcp.pop %v2153
      %v2198 = vmul.f32 1.0, %v2197
      %v2199 = vrcp.pop %v2154
      %v2200 = vmul.f32 1.0, %v2199
      %v2201 = vrcp.pop %v2155
      %v2202 = vmul.f32 1.0, %v2201
      %v2203 = vrcp.pop %v2156
      %v2204 = vmul.f32 1.0, %v2203
      %v2205 = vrcp.pop %v2157
      %v2206 = vmul.f32 1.0, %v2205
      %v2207 = vrcp.pop %v2158
      %v2208 = vmul.f32 1.0, %v2207
      %v2209 = vmax.f32 %v1744, %v2160
      %v2210 = vmax.f32 %v1745, %v2162
      %v2211 = vmax.f32 %v1746, %v2164
      %v2212 = vmax.f32 %v1747, %v2166
      %v2213 = vmax.f32 %v1748, %v2168
      %v2214 = vmax.f32 %v1749, %v2170
      %v2215 = vmax.f32 %v1750, %v2172
      %v2216 = vmax.f32 %v1751, %v2174
      %v2217 = vmax.f32 %v1752, %v2176
      %v2218 = vmax.f32 %v1753, %v2178
      %v2219 = vmax.f32 %v1754, %v2180
      %v2220 = vmax.f32 %v1755, %v2182
      %v2221 = vmax.f32 %v1756, %v2184
      %v2222 = vmax.f32 %v1757, %v2186
      %v2223 = vmax.f32 %v1758, %v2188
      %v2224 = vmax.f32 %v1759, %v2190
      %v2225 = vmax.f32 %v1760, %v2192
      %v2226 = vmax.f32 %v1761, %v2194
      %v2227 = vmax.f32 %v1762, %v2196
      %v2228 = vmax.f32 %v1763, %v2198
      %v2229 = vmax.f32 %v1764, %v2200
      %v2230 = vmax.f32 %v1765, %v2202
      %v2231 = vmax.f32 %v1766, %v2204
      %v2232 = vmax.f32 %v1767, %v2206
      %v2233 = vmax.f32 %v1768, %v2208
      %2234 = vst [vmem:[#allocation2] sm:$0xff] %v2209
      %2235 = vst [vmem:[#allocation2 + $0x8] sm:$0xff] %v2210
      %2236 = vst [vmem:[#allocation2 + $0x10] sm:$0xff] %v2211
      %2237 = vst [vmem:[#allocation2 + $0x18] sm:$0xff] %v2212
      %2238 = vst [vmem:[#allocation2 + $0x20] sm:$0xff] %v2213
      %2239 = vst [vmem:[#allocation2 + $0x28] sm:$0xff] %v2214
      %2240 = vst [vmem:[#allocation2 + $0x30] sm:$0xff] %v2215
      %2241 = vst [vmem:[#allocation2 + $0x38] sm:$0xff] %v2216
      %2242 = vst [vmem:[#allocation2 + $0x40] sm:$0xff] %v2217
      %2243 = vst [vmem:[#allocation2 + $0x48] sm:$0xff] %v2218
      %2244 = vst [vmem:[#allocation2 + $0x50] sm:$0xff] %v2219
      %2245 = vst [vmem:[#allocation2 + $0x58] sm:$0xff] %v2220
      %2246 = vst [vmem:[#allocation2 + $0x60] sm:$0xff] %v2221
      %2247 = vst [vmem:[#allocation2 + $0x68] sm:$0xff] %v2222
      %2248 = vst [vmem:[#allocation2 + $0x70] sm:$0xff] %v2223
      %2249 = vst [vmem:[#allocation2 + $0x78] sm:$0xff] %v2224
      %2250 = vst [vmem:[#allocation2 + $0x80] sm:$0xff] %v2225
      %2251 = vst [vmem:[#allocation2 + $0x88] sm:$0xff] %v2226
      %2252 = vst [vmem:[#allocation2 + $0x90] sm:$0xff] %v2227
      %2253 = vst [vmem:[#allocation2 + $0x98] sm:$0xff] %v2228
      %2254 = vst [vmem:[#allocation2 + $0xa0] sm:$0xff] %v2229
      %2255 = vst [vmem:[#allocation2 + $0xa8] sm:$0xff] %v2230
      %2256 = vst [vmem:[#allocation2 + $0xb0] sm:$0xff] %v2231
      %2257 = vst [vmem:[#allocation2 + $0xb8] sm:$0xff] %v2232
      %2258 = vst [vmem:[#allocation2 + $0xc0] sm:$0xf] %v2233
      %2259 = vst [vmem:[#allocation2 + $0xc4] sm:$0xf] 0.0
      %v2260 = vld [vmem:[%s4] sm:$0x1]
      %v2262 = vlaneseq
      %v2263 = vshrl.u32 %v2262, 7
      %v2264 = vsub.s32 0, %v2263
      %v2265 = vrot.slane %v2260, %v2264
      %v2267 = vld [vmem:[#allocation2] sm:$0xff]
      %v2268 = vld [vmem:[#allocation2 + $0x8] sm:$0xff]
      %v2269 = vld [vmem:[#allocation2 + $0x10] sm:$0xff]
      %v2270 = vld [vmem:[#allocation2 + $0x18] sm:$0xff]
      %v2271 = vld [vmem:[#allocation2 + $0x20] sm:$0xff]
      %v2272 = vld [vmem:[#allocation2 + $0x28] sm:$0xff]
      %v2273 = vld [vmem:[#allocation2 + $0x30] sm:$0xff]
      %v2274 = vld [vmem:[#allocation2 + $0x38] sm:$0xff]
      %v2275 = vld [vmem:[#allocation2 + $0x40] sm:$0xff]
      %v2276 = vld [vmem:[#allocation2 + $0x48] sm:$0xff]
      %v2277 = vld [vmem:[#allocation2 + $0x50] sm:$0xff]
      %v2278 = vld [vmem:[#allocation2 + $0x58] sm:$0xff]
      %v2279 = vld [vmem:[#allocation2 + $0x60] sm:$0xff]
      %v2280 = vld [vmem:[#allocation2 + $0x68] sm:$0xff]
      %v2281 = vld [vmem:[#allocation2 + $0x70] sm:$0xff]
      %v2282 = vld [vmem:[#allocation2 + $0x78] sm:$0xff]
      %v2283 = vld [vmem:[#allocation2 + $0x80] sm:$0xff]
      %v2284 = vld [vmem:[#allocation2 + $0x88] sm:$0xf]
      %v2285 = vld [vmem:[%s3] sm:$0xff]
      %vm2286 = vcmask 64512
      %v2288 = vsel %vm2286, %v2267, 0
      %v2291 = vsel %vm2286, %v2268, 0
      %v2294 = vsel %vm2286, %v2269, 0
      %v2297 = vsel %vm2286, %v2270, 0
      %v2300 = vsel %vm2286, %v2271, 0
      %v2303 = vsel %vm2286, %v2272, 0
      %v2306 = vsel %vm2286, %v2273, 0
      %v2309 = vsel %vm2286, %v2274, 0
      %v2312 = vsel %vm2286, %v2275, 0
      %v2315 = vsel %vm2286, %v2276, 0
      %v2318 = vsel %vm2286, %v2277, 0
      %v2321 = vsel %vm2286, %v2278, 0
      %v2324 = vsel %vm2286, %v2279, 0
      %v2327 = vsel %vm2286, %v2280, 0
      %v2330 = vsel %vm2286, %v2281, 0
      %v2333 = vsel %vm2286, %v2282, 0
      %v2336 = vsel %vm2286, %v2283, 0
      %v2339 = vsel %vm2286, %v2284, 0
      %2341 = vmatprep.subr.mxu0 0.0
      %2342 = vmatpush1.msra.mxu0 %v2285
      %2343 = vmatprep.subr.mxu0 0.0
      %2344 = vmatpush1.msra.mxu0 0.0
      %2345 = vmatprep.subr.mxu0 0.0
      %2346 = vmatpush1.msra.mxu0 0.0
      %2347 = vmatprep.subr.mxu0 0.0
      %2348 = vmatpush1.msra.mxu0 0.0
      %2349 = vmatprep.subr.mxu0 0.0
      %2350 = vmatpush1.msra.mxu0 0.0
      %2351 = vmatprep.subr.mxu0 0.0
      %2352 = vmatpush1.msra.mxu0 0.0
      %2353 = vmatprep.subr.mxu0 0.0
      %2354 = vmatpush1.msra.mxu0 0.0
      %2355 = vmatprep.subr.mxu0 0.0
      %2356 = vmatpush1.msra.mxu0 0.0
      %2357 = vmatprep.subr.mxu0 0.0
      %2358 = vmatpush1.msra.mxu0 0.0
      %2359 = vmatprep.subr.mxu0 0.0
      %2360 = vmatpush1.msra.mxu0 0.0
      %2361 = vmatprep.subr.mxu0 0.0
      %2362 = vmatpush1.msra.mxu0 0.0
      %2363 = vmatprep.subr.mxu0 0.0
      %2364 = vmatpush1.msra.mxu0 0.0
      %2365 = vmatprep.subr.mxu0 0.0
      %2366 = vmatpush1.msra.mxu0 0.0
      %2367 = vmatprep.subr.mxu0 0.0
      %2368 = vmatpush1.msra.mxu0 0.0
      %2369 = vmatprep.subr.mxu0 0.0
      %2370 = vmatpush1.msra.mxu0 0.0
      %2371 = vmatprep.subr.mxu0 0.0
      %2372 = vmatpush1.msra.mxu0 0.0
      %2373 = vmatprep.subr.mxu0 0.0
      %2374 = vmatpush1.msra.mxu0 0.0
      %2375 = vmatprep.subr.mxu0 0.0
      %2376 = vmatpush1.msra.mxu0 0.0
      %2377 = vmatprep.subr.mxu0 0.0
      %2378 = vmatpush1.msra.mxu0 0.0
      %2379 = vmatprep.subr.mxu0 0.0
      %2380 = vmatpush1.msra.mxu0 0.0
      %2381 = vmatprep.subr.mxu0 0.0
      %2382 = vmatpush1.msra.mxu0 0.0
      %2383 = vmatprep.subr.mxu0 0.0
      %2384 = vmatpush1.msra.mxu0 0.0
      %2385 = vmatprep.subr.mxu0 0.0
      %2386 = vmatpush1.msra.mxu0 0.0
      %2387 = vmatprep.subr.mxu0 0.0
      %2388 = vmatpush1.msra.mxu0 0.0
      %2389 = vmatprep.subr.mxu0 0.0
      %2390 = vmatpush1.msra.mxu0 0.0
      %2391 = vmatprep.subr.mxu0 0.0
      %2392 = vmatpush1.msra.mxu0 0.0
      %2393 = vmatprep.subr.mxu0 0.0
      %2394 = vmatpush1.msra.mxu0 0.0
      %2395 = vmatprep.subr.mxu0 0.0
      %2396 = vmatpush1.msra.mxu0 0.0
      %2397 = vmatprep.subr.mxu0 0.0
      %2398 = vmatpush1.msra.mxu0 0.0
      %2399 = vmatprep.subr.mxu0 0.0
      %2400 = vmatpush1.msra.mxu0 0.0
      %2401 = vmatprep.subr.mxu0 0.0
      %2402 = vmatpush1.msra.mxu0 0.0
      %2403 = vmatprep.subr.mxu0 0.0
      %2404 = vmatpush1.msra.mxu0 0.0
      %2405 = vmatprep.mubr.f32.mxu0 0.0
      %2406 = vmatmul.mubr.f32.gmra.mrb[0].mxu0 %v2288
      %v2407 = vpop.f32.mrb[0].mxu0
      %v2408 = vadd.f32 0.0, %v2407
      %v2409 = vpop.f32.mrb[0].mxu0
      %2410 = vmatprep.mubr.f32.mxu0 0.0
      %2411 = vmatmul.mubr.f32.gmra.mrb[0].mxu0 %v2291
      %v2412 = vpop.f32.mrb[0].mxu0
      %v2413 = vadd.f32 0.0, %v2412
      %v2414 = vpop.f32.mrb[0].mxu0
      %2415 = vmatprep.mubr.f32.mxu0 0.0
      %2416 = vmatmul.mubr.f32.gmra.mrb[0].mxu0 %v2294
      %v2417 = vpop.f32.mrb[0].mxu0
      %v2418 = vadd.f32 0.0, %v2417
      %v2419 = vpop.f32.mrb[0].mxu0
      %2420 = vmatprep.mubr.f32.mxu0 0.0
      %2421 = vmatmul.mubr.f32.gmra.mrb[0].mxu0 %v2297
      %v2422 = vpop.f32.mrb[0].mxu0
      %v2423 = vadd.f32 0.0, %v2422
      %v2424 = vpop.f32.mrb[0].mxu0
      %2425 = vmatprep.mubr.f32.mxu0 0.0
      %2426 = vmatmul.mubr.f32.gmra.mrb[0].mxu0 %v2300
      %v2427 = vpop.f32.mrb[0].mxu0
      %v2428 = vadd.f32 0.0, %v2427
      %v2429 = vpop.f32.mrb[0].mxu0
      %2430 = vmatprep.mubr.f32.mxu0 0.0
      %2431 = vmatmul.mubr.f32.gmra.mrb[0].mxu0 %v2303
      %v2432 = vpop.f32.mrb[0].mxu0
      %v2433 = vadd.f32 0.0, %v2432
      %v2434 = vpop.f32.mrb[0].mxu0
      %2435 = vmatprep.mubr.f32.mxu0 0.0
      %2436 = vmatmul.mubr.f32.gmra.mrb[0].mxu0 %v2306
      %v2437 = vpop.f32.mrb[0].mxu0
      %v2438 = vadd.f32 0.0, %v2437
      %v2439 = vpop.f32.mrb[0].mxu0
      %2440 = vmatprep.mubr.f32.mxu0 0.0
      %2441 = vmatmul.mubr.f32.gmra.mrb[0].mxu0 %v2309
      %v2442 = vpop.f32.mrb[0].mxu0
      %v2443 = vadd.f32 0.0, %v2442
      %v2444 = vpop.f32.mrb[0].mxu0
      %2445 = vmatprep.mubr.f32.mxu0 0.0
      %2446 = vmatmul.mubr.f32.gmra.mrb[0].mxu0 %v2312
      %v2447 = vpop.f32.mrb[0].mxu0
      %v2448 = vadd.f32 0.0, %v2447
      %v2449 = vpop.f32.mrb[0].mxu0
      %2450 = vmatprep.mubr.f32.mxu0 0.0
      %2451 = vmatmul.mubr.f32.gmra.mrb[0].mxu0 %v2315
      %v2452 = vpop.f32.mrb[0].mxu0
      %v2453 = vadd.f32 0.0, %v2452
      %v2454 = vpop.f32.mrb[0].mxu0
      %2455 = vmatprep.mubr.f32.mxu0 0.0
      %2456 = vmatmul.mubr.f32.gmra.mrb[0].mxu0 %v2318
      %v2457 = vpop.f32.mrb[0].mxu0
      %v2458 = vadd.f32 0.0, %v2457
      %v2459 = vpop.f32.mrb[0].mxu0
      %2460 = vmatprep.mubr.f32.mxu0 0.0
      %2461 = vmatmul.mubr.f32.gmra.mrb[0].mxu0 %v2321
      %v2462 = vpop.f32.mrb[0].mxu0
      %v2463 = vadd.f32 0.0, %v2462
      %v2464 = vpop.f32.mrb[0].mxu0
      %2465 = vmatprep.mubr.f32.mxu0 0.0
      %2466 = vmatmul.mubr.f32.gmra.mrb[0].mxu0 %v2324
      %v2467 = vpop.f32.mrb[0].mxu0
      %v2468 = vadd.f32 0.0, %v2467
      %v2469 = vpop.f32.mrb[0].mxu0
      %2470 = vmatprep.mubr.f32.mxu0 0.0
      %2471 = vmatmul.mubr.f32.gmra.mrb[0].mxu0 %v2327
      %v2472 = vpop.f32.mrb[0].mxu0
      %v2473 = vadd.f32 0.0, %v2472
      %v2474 = vpop.f32.mrb[0].mxu0
      %2475 = vmatprep.mubr.f32.mxu0 0.0
      %2476 = vmatmul.mubr.f32.gmra.mrb[0].mxu0 %v2330
      %v2477 = vpop.f32.mrb[0].mxu0
      %v2478 = vadd.f32 0.0, %v2477
      %v2479 = vpop.f32.mrb[0].mxu0
      %2480 = vmatprep.mubr.f32.mxu0 0.0
      %2481 = vmatmul.mubr.f32.gmra.mrb[0].mxu0 %v2333
      %v2482 = vpop.f32.mrb[0].mxu0
      %v2483 = vadd.f32 0.0, %v2482
      %v2484 = vpop.f32.mrb[0].mxu0
      %2485 = vmatprep.mubr.f32.mxu0 0.0
      %2486 = vmatmul.mubr.f32.gmra.mrb[0].mxu0 %v2336
      %v2487 = vpop.f32.mrb[0].mxu0
      %v2488 = vadd.f32 0.0, %v2487
      %v2489 = vpop.f32.mrb[0].mxu0
      %2490 = vmatprep.mubr.f32.mxu0 0.0
      %2491 = vmatmul.mubr.f32.gmra.mrb[0].mxu0 %v2339
      %v2492 = vpop.f32.mrb[0].mxu0
      %v2493 = vadd.f32 0.0, %v2492
      %v2494 = vpop.f32.mrb[0].mxu0
      %2495 = vdwg.mxu0
      %v2496 = vadd.f32 %v2265, %v2408
      %v2497 = vadd.f32 %v2265, %v2413
      %v2498 = vadd.f32 %v2265, %v2418
      %v2499 = vadd.f32 %v2265, %v2423
      %v2500 = vadd.f32 %v2265, %v2428
      %v2501 = vadd.f32 %v2265, %v2433
      %v2502 = vadd.f32 %v2265, %v2438
      %v2503 = vadd.f32 %v2265, %v2443
      %v2504 = vadd.f32 %v2265, %v2448
      %v2505 = vadd.f32 %v2265, %v2453
      %v2506 = vadd.f32 %v2265, %v2458
      %v2507 = vadd.f32 %v2265, %v2463
      %v2508 = vadd.f32 %v2265, %v2468
      %v2509 = vadd.f32 %v2265, %v2473
      %v2510 = vadd.f32 %v2265, %v2478
      %v2511 = vadd.f32 %v2265, %v2483
      %v2512 = vadd.f32 %v2265, %v2488
      %v2513 = vadd.f32 %v2265, %v2493
      %v2514 = vld [vmem:[#allocation2 + $0x1] sm:$0xff]
      %v2515 = vld [vmem:[#allocation2 + $0x9] sm:$0xff]
      %v2516 = vld [vmem:[#allocation2 + $0x11] sm:$0xff]
      %v2517 = vld [vmem:[#allocation2 + $0x19] sm:$0xff]
      %v2518 = vld [vmem:[#allocation2 + $0x21] sm:$0xff]
      %v2519 = vld [vmem:[#allocation2 + $0x29] sm:$0xff]
      %v2520 = vld [vmem:[#allocation2 + $0x31] sm:$0xff]
      %v2521 = vld [vmem:[#allocation2 + $0x39] sm:$0xff]
      %v2522 = vld [vmem:[#allocation2 + $0x41] sm:$0xff]
      %v2523 = vld [vmem:[#allocation2 + $0x49] sm:$0xff]
      %v2524 = vld [vmem:[#allocation2 + $0x51] sm:$0xff]
      %v2525 = vld [vmem:[#allocation2 + $0x59] sm:$0xff]
      %v2526 = vld [vmem:[#allocation2 + $0x61] sm:$0xff]
      %v2527 = vld [vmem:[#allocation2 + $0x69] sm:$0xff]
      %v2528 = vld [vmem:[#allocation2 + $0x71] sm:$0xff]
      %v2529 = vld [vmem:[#allocation2 + $0x79] sm:$0xff]
      %v2530 = vld [vmem:[#allocation2 + $0x81] sm:$0xff]
      %v2531 = vld [vmem:[#allocation2 + $0x89] sm:$0xf]
      %s2532 = scalar_lea.vmem %s3, 8
      %v2533 = vld [vmem:[%s2532] sm:$0xff]
      %v2535 = vsel %vm2286, %v2514, 0
      %v2538 = vsel %vm2286, %v2515, 0
      %v2541 = vsel %vm2286, %v2516, 0
      %v2544 = vsel %vm2286, %v2517, 0
      %v2547 = vsel %vm2286, %v2518, 0
      %v2550 = vsel %vm2286, %v2519, 0
      %v2553 = vsel %vm2286, %v2520, 0
      %v2556 = vsel %vm2286, %v2521, 0
      %v2559 = vsel %vm2286, %v2522, 0
      %v2562 = vsel %vm2286, %v2523, 0
      %v2565 = vsel %vm2286, %v2524, 0
      %v2568 = vsel %vm2286, %v2525, 0
      %v2571 = vsel %vm2286, %v2526, 0
      %v2574 = vsel %vm2286, %v2527, 0
      %v2577 = vsel %vm2286, %v2528, 0
      %v2580 = vsel %vm2286, %v2529, 0
      %v2583 = vsel %vm2286, %v2530, 0
      %v2586 = vsel %vm2286, %v2531, 0
      %2588 = vmatprep.subr.mxu0 0.0
      %2589 = vmatpush1.msra.mxu0 %v2533
      %2590 = vmatprep.subr.mxu0 0.0
      %2591 = vmatpush1.msra.mxu0 0.0
      %2592 = vmatprep.subr.mxu0 0.0
      %2593 = vmatpush1.msra.mxu0 0.0
      %2594 = vmatprep.subr.mxu0 0.0
      %2595 = vmatpush1.msra.mxu0 0.0
      %2596 = vmatprep.subr.mxu0 0.0
      %2597 = vmatpush1.msra.mxu0 0.0
      %2598 = vmatprep.subr.mxu0 0.0
      %2599 = vmatpush1.msra.mxu0 0.0
      %2600 = vmatprep.subr.mxu0 0.0
      %2601 = vmatpush1.msra.mxu0 0.0
      %2602 = vmatprep.subr.mxu0 0.0
      %2603 = vmatpush1.msra.mxu0 0.0
      %2604 = vmatprep.subr.mxu0 0.0
      %2605 = vmatpush1.msra.mxu0 0.0
      %2606 = vmatprep.subr.mxu0 0.0
      %2607 = vmatpush1.msra.mxu0 0.0
      %2608 = vmatprep.subr.mxu0 0.0
      %2609 = vmatpush1.msra.mxu0 0.0
      %2610 = vmatprep.subr.mxu0 0.0
      %2611 = vmatpush1.msra.mxu0 0.0
      %2612 = vmatprep.subr.mxu0 0.0
      %2613 = vmatpush1.msra.mxu0 0.0
      %2614 = vmatprep.subr.mxu0 0.0
      %2615 = vmatpush1.msra.mxu0 0.0
      %2616 = vmatprep.subr.mxu0 0.0
      %2617 = vmatpush1.msra.mxu0 0.0
      %2618 = vmatprep.subr.mxu0 0.0
      %2619 = vmatpush1.msra.mxu0 0.0
      %2620 = vmatprep.subr.mxu0 0.0
      %2621 = vmatpush1.msra.mxu0 0.0
      %2622 = vmatprep.subr.mxu0 0.0
      %2623 = vmatpush1.msra.mxu0 0.0
      %2624 = vmatprep.subr.mxu0 0.0
      %2625 = vmatpush1.msra.mxu0 0.0
      %2626 = vmatprep.subr.mxu0 0.0
      %2627 = vmatpush1.msra.mxu0 0.0
      %2628 = vmatprep.subr.mxu0 0.0
      %2629 = vmatpush1.msra.mxu0 0.0
      %2630 = vmatprep.subr.mxu0 0.0
      %2631 = vmatpush1.msra.mxu0 0.0
      %2632 = vmatprep.subr.mxu0 0.0
      %2633 = vmatpush1.msra.mxu0 0.0
      %2634 = vmatprep.subr.mxu0 0.0
      %2635 = vmatpush1.msra.mxu0 0.0
      %2636 = vmatprep.subr.mxu0 0.0
      %2637 = vmatpush1.msra.mxu0 0.0
      %2638 = vmatprep.subr.mxu0 0.0
      %2639 = vmatpush1.msra.mxu0 0.0
      %2640 = vmatprep.subr.mxu0 0.0
      %2641 = vmatpush1.msra.mxu0 0.0
      %2642 = vmatprep.subr.mxu0 0.0
      %2643 = vmatpush1.msra.mxu0 0.0
      %2644 = vmatprep.subr.mxu0 0.0
      %2645 = vmatpush1.msra.mxu0 0.0
      %2646 = vmatprep.subr.mxu0 0.0
      %2647 = vmatpush1.msra.mxu0 0.0
      %2648 = vmatprep.subr.mxu0 0.0
      %2649 = vmatpush1.msra.mxu0 0.0
      %2650 = vmatprep.subr.mxu0 0.0
      %2651 = vmatpush1.msra.mxu0 0.0
      %2652 = vmatprep.mubr.f32.mxu0 0.0
      %2653 = vmatmul.mubr.f32.gmra.mrb[0].mxu0 %v2535
      %v2654 = vpop.f32.mrb[0].mxu0
      %v2655 = vadd.f32 0.0, %v2654
      %v2656 = vpop.f32.mrb[0].mxu0
      %2657 = vmatprep.mubr.f32.mxu0 0.0
      %2658 = vmatmul.mubr.f32.gmra.mrb[0].mxu0 %v2538
      %v2659 = vpop.f32.mrb[0].mxu0
      %v2660 = vadd.f32 0.0, %v2659
      %v2661 = vpop.f32.mrb[0].mxu0
      %2662 = vmatprep.mubr.f32.mxu0 0.0
      %2663 = vmatmul.mubr.f32.gmra.mrb[0].mxu0 %v2541
      %v2664 = vpop.f32.mrb[0].mxu0
      %v2665 = vadd.f32 0.0, %v2664
      %v2666 = vpop.f32.mrb[0].mxu0
      %2667 = vmatprep.mubr.f32.mxu0 0.0
      %2668 = vmatmul.mubr.f32.gmra.mrb[0].mxu0 %v2544
      %v2669 = vpop.f32.mrb[0].mxu0
      %v2670 = vadd.f32 0.0, %v2669
      %v2671 = vpop.f32.mrb[0].mxu0
      %2672 = vmatprep.mubr.f32.mxu0 0.0
      %2673 = vmatmul.mubr.f32.gmra.mrb[0].mxu0 %v2547
      %v2674 = vpop.f32.mrb[0].mxu0
      %v2675 = vadd.f32 0.0, %v2674
      %v2676 = vpop.f32.mrb[0].mxu0
      %2677 = vmatprep.mubr.f32.mxu0 0.0
      %2678 = vmatmul.mubr.f32.gmra.mrb[0].mxu0 %v2550
      %v2679 = vpop.f32.mrb[0].mxu0
      %v2680 = vadd.f32 0.0, %v2679
      %v2681 = vpop.f32.mrb[0].mxu0
      %2682 = vmatprep.mubr.f32.mxu0 0.0
      %2683 = vmatmul.mubr.f32.gmra.mrb[0].mxu0 %v2553
      %v2684 = vpop.f32.mrb[0].mxu0
      %v2685 = vadd.f32 0.0, %v2684
      %v2686 = vpop.f32.mrb[0].mxu0
      %2687 = vmatprep.mubr.f32.mxu0 0.0
      %2688 = vmatmul.mubr.f32.gmra.mrb[0].mxu0 %v2556
      %v2689 = vpop.f32.mrb[0].mxu0
      %v2690 = vadd.f32 0.0, %v2689
      %v2691 = vpop.f32.mrb[0].mxu0
      %2692 = vmatprep.mubr.f32.mxu0 0.0
      %2693 = vmatmul.mubr.f32.gmra.mrb[0].mxu0 %v2559
      %v2694 = vpop.f32.mrb[0].mxu0
      %v2695 = vadd.f32 0.0, %v2694
      %v2696 = vpop.f32.mrb[0].mxu0
      %2697 = vmatprep.mubr.f32.mxu0 0.0
      %2698 = vmatmul.mubr.f32.gmra.mrb[0].mxu0 %v2562
      %v2699 = vpop.f32.mrb[0].mxu0
      %v2700 = vadd.f32 0.0, %v2699
      %v2701 = vpop.f32.mrb[0].mxu0
      %2702 = vmatprep.mubr.f32.mxu0 0.0
      %2703 = vmatmul.mubr.f32.gmra.mrb[0].mxu0 %v2565
      %v2704 = vpop.f32.mrb[0].mxu0
      %v2705 = vadd.f32 0.0, %v2704
      %v2706 = vpop.f32.mrb[0].mxu0
      %2707 = vmatprep.mubr.f32.mxu0 0.0
      %2708 = vmatmul.mubr.f32.gmra.mrb[0].mxu0 %v2568
      %v2709 = vpop.f32.mrb[0].mxu0
      %v2710 = vadd.f32 0.0, %v2709
      %v2711 = vpop.f32.mrb[0].mxu0
      %2712 = vmatprep.mubr.f32.mxu0 0.0
      %2713 = vmatmul.mubr.f32.gmra.mrb[0].mxu0 %v2571
      %v2714 = vpop.f32.mrb[0].mxu0
      %v2715 = vadd.f32 0.0, %v2714
      %v2716 = vpop.f32.mrb[0].mxu0
      %2717 = vmatprep.mubr.f32.mxu0 0.0
      %2718 = vmatmul.mubr.f32.gmra.mrb[0].mxu0 %v2574
      %v2719 = vpop.f32.mrb[0].mxu0
      %v2720 = vadd.f32 0.0, %v2719
      %v2721 = vpop.f32.mrb[0].mxu0
      %2722 = vmatprep.mubr.f32.mxu0 0.0
      %2723 = vmatmul.mubr.f32.gmra.mrb[0].mxu0 %v2577
      %v2724 = vpop.f32.mrb[0].mxu0
      %v2725 = vadd.f32 0.0, %v2724
      %v2726 = vpop.f32.mrb[0].mxu0
      %2727 = vmatprep.mubr.f32.mxu0 0.0
      %2728 = vmatmul.mubr.f32.gmra.mrb[0].mxu0 %v2580
      %v2729 = vpop.f32.mrb[0].mxu0
      %v2730 = vadd.f32 0.0, %v2729
      %v2731 = vpop.f32.mrb[0].mxu0
      %2732 = vmatprep.mubr.f32.mxu0 0.0
      %2733 = vmatmul.mubr.f32.gmra.mrb[0].mxu0 %v2583
      %v2734 = vpop.f32.mrb[0].mxu0
      %v2735 = vadd.f32 0.0, %v2734
      %v2736 = vpop.f32.mrb[0].mxu0
      %2737 = vmatprep.mubr.f32.mxu0 0.0
      %2738 = vmatmul.mubr.f32.gmra.mrb[0].mxu0 %v2586
      %v2739 = vpop.f32.mrb[0].mxu0
      %v2740 = vadd.f32 0.0, %v2739
      %v2741 = vpop.f32.mrb[0].mxu0
      %2742 = vdwg.mxu0
      %v2743 = vadd.f32 %v2496, %v2655
      %v2744 = vadd.f32 %v2497, %v2660
      %v2745 = vadd.f32 %v2498, %v2665
      %v2746 = vadd.f32 %v2499, %v2670
      %v2747 = vadd.f32 %v2500, %v2675
      %v2748 = vadd.f32 %v2501, %v2680
      %v2749 = vadd.f32 %v2502, %v2685
      %v2750 = vadd.f32 %v2503, %v2690
      %v2751 = vadd.f32 %v2504, %v2695
      %v2752 = vadd.f32 %v2505, %v2700
      %v2753 = vadd.f32 %v2506, %v2705
      %v2754 = vadd.f32 %v2507, %v2710
      %v2755 = vadd.f32 %v2508, %v2715
      %v2756 = vadd.f32 %v2509, %v2720
      %v2757 = vadd.f32 %v2510, %v2725
      %v2758 = vadd.f32 %v2511, %v2730
      %v2759 = vadd.f32 %v2512, %v2735
      %v2760 = vadd.f32 %v2513, %v2740
      %v2761 = vld [vmem:[#allocation2 + $0x2] sm:$0xff]
      %v2762 = vld [vmem:[#allocation2 + $0xa] sm:$0xff]
      %v2763 = vld [vmem:[#allocation2 + $0x12] sm:$0xff]
      %v2764 = vld [vmem:[#allocation2 + $0x1a] sm:$0xff]
      %v2765 = vld [vmem:[#allocation2 + $0x22] sm:$0xff]
      %v2766 = vld [vmem:[#allocation2 + $0x2a] sm:$0xff]
      %v2767 = vld [vmem:[#allocation2 + $0x32] sm:$0xff]
      %v2768 = vld [vmem:[#allocation2 + $0x3a] sm:$0xff]
      %v2769 = vld [vmem:[#allocation2 + $0x42] sm:$0xff]
      %v2770 = vld [vmem:[#allocation2 + $0x4a] sm:$0xff]
      %v2771 = vld [vmem:[#allocation2 + $0x52] sm:$0xff]
      %v2772 = vld [vmem:[#allocation2 + $0x5a] sm:$0xff]
      %v2773 = vld [vmem:[#allocation2 + $0x62] sm:$0xff]
      %v2774 = vld [vmem:[#allocation2 + $0x6a] sm:$0xff]
      %v2775 = vld [vmem:[#allocation2 + $0x72] sm:$0xff]
      %v2776 = vld [vmem:[#allocation2 + $0x7a] sm:$0xff]
      %v2777 = vld [vmem:[#allocation2 + $0x82] sm:$0xff]
      %v2778 = vld [vmem:[#allocation2 + $0x8a] sm:$0xf]
      %s2779 = scalar_lea.vmem %s3, 16
      %v2780 = vld [vmem:[%s2779] sm:$0xff]
      %v2782 = vsel %vm2286, %v2761, 0
      %v2785 = vsel %vm2286, %v2762, 0
      %v2788 = vsel %vm2286, %v2763, 0
      %v2791 = vsel %vm2286, %v2764, 0
      %v2794 = vsel %vm2286, %v2765, 0
      %v2797 = vsel %vm2286, %v2766, 0
      %v2800 = vsel %vm2286, %v2767, 0
      %v2803 = vsel %vm2286, %v2768, 0
      %v2806 = vsel %vm2286, %v2769, 0
      %v2809 = vsel %vm2286, %v2770, 0
      %v2812 = vsel %vm2286, %v2771, 0
      %v2815 = vsel %vm2286, %v2772, 0
      %v2818 = vsel %vm2286, %v2773, 0
      %v2821 = vsel %vm2286, %v2774, 0
      %v2824 = vsel %vm2286, %v2775, 0
      %v2827 = vsel %vm2286, %v2776, 0
      %v2830 = vsel %vm2286, %v2777, 0
      %v2833 = vsel %vm2286, %v2778, 0
      %2835 = vmatprep.subr.mxu0 0.0
      %2836 = vmatpush1.msra.mxu0 %v2780
      %2837 = vmatprep.subr.mxu0 0.0
      %2838 = vmatpush1.msra.mxu0 0.0
      %2839 = vmatprep.subr.mxu0 0.0
      %2840 = vmatpush1.msra.mxu0 0.0
      %2841 = vmatprep.subr.mxu0 0.0
      %2842 = vmatpush1.msra.mxu0 0.0
      %2843 = vmatprep.subr.mxu0 0.0
      %2844 = vmatpush1.msra.mxu0 0.0
      %2845 = vmatprep.subr.mxu0 0.0
      %2846 = vmatpush1.msra.mxu0 0.0
      %2847 = vmatprep.subr.mxu0 0.0
      %2848 = vmatpush1.msra.mxu0 0.0
      %2849 = vmatprep.subr.mxu0 0.0
      %2850 = vmatpush1.msra.mxu0 0.0
      %2851 = vmatprep.subr.mxu0 0.0
      %2852 = vmatpush1.msra.mxu0 0.0
      %2853 = vmatprep.subr.mxu0 0.0
      %2854 = vmatpush1.msra.mxu0 0.0
      %2855 = vmatprep.subr.mxu0 0.0
      %2856 = vmatpush1.msra.mxu0 0.0
      %2857 = vmatprep.subr.mxu0 0.0
      %2858 = vmatpush1.msra.mxu0 0.0
      %2859 = vmatprep.subr.mxu0 0.0
      %2860 = vmatpush1.msra.mxu0 0.0
      %2861 = vmatprep.subr.mxu0 0.0
      %2862 = vmatpush1.msra.mxu0 0.0
      %2863 = vmatprep.subr.mxu0 0.0
      %2864 = vmatpush1.msra.mxu0 0.0
      %2865 = vmatprep.subr.mxu0 0.0
      %2866 = vmatpush1.msra.mxu0 0.0
      %2867 = vmatprep.subr.mxu0 0.0
      %2868 = vmatpush1.msra.mxu0 0.0
      %2869 = vmatprep.subr.mxu0 0.0
      %2870 = vmatpush1.msra.mxu0 0.0
      %2871 = vmatprep.subr.mxu0 0.0
      %2872 = vmatpush1.msra.mxu0 0.0
      %2873 = vmatprep.subr.mxu0 0.0
      %2874 = vmatpush1.msra.mxu0 0.0
      %2875 = vmatprep.subr.mxu0 0.0
      %2876 = vmatpush1.msra.mxu0 0.0
      %2877 = vmatprep.subr.mxu0 0.0
      %2878 = vmatpush1.msra.mxu0 0.0
      %2879 = vmatprep.subr.mxu0 0.0
      %2880 = vmatpush1.msra.mxu0 0.0
      %2881 = vmatprep.subr.mxu0 0.0
      %2882 = vmatpush1.msra.mxu0 0.0
      %2883 = vmatprep.subr.mxu0 0.0
      %2884 = vmatpush1.msra.mxu0 0.0
      %2885 = vmatprep.subr.mxu0 0.0
      %2886 = vmatpush1.msra.mxu0 0.0
      %2887 = vmatprep.subr.mxu0 0.0
      %2888 = vmatpush1.msra.mxu0 0.0
      %2889 = vmatprep.subr.mxu0 0.0
      %2890 = vmatpush1.msra.mxu0 0.0
      %2891 = vmatprep.subr.mxu0 0.0
      %2892 = vmatpush1.msra.mxu0 0.0
      %2893 = vmatprep.subr.mxu0 0.0
      %2894 = vmatpush1.msra.mxu0 0.0
      %2895 = vmatprep.subr.mxu0 0.0
      %2896 = vmatpush1.msra.mxu0 0.0
      %2897 = vmatprep.subr.mxu0 0.0
      %2898 = vmatpush1.msra.mxu0 0.0
      %2899 = vmatprep.mubr.f32.mxu0 0.0
      %2900 = vmatmul.mubr.f32.gmra.mrb[0].mxu0 %v2782
      %v2901 = vpop.f32.mrb[0].mxu0
      %v2902 = vadd.f32 0.0, %v2901
      %v2903 = vpop.f32.mrb[0].mxu0
      %2904 = vmatprep.mubr.f32.mxu0 0.0
      %2905 = vmatmul.mubr.f32.gmra.mrb[0].mxu0 %v2785
      %v2906 = vpop.f32.mrb[0].mxu0
      %v2907 = vadd.f32 0.0, %v2906
      %v2908 = vpop.f32.mrb[0].mxu0
      %2909 = vmatprep.mubr.f32.mxu0 0.0
      %2910 = vmatmul.mubr.f32.gmra.mrb[0].mxu0 %v2788
      %v2911 = vpop.f32.mrb[0].mxu0
      %v2912 = vadd.f32 0.0, %v2911
      %v2913 = vpop.f32.mrb[0].mxu0
      %2914 = vmatprep.mubr.f32.mxu0 0.0
      %2915 = vmatmul.mubr.f32.gmra.mrb[0].mxu0 %v2791
      %v2916 = vpop.f32.mrb[0].mxu0
      %v2917 = vadd.f32 0.0, %v2916
      %v2918 = vpop.f32.mrb[0].mxu0
      %2919 = vmatprep.mubr.f32.mxu0 0.0
      %2920 = vmatmul.mubr.f32.gmra.mrb[0].mxu0 %v2794
      %v2921 = vpop.f32.mrb[0].mxu0
      %v2922 = vadd.f32 0.0, %v2921
      %v2923 = vpop.f32.mrb[0].mxu0
      %2924 = vmatprep.mubr.f32.mxu0 0.0
      %2925 = vmatmul.mubr.f32.gmra.mrb[0].mxu0 %v2797
      %v2926 = vpop.f32.mrb[0].mxu0
      %v2927 = vadd.f32 0.0, %v2926
      %v2928 = vpop.f32.mrb[0].mxu0
      %2929 = vmatprep.mubr.f32.mxu0 0.0
      %2930 = vmatmul.mubr.f32.gmra.mrb[0].mxu0 %v2800
      %v2931 = vpop.f32.mrb[0].mxu0
      %v2932 = vadd.f32 0.0, %v2931
      %v2933 = vpop.f32.mrb[0].mxu0
      %2934 = vmatprep.mubr.f32.mxu0 0.0
      %2935 = vmatmul.mubr.f32.gmra.mrb[0].mxu0 %v2803
      %v2936 = vpop.f32.mrb[0].mxu0
      %v2937 = vadd.f32 0.0, %v2936
      %v2938 = vpop.f32.mrb[0].mxu0
      %2939 = vmatprep.mubr.f32.mxu0 0.0
      %2940 = vmatmul.mubr.f32.gmra.mrb[0].mxu0 %v2806
      %v2941 = vpop.f32.mrb[0].mxu0
      %v2942 = vadd.f32 0.0, %v2941
      %v2943 = vpop.f32.mrb[0].mxu0
      %2944 = vmatprep.mubr.f32.mxu0 0.0
      %2945 = vmatmul.mubr.f32.gmra.mrb[0].mxu0 %v2809
      %v2946 = vpop.f32.mrb[0].mxu0
      %v2947 = vadd.f32 0.0, %v2946
      %v2948 = vpop.f32.mrb[0].mxu0
      %2949 = vmatprep.mubr.f32.mxu0 0.0
      %2950 = vmatmul.mubr.f32.gmra.mrb[0].mxu0 %v2812
      %v2951 = vpop.f32.mrb[0].mxu0
      %v2952 = vadd.f32 0.0, %v2951
      %v2953 = vpop.f32.mrb[0].mxu0
      %2954 = vmatprep.mubr.f32.mxu0 0.0
      %2955 = vmatmul.mubr.f32.gmra.mrb[0].mxu0 %v2815
      %v2956 = vpop.f32.mrb[0].mxu0
      %v2957 = vadd.f32 0.0, %v2956
      %v2958 = vpop.f32.mrb[0].mxu0
      %2959 = vmatprep.mubr.f32.mxu0 0.0
      %2960 = vmatmul.mubr.f32.gmra.mrb[0].mxu0 %v2818
      %v2961 = vpop.f32.mrb[0].mxu0
      %v2962 = vadd.f32 0.0, %v2961
      %v2963 = vpop.f32.mrb[0].mxu0
      %2964 = vmatprep.mubr.f32.mxu0 0.0
      %2965 = vmatmul.mubr.f32.gmra.mrb[0].mxu0 %v2821
      %v2966 = vpop.f32.mrb[0].mxu0
      %v2967 = vadd.f32 0.0, %v2966
      %v2968 = vpop.f32.mrb[0].mxu0
      %2969 = vmatprep.mubr.f32.mxu0 0.0
      %2970 = vmatmul.mubr.f32.gmra.mrb[0].mxu0 %v2824
      %v2971 = vpop.f32.mrb[0].mxu0
      %v2972 = vadd.f32 0.0, %v2971
      %v2973 = vpop.f32.mrb[0].mxu0
      %2974 = vmatprep.mubr.f32.mxu0 0.0
      %2975 = vmatmul.mubr.f32.gmra.mrb[0].mxu0 %v2827
      %v2976 = vpop.f32.mrb[0].mxu0
      %v2977 = vadd.f32 0.0, %v2976
      %v2978 = vpop.f32.mrb[0].mxu0
      %2979 = vmatprep.mubr.f32.mxu0 0.0
      %2980 = vmatmul.mubr.f32.gmra.mrb[0].mxu0 %v2830
      %v2981 = vpop.f32.mrb[0].mxu0
      %v2982 = vadd.f32 0.0, %v2981
      %v2983 = vpop.f32.mrb[0].mxu0
      %2984 = vmatprep.mubr.f32.mxu0 0.0
      %2985 = vmatmul.mubr.f32.gmra.mrb[0].mxu0 %v2833
      %v2986 = vpop.f32.mrb[0].mxu0
      %v2987 = vadd.f32 0.0, %v2986
      %v2988 = vpop.f32.mrb[0].mxu0
      %2989 = vdwg.mxu0
      %v2990 = vadd.f32 %v2743, %v2902
      %v2991 = vadd.f32 %v2744, %v2907
      %v2992 = vadd.f32 %v2745, %v2912
      %v2993 = vadd.f32 %v2746, %v2917
      %v2994 = vadd.f32 %v2747, %v2922
      %v2995 = vadd.f32 %v2748, %v2927
      %v2996 = vadd.f32 %v2749, %v2932
      %v2997 = vadd.f32 %v2750, %v2937
      %v2998 = vadd.f32 %v2751, %v2942
      %v2999 = vadd.f32 %v2752, %v2947
      %v3000 = vadd.f32 %v2753, %v2952
      %v3001 = vadd.f32 %v2754, %v2957
      %v3002 = vadd.f32 %v2755, %v2962
      %v3003 = vadd.f32 %v2756, %v2967
      %v3004 = vadd.f32 %v2757, %v2972
      %v3005 = vadd.f32 %v2758, %v2977
      %v3006 = vadd.f32 %v2759, %v2982
      %v3007 = vadd.f32 %v2760, %v2987
      %v3008 = vld [vmem:[#allocation2 + $0x3] sm:$0xff]
      %v3009 = vld [vmem:[#allocation2 + $0xb] sm:$0xff]
      %v3010 = vld [vmem:[#allocation2 + $0x13] sm:$0xff]
      %v3011 = vld [vmem:[#allocation2 + $0x1b] sm:$0xff]
      %v3012 = vld [vmem:[#allocation2 + $0x23] sm:$0xff]
      %v3013 = vld [vmem:[#allocation2 + $0x2b] sm:$0xff]
      %v3014 = vld [vmem:[#allocation2 + $0x33] sm:$0xff]
      %v3015 = vld [vmem:[#allocation2 + $0x3b] sm:$0xff]
      %v3016 = vld [vmem:[#allocation2 + $0x43] sm:$0xff]
      %v3017 = vld [vmem:[#allocation2 + $0x4b] sm:$0xff]
      %v3018 = vld [vmem:[#allocation2 + $0x53] sm:$0xff]
      %v3019 = vld [vmem:[#allocation2 + $0x5b] sm:$0xff]
      %v3020 = vld [vmem:[#allocation2 + $0x63] sm:$0xff]
      %v3021 = vld [vmem:[#allocation2 + $0x6b] sm:$0xff]
      %v3022 = vld [vmem:[#allocation2 + $0x73] sm:$0xff]
      %v3023 = vld [vmem:[#allocation2 + $0x7b] sm:$0xff]
      %v3024 = vld [vmem:[#allocation2 + $0x83] sm:$0xff]
      %v3025 = vld [vmem:[#allocation2 + $0x8b] sm:$0xf]
      %s3026 = scalar_lea.vmem %s3, 24
      %v3027 = vld [vmem:[%s3026] sm:$0xff]
      %v3029 = vsel %vm2286, %v3008, 0
      %v3032 = vsel %vm2286, %v3009, 0
      %v3035 = vsel %vm2286, %v3010, 0
      %v3038 = vsel %vm2286, %v3011, 0
      %v3041 = vsel %vm2286, %v3012, 0
      %v3044 = vsel %vm2286, %v3013, 0
      %v3047 = vsel %vm2286, %v3014, 0
      %v3050 = vsel %vm2286, %v3015, 0
      %v3053 = vsel %vm2286, %v3016, 0
      %v3056 = vsel %vm2286, %v3017, 0
      %v3059 = vsel %vm2286, %v3018, 0
      %v3062 = vsel %vm2286, %v3019, 0
      %v3065 = vsel %vm2286, %v3020, 0
      %v3068 = vsel %vm2286, %v3021, 0
      %v3071 = vsel %vm2286, %v3022, 0
      %v3074 = vsel %vm2286, %v3023, 0
      %v3077 = vsel %vm2286, %v3024, 0
      %v3080 = vsel %vm2286, %v3025, 0
      %3082 = vmatprep.subr.mxu0 0.0
      %3083 = vmatpush1.msra.mxu0 %v3027
      %3084 = vmatprep.subr.mxu0 0.0
      %3085 = vmatpush1.msra.mxu0 0.0
      %3086 = vmatprep.subr.mxu0 0.0
      %3087 = vmatpush1.msra.mxu0 0.0
      %3088 = vmatprep.subr.mxu0 0.0
      %3089 = vmatpush1.msra.mxu0 0.0
      %3090 = vmatprep.subr.mxu0 0.0
      %3091 = vmatpush1.msra.mxu0 0.0
      %3092 = vmatprep.subr.mxu0 0.0
      %3093 = vmatpush1.msra.mxu0 0.0
      %3094 = vmatprep.subr.mxu0 0.0
      %3095 = vmatpush1.msra.mxu0 0.0
      %3096 = vmatprep.subr.mxu0 0.0
      %3097 = vmatpush1.msra.mxu0 0.0
      %3098 = vmatprep.subr.mxu0 0.0
      %3099 = vmatpush1.msra.mxu0 0.0
      %3100 = vmatprep.subr.mxu0 0.0
      %3101 = vmatpush1.msra.mxu0 0.0
      %3102 = vmatprep.subr.mxu0 0.0
      %3103 = vmatpush1.msra.mxu0 0.0
      %3104 = vmatprep.subr.mxu0 0.0
      %3105 = vmatpush1.msra.mxu0 0.0
      %3106 = vmatprep.subr.mxu0 0.0
      %3107 = vmatpush1.msra.mxu0 0.0
      %3108 = vmatprep.subr.mxu0 0.0
      %3109 = vmatpush1.msra.mxu0 0.0
      %3110 = vmatprep.subr.mxu0 0.0
      %3111 = vmatpush1.msra.mxu0 0.0
      %3112 = vmatprep.subr.mxu0 0.0
      %3113 = vmatpush1.msra.mxu0 0.0
      %3114 = vmatprep.subr.mxu0 0.0
      %3115 = vmatpush1.msra.mxu0 0.0
      %3116 = vmatprep.subr.mxu0 0.0
      %3117 = vmatpush1.msra.mxu0 0.0
      %3118 = vmatprep.subr.mxu0 0.0
      %3119 = vmatpush1.msra.mxu0 0.0
      %3120 = vmatprep.subr.mxu0 0.0
      %3121 = vmatpush1.msra.mxu0 0.0
      %3122 = vmatprep.subr.mxu0 0.0
      %3123 = vmatpush1.msra.mxu0 0.0
      %3124 = vmatprep.subr.mxu0 0.0
      %3125 = vmatpush1.msra.mxu0 0.0
      %3126 = vmatprep.subr.mxu0 0.0
      %3127 = vmatpush1.msra.mxu0 0.0
      %3128 = vmatprep.subr.mxu0 0.0
      %3129 = vmatpush1.msra.mxu0 0.0
      %3130 = vmatprep.subr.mxu0 0.0
      %3131 = vmatpush1.msra.mxu0 0.0
      %3132 = vmatprep.subr.mxu0 0.0
      %3133 = vmatpush1.msra.mxu0 0.0
      %3134 = vmatprep.subr.mxu0 0.0
      %3135 = vmatpush1.msra.mxu0 0.0
      %3136 = vmatprep.subr.mxu0 0.0
      %3137 = vmatpush1.msra.mxu0 0.0
      %3138 = vmatprep.subr.mxu0 0.0
      %3139 = vmatpush1.msra.mxu0 0.0
      %3140 = vmatprep.subr.mxu0 0.0
      %3141 = vmatpush1.msra.mxu0 0.0
      %3142 = vmatprep.subr.mxu0 0.0
      %3143 = vmatpush1.msra.mxu0 0.0
      %3144 = vmatprep.subr.mxu0 0.0
      %3145 = vmatpush1.msra.mxu0 0.0
      %3146 = vmatprep.mubr.f32.mxu0 0.0
      %3147 = vmatmul.mubr.f32.gmra.mrb[0].mxu0 %v3029
      %v3148 = vpop.f32.mrb[0].mxu0
      %v3149 = vadd.f32 0.0, %v3148
      %v3150 = vpop.f32.mrb[0].mxu0
      %3151 = vmatprep.mubr.f32.mxu0 0.0
      %3152 = vmatmul.mubr.f32.gmra.mrb[0].mxu0 %v3032
      %v3153 = vpop.f32.mrb[0].mxu0
      %v3154 = vadd.f32 0.0, %v3153
      %v3155 = vpop.f32.mrb[0].mxu0
      %3156 = vmatprep.mubr.f32.mxu0 0.0
      %3157 = vmatmul.mubr.f32.gmra.mrb[0].mxu0 %v3035
      %v3158 = vpop.f32.mrb[0].mxu0
      %v3159 = vadd.f32 0.0, %v3158
      %v3160 = vpop.f32.mrb[0].mxu0
      %3161 = vmatprep.mubr.f32.mxu0 0.0
      %3162 = vmatmul.mubr.f32.gmra.mrb[0].mxu0 %v3038
      %v3163 = vpop.f32.mrb[0].mxu0
      %v3164 = vadd.f32 0.0, %v3163
      %v3165 = vpop.f32.mrb[0].mxu0
      %3166 = vmatprep.mubr.f32.mxu0 0.0
      %3167 = vmatmul.mubr.f32.gmra.mrb[0].mxu0 %v3041
      %v3168 = vpop.f32.mrb[0].mxu0
      %v3169 = vadd.f32 0.0, %v3168
      %v3170 = vpop.f32.mrb[0].mxu0
      %3171 = vmatprep.mubr.f32.mxu0 0.0
      %3172 = vmatmul.mubr.f32.gmra.mrb[0].mxu0 %v3044
      %v3173 = vpop.f32.mrb[0].mxu0
      %v3174 = vadd.f32 0.0, %v3173
      %v3175 = vpop.f32.mrb[0].mxu0
      %3176 = vmatprep.mubr.f32.mxu0 0.0
      %3177 = vmatmul.mubr.f32.gmra.mrb[0].mxu0 %v3047
      %v3178 = vpop.f32.mrb[0].mxu0
      %v3179 = vadd.f32 0.0, %v3178
      %v3180 = vpop.f32.mrb[0].mxu0
      %3181 = vmatprep.mubr.f32.mxu0 0.0
      %3182 = vmatmul.mubr.f32.gmra.mrb[0].mxu0 %v3050
      %v3183 = vpop.f32.mrb[0].mxu0
      %v3184 = vadd.f32 0.0, %v3183
      %v3185 = vpop.f32.mrb[0].mxu0
      %3186 = vmatprep.mubr.f32.mxu0 0.0
      %3187 = vmatmul.mubr.f32.gmra.mrb[0].mxu0 %v3053
      %v3188 = vpop.f32.mrb[0].mxu0
      %v3189 = vadd.f32 0.0, %v3188
      %v3190 = vpop.f32.mrb[0].mxu0
      %3191 = vmatprep.mubr.f32.mxu0 0.0
      %3192 = vmatmul.mubr.f32.gmra.mrb[0].mxu0 %v3056
      %v3193 = vpop.f32.mrb[0].mxu0
      %v3194 = vadd.f32 0.0, %v3193
      %v3195 = vpop.f32.mrb[0].mxu0
      %3196 = vmatprep.mubr.f32.mxu0 0.0
      %3197 = vmatmul.mubr.f32.gmra.mrb[0].mxu0 %v3059
      %v3198 = vpop.f32.mrb[0].mxu0
      %v3199 = vadd.f32 0.0, %v3198
      %v3200 = vpop.f32.mrb[0].mxu0
      %3201 = vmatprep.mubr.f32.mxu0 0.0
      %3202 = vmatmul.mubr.f32.gmra.mrb[0].mxu0 %v3062
      %v3203 = vpop.f32.mrb[0].mxu0
      %v3204 = vadd.f32 0.0, %v3203
      %v3205 = vpop.f32.mrb[0].mxu0
      %3206 = vmatprep.mubr.f32.mxu0 0.0
      %3207 = vmatmul.mubr.f32.gmra.mrb[0].mxu0 %v3065
      %v3208 = vpop.f32.mrb[0].mxu0
      %v3209 = vadd.f32 0.0, %v3208
      %v3210 = vpop.f32.mrb[0].mxu0
      %3211 = vmatprep.mubr.f32.mxu0 0.0
      %3212 = vmatmul.mubr.f32.gmra.mrb[0].mxu0 %v3068
      %v3213 = vpop.f32.mrb[0].mxu0
      %v3214 = vadd.f32 0.0, %v3213
      %v3215 = vpop.f32.mrb[0].mxu0
      %3216 = vmatprep.mubr.f32.mxu0 0.0
      %3217 = vmatmul.mubr.f32.gmra.mrb[0].mxu0 %v3071
      %v3218 = vpop.f32.mrb[0].mxu0
      %v3219 = vadd.f32 0.0, %v3218
      %v3220 = vpop.f32.mrb[0].mxu0
      %3221 = vmatprep.mubr.f32.mxu0 0.0
      %3222 = vmatmul.mubr.f32.gmra.mrb[0].mxu0 %v3074
      %v3223 = vpop.f32.mrb[0].mxu0
      %v3224 = vadd.f32 0.0, %v3223
      %v3225 = vpop.f32.mrb[0].mxu0
      %3226 = vmatprep.mubr.f32.mxu0 0.0
      %3227 = vmatmul.mubr.f32.gmra.mrb[0].mxu0 %v3077
      %v3228 = vpop.f32.mrb[0].mxu0
      %v3229 = vadd.f32 0.0, %v3228
      %v3230 = vpop.f32.mrb[0].mxu0
      %3231 = vmatprep.mubr.f32.mxu0 0.0
      %3232 = vmatmul.mubr.f32.gmra.mrb[0].mxu0 %v3080
      %v3233 = vpop.f32.mrb[0].mxu0
      %v3234 = vadd.f32 0.0, %v3233
      %v3235 = vpop.f32.mrb[0].mxu0
      %3236 = vdwg.mxu0
      %v3237 = vadd.f32 %v2990, %v3149
      %v3238 = vadd.f32 %v2991, %v3154
      %v3239 = vadd.f32 %v2992, %v3159
      %v3240 = vadd.f32 %v2993, %v3164
      %v3241 = vadd.f32 %v2994, %v3169
      %v3242 = vadd.f32 %v2995, %v3174
      %v3243 = vadd.f32 %v2996, %v3179
      %v3244 = vadd.f32 %v2997, %v3184
      %v3245 = vadd.f32 %v2998, %v3189
      %v3246 = vadd.f32 %v2999, %v3194
      %v3247 = vadd.f32 %v3000, %v3199
      %v3248 = vadd.f32 %v3001, %v3204
      %v3249 = vadd.f32 %v3002, %v3209
      %v3250 = vadd.f32 %v3003, %v3214
      %v3251 = vadd.f32 %v3004, %v3219
      %v3252 = vadd.f32 %v3005, %v3224
      %v3253 = vadd.f32 %v3006, %v3229
      %v3254 = vadd.f32 %v3007, %v3234
      %v3255 = vld [vmem:[#allocation2 + $0x4] sm:$0xff]
      %v3256 = vld [vmem:[#allocation2 + $0xc] sm:$0xff]
      %v3257 = vld [vmem:[#allocation2 + $0x14] sm:$0xff]
      %v3258 = vld [vmem:[#allocation2 + $0x1c] sm:$0xff]
      %v3259 = vld [vmem:[#allocation2 + $0x24] sm:$0xff]
      %v3260 = vld [vmem:[#allocation2 + $0x2c] sm:$0xff]
      %v3261 = vld [vmem:[#allocation2 + $0x34] sm:$0xff]
      %v3262 = vld [vmem:[#allocation2 + $0x3c] sm:$0xff]
      %v3263 = vld [vmem:[#allocation2 + $0x44] sm:$0xff]
      %v3264 = vld [vmem:[#allocation2 + $0x4c] sm:$0xff]
      %v3265 = vld [vmem:[#allocation2 + $0x54] sm:$0xff]
      %v3266 = vld [vmem:[#allocation2 + $0x5c] sm:$0xff]
      %v3267 = vld [vmem:[#allocation2 + $0x64] sm:$0xff]
      %v3268 = vld [vmem:[#allocation2 + $0x6c] sm:$0xff]
      %v3269 = vld [vmem:[#allocation2 + $0x74] sm:$0xff]
      %v3270 = vld [vmem:[#allocation2 + $0x7c] sm:$0xff]
      %v3271 = vld [vmem:[#allocation2 + $0x84] sm:$0xff]
      %v3272 = vld [vmem:[#allocation2 + $0x8c] sm:$0xf]
      %s3273 = scalar_lea.vmem %s3, 32
      %v3274 = vld [vmem:[%s3273] sm:$0xff]
      %v3276 = vsel %vm2286, %v3255, 0
      %v3279 = vsel %vm2286, %v3256, 0
      %v3282 = vsel %vm2286, %v3257, 0
      %v3285 = vsel %vm2286, %v3258, 0
      %v3288 = vsel %vm2286, %v3259, 0
      %v3291 = vsel %vm2286, %v3260, 0
      %v3294 = vsel %vm2286, %v3261, 0
      %v3297 = vsel %vm2286, %v3262, 0
      %v3300 = vsel %vm2286, %v3263, 0
      %v3303 = vsel %vm2286, %v3264, 0
      %v3306 = vsel %vm2286, %v3265, 0
      %v3309 = vsel %vm2286, %v3266, 0
      %v3312 = vsel %vm2286, %v3267, 0
      %v3315 = vsel %vm2286, %v3268, 0
      %v3318 = vsel %vm2286, %v3269, 0
      %v3321 = vsel %vm2286, %v3270, 0
      %v3324 = vsel %vm2286, %v3271, 0
      %v3327 = vsel %vm2286, %v3272, 0
      %3329 = vmatprep.subr.mxu0 0.0
      %3330 = vmatpush1.msra.mxu0 %v3274
      %3331 = vmatprep.subr.mxu0 0.0
      %3332 = vmatpush1.msra.mxu0 0.0
      %3333 = vmatprep.subr.mxu0 0.0
      %3334 = vmatpush1.msra.mxu0 0.0
      %3335 = vmatprep.subr.mxu0 0.0
      %3336 = vmatpush1.msra.mxu0 0.0
      %3337 = vmatprep.subr.mxu0 0.0
      %3338 = vmatpush1.msra.mxu0 0.0
      %3339 = vmatprep.subr.mxu0 0.0
      %3340 = vmatpush1.msra.mxu0 0.0
      %3341 = vmatprep.subr.mxu0 0.0
      %3342 = vmatpush1.msra.mxu0 0.0
      %3343 = vmatprep.subr.mxu0 0.0
      %3344 = vmatpush1.msra.mxu0 0.0
      %3345 = vmatprep.subr.mxu0 0.0
      %3346 = vmatpush1.msra.mxu0 0.0
      %3347 = vmatprep.subr.mxu0 0.0
      %3348 = vmatpush1.msra.mxu0 0.0
      %3349 = vmatprep.subr.mxu0 0.0
      %3350 = vmatpush1.msra.mxu0 0.0
      %3351 = vmatprep.subr.mxu0 0.0
      %3352 = vmatpush1.msra.mxu0 0.0
      %3353 = vmatprep.subr.mxu0 0.0
      %3354 = vmatpush1.msra.mxu0 0.0
      %3355 = vmatprep.subr.mxu0 0.0
      %3356 = vmatpush1.msra.mxu0 0.0
      %3357 = vmatprep.subr.mxu0 0.0
      %3358 = vmatpush1.msra.mxu0 0.0
      %3359 = vmatprep.subr.mxu0 0.0
      %3360 = vmatpush1.msra.mxu0 0.0
      %3361 = vmatprep.subr.mxu0 0.0
      %3362 = vmatpush1.msra.mxu0 0.0
      %3363 = vmatprep.subr.mxu0 0.0
      %3364 = vmatpush1.msra.mxu0 0.0
      %3365 = vmatprep.subr.mxu0 0.0
      %3366 = vmatpush1.msra.mxu0 0.0
      %3367 = vmatprep.subr.mxu0 0.0
      %3368 = vmatpush1.msra.mxu0 0.0
      %3369 = vmatprep.subr.mxu0 0.0
      %3370 = vmatpush1.msra.mxu0 0.0
      %3371 = vmatprep.subr.mxu0 0.0
      %3372 = vmatpush1.msra.mxu0 0.0
      %3373 = vmatprep.subr.mxu0 0.0
      %3374 = vmatpush1.msra.mxu0 0.0
      %3375 = vmatprep.subr.mxu0 0.0
      %3376 = vmatpush1.msra.mxu0 0.0
      %3377 = vmatprep.subr.mxu0 0.0
      %3378 = vmatpush1.msra.mxu0 0.0
      %3379 = vmatprep.subr.mxu0 0.0
      %3380 = vmatpush1.msra.mxu0 0.0
      %3381 = vmatprep.subr.mxu0 0.0
      %3382 = vmatpush1.msra.mxu0 0.0
      %3383 = vmatprep.subr.mxu0 0.0
      %3384 = vmatpush1.msra.mxu0 0.0
      %3385 = vmatprep.subr.mxu0 0.0
      %3386 = vmatpush1.msra.mxu0 0.0
      %3387 = vmatprep.subr.mxu0 0.0
      %3388 = vmatpush1.msra.mxu0 0.0
      %3389 = vmatprep.subr.mxu0 0.0
      %3390 = vmatpush1.msra.mxu0 0.0
      %3391 = vmatprep.subr.mxu0 0.0
      %3392 = vmatpush1.msra.mxu0 0.0
      %3393 = vmatprep.mubr.f32.mxu0 0.0
      %3394 = vmatmul.mubr.f32.gmra.mrb[0].mxu0 %v3276
      %v3395 = vpop.f32.mrb[0].mxu0
      %v3396 = vadd.f32 0.0, %v3395
      %v3397 = vpop.f32.mrb[0].mxu0
      %3398 = vmatprep.mubr.f32.mxu0 0.0
      %3399 = vmatmul.mubr.f32.gmra.mrb[0].mxu0 %v3279
      %v3400 = vpop.f32.mrb[0].mxu0
      %v3401 = vadd.f32 0.0, %v3400
      %v3402 = vpop.f32.mrb[0].mxu0
      %3403 = vmatprep.mubr.f32.mxu0 0.0
      %3404 = vmatmul.mubr.f32.gmra.mrb[0].mxu0 %v3282
      %v3405 = vpop.f32.mrb[0].mxu0
      %v3406 = vadd.f32 0.0, %v3405
      %v3407 = vpop.f32.mrb[0].mxu0
      %3408 = vmatprep.mubr.f32.mxu0 0.0
      %3409 = vmatmul.mubr.f32.gmra.mrb[0].mxu0 %v3285
      %v3410 = vpop.f32.mrb[0].mxu0
      %v3411 = vadd.f32 0.0, %v3410
      %v3412 = vpop.f32.mrb[0].mxu0
      %3413 = vmatprep.mubr.f32.mxu0 0.0
      %3414 = vmatmul.mubr.f32.gmra.mrb[0].mxu0 %v3288
      %v3415 = vpop.f32.mrb[0].mxu0
      %v3416 = vadd.f32 0.0, %v3415
      %v3417 = vpop.f32.mrb[0].mxu0
      %3418 = vmatprep.mubr.f32.mxu0 0.0
      %3419 = vmatmul.mubr.f32.gmra.mrb[0].mxu0 %v3291
      %v3420 = vpop.f32.mrb[0].mxu0
      %v3421 = vadd.f32 0.0, %v3420
      %v3422 = vpop.f32.mrb[0].mxu0
      %3423 = vmatprep.mubr.f32.mxu0 0.0
      %3424 = vmatmul.mubr.f32.gmra.mrb[0].mxu0 %v3294
      %v3425 = vpop.f32.mrb[0].mxu0
      %v3426 = vadd.f32 0.0, %v3425
      %v3427 = vpop.f32.mrb[0].mxu0
      %3428 = vmatprep.mubr.f32.mxu0 0.0
      %3429 = vmatmul.mubr.f32.gmra.mrb[0].mxu0 %v3297
      %v3430 = vpop.f32.mrb[0].mxu0
      %v3431 = vadd.f32 0.0, %v3430
      %v3432 = vpop.f32.mrb[0].mxu0
      %3433 = vmatprep.mubr.f32.mxu0 0.0
      %3434 = vmatmul.mubr.f32.gmra.mrb[0].mxu0 %v3300
      %v3435 = vpop.f32.mrb[0].mxu0
      %v3436 = vadd.f32 0.0, %v3435
      %v3437 = vpop.f32.mrb[0].mxu0
      %3438 = vmatprep.mubr.f32.mxu0 0.0
      %3439 = vmatmul.mubr.f32.gmra.mrb[0].mxu0 %v3303
      %v3440 = vpop.f32.mrb[0].mxu0
      %v3441 = vadd.f32 0.0, %v3440
      %v3442 = vpop.f32.mrb[0].mxu0
      %3443 = vmatprep.mubr.f32.mxu0 0.0
      %3444 = vmatmul.mubr.f32.gmra.mrb[0].mxu0 %v3306
      %v3445 = vpop.f32.mrb[0].mxu0
      %v3446 = vadd.f32 0.0, %v3445
      %v3447 = vpop.f32.mrb[0].mxu0
      %3448 = vmatprep.mubr.f32.mxu0 0.0
      %3449 = vmatmul.mubr.f32.gmra.mrb[0].mxu0 %v3309
      %v3450 = vpop.f32.mrb[0].mxu0
      %v3451 = vadd.f32 0.0, %v3450
      %v3452 = vpop.f32.mrb[0].mxu0
      %3453 = vmatprep.mubr.f32.mxu0 0.0
      %3454 = vmatmul.mubr.f32.gmra.mrb[0].mxu0 %v3312
      %v3455 = vpop.f32.mrb[0].mxu0
      %v3456 = vadd.f32 0.0, %v3455
      %v3457 = vpop.f32.mrb[0].mxu0
      %3458 = vmatprep.mubr.f32.mxu0 0.0
      %3459 = vmatmul.mubr.f32.gmra.mrb[0].mxu0 %v3315
      %v3460 = vpop.f32.mrb[0].mxu0
      %v3461 = vadd.f32 0.0, %v3460
      %v3462 = vpop.f32.mrb[0].mxu0
      %3463 = vmatprep.mubr.f32.mxu0 0.0
      %3464 = vmatmul.mubr.f32.gmra.mrb[0].mxu0 %v3318
      %v3465 = vpop.f32.mrb[0].mxu0
      %v3466 = vadd.f32 0.0, %v3465
      %v3467 = vpop.f32.mrb[0].mxu0
      %3468 = vmatprep.mubr.f32.mxu0 0.0
      %3469 = vmatmul.mubr.f32.gmra.mrb[0].mxu0 %v3321
      %v3470 = vpop.f32.mrb[0].mxu0
      %v3471 = vadd.f32 0.0, %v3470
      %v3472 = vpop.f32.mrb[0].mxu0
      %3473 = vmatprep.mubr.f32.mxu0 0.0
      %3474 = vmatmul.mubr.f32.gmra.mrb[0].mxu0 %v3324
      %v3475 = vpop.f32.mrb[0].mxu0
      %v3476 = vadd.f32 0.0, %v3475
      %v3477 = vpop.f32.mrb[0].mxu0
      %3478 = vmatprep.mubr.f32.mxu0 0.0
      %3479 = vmatmul.mubr.f32.gmra.mrb[0].mxu0 %v3327
      %v3480 = vpop.f32.mrb[0].mxu0
      %v3481 = vadd.f32 0.0, %v3480
      %v3482 = vpop.f32.mrb[0].mxu0
      %3483 = vdwg.mxu0
      %v3484 = vadd.f32 %v3237, %v3396
      %v3485 = vadd.f32 %v3238, %v3401
      %v3486 = vadd.f32 %v3239, %v3406
      %v3487 = vadd.f32 %v3240, %v3411
      %v3488 = vadd.f32 %v3241, %v3416
      %v3489 = vadd.f32 %v3242, %v3421
      %v3490 = vadd.f32 %v3243, %v3426
      %v3491 = vadd.f32 %v3244, %v3431
      %v3492 = vadd.f32 %v3245, %v3436
      %v3493 = vadd.f32 %v3246, %v3441
      %v3494 = vadd.f32 %v3247, %v3446
      %v3495 = vadd.f32 %v3248, %v3451
      %v3496 = vadd.f32 %v3249, %v3456
      %v3497 = vadd.f32 %v3250, %v3461
      %v3498 = vadd.f32 %v3251, %v3466
      %v3499 = vadd.f32 %v3252, %v3471
      %v3500 = vadd.f32 %v3253, %v3476
      %v3501 = vadd.f32 %v3254, %v3481
      %v3502 = vld [vmem:[#allocation2 + $0xe] sm:$0xff]
      %v3503 = vld [vmem:[#allocation2 + $0x16] sm:$0xff]
      %v3504 = vld [vmem:[#allocation2 + $0x1e] sm:$0xff]
      %v3505 = vld [vmem:[#allocation2 + $0x26] sm:$0xff]
      %v3506 = vld [vmem:[#allocation2 + $0x2e] sm:$0xff]
      %v3507 = vld [vmem:[#allocation2 + $0x36] sm:$0xff]
      %v3508 = vld [vmem:[#allocation2 + $0x3e] sm:$0xff]
      %v3509 = vld [vmem:[#allocation2 + $0x46] sm:$0xff]
      %v3510 = vld [vmem:[#allocation2 + $0x4e] sm:$0xff]
      %v3511 = vld [vmem:[#allocation2 + $0x56] sm:$0xff]
      %v3512 = vld [vmem:[#allocation2 + $0x5e] sm:$0xff]
      %v3513 = vld [vmem:[#allocation2 + $0x66] sm:$0xff]
      %v3514 = vld [vmem:[#allocation2 + $0x6e] sm:$0xff]
      %v3515 = vld [vmem:[#allocation2 + $0x76] sm:$0xff]
      %v3516 = vld [vmem:[#allocation2 + $0x7e] sm:$0xff]
      %v3517 = vld [vmem:[#allocation2 + $0x86] sm:$0xff]
      %v3518 = vld [vmem:[#allocation2 + $0x8e] sm:$0xff]
      %v3519 = vld [vmem:[#allocation2 + $0x96] sm:$0xf]
      %s3520 = scalar_lea.vmem %s3, 40
      %v3521 = vld [vmem:[%s3520] sm:$0xff]
      %v3523 = vsel %vm2286, %v3502, 0
      %v3526 = vsel %vm2286, %v3503, 0
      %v3529 = vsel %vm2286, %v3504, 0
      %v3532 = vsel %vm2286, %v3505, 0
      %v3535 = vsel %vm2286, %v3506, 0
      %v3538 = vsel %vm2286, %v3507, 0
      %v3541 = vsel %vm2286, %v3508, 0
      %v3544 = vsel %vm2286, %v3509, 0
      %v3547 = vsel %vm2286, %v3510, 0
      %v3550 = vsel %vm2286, %v3511, 0
      %v3553 = vsel %vm2286, %v3512, 0
      %v3556 = vsel %vm2286, %v3513, 0
      %v3559 = vsel %vm2286, %v3514, 0
      %v3562 = vsel %vm2286, %v3515, 0
      %v3565 = vsel %vm2286, %v3516, 0
      %v3568 = vsel %vm2286, %v3517, 0
      %v3571 = vsel %vm2286, %v3518, 0
      %v3574 = vsel %vm2286, %v3519, 0
      %3576 = vmatprep.subr.mxu0 0.0
      %3577 = vmatpush1.msra.mxu0 %v3521
      %3578 = vmatprep.subr.mxu0 0.0
      %3579 = vmatpush1.msra.mxu0 0.0
      %3580 = vmatprep.subr.mxu0 0.0
      %3581 = vmatpush1.msra.mxu0 0.0
      %3582 = vmatprep.subr.mxu0 0.0
      %3583 = vmatpush1.msra.mxu0 0.0
      %3584 = vmatprep.subr.mxu0 0.0
      %3585 = vmatpush1.msra.mxu0 0.0
      %3586 = vmatprep.subr.mxu0 0.0
      %3587 = vmatpush1.msra.mxu0 0.0
      %3588 = vmatprep.subr.mxu0 0.0
      %3589 = vmatpush1.msra.mxu0 0.0
      %3590 = vmatprep.subr.mxu0 0.0
      %3591 = vmatpush1.msra.mxu0 0.0
      %3592 = vmatprep.subr.mxu0 0.0
      %3593 = vmatpush1.msra.mxu0 0.0
      %3594 = vmatprep.subr.mxu0 0.0
      %3595 = vmatpush1.msra.mxu0 0.0
      %3596 = vmatprep.subr.mxu0 0.0
      %3597 = vmatpush1.msra.mxu0 0.0
      %3598 = vmatprep.subr.mxu0 0.0
      %3599 = vmatpush1.msra.mxu0 0.0
      %3600 = vmatprep.subr.mxu0 0.0
      %3601 = vmatpush1.msra.mxu0 0.0
      %3602 = vmatprep.subr.mxu0 0.0
      %3603 = vmatpush1.msra.mxu0 0.0
      %3604 = vmatprep.subr.mxu0 0.0
      %3605 = vmatpush1.msra.mxu0 0.0
      %3606 = vmatprep.subr.mxu0 0.0
      %3607 = vmatpush1.msra.mxu0 0.0
      %3608 = vmatprep.subr.mxu0 0.0
      %3609 = vmatpush1.msra.mxu0 0.0
      %3610 = vmatprep.subr.mxu0 0.0
      %3611 = vmatpush1.msra.mxu0 0.0
      %3612 = vmatprep.subr.mxu0 0.0
      %3613 = vmatpush1.msra.mxu0 0.0
      %3614 = vmatprep.subr.mxu0 0.0
      %3615 = vmatpush1.msra.mxu0 0.0
      %3616 = vmatprep.subr.mxu0 0.0
      %3617 = vmatpush1.msra.mxu0 0.0
      %3618 = vmatprep.subr.mxu0 0.0
      %3619 = vmatpush1.msra.mxu0 0.0
      %3620 = vmatprep.subr.mxu0 0.0
      %3621 = vmatpush1.msra.mxu0 0.0
      %3622 = vmatprep.subr.mxu0 0.0
      %3623 = vmatpush1.msra.mxu0 0.0
      %3624 = vmatprep.subr.mxu0 0.0
      %3625 = vmatpush1.msra.mxu0 0.0
      %3626 = vmatprep.subr.mxu0 0.0
      %3627 = vmatpush1.msra.mxu0 0.0
      %3628 = vmatprep.subr.mxu0 0.0
      %3629 = vmatpush1.msra.mxu0 0.0
      %3630 = vmatprep.subr.mxu0 0.0
      %3631 = vmatpush1.msra.mxu0 0.0
      %3632 = vmatprep.subr.mxu0 0.0
      %3633 = vmatpush1.msra.mxu0 0.0
      %3634 = vmatprep.subr.mxu0 0.0
      %3635 = vmatpush1.msra.mxu0 0.0
      %3636 = vmatprep.subr.mxu0 0.0
      %3637 = vmatpush1.msra.mxu0 0.0
      %3638 = vmatprep.subr.mxu0 0.0
      %3639 = vmatpush1.msra.mxu0 0.0
      %3640 = vmatprep.mubr.f32.mxu0 0.0
      %3641 = vmatmul.mubr.f32.gmra.mrb[0].mxu0 %v3523
      %v3642 = vpop.f32.mrb[0].mxu0
      %v3643 = vadd.f32 0.0, %v3642
      %v3644 = vpop.f32.mrb[0].mxu0
      %3645 = vmatprep.mubr.f32.mxu0 0.0
      %3646 = vmatmul.mubr.f32.gmra.mrb[0].mxu0 %v3526
      %v3647 = vpop.f32.mrb[0].mxu0
      %v3648 = vadd.f32 0.0, %v3647
      %v3649 = vpop.f32.mrb[0].mxu0
      %3650 = vmatprep.mubr.f32.mxu0 0.0
      %3651 = vmatmul.mubr.f32.gmra.mrb[0].mxu0 %v3529
      %v3652 = vpop.f32.mrb[0].mxu0
      %v3653 = vadd.f32 0.0, %v3652
      %v3654 = vpop.f32.mrb[0].mxu0
      %3655 = vmatprep.mubr.f32.mxu0 0.0
      %3656 = vmatmul.mubr.f32.gmra.mrb[0].mxu0 %v3532
      %v3657 = vpop.f32.mrb[0].mxu0
      %v3658 = vadd.f32 0.0, %v3657
      %v3659 = vpop.f32.mrb[0].mxu0
      %3660 = vmatprep.mubr.f32.mxu0 0.0
      %3661 = vmatmul.mubr.f32.gmra.mrb[0].mxu0 %v3535
      %v3662 = vpop.f32.mrb[0].mxu0
      %v3663 = vadd.f32 0.0, %v3662
      %v3664 = vpop.f32.mrb[0].mxu0
      %3665 = vmatprep.mubr.f32.mxu0 0.0
      %3666 = vmatmul.mubr.f32.gmra.mrb[0].mxu0 %v3538
      %v3667 = vpop.f32.mrb[0].mxu0
      %v3668 = vadd.f32 0.0, %v3667
      %v3669 = vpop.f32.mrb[0].mxu0
      %3670 = vmatprep.mubr.f32.mxu0 0.0
      %3671 = vmatmul.mubr.f32.gmra.mrb[0].mxu0 %v3541
      %v3672 = vpop.f32.mrb[0].mxu0
      %v3673 = vadd.f32 0.0, %v3672
      %v3674 = vpop.f32.mrb[0].mxu0
      %3675 = vmatprep.mubr.f32.mxu0 0.0
      %3676 = vmatmul.mubr.f32.gmra.mrb[0].mxu0 %v3544
      %v3677 = vpop.f32.mrb[0].mxu0
      %v3678 = vadd.f32 0.0, %v3677
      %v3679 = vpop.f32.mrb[0].mxu0
      %3680 = vmatprep.mubr.f32.mxu0 0.0
      %3681 = vmatmul.mubr.f32.gmra.mrb[0].mxu0 %v3547
      %v3682 = vpop.f32.mrb[0].mxu0
      %v3683 = vadd.f32 0.0, %v3682
      %v3684 = vpop.f32.mrb[0].mxu0
      %3685 = vmatprep.mubr.f32.mxu0 0.0
      %3686 = vmatmul.mubr.f32.gmra.mrb[0].mxu0 %v3550
      %v3687 = vpop.f32.mrb[0].mxu0
      %v3688 = vadd.f32 0.0, %v3687
      %v3689 = vpop.f32.mrb[0].mxu0
      %3690 = vmatprep.mubr.f32.mxu0 0.0
      %3691 = vmatmul.mubr.f32.gmra.mrb[0].mxu0 %v3553
      %v3692 = vpop.f32.mrb[0].mxu0
      %v3693 = vadd.f32 0.0, %v3692
      %v3694 = vpop.f32.mrb[0].mxu0
      %3695 = vmatprep.mubr.f32.mxu0 0.0
      %3696 = vmatmul.mubr.f32.gmra.mrb[0].mxu0 %v3556
      %v3697 = vpop.f32.mrb[0].mxu0
      %v3698 = vadd.f32 0.0, %v3697
      %v3699 = vpop.f32.mrb[0].mxu0
      %3700 = vmatprep.mubr.f32.mxu0 0.0
      %3701 = vmatmul.mubr.f32.gmra.mrb[0].mxu0 %v3559
      %v3702 = vpop.f32.mrb[0].mxu0
      %v3703 = vadd.f32 0.0, %v3702
      %v3704 = vpop.f32.mrb[0].mxu0
      %3705 = vmatprep.mubr.f32.mxu0 0.0
      %3706 = vmatmul.mubr.f32.gmra.mrb[0].mxu0 %v3562
      %v3707 = vpop.f32.mrb[0].mxu0
      %v3708 = vadd.f32 0.0, %v3707
      %v3709 = vpop.f32.mrb[0].mxu0
      %3710 = vmatprep.mubr.f32.mxu0 0.0
      %3711 = vmatmul.mubr.f32.gmra.mrb[0].mxu0 %v3565
      %v3712 = vpop.f32.mrb[0].mxu0
      %v3713 = vadd.f32 0.0, %v3712
      %v3714 = vpop.f32.mrb[0].mxu0
      %3715 = vmatprep.mubr.f32.mxu0 0.0
      %3716 = vmatmul.mubr.f32.gmra.mrb[0].mxu0 %v3568
      %v3717 = vpop.f32.mrb[0].mxu0
      %v3718 = vadd.f32 0.0, %v3717
      %v3719 = vpop.f32.mrb[0].mxu0
      %3720 = vmatprep.mubr.f32.mxu0 0.0
      %3721 = vmatmul.mubr.f32.gmra.mrb[0].mxu0 %v3571
      %v3722 = vpop.f32.mrb[0].mxu0
      %v3723 = vadd.f32 0.0, %v3722
      %v3724 = vpop.f32.mrb[0].mxu0
      %3725 = vmatprep.mubr.f32.mxu0 0.0
      %3726 = vmatmul.mubr.f32.gmra.mrb[0].mxu0 %v3574
      %v3727 = vpop.f32.mrb[0].mxu0
      %v3728 = vadd.f32 0.0, %v3727
      %v3729 = vpop.f32.mrb[0].mxu0
      %3730 = vdwg.mxu0
      %v3731 = vadd.f32 %v3484, %v3643
      %v3732 = vadd.f32 %v3485, %v3648
      %v3733 = vadd.f32 %v3486, %v3653
      %v3734 = vadd.f32 %v3487, %v3658
      %v3735 = vadd.f32 %v3488, %v3663
      %v3736 = vadd.f32 %v3489, %v3668
      %v3737 = vadd.f32 %v3490, %v3673
      %v3738 = vadd.f32 %v3491, %v3678
      %v3739 = vadd.f32 %v3492, %v3683
      %v3740 = vadd.f32 %v3493, %v3688
      %v3741 = vadd.f32 %v3494, %v3693
      %v3742 = vadd.f32 %v3495, %v3698
      %v3743 = vadd.f32 %v3496, %v3703
      %v3744 = vadd.f32 %v3497, %v3708
      %v3745 = vadd.f32 %v3498, %v3713
      %v3746 = vadd.f32 %v3499, %v3718
      %v3747 = vadd.f32 %v3500, %v3723
      %v3748 = vadd.f32 %v3501, %v3728
      %v3749 = vld [vmem:[#allocation2 + $0xf] sm:$0xff]
      %v3750 = vld [vmem:[#allocation2 + $0x17] sm:$0xff]
      %v3751 = vld [vmem:[#allocation2 + $0x1f] sm:$0xff]
      %v3752 = vld [vmem:[#allocation2 + $0x27] sm:$0xff]
      %v3753 = vld [vmem:[#allocation2 + $0x2f] sm:$0xff]
      %v3754 = vld [vmem:[#allocation2 + $0x37] sm:$0xff]
      %v3755 = vld [vmem:[#allocation2 + $0x3f] sm:$0xff]
      %v3756 = vld [vmem:[#allocation2 + $0x47] sm:$0xff]
      %v3757 = vld [vmem:[#allocation2 + $0x4f] sm:$0xff]
      %v3758 = vld [vmem:[#allocation2 + $0x57] sm:$0xff]
      %v3759 = vld [vmem:[#allocation2 + $0x5f] sm:$0xff]
      %v3760 = vld [vmem:[#allocation2 + $0x67] sm:$0xff]
      %v3761 = vld [vmem:[#allocation2 + $0x6f] sm:$0xff]
      %v3762 = vld [vmem:[#allocation2 + $0x77] sm:$0xff]
      %v3763 = vld [vmem:[#allocation2 + $0x7f] sm:$0xff]
      %v3764 = vld [vmem:[#allocation2 + $0x87] sm:$0xff]
      %v3765 = vld [vmem:[#allocation2 + $0x8f] sm:$0xff]
      %v3766 = vld [vmem:[#allocation2 + $0x97] sm:$0xf]
      %s3767 = scalar_lea.vmem %s3, 48
      %v3768 = vld [vmem:[%s3767] sm:$0xff]
      %v3770 = vsel %vm2286, %v3749, 0
      %v3773 = vsel %vm2286, %v3750, 0
      %v3776 = vsel %vm2286, %v3751, 0
      %v3779 = vsel %vm2286, %v3752, 0
      %v3782 = vsel %vm2286, %v3753, 0
      %v3785 = vsel %vm2286, %v3754, 0
      %v3788 = vsel %vm2286, %v3755, 0
      %v3791 = vsel %vm2286, %v3756, 0
      %v3794 = vsel %vm2286, %v3757, 0
      %v3797 = vsel %vm2286, %v3758, 0
      %v3800 = vsel %vm2286, %v3759, 0
      %v3803 = vsel %vm2286, %v3760, 0
      %v3806 = vsel %vm2286, %v3761, 0
      %v3809 = vsel %vm2286, %v3762, 0
      %v3812 = vsel %vm2286, %v3763, 0
      %v3815 = vsel %vm2286, %v3764, 0
      %v3818 = vsel %vm2286, %v3765, 0
      %v3821 = vsel %vm2286, %v3766, 0
      %3823 = vmatprep.subr.mxu0 0.0
      %3824 = vmatpush1.msra.mxu0 %v3768
      %3825 = vmatprep.subr.mxu0 0.0
      %3826 = vmatpush1.msra.mxu0 0.0
      %3827 = vmatprep.subr.mxu0 0.0
      %3828 = vmatpush1.msra.mxu0 0.0
      %3829 = vmatprep.subr.mxu0 0.0
      %3830 = vmatpush1.msra.mxu0 0.0
      %3831 = vmatprep.subr.mxu0 0.0
      %3832 = vmatpush1.msra.mxu0 0.0
      %3833 = vmatprep.subr.mxu0 0.0
      %3834 = vmatpush1.msra.mxu0 0.0
      %3835 = vmatprep.subr.mxu0 0.0
      %3836 = vmatpush1.msra.mxu0 0.0
      %3837 = vmatprep.subr.mxu0 0.0
      %3838 = vmatpush1.msra.mxu0 0.0
      %3839 = vmatprep.subr.mxu0 0.0
      %3840 = vmatpush1.msra.mxu0 0.0
      %3841 = vmatprep.subr.mxu0 0.0
      %3842 = vmatpush1.msra.mxu0 0.0
      %3843 = vmatprep.subr.mxu0 0.0
      %3844 = vmatpush1.msra.mxu0 0.0
      %3845 = vmatprep.subr.mxu0 0.0
      %3846 = vmatpush1.msra.mxu0 0.0
      %3847 = vmatprep.subr.mxu0 0.0
      %3848 = vmatpush1.msra.mxu0 0.0
      %3849 = vmatprep.subr.mxu0 0.0
      %3850 = vmatpush1.msra.mxu0 0.0
      %3851 = vmatprep.subr.mxu0 0.0
      %3852 = vmatpush1.msra.mxu0 0.0
      %3853 = vmatprep.subr.mxu0 0.0
      %3854 = vmatpush1.msra.mxu0 0.0
      %3855 = vmatprep.subr.mxu0 0.0
      %3856 = vmatpush1.msra.mxu0 0.0
      %3857 = vmatprep.subr.mxu0 0.0
      %3858 = vmatpush1.msra.mxu0 0.0
      %3859 = vmatprep.subr.mxu0 0.0
      %3860 = vmatpush1.msra.mxu0 0.0
      %3861 = vmatprep.subr.mxu0 0.0
      %3862 = vmatpush1.msra.mxu0 0.0
      %3863 = vmatprep.subr.mxu0 0.0
      %3864 = vmatpush1.msra.mxu0 0.0
      %3865 = vmatprep.subr.mxu0 0.0
      %3866 = vmatpush1.msra.mxu0 0.0
      %3867 = vmatprep.subr.mxu0 0.0
      %3868 = vmatpush1.msra.mxu0 0.0
      %3869 = vmatprep.subr.mxu0 0.0
      %3870 = vmatpush1.msra.mxu0 0.0
      %3871 = vmatprep.subr.mxu0 0.0
      %3872 = vmatpush1.msra.mxu0 0.0
      %3873 = vmatprep.subr.mxu0 0.0
      %3874 = vmatpush1.msra.mxu0 0.0
      %3875 = vmatprep.subr.mxu0 0.0
      %3876 = vmatpush1.msra.mxu0 0.0
      %3877 = vmatprep.subr.mxu0 0.0
      %3878 = vmatpush1.msra.mxu0 0.0
      %3879 = vmatprep.subr.mxu0 0.0
      %3880 = vmatpush1.msra.mxu0 0.0
      %3881 = vmatprep.subr.mxu0 0.0
      %3882 = vmatpush1.msra.mxu0 0.0
      %3883 = vmatprep.subr.mxu0 0.0
      %3884 = vmatpush1.msra.mxu0 0.0
      %3885 = vmatprep.subr.mxu0 0.0
      %3886 = vmatpush1.msra.mxu0 0.0
      %3887 = vmatprep.mubr.f32.mxu0 0.0
      %3888 = vmatmul.mubr.f32.gmra.mrb[0].mxu0 %v3770
      %v3889 = vpop.f32.mrb[0].mxu0
      %v3890 = vadd.f32 0.0, %v3889
      %v3891 = vpop.f32.mrb[0].mxu0
      %3892 = vmatprep.mubr.f32.mxu0 0.0
      %3893 = vmatmul.mubr.f32.gmra.mrb[0].mxu0 %v3773
      %v3894 = vpop.f32.mrb[0].mxu0
      %v3895 = vadd.f32 0.0, %v3894
      %v3896 = vpop.f32.mrb[0].mxu0
      %3897 = vmatprep.mubr.f32.mxu0 0.0
      %3898 = vmatmul.mubr.f32.gmra.mrb[0].mxu0 %v3776
      %v3899 = vpop.f32.mrb[0].mxu0
      %v3900 = vadd.f32 0.0, %v3899
      %v3901 = vpop.f32.mrb[0].mxu0
      %3902 = vmatprep.mubr.f32.mxu0 0.0
      %3903 = vmatmul.mubr.f32.gmra.mrb[0].mxu0 %v3779
      %v3904 = vpop.f32.mrb[0].mxu0
      %v3905 = vadd.f32 0.0, %v3904
      %v3906 = vpop.f32.mrb[0].mxu0
      %3907 = vmatprep.mubr.f32.mxu0 0.0
      %3908 = vmatmul.mubr.f32.gmra.mrb[0].mxu0 %v3782
      %v3909 = vpop.f32.mrb[0].mxu0
      %v3910 = vadd.f32 0.0, %v3909
      %v3911 = vpop.f32.mrb[0].mxu0
      %3912 = vmatprep.mubr.f32.mxu0 0.0
      %3913 = vmatmul.mubr.f32.gmra.mrb[0].mxu0 %v3785
      %v3914 = vpop.f32.mrb[0].mxu0
      %v3915 = vadd.f32 0.0, %v3914
      %v3916 = vpop.f32.mrb[0].mxu0
      %3917 = vmatprep.mubr.f32.mxu0 0.0
      %3918 = vmatmul.mubr.f32.gmra.mrb[0].mxu0 %v3788
      %v3919 = vpop.f32.mrb[0].mxu0
      %v3920 = vadd.f32 0.0, %v3919
      %v3921 = vpop.f32.mrb[0].mxu0
      %3922 = vmatprep.mubr.f32.mxu0 0.0
      %3923 = vmatmul.mubr.f32.gmra.mrb[0].mxu0 %v3791
      %v3924 = vpop.f32.mrb[0].mxu0
      %v3925 = vadd.f32 0.0, %v3924
      %v3926 = vpop.f32.mrb[0].mxu0
      %3927 = vmatprep.mubr.f32.mxu0 0.0
      %3928 = vmatmul.mubr.f32.gmra.mrb[0].mxu0 %v3794
      %v3929 = vpop.f32.mrb[0].mxu0
      %v3930 = vadd.f32 0.0, %v3929
      %v3931 = vpop.f32.mrb[0].mxu0
      %3932 = vmatprep.mubr.f32.mxu0 0.0
      %3933 = vmatmul.mubr.f32.gmra.mrb[0].mxu0 %v3797
      %v3934 = vpop.f32.mrb[0].mxu0
      %v3935 = vadd.f32 0.0, %v3934
      %v3936 = vpop.f32.mrb[0].mxu0
      %3937 = vmatprep.mubr.f32.mxu0 0.0
      %3938 = vmatmul.mubr.f32.gmra.mrb[0].mxu0 %v3800
      %v3939 = vpop.f32.mrb[0].mxu0
      %v3940 = vadd.f32 0.0, %v3939
      %v3941 = vpop.f32.mrb[0].mxu0
      %3942 = vmatprep.mubr.f32.mxu0 0.0
      %3943 = vmatmul.mubr.f32.gmra.mrb[0].mxu0 %v3803
      %v3944 = vpop.f32.mrb[0].mxu0
      %v3945 = vadd.f32 0.0, %v3944
      %v3946 = vpop.f32.mrb[0].mxu0
      %3947 = vmatprep.mubr.f32.mxu0 0.0
      %3948 = vmatmul.mubr.f32.gmra.mrb[0].mxu0 %v3806
      %v3949 = vpop.f32.mrb[0].mxu0
      %v3950 = vadd.f32 0.0, %v3949
      %v3951 = vpop.f32.mrb[0].mxu0
      %3952 = vmatprep.mubr.f32.mxu0 0.0
      %3953 = vmatmul.mubr.f32.gmra.mrb[0].mxu0 %v3809
      %v3954 = vpop.f32.mrb[0].mxu0
      %v3955 = vadd.f32 0.0, %v3954
      %v3956 = vpop.f32.mrb[0].mxu0
      %3957 = vmatprep.mubr.f32.mxu0 0.0
      %3958 = vmatmul.mubr.f32.gmra.mrb[0].mxu0 %v3812
      %v3959 = vpop.f32.mrb[0].mxu0
      %v3960 = vadd.f32 0.0, %v3959
      %v3961 = vpop.f32.mrb[0].mxu0
      %3962 = vmatprep.mubr.f32.mxu0 0.0
      %3963 = vmatmul.mubr.f32.gmra.mrb[0].mxu0 %v3815
      %v3964 = vpop.f32.mrb[0].mxu0
      %v3965 = vadd.f32 0.0, %v3964
      %v3966 = vpop.f32.mrb[0].mxu0
      %3967 = vmatprep.mubr.f32.mxu0 0.0
      %3968 = vmatmul.mubr.f32.gmra.mrb[0].mxu0 %v3818
      %v3969 = vpop.f32.mrb[0].mxu0
      %v3970 = vadd.f32 0.0, %v3969
      %v3971 = vpop.f32.mrb[0].mxu0
      %3972 = vmatprep.mubr.f32.mxu0 0.0
      %3973 = vmatmul.mubr.f32.gmra.mrb[0].mxu0 %v3821
      %v3974 = vpop.f32.mrb[0].mxu0
      %v3975 = vadd.f32 0.0, %v3974
      %v3976 = vpop.f32.mrb[0].mxu0
      %3977 = vdwg.mxu0
      %v3978 = vadd.f32 %v3731, %v3890
      %v3979 = vadd.f32 %v3732, %v3895
      %v3980 = vadd.f32 %v3733, %v3900
      %v3981 = vadd.f32 %v3734, %v3905
      %v3982 = vadd.f32 %v3735, %v3910
      %v3983 = vadd.f32 %v3736, %v3915
      %v3984 = vadd.f32 %v3737, %v3920
      %v3985 = vadd.f32 %v3738, %v3925
      %v3986 = vadd.f32 %v3739, %v3930
      %v3987 = vadd.f32 %v3740, %v3935
      %v3988 = vadd.f32 %v3741, %v3940
      %v3989 = vadd.f32 %v3742, %v3945
      %v3990 = vadd.f32 %v3743, %v3950
      %v3991 = vadd.f32 %v3744, %v3955
      %v3992 = vadd.f32 %v3745, %v3960
      %v3993 = vadd.f32 %v3746, %v3965
      %v3994 = vadd.f32 %v3747, %v3970
      %v3995 = vadd.f32 %v3748, %v3975
      %v3996 = vld [vmem:[#allocation2 + $0x10] sm:$0xff]
      %v3997 = vld [vmem:[#allocation2 + $0x18] sm:$0xff]
      %v3998 = vld [vmem:[#allocation2 + $0x20] sm:$0xff]
      %v3999 = vld [vmem:[#allocation2 + $0x28] sm:$0xff]
      %v4000 = vld [vmem:[#allocation2 + $0x30] sm:$0xff]
      %v4001 = vld [vmem:[#allocation2 + $0x38] sm:$0xff]
      %v4002 = vld [vmem:[#allocation2 + $0x40] sm:$0xff]
      %v4003 = vld [vmem:[#allocation2 + $0x48] sm:$0xff]
      %v4004 = vld [vmem:[#allocation2 + $0x50] sm:$0xff]
      %v4005 = vld [vmem:[#allocation2 + $0x58] sm:$0xff]
      %v4006 = vld [vmem:[#allocation2 + $0x60] sm:$0xff]
      %v4007 = vld [vmem:[#allocation2 + $0x68] sm:$0xff]
      %v4008 = vld [vmem:[#allocation2 + $0x70] sm:$0xff]
      %v4009 = vld [vmem:[#allocation2 + $0x78] sm:$0xff]
      %v4010 = vld [vmem:[#allocation2 + $0x80] sm:$0xff]
      %v4011 = vld [vmem:[#allocation2 + $0x88] sm:$0xff]
      %v4012 = vld [vmem:[#allocation2 + $0x90] sm:$0xff]
      %v4013 = vld [vmem:[#allocation2 + $0x98] sm:$0xf]
      %s4014 = scalar_lea.vmem %s3, 56
      %v4015 = vld [vmem:[%s4014] sm:$0xff]
      %v4017 = vsel %vm2286, %v3996, 0
      %v4020 = vsel %vm2286, %v3997, 0
      %v4023 = vsel %vm2286, %v3998, 0
      %v4026 = vsel %vm2286, %v3999, 0
      %v4029 = vsel %vm2286, %v4000, 0
      %v4032 = vsel %vm2286, %v4001, 0
      %v4035 = vsel %vm2286, %v4002, 0
      %v4038 = vsel %vm2286, %v4003, 0
      %v4041 = vsel %vm2286, %v4004, 0
      %v4044 = vsel %vm2286, %v4005, 0
      %v4047 = vsel %vm2286, %v4006, 0
      %v4050 = vsel %vm2286, %v4007, 0
      %v4053 = vsel %vm2286, %v4008, 0
      %v4056 = vsel %vm2286, %v4009, 0
      %v4059 = vsel %vm2286, %v4010, 0
      %v4062 = vsel %vm2286, %v4011, 0
      %v4065 = vsel %vm2286, %v4012, 0
      %v4068 = vsel %vm2286, %v4013, 0
      %4070 = vmatprep.subr.mxu0 0.0
      %4071 = vmatpush1.msra.mxu0 %v4015
      %4072 = vmatprep.subr.mxu0 0.0
      %4073 = vmatpush1.msra.mxu0 0.0
      %4074 = vmatprep.subr.mxu0 0.0
      %4075 = vmatpush1.msra.mxu0 0.0
      %4076 = vmatprep.subr.mxu0 0.0
      %4077 = vmatpush1.msra.mxu0 0.0
      %4078 = vmatprep.subr.mxu0 0.0
      %4079 = vmatpush1.msra.mxu0 0.0
      %4080 = vmatprep.subr.mxu0 0.0
      %4081 = vmatpush1.msra.mxu0 0.0
      %4082 = vmatprep.subr.mxu0 0.0
      %4083 = vmatpush1.msra.mxu0 0.0
      %4084 = vmatprep.subr.mxu0 0.0
      %4085 = vmatpush1.msra.mxu0 0.0
      %4086 = vmatprep.subr.mxu0 0.0
      %4087 = vmatpush1.msra.mxu0 0.0
      %4088 = vmatprep.subr.mxu0 0.0
      %4089 = vmatpush1.msra.mxu0 0.0
      %4090 = vmatprep.subr.mxu0 0.0
      %4091 = vmatpush1.msra.mxu0 0.0
      %4092 = vmatprep.subr.mxu0 0.0
      %4093 = vmatpush1.msra.mxu0 0.0
      %4094 = vmatprep.subr.mxu0 0.0
      %4095 = vmatpush1.msra.mxu0 0.0
      %4096 = vmatprep.subr.mxu0 0.0
      %4097 = vmatpush1.msra.mxu0 0.0
      %4098 = vmatprep.subr.mxu0 0.0
      %4099 = vmatpush1.msra.mxu0 0.0
      %4100 = vmatprep.subr.mxu0 0.0
      %4101 = vmatpush1.msra.mxu0 0.0
      %4102 = vmatprep.subr.mxu0 0.0
      %4103 = vmatpush1.msra.mxu0 0.0
      %4104 = vmatprep.subr.mxu0 0.0
      %4105 = vmatpush1.msra.mxu0 0.0
      %4106 = vmatprep.subr.mxu0 0.0
      %4107 = vmatpush1.msra.mxu0 0.0
      %4108 = vmatprep.subr.mxu0 0.0
      %4109 = vmatpush1.msra.mxu0 0.0
      %4110 = vmatprep.subr.mxu0 0.0
      %4111 = vmatpush1.msra.mxu0 0.0
      %4112 = vmatprep.subr.mxu0 0.0
      %4113 = vmatpush1.msra.mxu0 0.0
      %4114 = vmatprep.subr.mxu0 0.0
      %4115 = vmatpush1.msra.mxu0 0.0
      %4116 = vmatprep.subr.mxu0 0.0
      %4117 = vmatpush1.msra.mxu0 0.0
      %4118 = vmatprep.subr.mxu0 0.0
      %4119 = vmatpush1.msra.mxu0 0.0
      %4120 = vmatprep.subr.mxu0 0.0
      %4121 = vmatpush1.msra.mxu0 0.0
      %4122 = vmatprep.subr.mxu0 0.0
      %4123 = vmatpush1.msra.mxu0 0.0
      %4124 = vmatprep.subr.mxu0 0.0
      %4125 = vmatpush1.msra.mxu0 0.0
      %4126 = vmatprep.subr.mxu0 0.0
      %4127 = vmatpush1.msra.mxu0 0.0
      %4128 = vmatprep.subr.mxu0 0.0
      %4129 = vmatpush1.msra.mxu0 0.0
      %4130 = vmatprep.subr.mxu0 0.0
      %4131 = vmatpush1.msra.mxu0 0.0
      %4132 = vmatprep.subr.mxu0 0.0
      %4133 = vmatpush1.msra.mxu0 0.0
      %4134 = vmatprep.mubr.f32.mxu0 0.0
      %4135 = vmatmul.mubr.f32.gmra.mrb[0].mxu0 %v4017
      %v4136 = vpop.f32.mrb[0].mxu0
      %v4137 = vadd.f32 0.0, %v4136
      %v4138 = vpop.f32.mrb[0].mxu0
      %4139 = vmatprep.mubr.f32.mxu0 0.0
      %4140 = vmatmul.mubr.f32.gmra.mrb[0].mxu0 %v4020
      %v4141 = vpop.f32.mrb[0].mxu0
      %v4142 = vadd.f32 0.0, %v4141
      %v4143 = vpop.f32.mrb[0].mxu0
      %4144 = vmatprep.mubr.f32.mxu0 0.0
      %4145 = vmatmul.mubr.f32.gmra.mrb[0].mxu0 %v4023
      %v4146 = vpop.f32.mrb[0].mxu0
      %v4147 = vadd.f32 0.0, %v4146
      %v4148 = vpop.f32.mrb[0].mxu0
      %4149 = vmatprep.mubr.f32.mxu0 0.0
      %4150 = vmatmul.mubr.f32.gmra.mrb[0].mxu0 %v4026
      %v4151 = vpop.f32.mrb[0].mxu0
      %v4152 = vadd.f32 0.0, %v4151
      %v4153 = vpop.f32.mrb[0].mxu0
      %4154 = vmatprep.mubr.f32.mxu0 0.0
      %4155 = vmatmul.mubr.f32.gmra.mrb[0].mxu0 %v4029
      %v4156 = vpop.f32.mrb[0].mxu0
      %v4157 = vadd.f32 0.0, %v4156
      %v4158 = vpop.f32.mrb[0].mxu0
      %4159 = vmatprep.mubr.f32.mxu0 0.0
      %4160 = vmatmul.mubr.f32.gmra.mrb[0].mxu0 %v4032
      %v4161 = vpop.f32.mrb[0].mxu0
      %v4162 = vadd.f32 0.0, %v4161
      %v4163 = vpop.f32.mrb[0].mxu0
      %4164 = vmatprep.mubr.f32.mxu0 0.0
      %4165 = vmatmul.mubr.f32.gmra.mrb[0].mxu0 %v4035
      %v4166 = vpop.f32.mrb[0].mxu0
      %v4167 = vadd.f32 0.0, %v4166
      %v4168 = vpop.f32.mrb[0].mxu0
      %4169 = vmatprep.mubr.f32.mxu0 0.0
      %4170 = vmatmul.mubr.f32.gmra.mrb[0].mxu0 %v4038
      %v4171 = vpop.f32.mrb[0].mxu0
      %v4172 = vadd.f32 0.0, %v4171
      %v4173 = vpop.f32.mrb[0].mxu0
      %4174 = vmatprep.mubr.f32.mxu0 0.0
      %4175 = vmatmul.mubr.f32.gmra.mrb[0].mxu0 %v4041
      %v4176 = vpop.f32.mrb[0].mxu0
      %v4177 = vadd.f32 0.0, %v4176
      %v4178 = vpop.f32.mrb[0].mxu0
      %4179 = vmatprep.mubr.f32.mxu0 0.0
      %4180 = vmatmul.mubr.f32.gmra.mrb[0].mxu0 %v4044
      %v4181 = vpop.f32.mrb[0].mxu0
      %v4182 = vadd.f32 0.0, %v4181
      %v4183 = vpop.f32.mrb[0].mxu0
      %4184 = vmatprep.mubr.f32.mxu0 0.0
      %4185 = vmatmul.mubr.f32.gmra.mrb[0].mxu0 %v4047
      %v4186 = vpop.f32.mrb[0].mxu0
      %v4187 = vadd.f32 0.0, %v4186
      %v4188 = vpop.f32.mrb[0].mxu0
      %4189 = vmatprep.mubr.f32.mxu0 0.0
      %4190 = vmatmul.mubr.f32.gmra.mrb[0].mxu0 %v4050
      %v4191 = vpop.f32.mrb[0].mxu0
      %v4192 = vadd.f32 0.0, %v4191
      %v4193 = vpop.f32.mrb[0].mxu0
      %4194 = vmatprep.mubr.f32.mxu0 0.0
      %4195 = vmatmul.mubr.f32.gmra.mrb[0].mxu0 %v4053
      %v4196 = vpop.f32.mrb[0].mxu0
      %v4197 = vadd.f32 0.0, %v4196
      %v4198 = vpop.f32.mrb[0].mxu0
      %4199 = vmatprep.mubr.f32.mxu0 0.0
      %4200 = vmatmul.mubr.f32.gmra.mrb[0].mxu0 %v4056
      %v4201 = vpop.f32.mrb[0].mxu0
      %v4202 = vadd.f32 0.0, %v4201
      %v4203 = vpop.f32.mrb[0].mxu0
      %4204 = vmatprep.mubr.f32.mxu0 0.0
      %4205 = vmatmul.mubr.f32.gmra.mrb[0].mxu0 %v4059
      %v4206 = vpop.f32.mrb[0].mxu0
      %v4207 = vadd.f32 0.0, %v4206
      %v4208 = vpop.f32.mrb[0].mxu0
      %4209 = vmatprep.mubr.f32.mxu0 0.0
      %4210 = vmatmul.mubr.f32.gmra.mrb[0].mxu0 %v4062
      %v4211 = vpop.f32.mrb[0].mxu0
      %v4212 = vadd.f32 0.0, %v4211
      %v4213 = vpop.f32.mrb[0].mxu0
      %4214 = vmatprep.mubr.f32.mxu0 0.0
      %4215 = vmatmul.mubr.f32.gmra.mrb[0].mxu0 %v4065
      %v4216 = vpop.f32.mrb[0].mxu0
      %v4217 = vadd.f32 0.0, %v4216
      %v4218 = vpop.f32.mrb[0].mxu0
      %4219 = vmatprep.mubr.f32.mxu0 0.0
      %4220 = vmatmul.mubr.f32.gmra.mrb[0].mxu0 %v4068
      %v4221 = vpop.f32.mrb[0].mxu0
      %v4222 = vadd.f32 0.0, %v4221
      %v4223 = vpop.f32.mrb[0].mxu0
      %4224 = vdwg.mxu0
      %v4225 = vadd.f32 %v3978, %v4137
      %v4226 = vadd.f32 %v3979, %v4142
      %v4227 = vadd.f32 %v3980, %v4147
      %v4228 = vadd.f32 %v3981, %v4152
      %v4229 = vadd.f32 %v3982, %v4157
      %v4230 = vadd.f32 %v3983, %v4162
      %v4231 = vadd.f32 %v3984, %v4167
      %v4232 = vadd.f32 %v3985, %v4172
      %v4233 = vadd.f32 %v3986, %v4177
      %v4234 = vadd.f32 %v3987, %v4182
      %v4235 = vadd.f32 %v3988, %v4187
      %v4236 = vadd.f32 %v3989, %v4192
      %v4237 = vadd.f32 %v3990, %v4197
      %v4238 = vadd.f32 %v3991, %v4202
      %v4239 = vadd.f32 %v3992, %v4207
      %v4240 = vadd.f32 %v3993, %v4212
      %v4241 = vadd.f32 %v3994, %v4217
      %v4242 = vadd.f32 %v3995, %v4222
      %v4243 = vld [vmem:[#allocation2 + $0x11] sm:$0xff]
      %v4244 = vld [vmem:[#allocation2 + $0x19] sm:$0xff]
      %v4245 = vld [vmem:[#allocation2 + $0x21] sm:$0xff]
      %v4246 = vld [vmem:[#allocation2 + $0x29] sm:$0xff]
      %v4247 = vld [vmem:[#allocation2 + $0x31] sm:$0xff]
      %v4248 = vld [vmem:[#allocation2 + $0x39] sm:$0xff]
      %v4249 = vld [vmem:[#allocation2 + $0x41] sm:$0xff]
      %v4250 = vld [vmem:[#allocation2 + $0x49] sm:$0xff]
      %v4251 = vld [vmem:[#allocation2 + $0x51] sm:$0xff]
      %v4252 = vld [vmem:[#allocation2 + $0x59] sm:$0xff]
      %v4253 = vld [vmem:[#allocation2 + $0x61] sm:$0xff]
      %v4254 = vld [vmem:[#allocation2 + $0x69] sm:$0xff]
      %v4255 = vld [vmem:[#allocation2 + $0x71] sm:$0xff]
      %v4256 = vld [vmem:[#allocation2 + $0x79] sm:$0xff]
      %v4257 = vld [vmem:[#allocation2 + $0x81] sm:$0xff]
      %v4258 = vld [vmem:[#allocation2 + $0x89] sm:$0xff]
      %v4259 = vld [vmem:[#allocation2 + $0x91] sm:$0xff]
      %v4260 = vld [vmem:[#allocation2 + $0x99] sm:$0xf]
      %s4261 = scalar_lea.vmem %s3, 64
      %v4262 = vld [vmem:[%s4261] sm:$0xff]
      %v4264 = vsel %vm2286, %v4243, 0
      %v4267 = vsel %vm2286, %v4244, 0
      %v4270 = vsel %vm2286, %v4245, 0
      %v4273 = vsel %vm2286, %v4246, 0
      %v4276 = vsel %vm2286, %v4247, 0
      %v4279 = vsel %vm2286, %v4248, 0
      %v4282 = vsel %vm2286, %v4249, 0
      %v4285 = vsel %vm2286, %v4250, 0
      %v4288 = vsel %vm2286, %v4251, 0
      %v4291 = vsel %vm2286, %v4252, 0
      %v4294 = vsel %vm2286, %v4253, 0
      %v4297 = vsel %vm2286, %v4254, 0
      %v4300 = vsel %vm2286, %v4255, 0
      %v4303 = vsel %vm2286, %v4256, 0
      %v4306 = vsel %vm2286, %v4257, 0
      %v4309 = vsel %vm2286, %v4258, 0
      %v4312 = vsel %vm2286, %v4259, 0
      %v4315 = vsel %vm2286, %v4260, 0
      %4317 = vmatprep.subr.mxu0 0.0
      %4318 = vmatpush1.msra.mxu0 %v4262
      %4319 = vmatprep.subr.mxu0 0.0
      %4320 = vmatpush1.msra.mxu0 0.0
      %4321 = vmatprep.subr.mxu0 0.0
      %4322 = vmatpush1.msra.mxu0 0.0
      %4323 = vmatprep.subr.mxu0 0.0
      %4324 = vmatpush1.msra.mxu0 0.0
      %4325 = vmatprep.subr.mxu0 0.0
      %4326 = vmatpush1.msra.mxu0 0.0
      %4327 = vmatprep.subr.mxu0 0.0
      %4328 = vmatpush1.msra.mxu0 0.0
      %4329 = vmatprep.subr.mxu0 0.0
      %4330 = vmatpush1.msra.mxu0 0.0
      %4331 = vmatprep.subr.mxu0 0.0
      %4332 = vmatpush1.msra.mxu0 0.0
      %4333 = vmatprep.subr.mxu0 0.0
      %4334 = vmatpush1.msra.mxu0 0.0
      %4335 = vmatprep.subr.mxu0 0.0
      %4336 = vmatpush1.msra.mxu0 0.0
      %4337 = vmatprep.subr.mxu0 0.0
      %4338 = vmatpush1.msra.mxu0 0.0
      %4339 = vmatprep.subr.mxu0 0.0
      %4340 = vmatpush1.msra.mxu0 0.0
      %4341 = vmatprep.subr.mxu0 0.0
      %4342 = vmatpush1.msra.mxu0 0.0
      %4343 = vmatprep.subr.mxu0 0.0
      %4344 = vmatpush1.msra.mxu0 0.0
      %4345 = vmatprep.subr.mxu0 0.0
      %4346 = vmatpush1.msra.mxu0 0.0
      %4347 = vmatprep.subr.mxu0 0.0
      %4348 = vmatpush1.msra.mxu0 0.0
      %4349 = vmatprep.subr.mxu0 0.0
      %4350 = vmatpush1.msra.mxu0 0.0
      %4351 = vmatprep.subr.mxu0 0.0
      %4352 = vmatpush1.msra.mxu0 0.0
      %4353 = vmatprep.subr.mxu0 0.0
      %4354 = vmatpush1.msra.mxu0 0.0
      %4355 = vmatprep.subr.mxu0 0.0
      %4356 = vmatpush1.msra.mxu0 0.0
      %4357 = vmatprep.subr.mxu0 0.0
      %4358 = vmatpush1.msra.mxu0 0.0
      %4359 = vmatprep.subr.mxu0 0.0
      %4360 = vmatpush1.msra.mxu0 0.0
      %4361 = vmatprep.subr.mxu0 0.0
      %4362 = vmatpush1.msra.mxu0 0.0
      %4363 = vmatprep.subr.mxu0 0.0
      %4364 = vmatpush1.msra.mxu0 0.0
      %4365 = vmatprep.subr.mxu0 0.0
      %4366 = vmatpush1.msra.mxu0 0.0
      %4367 = vmatprep.subr.mxu0 0.0
      %4368 = vmatpush1.msra.mxu0 0.0
      %4369 = vmatprep.subr.mxu0 0.0
      %4370 = vmatpush1.msra.mxu0 0.0
      %4371 = vmatprep.subr.mxu0 0.0
      %4372 = vmatpush1.msra.mxu0 0.0
      %4373 = vmatprep.subr.mxu0 0.0
      %4374 = vmatpush1.msra.mxu0 0.0
      %4375 = vmatprep.subr.mxu0 0.0
      %4376 = vmatpush1.msra.mxu0 0.0
      %4377 = vmatprep.subr.mxu0 0.0
      %4378 = vmatpush1.msra.mxu0 0.0
      %4379 = vmatprep.subr.mxu0 0.0
      %4380 = vmatpush1.msra.mxu0 0.0
      %4381 = vmatprep.mubr.f32.mxu0 0.0
      %4382 = vmatmul.mubr.f32.gmra.mrb[0].mxu0 %v4264
      %v4383 = vpop.f32.mrb[0].mxu0
      %v4384 = vadd.f32 0.0, %v4383
      %v4385 = vpop.f32.mrb[0].mxu0
      %4386 = vmatprep.mubr.f32.mxu0 0.0
      %4387 = vmatmul.mubr.f32.gmra.mrb[0].mxu0 %v4267
      %v4388 = vpop.f32.mrb[0].mxu0
      %v4389 = vadd.f32 0.0, %v4388
      %v4390 = vpop.f32.mrb[0].mxu0
      %4391 = vmatprep.mubr.f32.mxu0 0.0
      %4392 = vmatmul.mubr.f32.gmra.mrb[0].mxu0 %v4270
      %v4393 = vpop.f32.mrb[0].mxu0
      %v4394 = vadd.f32 0.0, %v4393
      %v4395 = vpop.f32.mrb[0].mxu0
      %4396 = vmatprep.mubr.f32.mxu0 0.0
      %4397 = vmatmul.mubr.f32.gmra.mrb[0].mxu0 %v4273
      %v4398 = vpop.f32.mrb[0].mxu0
      %v4399 = vadd.f32 0.0, %v4398
      %v4400 = vpop.f32.mrb[0].mxu0
      %4401 = vmatprep.mubr.f32.mxu0 0.0
      %4402 = vmatmul.mubr.f32.gmra.mrb[0].mxu0 %v4276
      %v4403 = vpop.f32.mrb[0].mxu0
      %v4404 = vadd.f32 0.0, %v4403
      %v4405 = vpop.f32.mrb[0].mxu0
      %4406 = vmatprep.mubr.f32.mxu0 0.0
      %4407 = vmatmul.mubr.f32.gmra.mrb[0].mxu0 %v4279
      %v4408 = vpop.f32.mrb[0].mxu0
      %v4409 = vadd.f32 0.0, %v4408
      %v4410 = vpop.f32.mrb[0].mxu0
      %4411 = vmatprep.mubr.f32.mxu0 0.0
      %4412 = vmatmul.mubr.f32.gmra.mrb[0].mxu0 %v4282
      %v4413 = vpop.f32.mrb[0].mxu0
      %v4414 = vadd.f32 0.0, %v4413
      %v4415 = vpop.f32.mrb[0].mxu0
      %4416 = vmatprep.mubr.f32.mxu0 0.0
      %4417 = vmatmul.mubr.f32.gmra.mrb[0].mxu0 %v4285
      %v4418 = vpop.f32.mrb[0].mxu0
      %v4419 = vadd.f32 0.0, %v4418
      %v4420 = vpop.f32.mrb[0].mxu0
      %4421 = vmatprep.mubr.f32.mxu0 0.0
      %4422 = vmatmul.mubr.f32.gmra.mrb[0].mxu0 %v4288
      %v4423 = vpop.f32.mrb[0].mxu0
      %v4424 = vadd.f32 0.0, %v4423
      %v4425 = vpop.f32.mrb[0].mxu0
      %4426 = vmatprep.mubr.f32.mxu0 0.0
      %4427 = vmatmul.mubr.f32.gmra.mrb[0].mxu0 %v4291
      %v4428 = vpop.f32.mrb[0].mxu0
      %v4429 = vadd.f32 0.0, %v4428
      %v4430 = vpop.f32.mrb[0].mxu0
      %4431 = vmatprep.mubr.f32.mxu0 0.0
      %4432 = vmatmul.mubr.f32.gmra.mrb[0].mxu0 %v4294
      %v4433 = vpop.f32.mrb[0].mxu0
      %v4434 = vadd.f32 0.0, %v4433
      %v4435 = vpop.f32.mrb[0].mxu0
      %4436 = vmatprep.mubr.f32.mxu0 0.0
      %4437 = vmatmul.mubr.f32.gmra.mrb[0].mxu0 %v4297
      %v4438 = vpop.f32.mrb[0].mxu0
      %v4439 = vadd.f32 0.0, %v4438
      %v4440 = vpop.f32.mrb[0].mxu0
      %4441 = vmatprep.mubr.f32.mxu0 0.0
      %4442 = vmatmul.mubr.f32.gmra.mrb[0].mxu0 %v4300
      %v4443 = vpop.f32.mrb[0].mxu0
      %v4444 = vadd.f32 0.0, %v4443
      %v4445 = vpop.f32.mrb[0].mxu0
      %4446 = vmatprep.mubr.f32.mxu0 0.0
      %4447 = vmatmul.mubr.f32.gmra.mrb[0].mxu0 %v4303
      %v4448 = vpop.f32.mrb[0].mxu0
      %v4449 = vadd.f32 0.0, %v4448
      %v4450 = vpop.f32.mrb[0].mxu0
      %4451 = vmatprep.mubr.f32.mxu0 0.0
      %4452 = vmatmul.mubr.f32.gmra.mrb[0].mxu0 %v4306
      %v4453 = vpop.f32.mrb[0].mxu0
      %v4454 = vadd.f32 0.0, %v4453
      %v4455 = vpop.f32.mrb[0].mxu0
      %4456 = vmatprep.mubr.f32.mxu0 0.0
      %4457 = vmatmul.mubr.f32.gmra.mrb[0].mxu0 %v4309
      %v4458 = vpop.f32.mrb[0].mxu0
      %v4459 = vadd.f32 0.0, %v4458
      %v4460 = vpop.f32.mrb[0].mxu0
      %4461 = vmatprep.mubr.f32.mxu0 0.0
      %4462 = vmatmul.mubr.f32.gmra.mrb[0].mxu0 %v4312
      %v4463 = vpop.f32.mrb[0].mxu0
      %v4464 = vadd.f32 0.0, %v4463
      %v4465 = vpop.f32.mrb[0].mxu0
      %4466 = vmatprep.mubr.f32.mxu0 0.0
      %4467 = vmatmul.mubr.f32.gmra.mrb[0].mxu0 %v4315
      %v4468 = vpop.f32.mrb[0].mxu0
      %v4469 = vadd.f32 0.0, %v4468
      %v4470 = vpop.f32.mrb[0].mxu0
      %4471 = vdwg.mxu0
      %v4472 = vadd.f32 %v4225, %v4384
      %v4473 = vadd.f32 %v4226, %v4389
      %v4474 = vadd.f32 %v4227, %v4394
      %v4475 = vadd.f32 %v4228, %v4399
      %v4476 = vadd.f32 %v4229, %v4404
      %v4477 = vadd.f32 %v4230, %v4409
      %v4478 = vadd.f32 %v4231, %v4414
      %v4479 = vadd.f32 %v4232, %v4419
      %v4480 = vadd.f32 %v4233, %v4424
      %v4481 = vadd.f32 %v4234, %v4429
      %v4482 = vadd.f32 %v4235, %v4434
      %v4483 = vadd.f32 %v4236, %v4439
      %v4484 = vadd.f32 %v4237, %v4444
      %v4485 = vadd.f32 %v4238, %v4449
      %v4486 = vadd.f32 %v4239, %v4454
      %v4487 = vadd.f32 %v4240, %v4459
      %v4488 = vadd.f32 %v4241, %v4464
      %v4489 = vadd.f32 %v4242, %v4469
      %v4490 = vld [vmem:[#allocation2 + $0x12] sm:$0xff]
      %v4491 = vld [vmem:[#allocation2 + $0x1a] sm:$0xff]
      %v4492 = vld [vmem:[#allocation2 + $0x22] sm:$0xff]
      %v4493 = vld [vmem:[#allocation2 + $0x2a] sm:$0xff]
      %v4494 = vld [vmem:[#allocation2 + $0x32] sm:$0xff]
      %v4495 = vld [vmem:[#allocation2 + $0x3a] sm:$0xff]
      %v4496 = vld [vmem:[#allocation2 + $0x42] sm:$0xff]
      %v4497 = vld [vmem:[#allocation2 + $0x4a] sm:$0xff]
      %v4498 = vld [vmem:[#allocation2 + $0x52] sm:$0xff]
      %v4499 = vld [vmem:[#allocation2 + $0x5a] sm:$0xff]
      %v4500 = vld [vmem:[#allocation2 + $0x62] sm:$0xff]
      %v4501 = vld [vmem:[#allocation2 + $0x6a] sm:$0xff]
      %v4502 = vld [vmem:[#allocation2 + $0x72] sm:$0xff]
      %v4503 = vld [vmem:[#allocation2 + $0x7a] sm:$0xff]
      %v4504 = vld [vmem:[#allocation2 + $0x82] sm:$0xff]
      %v4505 = vld [vmem:[#allocation2 + $0x8a] sm:$0xff]
      %v4506 = vld [vmem:[#allocation2 + $0x92] sm:$0xff]
      %v4507 = vld [vmem:[#allocation2 + $0x9a] sm:$0xf]
      %s4508 = scalar_lea.vmem %s3, 72
      %v4509 = vld [vmem:[%s4508] sm:$0xff]
      %v4511 = vsel %vm2286, %v4490, 0
      %v4514 = vsel %vm2286, %v4491, 0
      %v4517 = vsel %vm2286, %v4492, 0
      %v4520 = vsel %vm2286, %v4493, 0
      %v4523 = vsel %vm2286, %v4494, 0
      %v4526 = vsel %vm2286, %v4495, 0
      %v4529 = vsel %vm2286, %v4496, 0
      %v4532 = vsel %vm2286, %v4497, 0
      %v4535 = vsel %vm2286, %v4498, 0
      %v4538 = vsel %vm2286, %v4499, 0
      %v4541 = vsel %vm2286, %v4500, 0
      %v4544 = vsel %vm2286, %v4501, 0
      %v4547 = vsel %vm2286, %v4502, 0
      %v4550 = vsel %vm2286, %v4503, 0
      %v4553 = vsel %vm2286, %v4504, 0
      %v4556 = vsel %vm2286, %v4505, 0
      %v4559 = vsel %vm2286, %v4506, 0
      %v4562 = vsel %vm2286, %v4507, 0
      %4564 = vmatprep.subr.mxu0 0.0
      %4565 = vmatpush1.msra.mxu0 %v4509
      %4566 = vmatprep.subr.mxu0 0.0
      %4567 = vmatpush1.msra.mxu0 0.0
      %4568 = vmatprep.subr.mxu0 0.0
      %4569 = vmatpush1.msra.mxu0 0.0
      %4570 = vmatprep.subr.mxu0 0.0
      %4571 = vmatpush1.msra.mxu0 0.0
      %4572 = vmatprep.subr.mxu0 0.0
      %4573 = vmatpush1.msra.mxu0 0.0
      %4574 = vmatprep.subr.mxu0 0.0
      %4575 = vmatpush1.msra.mxu0 0.0
      %4576 = vmatprep.subr.mxu0 0.0
      %4577 = vmatpush1.msra.mxu0 0.0
      %4578 = vmatprep.subr.mxu0 0.0
      %4579 = vmatpush1.msra.mxu0 0.0
      %4580 = vmatprep.subr.mxu0 0.0
      %4581 = vmatpush1.msra.mxu0 0.0
      %4582 = vmatprep.subr.mxu0 0.0
      %4583 = vmatpush1.msra.mxu0 0.0
      %4584 = vmatprep.subr.mxu0 0.0
      %4585 = vmatpush1.msra.mxu0 0.0
      %4586 = vmatprep.subr.mxu0 0.0
      %4587 = vmatpush1.msra.mxu0 0.0
      %4588 = vmatprep.subr.mxu0 0.0
      %4589 = vmatpush1.msra.mxu0 0.0
      %4590 = vmatprep.subr.mxu0 0.0
      %4591 = vmatpush1.msra.mxu0 0.0
      %4592 = vmatprep.subr.mxu0 0.0
      %4593 = vmatpush1.msra.mxu0 0.0
      %4594 = vmatprep.subr.mxu0 0.0
      %4595 = vmatpush1.msra.mxu0 0.0
      %4596 = vmatprep.subr.mxu0 0.0
      %4597 = vmatpush1.msra.mxu0 0.0
      %4598 = vmatprep.subr.mxu0 0.0
      %4599 = vmatpush1.msra.mxu0 0.0
      %4600 = vmatprep.subr.mxu0 0.0
      %4601 = vmatpush1.msra.mxu0 0.0
      %4602 = vmatprep.subr.mxu0 0.0
      %4603 = vmatpush1.msra.mxu0 0.0
      %4604 = vmatprep.subr.mxu0 0.0
      %4605 = vmatpush1.msra.mxu0 0.0
      %4606 = vmatprep.subr.mxu0 0.0
      %4607 = vmatpush1.msra.mxu0 0.0
      %4608 = vmatprep.subr.mxu0 0.0
      %4609 = vmatpush1.msra.mxu0 0.0
      %4610 = vmatprep.subr.mxu0 0.0
      %4611 = vmatpush1.msra.mxu0 0.0
      %4612 = vmatprep.subr.mxu0 0.0
      %4613 = vmatpush1.msra.mxu0 0.0
      %4614 = vmatprep.subr.mxu0 0.0
      %4615 = vmatpush1.msra.mxu0 0.0
      %4616 = vmatprep.subr.mxu0 0.0
      %4617 = vmatpush1.msra.mxu0 0.0
      %4618 = vmatprep.subr.mxu0 0.0
      %4619 = vmatpush1.msra.mxu0 0.0
      %4620 = vmatprep.subr.mxu0 0.0
      %4621 = vmatpush1.msra.mxu0 0.0
      %4622 = vmatprep.subr.mxu0 0.0
      %4623 = vmatpush1.msra.mxu0 0.0
      %4624 = vmatprep.subr.mxu0 0.0
      %4625 = vmatpush1.msra.mxu0 0.0
      %4626 = vmatprep.subr.mxu0 0.0
      %4627 = vmatpush1.msra.mxu0 0.0
      %4628 = vmatprep.mubr.f32.mxu0 0.0
      %4629 = vmatmul.mubr.f32.gmra.mrb[0].mxu0 %v4511
      %v4630 = vpop.f32.mrb[0].mxu0
      %v4631 = vadd.f32 0.0, %v4630
      %v4632 = vpop.f32.mrb[0].mxu0
      %4633 = vmatprep.mubr.f32.mxu0 0.0
      %4634 = vmatmul.mubr.f32.gmra.mrb[0].mxu0 %v4514
      %v4635 = vpop.f32.mrb[0].mxu0
      %v4636 = vadd.f32 0.0, %v4635
      %v4637 = vpop.f32.mrb[0].mxu0
      %4638 = vmatprep.mubr.f32.mxu0 0.0
      %4639 = vmatmul.mubr.f32.gmra.mrb[0].mxu0 %v4517
      %v4640 = vpop.f32.mrb[0].mxu0
      %v4641 = vadd.f32 0.0, %v4640
      %v4642 = vpop.f32.mrb[0].mxu0
      %4643 = vmatprep.mubr.f32.mxu0 0.0
      %4644 = vmatmul.mubr.f32.gmra.mrb[0].mxu0 %v4520
      %v4645 = vpop.f32.mrb[0].mxu0
      %v4646 = vadd.f32 0.0, %v4645
      %v4647 = vpop.f32.mrb[0].mxu0
      %4648 = vmatprep.mubr.f32.mxu0 0.0
      %4649 = vmatmul.mubr.f32.gmra.mrb[0].mxu0 %v4523
      %v4650 = vpop.f32.mrb[0].mxu0
      %v4651 = vadd.f32 0.0, %v4650
      %v4652 = vpop.f32.mrb[0].mxu0
      %4653 = vmatprep.mubr.f32.mxu0 0.0
      %4654 = vmatmul.mubr.f32.gmra.mrb[0].mxu0 %v4526
      %v4655 = vpop.f32.mrb[0].mxu0
      %v4656 = vadd.f32 0.0, %v4655
      %v4657 = vpop.f32.mrb[0].mxu0
      %4658 = vmatprep.mubr.f32.mxu0 0.0
      %4659 = vmatmul.mubr.f32.gmra.mrb[0].mxu0 %v4529
      %v4660 = vpop.f32.mrb[0].mxu0
      %v4661 = vadd.f32 0.0, %v4660
      %v4662 = vpop.f32.mrb[0].mxu0
      %4663 = vmatprep.mubr.f32.mxu0 0.0
      %4664 = vmatmul.mubr.f32.gmra.mrb[0].mxu0 %v4532
      %v4665 = vpop.f32.mrb[0].mxu0
      %v4666 = vadd.f32 0.0, %v4665
      %v4667 = vpop.f32.mrb[0].mxu0
      %4668 = vmatprep.mubr.f32.mxu0 0.0
      %4669 = vmatmul.mubr.f32.gmra.mrb[0].mxu0 %v4535
      %v4670 = vpop.f32.mrb[0].mxu0
      %v4671 = vadd.f32 0.0, %v4670
      %v4672 = vpop.f32.mrb[0].mxu0
      %4673 = vmatprep.mubr.f32.mxu0 0.0
      %4674 = vmatmul.mubr.f32.gmra.mrb[0].mxu0 %v4538
      %v4675 = vpop.f32.mrb[0].mxu0
      %v4676 = vadd.f32 0.0, %v4675
      %v4677 = vpop.f32.mrb[0].mxu0
      %4678 = vmatprep.mubr.f32.mxu0 0.0
      %4679 = vmatmul.mubr.f32.gmra.mrb[0].mxu0 %v4541
      %v4680 = vpop.f32.mrb[0].mxu0
      %v4681 = vadd.f32 0.0, %v4680
      %v4682 = vpop.f32.mrb[0].mxu0
      %4683 = vmatprep.mubr.f32.mxu0 0.0
      %4684 = vmatmul.mubr.f32.gmra.mrb[0].mxu0 %v4544
      %v4685 = vpop.f32.mrb[0].mxu0
      %v4686 = vadd.f32 0.0, %v4685
      %v4687 = vpop.f32.mrb[0].mxu0
      %4688 = vmatprep.mubr.f32.mxu0 0.0
      %4689 = vmatmul.mubr.f32.gmra.mrb[0].mxu0 %v4547
      %v4690 = vpop.f32.mrb[0].mxu0
      %v4691 = vadd.f32 0.0, %v4690
      %v4692 = vpop.f32.mrb[0].mxu0
      %4693 = vmatprep.mubr.f32.mxu0 0.0
      %4694 = vmatmul.mubr.f32.gmra.mrb[0].mxu0 %v4550
      %v4695 = vpop.f32.mrb[0].mxu0
      %v4696 = vadd.f32 0.0, %v4695
      %v4697 = vpop.f32.mrb[0].mxu0
      %4698 = vmatprep.mubr.f32.mxu0 0.0
      %4699 = vmatmul.mubr.f32.gmra.mrb[0].mxu0 %v4553
      %v4700 = vpop.f32.mrb[0].mxu0
      %v4701 = vadd.f32 0.0, %v4700
      %v4702 = vpop.f32.mrb[0].mxu0
      %4703 = vmatprep.mubr.f32.mxu0 0.0
      %4704 = vmatmul.mubr.f32.gmra.mrb[0].mxu0 %v4556
      %v4705 = vpop.f32.mrb[0].mxu0
      %v4706 = vadd.f32 0.0, %v4705
      %v4707 = vpop.f32.mrb[0].mxu0
      %4708 = vmatprep.mubr.f32.mxu0 0.0
      %4709 = vmatmul.mubr.f32.gmra.mrb[0].mxu0 %v4559
      %v4710 = vpop.f32.mrb[0].mxu0
      %v4711 = vadd.f32 0.0, %v4710
      %v4712 = vpop.f32.mrb[0].mxu0
      %4713 = vmatprep.mubr.f32.mxu0 0.0
      %4714 = vmatmul.mubr.f32.gmra.mrb[0].mxu0 %v4562
      %v4715 = vpop.f32.mrb[0].mxu0
      %v4716 = vadd.f32 0.0, %v4715
      %v4717 = vpop.f32.mrb[0].mxu0
      %4718 = vdwg.mxu0
      %v4719 = vadd.f32 %v4472, %v4631
      %v4720 = vadd.f32 %v4473, %v4636
      %v4721 = vadd.f32 %v4474, %v4641
      %v4722 = vadd.f32 %v4475, %v4646
      %v4723 = vadd.f32 %v4476, %v4651
      %v4724 = vadd.f32 %v4477, %v4656
      %v4725 = vadd.f32 %v4478, %v4661
      %v4726 = vadd.f32 %v4479, %v4666
      %v4727 = vadd.f32 %v4480, %v4671
      %v4728 = vadd.f32 %v4481, %v4676
      %v4729 = vadd.f32 %v4482, %v4681
      %v4730 = vadd.f32 %v4483, %v4686
      %v4731 = vadd.f32 %v4484, %v4691
      %v4732 = vadd.f32 %v4485, %v4696
      %v4733 = vadd.f32 %v4486, %v4701
      %v4734 = vadd.f32 %v4487, %v4706
      %v4735 = vadd.f32 %v4488, %v4711
      %v4736 = vadd.f32 %v4489, %v4716
      %v4737 = vld [vmem:[#allocation2 + $0x1c] sm:$0xff]
      %v4738 = vld [vmem:[#allocation2 + $0x24] sm:$0xff]
      %v4739 = vld [vmem:[#allocation2 + $0x2c] sm:$0xff]
      %v4740 = vld [vmem:[#allocation2 + $0x34] sm:$0xff]
      %v4741 = vld [vmem:[#allocation2 + $0x3c] sm:$0xff]
      %v4742 = vld [vmem:[#allocation2 + $0x44] sm:$0xff]
      %v4743 = vld [vmem:[#allocation2 + $0x4c] sm:$0xff]
      %v4744 = vld [vmem:[#allocation2 + $0x54] sm:$0xff]
      %v4745 = vld [vmem:[#allocation2 + $0x5c] sm:$0xff]
      %v4746 = vld [vmem:[#allocation2 + $0x64] sm:$0xff]
      %v4747 = vld [vmem:[#allocation2 + $0x6c] sm:$0xff]
      %v4748 = vld [vmem:[#allocation2 + $0x74] sm:$0xff]
      %v4749 = vld [vmem:[#allocation2 + $0x7c] sm:$0xff]
      %v4750 = vld [vmem:[#allocation2 + $0x84] sm:$0xff]
      %v4751 = vld [vmem:[#allocation2 + $0x8c] sm:$0xff]
      %v4752 = vld [vmem:[#allocation2 + $0x94] sm:$0xff]
      %v4753 = vld [vmem:[#allocation2 + $0x9c] sm:$0xff]
      %v4754 = vld [vmem:[#allocation2 + $0xa4] sm:$0xf]
      %s4755 = scalar_lea.vmem %s3, 80
      %v4756 = vld [vmem:[%s4755] sm:$0xff]
      %v4758 = vsel %vm2286, %v4737, 0
      %v4761 = vsel %vm2286, %v4738, 0
      %v4764 = vsel %vm2286, %v4739, 0
      %v4767 = vsel %vm2286, %v4740, 0
      %v4770 = vsel %vm2286, %v4741, 0
      %v4773 = vsel %vm2286, %v4742, 0
      %v4776 = vsel %vm2286, %v4743, 0
      %v4779 = vsel %vm2286, %v4744, 0
      %v4782 = vsel %vm2286, %v4745, 0
      %v4785 = vsel %vm2286, %v4746, 0
      %v4788 = vsel %vm2286, %v4747, 0
      %v4791 = vsel %vm2286, %v4748, 0
      %v4794 = vsel %vm2286, %v4749, 0
      %v4797 = vsel %vm2286, %v4750, 0
      %v4800 = vsel %vm2286, %v4751, 0
      %v4803 = vsel %vm2286, %v4752, 0
      %v4806 = vsel %vm2286, %v4753, 0
      %v4809 = vsel %vm2286, %v4754, 0
      %4811 = vmatprep.subr.mxu0 0.0
      %4812 = vmatpush1.msra.mxu0 %v4756
      %4813 = vmatprep.subr.mxu0 0.0
      %4814 = vmatpush1.msra.mxu0 0.0
      %4815 = vmatprep.subr.mxu0 0.0
      %4816 = vmatpush1.msra.mxu0 0.0
      %4817 = vmatprep.subr.mxu0 0.0
      %4818 = vmatpush1.msra.mxu0 0.0
      %4819 = vmatprep.subr.mxu0 0.0
      %4820 = vmatpush1.msra.mxu0 0.0
      %4821 = vmatprep.subr.mxu0 0.0
      %4822 = vmatpush1.msra.mxu0 0.0
      %4823 = vmatprep.subr.mxu0 0.0
      %4824 = vmatpush1.msra.mxu0 0.0
      %4825 = vmatprep.subr.mxu0 0.0
      %4826 = vmatpush1.msra.mxu0 0.0
      %4827 = vmatprep.subr.mxu0 0.0
      %4828 = vmatpush1.msra.mxu0 0.0
      %4829 = vmatprep.subr.mxu0 0.0
      %4830 = vmatpush1.msra.mxu0 0.0
      %4831 = vmatprep.subr.mxu0 0.0
      %4832 = vmatpush1.msra.mxu0 0.0
      %4833 = vmatprep.subr.mxu0 0.0
      %4834 = vmatpush1.msra.mxu0 0.0
      %4835 = vmatprep.subr.mxu0 0.0
      %4836 = vmatpush1.msra.mxu0 0.0
      %4837 = vmatprep.subr.mxu0 0.0
      %4838 = vmatpush1.msra.mxu0 0.0
      %4839 = vmatprep.subr.mxu0 0.0
      %4840 = vmatpush1.msra.mxu0 0.0
      %4841 = vmatprep.subr.mxu0 0.0
      %4842 = vmatpush1.msra.mxu0 0.0
      %4843 = vmatprep.subr.mxu0 0.0
      %4844 = vmatpush1.msra.mxu0 0.0
      %4845 = vmatprep.subr.mxu0 0.0
      %4846 = vmatpush1.msra.mxu0 0.0
      %4847 = vmatprep.subr.mxu0 0.0
      %4848 = vmatpush1.msra.mxu0 0.0
      %4849 = vmatprep.subr.mxu0 0.0
      %4850 = vmatpush1.msra.mxu0 0.0
      %4851 = vmatprep.subr.mxu0 0.0
      %4852 = vmatpush1.msra.mxu0 0.0
      %4853 = vmatprep.subr.mxu0 0.0
      %4854 = vmatpush1.msra.mxu0 0.0
      %4855 = vmatprep.subr.mxu0 0.0
      %4856 = vmatpush1.msra.mxu0 0.0
      %4857 = vmatprep.subr.mxu0 0.0
      %4858 = vmatpush1.msra.mxu0 0.0
      %4859 = vmatprep.subr.mxu0 0.0
      %4860 = vmatpush1.msra.mxu0 0.0
      %4861 = vmatprep.subr.mxu0 0.0
      %4862 = vmatpush1.msra.mxu0 0.0
      %4863 = vmatprep.subr.mxu0 0.0
      %4864 = vmatpush1.msra.mxu0 0.0
      %4865 = vmatprep.subr.mxu0 0.0
      %4866 = vmatpush1.msra.mxu0 0.0
      %4867 = vmatprep.subr.mxu0 0.0
      %4868 = vmatpush1.msra.mxu0 0.0
      %4869 = vmatprep.subr.mxu0 0.0
      %4870 = vmatpush1.msra.mxu0 0.0
      %4871 = vmatprep.subr.mxu0 0.0
      %4872 = vmatpush1.msra.mxu0 0.0
      %4873 = vmatprep.subr.mxu0 0.0
      %4874 = vmatpush1.msra.mxu0 0.0
      %4875 = vmatprep.mubr.f32.mxu0 0.0
      %4876 = vmatmul.mubr.f32.gmra.mrb[0].mxu0 %v4758
      %v4877 = vpop.f32.mrb[0].mxu0
      %v4878 = vadd.f32 0.0, %v4877
      %v4879 = vpop.f32.mrb[0].mxu0
      %4880 = vmatprep.mubr.f32.mxu0 0.0
      %4881 = vmatmul.mubr.f32.gmra.mrb[0].mxu0 %v4761
      %v4882 = vpop.f32.mrb[0].mxu0
      %v4883 = vadd.f32 0.0, %v4882
      %v4884 = vpop.f32.mrb[0].mxu0
      %4885 = vmatprep.mubr.f32.mxu0 0.0
      %4886 = vmatmul.mubr.f32.gmra.mrb[0].mxu0 %v4764
      %v4887 = vpop.f32.mrb[0].mxu0
      %v4888 = vadd.f32 0.0, %v4887
      %v4889 = vpop.f32.mrb[0].mxu0
      %4890 = vmatprep.mubr.f32.mxu0 0.0
      %4891 = vmatmul.mubr.f32.gmra.mrb[0].mxu0 %v4767
      %v4892 = vpop.f32.mrb[0].mxu0
      %v4893 = vadd.f32 0.0, %v4892
      %v4894 = vpop.f32.mrb[0].mxu0
      %4895 = vmatprep.mubr.f32.mxu0 0.0
      %4896 = vmatmul.mubr.f32.gmra.mrb[0].mxu0 %v4770
      %v4897 = vpop.f32.mrb[0].mxu0
      %v4898 = vadd.f32 0.0, %v4897
      %v4899 = vpop.f32.mrb[0].mxu0
      %4900 = vmatprep.mubr.f32.mxu0 0.0
      %4901 = vmatmul.mubr.f32.gmra.mrb[0].mxu0 %v4773
      %v4902 = vpop.f32.mrb[0].mxu0
      %v4903 = vadd.f32 0.0, %v4902
      %v4904 = vpop.f32.mrb[0].mxu0
      %4905 = vmatprep.mubr.f32.mxu0 0.0
      %4906 = vmatmul.mubr.f32.gmra.mrb[0].mxu0 %v4776
      %v4907 = vpop.f32.mrb[0].mxu0
      %v4908 = vadd.f32 0.0, %v4907
      %v4909 = vpop.f32.mrb[0].mxu0
      %4910 = vmatprep.mubr.f32.mxu0 0.0
      %4911 = vmatmul.mubr.f32.gmra.mrb[0].mxu0 %v4779
      %v4912 = vpop.f32.mrb[0].mxu0
      %v4913 = vadd.f32 0.0, %v4912
      %v4914 = vpop.f32.mrb[0].mxu0
      %4915 = vmatprep.mubr.f32.mxu0 0.0
      %4916 = vmatmul.mubr.f32.gmra.mrb[0].mxu0 %v4782
      %v4917 = vpop.f32.mrb[0].mxu0
      %v4918 = vadd.f32 0.0, %v4917
      %v4919 = vpop.f32.mrb[0].mxu0
      %4920 = vmatprep.mubr.f32.mxu0 0.0
      %4921 = vmatmul.mubr.f32.gmra.mrb[0].mxu0 %v4785
      %v4922 = vpop.f32.mrb[0].mxu0
      %v4923 = vadd.f32 0.0, %v4922
      %v4924 = vpop.f32.mrb[0].mxu0
      %4925 = vmatprep.mubr.f32.mxu0 0.0
      %4926 = vmatmul.mubr.f32.gmra.mrb[0].mxu0 %v4788
      %v4927 = vpop.f32.mrb[0].mxu0
      %v4928 = vadd.f32 0.0, %v4927
      %v4929 = vpop.f32.mrb[0].mxu0
      %4930 = vmatprep.mubr.f32.mxu0 0.0
      %4931 = vmatmul.mubr.f32.gmra.mrb[0].mxu0 %v4791
      %v4932 = vpop.f32.mrb[0].mxu0
      %v4933 = vadd.f32 0.0, %v4932
      %v4934 = vpop.f32.mrb[0].mxu0
      %4935 = vmatprep.mubr.f32.mxu0 0.0
      %4936 = vmatmul.mubr.f32.gmra.mrb[0].mxu0 %v4794
      %v4937 = vpop.f32.mrb[0].mxu0
      %v4938 = vadd.f32 0.0, %v4937
      %v4939 = vpop.f32.mrb[0].mxu0
      %4940 = vmatprep.mubr.f32.mxu0 0.0
      %4941 = vmatmul.mubr.f32.gmra.mrb[0].mxu0 %v4797
      %v4942 = vpop.f32.mrb[0].mxu0
      %v4943 = vadd.f32 0.0, %v4942
      %v4944 = vpop.f32.mrb[0].mxu0
      %4945 = vmatprep.mubr.f32.mxu0 0.0
      %4946 = vmatmul.mubr.f32.gmra.mrb[0].mxu0 %v4800
      %v4947 = vpop.f32.mrb[0].mxu0
      %v4948 = vadd.f32 0.0, %v4947
      %v4949 = vpop.f32.mrb[0].mxu0
      %4950 = vmatprep.mubr.f32.mxu0 0.0
      %4951 = vmatmul.mubr.f32.gmra.mrb[0].mxu0 %v4803
      %v4952 = vpop.f32.mrb[0].mxu0
      %v4953 = vadd.f32 0.0, %v4952
      %v4954 = vpop.f32.mrb[0].mxu0
      %4955 = vmatprep.mubr.f32.mxu0 0.0
      %4956 = vmatmul.mubr.f32.gmra.mrb[0].mxu0 %v4806
      %v4957 = vpop.f32.mrb[0].mxu0
      %v4958 = vadd.f32 0.0, %v4957
      %v4959 = vpop.f32.mrb[0].mxu0
      %4960 = vmatprep.mubr.f32.mxu0 0.0
      %4961 = vmatmul.mubr.f32.gmra.mrb[0].mxu0 %v4809
      %v4962 = vpop.f32.mrb[0].mxu0
      %v4963 = vadd.f32 0.0, %v4962
      %v4964 = vpop.f32.mrb[0].mxu0
      %4965 = vdwg.mxu0
      %v4966 = vadd.f32 %v4719, %v4878
      %v4967 = vadd.f32 %v4720, %v4883
      %v4968 = vadd.f32 %v4721, %v4888
      %v4969 = vadd.f32 %v4722, %v4893
      %v4970 = vadd.f32 %v4723, %v4898
      %v4971 = vadd.f32 %v4724, %v4903
      %v4972 = vadd.f32 %v4725, %v4908
      %v4973 = vadd.f32 %v4726, %v4913
      %v4974 = vadd.f32 %v4727, %v4918
      %v4975 = vadd.f32 %v4728, %v4923
      %v4976 = vadd.f32 %v4729, %v4928
      %v4977 = vadd.f32 %v4730, %v4933
      %v4978 = vadd.f32 %v4731, %v4938
      %v4979 = vadd.f32 %v4732, %v4943
      %v4980 = vadd.f32 %v4733, %v4948
      %v4981 = vadd.f32 %v4734, %v4953
      %v4982 = vadd.f32 %v4735, %v4958
      %v4983 = vadd.f32 %v4736, %v4963
      %v4984 = vld [vmem:[#allocation2 + $0x1d] sm:$0xff]
      %v4985 = vld [vmem:[#allocation2 + $0x25] sm:$0xff]
      %v4986 = vld [vmem:[#allocation2 + $0x2d] sm:$0xff]
      %v4987 = vld [vmem:[#allocation2 + $0x35] sm:$0xff]
      %v4988 = vld [vmem:[#allocation2 + $0x3d] sm:$0xff]
      %v4989 = vld [vmem:[#allocation2 + $0x45] sm:$0xff]
      %v4990 = vld [vmem:[#allocation2 + $0x4d] sm:$0xff]
      %v4991 = vld [vmem:[#allocation2 + $0x55] sm:$0xff]
      %v4992 = vld [vmem:[#allocation2 + $0x5d] sm:$0xff]
      %v4993 = vld [vmem:[#allocation2 + $0x65] sm:$0xff]
      %v4994 = vld [vmem:[#allocation2 + $0x6d] sm:$0xff]
      %v4995 = vld [vmem:[#allocation2 + $0x75] sm:$0xff]
      %v4996 = vld [vmem:[#allocation2 + $0x7d] sm:$0xff]
      %v4997 = vld [vmem:[#allocation2 + $0x85] sm:$0xff]
      %v4998 = vld [vmem:[#allocation2 + $0x8d] sm:$0xff]
      %v4999 = vld [vmem:[#allocation2 + $0x95] sm:$0xff]
      %v5000 = vld [vmem:[#allocation2 + $0x9d] sm:$0xff]
      %v5001 = vld [vmem:[#allocation2 + $0xa5] sm:$0xf]
      %s5002 = scalar_lea.vmem %s3, 88
      %v5003 = vld [vmem:[%s5002] sm:$0xff]
      %v5005 = vsel %vm2286, %v4984, 0
      %v5008 = vsel %vm2286, %v4985, 0
      %v5011 = vsel %vm2286, %v4986, 0
      %v5014 = vsel %vm2286, %v4987, 0
      %v5017 = vsel %vm2286, %v4988, 0
      %v5020 = vsel %vm2286, %v4989, 0
      %v5023 = vsel %vm2286, %v4990, 0
      %v5026 = vsel %vm2286, %v4991, 0
      %v5029 = vsel %vm2286, %v4992, 0
      %v5032 = vsel %vm2286, %v4993, 0
      %v5035 = vsel %vm2286, %v4994, 0
      %v5038 = vsel %vm2286, %v4995, 0
      %v5041 = vsel %vm2286, %v4996, 0
      %v5044 = vsel %vm2286, %v4997, 0
      %v5047 = vsel %vm2286, %v4998, 0
      %v5050 = vsel %vm2286, %v4999, 0
      %v5053 = vsel %vm2286, %v5000, 0
      %v5056 = vsel %vm2286, %v5001, 0
      %5058 = vmatprep.subr.mxu0 0.0
      %5059 = vmatpush1.msra.mxu0 %v5003
      %5060 = vmatprep.subr.mxu0 0.0
      %5061 = vmatpush1.msra.mxu0 0.0
      %5062 = vmatprep.subr.mxu0 0.0
      %5063 = vmatpush1.msra.mxu0 0.0
      %5064 = vmatprep.subr.mxu0 0.0
      %5065 = vmatpush1.msra.mxu0 0.0
      %5066 = vmatprep.subr.mxu0 0.0
      %5067 = vmatpush1.msra.mxu0 0.0
      %5068 = vmatprep.subr.mxu0 0.0
      %5069 = vmatpush1.msra.mxu0 0.0
      %5070 = vmatprep.subr.mxu0 0.0
      %5071 = vmatpush1.msra.mxu0 0.0
      %5072 = vmatprep.subr.mxu0 0.0
      %5073 = vmatpush1.msra.mxu0 0.0
      %5074 = vmatprep.subr.mxu0 0.0
      %5075 = vmatpush1.msra.mxu0 0.0
      %5076 = vmatprep.subr.mxu0 0.0
      %5077 = vmatpush1.msra.mxu0 0.0
      %5078 = vmatprep.subr.mxu0 0.0
      %5079 = vmatpush1.msra.mxu0 0.0
      %5080 = vmatprep.subr.mxu0 0.0
      %5081 = vmatpush1.msra.mxu0 0.0
      %5082 = vmatprep.subr.mxu0 0.0
      %5083 = vmatpush1.msra.mxu0 0.0
      %5084 = vmatprep.subr.mxu0 0.0
      %5085 = vmatpush1.msra.mxu0 0.0
      %5086 = vmatprep.subr.mxu0 0.0
      %5087 = vmatpush1.msra.mxu0 0.0
      %5088 = vmatprep.subr.mxu0 0.0
      %5089 = vmatpush1.msra.mxu0 0.0
      %5090 = vmatprep.subr.mxu0 0.0
      %5091 = vmatpush1.msra.mxu0 0.0
      %5092 = vmatprep.subr.mxu0 0.0
      %5093 = vmatpush1.msra.mxu0 0.0
      %5094 = vmatprep.subr.mxu0 0.0
      %5095 = vmatpush1.msra.mxu0 0.0
      %5096 = vmatprep.subr.mxu0 0.0
      %5097 = vmatpush1.msra.mxu0 0.0
      %5098 = vmatprep.subr.mxu0 0.0
      %5099 = vmatpush1.msra.mxu0 0.0
      %5100 = vmatprep.subr.mxu0 0.0
      %5101 = vmatpush1.msra.mxu0 0.0
      %5102 = vmatprep.subr.mxu0 0.0
      %5103 = vmatpush1.msra.mxu0 0.0
      %5104 = vmatprep.subr.mxu0 0.0
      %5105 = vmatpush1.msra.mxu0 0.0
      %5106 = vmatprep.subr.mxu0 0.0
      %5107 = vmatpush1.msra.mxu0 0.0
      %5108 = vmatprep.subr.mxu0 0.0
      %5109 = vmatpush1.msra.mxu0 0.0
      %5110 = vmatprep.subr.mxu0 0.0
      %5111 = vmatpush1.msra.mxu0 0.0
      %5112 = vmatprep.subr.mxu0 0.0
      %5113 = vmatpush1.msra.mxu0 0.0
      %5114 = vmatprep.subr.mxu0 0.0
      %5115 = vmatpush1.msra.mxu0 0.0
      %5116 = vmatprep.subr.mxu0 0.0
      %5117 = vmatpush1.msra.mxu0 0.0
      %5118 = vmatprep.subr.mxu0 0.0
      %5119 = vmatpush1.msra.mxu0 0.0
      %5120 = vmatprep.subr.mxu0 0.0
      %5121 = vmatpush1.msra.mxu0 0.0
      %5122 = vmatprep.mubr.f32.mxu0 0.0
      %5123 = vmatmul.mubr.f32.gmra.mrb[0].mxu0 %v5005
      %v5124 = vpop.f32.mrb[0].mxu0
      %v5125 = vadd.f32 0.0, %v5124
      %v5126 = vpop.f32.mrb[0].mxu0
      %5127 = vmatprep.mubr.f32.mxu0 0.0
      %5128 = vmatmul.mubr.f32.gmra.mrb[0].mxu0 %v5008
      %v5129 = vpop.f32.mrb[0].mxu0
      %v5130 = vadd.f32 0.0, %v5129
      %v5131 = vpop.f32.mrb[0].mxu0
      %5132 = vmatprep.mubr.f32.mxu0 0.0
      %5133 = vmatmul.mubr.f32.gmra.mrb[0].mxu0 %v5011
      %v5134 = vpop.f32.mrb[0].mxu0
      %v5135 = vadd.f32 0.0, %v5134
      %v5136 = vpop.f32.mrb[0].mxu0
      %5137 = vmatprep.mubr.f32.mxu0 0.0
      %5138 = vmatmul.mubr.f32.gmra.mrb[0].mxu0 %v5014
      %v5139 = vpop.f32.mrb[0].mxu0
      %v5140 = vadd.f32 0.0, %v5139
      %v5141 = vpop.f32.mrb[0].mxu0
      %5142 = vmatprep.mubr.f32.mxu0 0.0
      %5143 = vmatmul.mubr.f32.gmra.mrb[0].mxu0 %v5017
      %v5144 = vpop.f32.mrb[0].mxu0
      %v5145 = vadd.f32 0.0, %v5144
      %v5146 = vpop.f32.mrb[0].mxu0
      %5147 = vmatprep.mubr.f32.mxu0 0.0
      %5148 = vmatmul.mubr.f32.gmra.mrb[0].mxu0 %v5020
      %v5149 = vpop.f32.mrb[0].mxu0
      %v5150 = vadd.f32 0.0, %v5149
      %v5151 = vpop.f32.mrb[0].mxu0
      %5152 = vmatprep.mubr.f32.mxu0 0.0
      %5153 = vmatmul.mubr.f32.gmra.mrb[0].mxu0 %v5023
      %v5154 = vpop.f32.mrb[0].mxu0
      %v5155 = vadd.f32 0.0, %v5154
      %v5156 = vpop.f32.mrb[0].mxu0
      %5157 = vmatprep.mubr.f32.mxu0 0.0
      %5158 = vmatmul.mubr.f32.gmra.mrb[0].mxu0 %v5026
      %v5159 = vpop.f32.mrb[0].mxu0
      %v5160 = vadd.f32 0.0, %v5159
      %v5161 = vpop.f32.mrb[0].mxu0
      %5162 = vmatprep.mubr.f32.mxu0 0.0
      %5163 = vmatmul.mubr.f32.gmra.mrb[0].mxu0 %v5029
      %v5164 = vpop.f32.mrb[0].mxu0
      %v5165 = vadd.f32 0.0, %v5164
      %v5166 = vpop.f32.mrb[0].mxu0
      %5167 = vmatprep.mubr.f32.mxu0 0.0
      %5168 = vmatmul.mubr.f32.gmra.mrb[0].mxu0 %v5032
      %v5169 = vpop.f32.mrb[0].mxu0
      %v5170 = vadd.f32 0.0, %v5169
      %v5171 = vpop.f32.mrb[0].mxu0
      %5172 = vmatprep.mubr.f32.mxu0 0.0
      %5173 = vmatmul.mubr.f32.gmra.mrb[0].mxu0 %v5035
      %v5174 = vpop.f32.mrb[0].mxu0
      %v5175 = vadd.f32 0.0, %v5174
      %v5176 = vpop.f32.mrb[0].mxu0
      %5177 = vmatprep.mubr.f32.mxu0 0.0
      %5178 = vmatmul.mubr.f32.gmra.mrb[0].mxu0 %v5038
      %v5179 = vpop.f32.mrb[0].mxu0
      %v5180 = vadd.f32 0.0, %v5179
      %v5181 = vpop.f32.mrb[0].mxu0
      %5182 = vmatprep.mubr.f32.mxu0 0.0
      %5183 = vmatmul.mubr.f32.gmra.mrb[0].mxu0 %v5041
      %v5184 = vpop.f32.mrb[0].mxu0
      %v5185 = vadd.f32 0.0, %v5184
      %v5186 = vpop.f32.mrb[0].mxu0
      %5187 = vmatprep.mubr.f32.mxu0 0.0
      %5188 = vmatmul.mubr.f32.gmra.mrb[0].mxu0 %v5044
      %v5189 = vpop.f32.mrb[0].mxu0
      %v5190 = vadd.f32 0.0, %v5189
      %v5191 = vpop.f32.mrb[0].mxu0
      %5192 = vmatprep.mubr.f32.mxu0 0.0
      %5193 = vmatmul.mubr.f32.gmra.mrb[0].mxu0 %v5047
      %v5194 = vpop.f32.mrb[0].mxu0
      %v5195 = vadd.f32 0.0, %v5194
      %v5196 = vpop.f32.mrb[0].mxu0
      %5197 = vmatprep.mubr.f32.mxu0 0.0
      %5198 = vmatmul.mubr.f32.gmra.mrb[0].mxu0 %v5050
      %v5199 = vpop.f32.mrb[0].mxu0
      %v5200 = vadd.f32 0.0, %v5199
      %v5201 = vpop.f32.mrb[0].mxu0
      %5202 = vmatprep.mubr.f32.mxu0 0.0
      %5203 = vmatmul.mubr.f32.gmra.mrb[0].mxu0 %v5053
      %v5204 = vpop.f32.mrb[0].mxu0
      %v5205 = vadd.f32 0.0, %v5204
      %v5206 = vpop.f32.mrb[0].mxu0
      %5207 = vmatprep.mubr.f32.mxu0 0.0
      %5208 = vmatmul.mubr.f32.gmra.mrb[0].mxu0 %v5056
      %v5209 = vpop.f32.mrb[0].mxu0
      %v5210 = vadd.f32 0.0, %v5209
      %v5211 = vpop.f32.mrb[0].mxu0
      %5212 = vdwg.mxu0
      %v5213 = vadd.f32 %v4966, %v5125
      %v5214 = vadd.f32 %v4967, %v5130
      %v5215 = vadd.f32 %v4968, %v5135
      %v5216 = vadd.f32 %v4969, %v5140
      %v5217 = vadd.f32 %v4970, %v5145
      %v5218 = vadd.f32 %v4971, %v5150
      %v5219 = vadd.f32 %v4972, %v5155
      %v5220 = vadd.f32 %v4973, %v5160
      %v5221 = vadd.f32 %v4974, %v5165
      %v5222 = vadd.f32 %v4975, %v5170
      %v5223 = vadd.f32 %v4976, %v5175
      %v5224 = vadd.f32 %v4977, %v5180
      %v5225 = vadd.f32 %v4978, %v5185
      %v5226 = vadd.f32 %v4979, %v5190
      %v5227 = vadd.f32 %v4980, %v5195
      %v5228 = vadd.f32 %v4981, %v5200
      %v5229 = vadd.f32 %v4982, %v5205
      %v5230 = vadd.f32 %v4983, %v5210
      %v5231 = vld [vmem:[#allocation2 + $0x1e] sm:$0xff]
      %v5232 = vld [vmem:[#allocation2 + $0x26] sm:$0xff]
      %v5233 = vld [vmem:[#allocation2 + $0x2e] sm:$0xff]
      %v5234 = vld [vmem:[#allocation2 + $0x36] sm:$0xff]
      %v5235 = vld [vmem:[#allocation2 + $0x3e] sm:$0xff]
      %v5236 = vld [vmem:[#allocation2 + $0x46] sm:$0xff]
      %v5237 = vld [vmem:[#allocation2 + $0x4e] sm:$0xff]
      %v5238 = vld [vmem:[#allocation2 + $0x56] sm:$0xff]
      %v5239 = vld [vmem:[#allocation2 + $0x5e] sm:$0xff]
      %v5240 = vld [vmem:[#allocation2 + $0x66] sm:$0xff]
      %v5241 = vld [vmem:[#allocation2 + $0x6e] sm:$0xff]
      %v5242 = vld [vmem:[#allocation2 + $0x76] sm:$0xff]
      %v5243 = vld [vmem:[#allocation2 + $0x7e] sm:$0xff]
      %v5244 = vld [vmem:[#allocation2 + $0x86] sm:$0xff]
      %v5245 = vld [vmem:[#allocation2 + $0x8e] sm:$0xff]
      %v5246 = vld [vmem:[#allocation2 + $0x96] sm:$0xff]
      %v5247 = vld [vmem:[#allocation2 + $0x9e] sm:$0xff]
      %v5248 = vld [vmem:[#allocation2 + $0xa6] sm:$0xf]
      %s5249 = scalar_lea.vmem %s3, 96
      %v5250 = vld [vmem:[%s5249] sm:$0xff]
      %v5252 = vsel %vm2286, %v5231, 0
      %v5255 = vsel %vm2286, %v5232, 0
      %v5258 = vsel %vm2286, %v5233, 0
      %v5261 = vsel %vm2286, %v5234, 0
      %v5264 = vsel %vm2286, %v5235, 0
      %v5267 = vsel %vm2286, %v5236, 0
      %v5270 = vsel %vm2286, %v5237, 0
      %v5273 = vsel %vm2286, %v5238, 0
      %v5276 = vsel %vm2286, %v5239, 0
      %v5279 = vsel %vm2286, %v5240, 0
      %v5282 = vsel %vm2286, %v5241, 0
      %v5285 = vsel %vm2286, %v5242, 0
      %v5288 = vsel %vm2286, %v5243, 0
      %v5291 = vsel %vm2286, %v5244, 0
      %v5294 = vsel %vm2286, %v5245, 0
      %v5297 = vsel %vm2286, %v5246, 0
      %v5300 = vsel %vm2286, %v5247, 0
      %v5303 = vsel %vm2286, %v5248, 0
      %5305 = vmatprep.subr.mxu0 0.0
      %5306 = vmatpush1.msra.mxu0 %v5250
      %5307 = vmatprep.subr.mxu0 0.0
      %5308 = vmatpush1.msra.mxu0 0.0
      %5309 = vmatprep.subr.mxu0 0.0
      %5310 = vmatpush1.msra.mxu0 0.0
      %5311 = vmatprep.subr.mxu0 0.0
      %5312 = vmatpush1.msra.mxu0 0.0
      %5313 = vmatprep.subr.mxu0 0.0
      %5314 = vmatpush1.msra.mxu0 0.0
      %5315 = vmatprep.subr.mxu0 0.0
      %5316 = vmatpush1.msra.mxu0 0.0
      %5317 = vmatprep.subr.mxu0 0.0
      %5318 = vmatpush1.msra.mxu0 0.0
      %5319 = vmatprep.subr.mxu0 0.0
      %5320 = vmatpush1.msra.mxu0 0.0
      %5321 = vmatprep.subr.mxu0 0.0
      %5322 = vmatpush1.msra.mxu0 0.0
      %5323 = vmatprep.subr.mxu0 0.0
      %5324 = vmatpush1.msra.mxu0 0.0
      %5325 = vmatprep.subr.mxu0 0.0
      %5326 = vmatpush1.msra.mxu0 0.0
      %5327 = vmatprep.subr.mxu0 0.0
      %5328 = vmatpush1.msra.mxu0 0.0
      %5329 = vmatprep.subr.mxu0 0.0
      %5330 = vmatpush1.msra.mxu0 0.0
      %5331 = vmatprep.subr.mxu0 0.0
      %5332 = vmatpush1.msra.mxu0 0.0
      %5333 = vmatprep.subr.mxu0 0.0
      %5334 = vmatpush1.msra.mxu0 0.0
      %5335 = vmatprep.subr.mxu0 0.0
      %5336 = vmatpush1.msra.mxu0 0.0
      %5337 = vmatprep.subr.mxu0 0.0
      %5338 = vmatpush1.msra.mxu0 0.0
      %5339 = vmatprep.subr.mxu0 0.0
      %5340 = vmatpush1.msra.mxu0 0.0
      %5341 = vmatprep.subr.mxu0 0.0
      %5342 = vmatpush1.msra.mxu0 0.0
      %5343 = vmatprep.subr.mxu0 0.0
      %5344 = vmatpush1.msra.mxu0 0.0
      %5345 = vmatprep.subr.mxu0 0.0
      %5346 = vmatpush1.msra.mxu0 0.0
      %5347 = vmatprep.subr.mxu0 0.0
      %5348 = vmatpush1.msra.mxu0 0.0
      %5349 = vmatprep.subr.mxu0 0.0
      %5350 = vmatpush1.msra.mxu0 0.0
      %5351 = vmatprep.subr.mxu0 0.0
      %5352 = vmatpush1.msra.mxu0 0.0
      %5353 = vmatprep.subr.mxu0 0.0
      %5354 = vmatpush1.msra.mxu0 0.0
      %5355 = vmatprep.subr.mxu0 0.0
      %5356 = vmatpush1.msra.mxu0 0.0
      %5357 = vmatprep.subr.mxu0 0.0
      %5358 = vmatpush1.msra.mxu0 0.0
      %5359 = vmatprep.subr.mxu0 0.0
      %5360 = vmatpush1.msra.mxu0 0.0
      %5361 = vmatprep.subr.mxu0 0.0
      %5362 = vmatpush1.msra.mxu0 0.0
      %5363 = vmatprep.subr.mxu0 0.0
      %5364 = vmatpush1.msra.mxu0 0.0
      %5365 = vmatprep.subr.mxu0 0.0
      %5366 = vmatpush1.msra.mxu0 0.0
      %5367 = vmatprep.subr.mxu0 0.0
      %5368 = vmatpush1.msra.mxu0 0.0
      %5369 = vmatprep.mubr.f32.mxu0 0.0
      %5370 = vmatmul.mubr.f32.gmra.mrb[0].mxu0 %v5252
      %v5371 = vpop.f32.mrb[0].mxu0
      %v5372 = vadd.f32 0.0, %v5371
      %v5373 = vpop.f32.mrb[0].mxu0
      %5374 = vmatprep.mubr.f32.mxu0 0.0
      %5375 = vmatmul.mubr.f32.gmra.mrb[0].mxu0 %v5255
      %v5376 = vpop.f32.mrb[0].mxu0
      %v5377 = vadd.f32 0.0, %v5376
      %v5378 = vpop.f32.mrb[0].mxu0
      %5379 = vmatprep.mubr.f32.mxu0 0.0
      %5380 = vmatmul.mubr.f32.gmra.mrb[0].mxu0 %v5258
      %v5381 = vpop.f32.mrb[0].mxu0
      %v5382 = vadd.f32 0.0, %v5381
      %v5383 = vpop.f32.mrb[0].mxu0
      %5384 = vmatprep.mubr.f32.mxu0 0.0
      %5385 = vmatmul.mubr.f32.gmra.mrb[0].mxu0 %v5261
      %v5386 = vpop.f32.mrb[0].mxu0
      %v5387 = vadd.f32 0.0, %v5386
      %v5388 = vpop.f32.mrb[0].mxu0
      %5389 = vmatprep.mubr.f32.mxu0 0.0
      %5390 = vmatmul.mubr.f32.gmra.mrb[0].mxu0 %v5264
      %v5391 = vpop.f32.mrb[0].mxu0
      %v5392 = vadd.f32 0.0, %v5391
      %v5393 = vpop.f32.mrb[0].mxu0
      %5394 = vmatprep.mubr.f32.mxu0 0.0
      %5395 = vmatmul.mubr.f32.gmra.mrb[0].mxu0 %v5267
      %v5396 = vpop.f32.mrb[0].mxu0
      %v5397 = vadd.f32 0.0, %v5396
      %v5398 = vpop.f32.mrb[0].mxu0
      %5399 = vmatprep.mubr.f32.mxu0 0.0
      %5400 = vmatmul.mubr.f32.gmra.mrb[0].mxu0 %v5270
      %v5401 = vpop.f32.mrb[0].mxu0
      %v5402 = vadd.f32 0.0, %v5401
      %v5403 = vpop.f32.mrb[0].mxu0
      %5404 = vmatprep.mubr.f32.mxu0 0.0
      %5405 = vmatmul.mubr.f32.gmra.mrb[0].mxu0 %v5273
      %v5406 = vpop.f32.mrb[0].mxu0
      %v5407 = vadd.f32 0.0, %v5406
      %v5408 = vpop.f32.mrb[0].mxu0
      %5409 = vmatprep.mubr.f32.mxu0 0.0
      %5410 = vmatmul.mubr.f32.gmra.mrb[0].mxu0 %v5276
      %v5411 = vpop.f32.mrb[0].mxu0
      %v5412 = vadd.f32 0.0, %v5411
      %v5413 = vpop.f32.mrb[0].mxu0
      %5414 = vmatprep.mubr.f32.mxu0 0.0
      %5415 = vmatmul.mubr.f32.gmra.mrb[0].mxu0 %v5279
      %v5416 = vpop.f32.mrb[0].mxu0
      %v5417 = vadd.f32 0.0, %v5416
      %v5418 = vpop.f32.mrb[0].mxu0
      %5419 = vmatprep.mubr.f32.mxu0 0.0
      %5420 = vmatmul.mubr.f32.gmra.mrb[0].mxu0 %v5282
      %v5421 = vpop.f32.mrb[0].mxu0
      %v5422 = vadd.f32 0.0, %v5421
      %v5423 = vpop.f32.mrb[0].mxu0
      %5424 = vmatprep.mubr.f32.mxu0 0.0
      %5425 = vmatmul.mubr.f32.gmra.mrb[0].mxu0 %v5285
      %v5426 = vpop.f32.mrb[0].mxu0
      %v5427 = vadd.f32 0.0, %v5426
      %v5428 = vpop.f32.mrb[0].mxu0
      %5429 = vmatprep.mubr.f32.mxu0 0.0
      %5430 = vmatmul.mubr.f32.gmra.mrb[0].mxu0 %v5288
      %v5431 = vpop.f32.mrb[0].mxu0
      %v5432 = vadd.f32 0.0, %v5431
      %v5433 = vpop.f32.mrb[0].mxu0
      %5434 = vmatprep.mubr.f32.mxu0 0.0
      %5435 = vmatmul.mubr.f32.gmra.mrb[0].mxu0 %v5291
      %v5436 = vpop.f32.mrb[0].mxu0
      %v5437 = vadd.f32 0.0, %v5436
      %v5438 = vpop.f32.mrb[0].mxu0
      %5439 = vmatprep.mubr.f32.mxu0 0.0
      %5440 = vmatmul.mubr.f32.gmra.mrb[0].mxu0 %v5294
      %v5441 = vpop.f32.mrb[0].mxu0
      %v5442 = vadd.f32 0.0, %v5441
      %v5443 = vpop.f32.mrb[0].mxu0
      %5444 = vmatprep.mubr.f32.mxu0 0.0
      %5445 = vmatmul.mubr.f32.gmra.mrb[0].mxu0 %v5297
      %v5446 = vpop.f32.mrb[0].mxu0
      %v5447 = vadd.f32 0.0, %v5446
      %v5448 = vpop.f32.mrb[0].mxu0
      %5449 = vmatprep.mubr.f32.mxu0 0.0
      %5450 = vmatmul.mubr.f32.gmra.mrb[0].mxu0 %v5300
      %v5451 = vpop.f32.mrb[0].mxu0
      %v5452 = vadd.f32 0.0, %v5451
      %v5453 = vpop.f32.mrb[0].mxu0
      %5454 = vmatprep.mubr.f32.mxu0 0.0
      %5455 = vmatmul.mubr.f32.gmra.mrb[0].mxu0 %v5303
      %v5456 = vpop.f32.mrb[0].mxu0
      %v5457 = vadd.f32 0.0, %v5456
      %v5458 = vpop.f32.mrb[0].mxu0
      %5459 = vdwg.mxu0
      %v5460 = vadd.f32 %v5213, %v5372
      %v5461 = vadd.f32 %v5214, %v5377
      %v5462 = vadd.f32 %v5215, %v5382
      %v5463 = vadd.f32 %v5216, %v5387
      %v5464 = vadd.f32 %v5217, %v5392
      %v5465 = vadd.f32 %v5218, %v5397
      %v5466 = vadd.f32 %v5219, %v5402
      %v5467 = vadd.f32 %v5220, %v5407
      %v5468 = vadd.f32 %v5221, %v5412
      %v5469 = vadd.f32 %v5222, %v5417
      %v5470 = vadd.f32 %v5223, %v5422
      %v5471 = vadd.f32 %v5224, %v5427
      %v5472 = vadd.f32 %v5225, %v5432
      %v5473 = vadd.f32 %v5226, %v5437
      %v5474 = vadd.f32 %v5227, %v5442
      %v5475 = vadd.f32 %v5228, %v5447
      %v5476 = vadd.f32 %v5229, %v5452
      %v5477 = vadd.f32 %v5230, %v5457
      %v5478 = vld [vmem:[#allocation2 + $0x1f] sm:$0xff]
      %v5479 = vld [vmem:[#allocation2 + $0x27] sm:$0xff]
      %v5480 = vld [vmem:[#allocation2 + $0x2f] sm:$0xff]
      %v5481 = vld [vmem:[#allocation2 + $0x37] sm:$0xff]
      %v5482 = vld [vmem:[#allocation2 + $0x3f] sm:$0xff]
      %v5483 = vld [vmem:[#allocation2 + $0x47] sm:$0xff]
      %v5484 = vld [vmem:[#allocation2 + $0x4f] sm:$0xff]
      %v5485 = vld [vmem:[#allocation2 + $0x57] sm:$0xff]
      %v5486 = vld [vmem:[#allocation2 + $0x5f] sm:$0xff]
      %v5487 = vld [vmem:[#allocation2 + $0x67] sm:$0xff]
      %v5488 = vld [vmem:[#allocation2 + $0x6f] sm:$0xff]
      %v5489 = vld [vmem:[#allocation2 + $0x77] sm:$0xff]
      %v5490 = vld [vmem:[#allocation2 + $0x7f] sm:$0xff]
      %v5491 = vld [vmem:[#allocation2 + $0x87] sm:$0xff]
      %v5492 = vld [vmem:[#allocation2 + $0x8f] sm:$0xff]
      %v5493 = vld [vmem:[#allocation2 + $0x97] sm:$0xff]
      %v5494 = vld [vmem:[#allocation2 + $0x9f] sm:$0xff]
      %v5495 = vld [vmem:[#allocation2 + $0xa7] sm:$0xf]
      %s5496 = scalar_lea.vmem %s3, 104
      %v5497 = vld [vmem:[%s5496] sm:$0xff]
      %v5499 = vsel %vm2286, %v5478, 0
      %v5502 = vsel %vm2286, %v5479, 0
      %v5505 = vsel %vm2286, %v5480, 0
      %v5508 = vsel %vm2286, %v5481, 0
      %v5511 = vsel %vm2286, %v5482, 0
      %v5514 = vsel %vm2286, %v5483, 0
      %v5517 = vsel %vm2286, %v5484, 0
      %v5520 = vsel %vm2286, %v5485, 0
      %v5523 = vsel %vm2286, %v5486, 0
      %v5526 = vsel %vm2286, %v5487, 0
      %v5529 = vsel %vm2286, %v5488, 0
      %v5532 = vsel %vm2286, %v5489, 0
      %v5535 = vsel %vm2286, %v5490, 0
      %v5538 = vsel %vm2286, %v5491, 0
      %v5541 = vsel %vm2286, %v5492, 0
      %v5544 = vsel %vm2286, %v5493, 0
      %v5547 = vsel %vm2286, %v5494, 0
      %v5550 = vsel %vm2286, %v5495, 0
      %5552 = vmatprep.subr.mxu0 0.0
      %5553 = vmatpush1.msra.mxu0 %v5497
      %5554 = vmatprep.subr.mxu0 0.0
      %5555 = vmatpush1.msra.mxu0 0.0
      %5556 = vmatprep.subr.mxu0 0.0
      %5557 = vmatpush1.msra.mxu0 0.0
      %5558 = vmatprep.subr.mxu0 0.0
      %5559 = vmatpush1.msra.mxu0 0.0
      %5560 = vmatprep.subr.mxu0 0.0
      %5561 = vmatpush1.msra.mxu0 0.0
      %5562 = vmatprep.subr.mxu0 0.0
      %5563 = vmatpush1.msra.mxu0 0.0
      %5564 = vmatprep.subr.mxu0 0.0
      %5565 = vmatpush1.msra.mxu0 0.0
      %5566 = vmatprep.subr.mxu0 0.0
      %5567 = vmatpush1.msra.mxu0 0.0
      %5568 = vmatprep.subr.mxu0 0.0
      %5569 = vmatpush1.msra.mxu0 0.0
      %5570 = vmatprep.subr.mxu0 0.0
      %5571 = vmatpush1.msra.mxu0 0.0
      %5572 = vmatprep.subr.mxu0 0.0
      %5573 = vmatpush1.msra.mxu0 0.0
      %5574 = vmatprep.subr.mxu0 0.0
      %5575 = vmatpush1.msra.mxu0 0.0
      %5576 = vmatprep.subr.mxu0 0.0
      %5577 = vmatpush1.msra.mxu0 0.0
      %5578 = vmatprep.subr.mxu0 0.0
      %5579 = vmatpush1.msra.mxu0 0.0
      %5580 = vmatprep.subr.mxu0 0.0
      %5581 = vmatpush1.msra.mxu0 0.0
      %5582 = vmatprep.subr.mxu0 0.0
      %5583 = vmatpush1.msra.mxu0 0.0
      %5584 = vmatprep.subr.mxu0 0.0
      %5585 = vmatpush1.msra.mxu0 0.0
      %5586 = vmatprep.subr.mxu0 0.0
      %5587 = vmatpush1.msra.mxu0 0.0
      %5588 = vmatprep.subr.mxu0 0.0
      %5589 = vmatpush1.msra.mxu0 0.0
      %5590 = vmatprep.subr.mxu0 0.0
      %5591 = vmatpush1.msra.mxu0 0.0
      %5592 = vmatprep.subr.mxu0 0.0
      %5593 = vmatpush1.msra.mxu0 0.0
      %5594 = vmatprep.subr.mxu0 0.0
      %5595 = vmatpush1.msra.mxu0 0.0
      %5596 = vmatprep.subr.mxu0 0.0
      %5597 = vmatpush1.msra.mxu0 0.0
      %5598 = vmatprep.subr.mxu0 0.0
      %5599 = vmatpush1.msra.mxu0 0.0
      %5600 = vmatprep.subr.mxu0 0.0
      %5601 = vmatpush1.msra.mxu0 0.0
      %5602 = vmatprep.subr.mxu0 0.0
      %5603 = vmatpush1.msra.mxu0 0.0
      %5604 = vmatprep.subr.mxu0 0.0
      %5605 = vmatpush1.msra.mxu0 0.0
      %5606 = vmatprep.subr.mxu0 0.0
      %5607 = vmatpush1.msra.mxu0 0.0
      %5608 = vmatprep.subr.mxu0 0.0
      %5609 = vmatpush1.msra.mxu0 0.0
      %5610 = vmatprep.subr.mxu0 0.0
      %5611 = vmatpush1.msra.mxu0 0.0
      %5612 = vmatprep.subr.mxu0 0.0
      %5613 = vmatpush1.msra.mxu0 0.0
      %5614 = vmatprep.subr.mxu0 0.0
      %5615 = vmatpush1.msra.mxu0 0.0
      %5616 = vmatprep.mubr.f32.mxu0 0.0
      %5617 = vmatmul.mubr.f32.gmra.mrb[0].mxu0 %v5499
      %v5618 = vpop.f32.mrb[0].mxu0
      %v5619 = vadd.f32 0.0, %v5618
      %v5620 = vpop.f32.mrb[0].mxu0
      %5621 = vmatprep.mubr.f32.mxu0 0.0
      %5622 = vmatmul.mubr.f32.gmra.mrb[0].mxu0 %v5502
      %v5623 = vpop.f32.mrb[0].mxu0
      %v5624 = vadd.f32 0.0, %v5623
      %v5625 = vpop.f32.mrb[0].mxu0
      %5626 = vmatprep.mubr.f32.mxu0 0.0
      %5627 = vmatmul.mubr.f32.gmra.mrb[0].mxu0 %v5505
      %v5628 = vpop.f32.mrb[0].mxu0
      %v5629 = vadd.f32 0.0, %v5628
      %v5630 = vpop.f32.mrb[0].mxu0
      %5631 = vmatprep.mubr.f32.mxu0 0.0
      %5632 = vmatmul.mubr.f32.gmra.mrb[0].mxu0 %v5508
      %v5633 = vpop.f32.mrb[0].mxu0
      %v5634 = vadd.f32 0.0, %v5633
      %v5635 = vpop.f32.mrb[0].mxu0
      %5636 = vmatprep.mubr.f32.mxu0 0.0
      %5637 = vmatmul.mubr.f32.gmra.mrb[0].mxu0 %v5511
      %v5638 = vpop.f32.mrb[0].mxu0
      %v5639 = vadd.f32 0.0, %v5638
      %v5640 = vpop.f32.mrb[0].mxu0
      %5641 = vmatprep.mubr.f32.mxu0 0.0
      %5642 = vmatmul.mubr.f32.gmra.mrb[0].mxu0 %v5514
      %v5643 = vpop.f32.mrb[0].mxu0
      %v5644 = vadd.f32 0.0, %v5643
      %v5645 = vpop.f32.mrb[0].mxu0
      %5646 = vmatprep.mubr.f32.mxu0 0.0
      %5647 = vmatmul.mubr.f32.gmra.mrb[0].mxu0 %v5517
      %v5648 = vpop.f32.mrb[0].mxu0
      %v5649 = vadd.f32 0.0, %v5648
      %v5650 = vpop.f32.mrb[0].mxu0
      %5651 = vmatprep.mubr.f32.mxu0 0.0
      %5652 = vmatmul.mubr.f32.gmra.mrb[0].mxu0 %v5520
      %v5653 = vpop.f32.mrb[0].mxu0
      %v5654 = vadd.f32 0.0, %v5653
      %v5655 = vpop.f32.mrb[0].mxu0
      %5656 = vmatprep.mubr.f32.mxu0 0.0
      %5657 = vmatmul.mubr.f32.gmra.mrb[0].mxu0 %v5523
      %v5658 = vpop.f32.mrb[0].mxu0
      %v5659 = vadd.f32 0.0, %v5658
      %v5660 = vpop.f32.mrb[0].mxu0
      %5661 = vmatprep.mubr.f32.mxu0 0.0
      %5662 = vmatmul.mubr.f32.gmra.mrb[0].mxu0 %v5526
      %v5663 = vpop.f32.mrb[0].mxu0
      %v5664 = vadd.f32 0.0, %v5663
      %v5665 = vpop.f32.mrb[0].mxu0
      %5666 = vmatprep.mubr.f32.mxu0 0.0
      %5667 = vmatmul.mubr.f32.gmra.mrb[0].mxu0 %v5529
      %v5668 = vpop.f32.mrb[0].mxu0
      %v5669 = vadd.f32 0.0, %v5668
      %v5670 = vpop.f32.mrb[0].mxu0
      %5671 = vmatprep.mubr.f32.mxu0 0.0
      %5672 = vmatmul.mubr.f32.gmra.mrb[0].mxu0 %v5532
      %v5673 = vpop.f32.mrb[0].mxu0
      %v5674 = vadd.f32 0.0, %v5673
      %v5675 = vpop.f32.mrb[0].mxu0
      %5676 = vmatprep.mubr.f32.mxu0 0.0
      %5677 = vmatmul.mubr.f32.gmra.mrb[0].mxu0 %v5535
      %v5678 = vpop.f32.mrb[0].mxu0
      %v5679 = vadd.f32 0.0, %v5678
      %v5680 = vpop.f32.mrb[0].mxu0
      %5681 = vmatprep.mubr.f32.mxu0 0.0
      %5682 = vmatmul.mubr.f32.gmra.mrb[0].mxu0 %v5538
      %v5683 = vpop.f32.mrb[0].mxu0
      %v5684 = vadd.f32 0.0, %v5683
      %v5685 = vpop.f32.mrb[0].mxu0
      %5686 = vmatprep.mubr.f32.mxu0 0.0
      %5687 = vmatmul.mubr.f32.gmra.mrb[0].mxu0 %v5541
      %v5688 = vpop.f32.mrb[0].mxu0
      %v5689 = vadd.f32 0.0, %v5688
      %v5690 = vpop.f32.mrb[0].mxu0
      %5691 = vmatprep.mubr.f32.mxu0 0.0
      %5692 = vmatmul.mubr.f32.gmra.mrb[0].mxu0 %v5544
      %v5693 = vpop.f32.mrb[0].mxu0
      %v5694 = vadd.f32 0.0, %v5693
      %v5695 = vpop.f32.mrb[0].mxu0
      %5696 = vmatprep.mubr.f32.mxu0 0.0
      %5697 = vmatmul.mubr.f32.gmra.mrb[0].mxu0 %v5547
      %v5698 = vpop.f32.mrb[0].mxu0
      %v5699 = vadd.f32 0.0, %v5698
      %v5700 = vpop.f32.mrb[0].mxu0
      %5701 = vmatprep.mubr.f32.mxu0 0.0
      %5702 = vmatmul.mubr.f32.gmra.mrb[0].mxu0 %v5550
      %v5703 = vpop.f32.mrb[0].mxu0
      %v5704 = vadd.f32 0.0, %v5703
      %v5705 = vpop.f32.mrb[0].mxu0
      %5706 = vdwg.mxu0
      %v5707 = vadd.f32 %v5460, %v5619
      %v5708 = vadd.f32 %v5461, %v5624
      %v5709 = vadd.f32 %v5462, %v5629
      %v5710 = vadd.f32 %v5463, %v5634
      %v5711 = vadd.f32 %v5464, %v5639
      %v5712 = vadd.f32 %v5465, %v5644
      %v5713 = vadd.f32 %v5466, %v5649
      %v5714 = vadd.f32 %v5467, %v5654
      %v5715 = vadd.f32 %v5468, %v5659
      %v5716 = vadd.f32 %v5469, %v5664
      %v5717 = vadd.f32 %v5470, %v5669
      %v5718 = vadd.f32 %v5471, %v5674
      %v5719 = vadd.f32 %v5472, %v5679
      %v5720 = vadd.f32 %v5473, %v5684
      %v5721 = vadd.f32 %v5474, %v5689
      %v5722 = vadd.f32 %v5475, %v5694
      %v5723 = vadd.f32 %v5476, %v5699
      %v5724 = vadd.f32 %v5477, %v5704
      %v5725 = vld [vmem:[#allocation2 + $0x20] sm:$0xff]
      %v5726 = vld [vmem:[#allocation2 + $0x28] sm:$0xff]
      %v5727 = vld [vmem:[#allocation2 + $0x30] sm:$0xff]
      %v5728 = vld [vmem:[#allocation2 + $0x38] sm:$0xff]
      %v5729 = vld [vmem:[#allocation2 + $0x40] sm:$0xff]
      %v5730 = vld [vmem:[#allocation2 + $0x48] sm:$0xff]
      %v5731 = vld [vmem:[#allocation2 + $0x50] sm:$0xff]
      %v5732 = vld [vmem:[#allocation2 + $0x58] sm:$0xff]
      %v5733 = vld [vmem:[#allocation2 + $0x60] sm:$0xff]
      %v5734 = vld [vmem:[#allocation2 + $0x68] sm:$0xff]
      %v5735 = vld [vmem:[#allocation2 + $0x70] sm:$0xff]
      %v5736 = vld [vmem:[#allocation2 + $0x78] sm:$0xff]
      %v5737 = vld [vmem:[#allocation2 + $0x80] sm:$0xff]
      %v5738 = vld [vmem:[#allocation2 + $0x88] sm:$0xff]
      %v5739 = vld [vmem:[#allocation2 + $0x90] sm:$0xff]
      %v5740 = vld [vmem:[#allocation2 + $0x98] sm:$0xff]
      %v5741 = vld [vmem:[#allocation2 + $0xa0] sm:$0xff]
      %v5742 = vld [vmem:[#allocation2 + $0xa8] sm:$0xf]
      %s5743 = scalar_lea.vmem %s3, 112
      %v5744 = vld [vmem:[%s5743] sm:$0xff]
      %v5746 = vsel %vm2286, %v5725, 0
      %v5749 = vsel %vm2286, %v5726, 0
      %v5752 = vsel %vm2286, %v5727, 0
      %v5755 = vsel %vm2286, %v5728, 0
      %v5758 = vsel %vm2286, %v5729, 0
      %v5761 = vsel %vm2286, %v5730, 0
      %v5764 = vsel %vm2286, %v5731, 0
      %v5767 = vsel %vm2286, %v5732, 0
      %v5770 = vsel %vm2286, %v5733, 0
      %v5773 = vsel %vm2286, %v5734, 0
      %v5776 = vsel %vm2286, %v5735, 0
      %v5779 = vsel %vm2286, %v5736, 0
      %v5782 = vsel %vm2286, %v5737, 0
      %v5785 = vsel %vm2286, %v5738, 0
      %v5788 = vsel %vm2286, %v5739, 0
      %v5791 = vsel %vm2286, %v5740, 0
      %v5794 = vsel %vm2286, %v5741, 0
      %v5797 = vsel %vm2286, %v5742, 0
      %5799 = vmatprep.subr.mxu0 0.0
      %5800 = vmatpush1.msra.mxu0 %v5744
      %5801 = vmatprep.subr.mxu0 0.0
      %5802 = vmatpush1.msra.mxu0 0.0
      %5803 = vmatprep.subr.mxu0 0.0
      %5804 = vmatpush1.msra.mxu0 0.0
      %5805 = vmatprep.subr.mxu0 0.0
      %5806 = vmatpush1.msra.mxu0 0.0
      %5807 = vmatprep.subr.mxu0 0.0
      %5808 = vmatpush1.msra.mxu0 0.0
      %5809 = vmatprep.subr.mxu0 0.0
      %5810 = vmatpush1.msra.mxu0 0.0
      %5811 = vmatprep.subr.mxu0 0.0
      %5812 = vmatpush1.msra.mxu0 0.0
      %5813 = vmatprep.subr.mxu0 0.0
      %5814 = vmatpush1.msra.mxu0 0.0
      %5815 = vmatprep.subr.mxu0 0.0
      %5816 = vmatpush1.msra.mxu0 0.0
      %5817 = vmatprep.subr.mxu0 0.0
      %5818 = vmatpush1.msra.mxu0 0.0
      %5819 = vmatprep.subr.mxu0 0.0
      %5820 = vmatpush1.msra.mxu0 0.0
      %5821 = vmatprep.subr.mxu0 0.0
      %5822 = vmatpush1.msra.mxu0 0.0
      %5823 = vmatprep.subr.mxu0 0.0
      %5824 = vmatpush1.msra.mxu0 0.0
      %5825 = vmatprep.subr.mxu0 0.0
      %5826 = vmatpush1.msra.mxu0 0.0
      %5827 = vmatprep.subr.mxu0 0.0
      %5828 = vmatpush1.msra.mxu0 0.0
      %5829 = vmatprep.subr.mxu0 0.0
      %5830 = vmatpush1.msra.mxu0 0.0
      %5831 = vmatprep.subr.mxu0 0.0
      %5832 = vmatpush1.msra.mxu0 0.0
      %5833 = vmatprep.subr.mxu0 0.0
      %5834 = vmatpush1.msra.mxu0 0.0
      %5835 = vmatprep.subr.mxu0 0.0
      %5836 = vmatpush1.msra.mxu0 0.0
      %5837 = vmatprep.subr.mxu0 0.0
      %5838 = vmatpush1.msra.mxu0 0.0
      %5839 = vmatprep.subr.mxu0 0.0
      %5840 = vmatpush1.msra.mxu0 0.0
      %5841 = vmatprep.subr.mxu0 0.0
      %5842 = vmatpush1.msra.mxu0 0.0
      %5843 = vmatprep.subr.mxu0 0.0
      %5844 = vmatpush1.msra.mxu0 0.0
      %5845 = vmatprep.subr.mxu0 0.0
      %5846 = vmatpush1.msra.mxu0 0.0
      %5847 = vmatprep.subr.mxu0 0.0
      %5848 = vmatpush1.msra.mxu0 0.0
      %5849 = vmatprep.subr.mxu0 0.0
      %5850 = vmatpush1.msra.mxu0 0.0
      %5851 = vmatprep.subr.mxu0 0.0
      %5852 = vmatpush1.msra.mxu0 0.0
      %5853 = vmatprep.subr.mxu0 0.0
      %5854 = vmatpush1.msra.mxu0 0.0
      %5855 = vmatprep.subr.mxu0 0.0
      %5856 = vmatpush1.msra.mxu0 0.0
      %5857 = vmatprep.subr.mxu0 0.0
      %5858 = vmatpush1.msra.mxu0 0.0
      %5859 = vmatprep.subr.mxu0 0.0
      %5860 = vmatpush1.msra.mxu0 0.0
      %5861 = vmatprep.subr.mxu0 0.0
      %5862 = vmatpush1.msra.mxu0 0.0
      %5863 = vmatprep.mubr.f32.mxu0 0.0
      %5864 = vmatmul.mubr.f32.gmra.mrb[0].mxu0 %v5746
      %v5865 = vpop.f32.mrb[0].mxu0
      %v5866 = vadd.f32 0.0, %v5865
      %v5867 = vpop.f32.mrb[0].mxu0
      %5868 = vmatprep.mubr.f32.mxu0 0.0
      %5869 = vmatmul.mubr.f32.gmra.mrb[0].mxu0 %v5749
      %v5870 = vpop.f32.mrb[0].mxu0
      %v5871 = vadd.f32 0.0, %v5870
      %v5872 = vpop.f32.mrb[0].mxu0
      %5873 = vmatprep.mubr.f32.mxu0 0.0
      %5874 = vmatmul.mubr.f32.gmra.mrb[0].mxu0 %v5752
      %v5875 = vpop.f32.mrb[0].mxu0
      %v5876 = vadd.f32 0.0, %v5875
      %v5877 = vpop.f32.mrb[0].mxu0
      %5878 = vmatprep.mubr.f32.mxu0 0.0
      %5879 = vmatmul.mubr.f32.gmra.mrb[0].mxu0 %v5755
      %v5880 = vpop.f32.mrb[0].mxu0
      %v5881 = vadd.f32 0.0, %v5880
      %v5882 = vpop.f32.mrb[0].mxu0
      %5883 = vmatprep.mubr.f32.mxu0 0.0
      %5884 = vmatmul.mubr.f32.gmra.mrb[0].mxu0 %v5758
      %v5885 = vpop.f32.mrb[0].mxu0
      %v5886 = vadd.f32 0.0, %v5885
      %v5887 = vpop.f32.mrb[0].mxu0
      %5888 = vmatprep.mubr.f32.mxu0 0.0
      %5889 = vmatmul.mubr.f32.gmra.mrb[0].mxu0 %v5761
      %v5890 = vpop.f32.mrb[0].mxu0
      %v5891 = vadd.f32 0.0, %v5890
      %v5892 = vpop.f32.mrb[0].mxu0
      %5893 = vmatprep.mubr.f32.mxu0 0.0
      %5894 = vmatmul.mubr.f32.gmra.mrb[0].mxu0 %v5764
      %v5895 = vpop.f32.mrb[0].mxu0
      %v5896 = vadd.f32 0.0, %v5895
      %v5897 = vpop.f32.mrb[0].mxu0
      %5898 = vmatprep.mubr.f32.mxu0 0.0
      %5899 = vmatmul.mubr.f32.gmra.mrb[0].mxu0 %v5767
      %v5900 = vpop.f32.mrb[0].mxu0
      %v5901 = vadd.f32 0.0, %v5900
      %v5902 = vpop.f32.mrb[0].mxu0
      %5903 = vmatprep.mubr.f32.mxu0 0.0
      %5904 = vmatmul.mubr.f32.gmra.mrb[0].mxu0 %v5770
      %v5905 = vpop.f32.mrb[0].mxu0
      %v5906 = vadd.f32 0.0, %v5905
      %v5907 = vpop.f32.mrb[0].mxu0
      %5908 = vmatprep.mubr.f32.mxu0 0.0
      %5909 = vmatmul.mubr.f32.gmra.mrb[0].mxu0 %v5773
      %v5910 = vpop.f32.mrb[0].mxu0
      %v5911 = vadd.f32 0.0, %v5910
      %v5912 = vpop.f32.mrb[0].mxu0
      %5913 = vmatprep.mubr.f32.mxu0 0.0
      %5914 = vmatmul.mubr.f32.gmra.mrb[0].mxu0 %v5776
      %v5915 = vpop.f32.mrb[0].mxu0
      %v5916 = vadd.f32 0.0, %v5915
      %v5917 = vpop.f32.mrb[0].mxu0
      %5918 = vmatprep.mubr.f32.mxu0 0.0
      %5919 = vmatmul.mubr.f32.gmra.mrb[0].mxu0 %v5779
      %v5920 = vpop.f32.mrb[0].mxu0
      %v5921 = vadd.f32 0.0, %v5920
      %v5922 = vpop.f32.mrb[0].mxu0
      %5923 = vmatprep.mubr.f32.mxu0 0.0
      %5924 = vmatmul.mubr.f32.gmra.mrb[0].mxu0 %v5782
      %v5925 = vpop.f32.mrb[0].mxu0
      %v5926 = vadd.f32 0.0, %v5925
      %v5927 = vpop.f32.mrb[0].mxu0
      %5928 = vmatprep.mubr.f32.mxu0 0.0
      %5929 = vmatmul.mubr.f32.gmra.mrb[0].mxu0 %v5785
      %v5930 = vpop.f32.mrb[0].mxu0
      %v5931 = vadd.f32 0.0, %v5930
      %v5932 = vpop.f32.mrb[0].mxu0
      %5933 = vmatprep.mubr.f32.mxu0 0.0
      %5934 = vmatmul.mubr.f32.gmra.mrb[0].mxu0 %v5788
      %v5935 = vpop.f32.mrb[0].mxu0
      %v5936 = vadd.f32 0.0, %v5935
      %v5937 = vpop.f32.mrb[0].mxu0
      %5938 = vmatprep.mubr.f32.mxu0 0.0
      %5939 = vmatmul.mubr.f32.gmra.mrb[0].mxu0 %v5791
      %v5940 = vpop.f32.mrb[0].mxu0
      %v5941 = vadd.f32 0.0, %v5940
      %v5942 = vpop.f32.mrb[0].mxu0
      %5943 = vmatprep.mubr.f32.mxu0 0.0
      %5944 = vmatmul.mubr.f32.gmra.mrb[0].mxu0 %v5794
      %v5945 = vpop.f32.mrb[0].mxu0
      %v5946 = vadd.f32 0.0, %v5945
      %v5947 = vpop.f32.mrb[0].mxu0
      %5948 = vmatprep.mubr.f32.mxu0 0.0
      %5949 = vmatmul.mubr.f32.gmra.mrb[0].mxu0 %v5797
      %v5950 = vpop.f32.mrb[0].mxu0
      %v5951 = vadd.f32 0.0, %v5950
      %v5952 = vpop.f32.mrb[0].mxu0
      %5953 = vdwg.mxu0
      %v5954 = vadd.f32 %v5707, %v5866
      %v5955 = vadd.f32 %v5708, %v5871
      %v5956 = vadd.f32 %v5709, %v5876
      %v5957 = vadd.f32 %v5710, %v5881
      %v5958 = vadd.f32 %v5711, %v5886
      %v5959 = vadd.f32 %v5712, %v5891
      %v5960 = vadd.f32 %v5713, %v5896
      %v5961 = vadd.f32 %v5714, %v5901
      %v5962 = vadd.f32 %v5715, %v5906
      %v5963 = vadd.f32 %v5716, %v5911
      %v5964 = vadd.f32 %v5717, %v5916
      %v5965 = vadd.f32 %v5718, %v5921
      %v5966 = vadd.f32 %v5719, %v5926
      %v5967 = vadd.f32 %v5720, %v5931
      %v5968 = vadd.f32 %v5721, %v5936
      %v5969 = vadd.f32 %v5722, %v5941
      %v5970 = vadd.f32 %v5723, %v5946
      %v5971 = vadd.f32 %v5724, %v5951
      %v5972 = vld [vmem:[#allocation2 + $0x2a] sm:$0xff]
      %v5973 = vld [vmem:[#allocation2 + $0x32] sm:$0xff]
      %v5974 = vld [vmem:[#allocation2 + $0x3a] sm:$0xff]
      %v5975 = vld [vmem:[#allocation2 + $0x42] sm:$0xff]
      %v5976 = vld [vmem:[#allocation2 + $0x4a] sm:$0xff]
      %v5977 = vld [vmem:[#allocation2 + $0x52] sm:$0xff]
      %v5978 = vld [vmem:[#allocation2 + $0x5a] sm:$0xff]
      %v5979 = vld [vmem:[#allocation2 + $0x62] sm:$0xff]
      %v5980 = vld [vmem:[#allocation2 + $0x6a] sm:$0xff]
      %v5981 = vld [vmem:[#allocation2 + $0x72] sm:$0xff]
      %v5982 = vld [vmem:[#allocation2 + $0x7a] sm:$0xff]
      %v5983 = vld [vmem:[#allocation2 + $0x82] sm:$0xff]
      %v5984 = vld [vmem:[#allocation2 + $0x8a] sm:$0xff]
      %v5985 = vld [vmem:[#allocation2 + $0x92] sm:$0xff]
      %v5986 = vld [vmem:[#allocation2 + $0x9a] sm:$0xff]
      %v5987 = vld [vmem:[#allocation2 + $0xa2] sm:$0xff]
      %v5988 = vld [vmem:[#allocation2 + $0xaa] sm:$0xff]
      %v5989 = vld [vmem:[#allocation2 + $0xb2] sm:$0xf]
      %s5990 = scalar_lea.vmem %s3, 120
      %v5991 = vld [vmem:[%s5990] sm:$0xff]
      %v5993 = vsel %vm2286, %v5972, 0
      %v5996 = vsel %vm2286, %v5973, 0
      %v5999 = vsel %vm2286, %v5974, 0
      %v6002 = vsel %vm2286, %v5975, 0
      %v6005 = vsel %vm2286, %v5976, 0
      %v6008 = vsel %vm2286, %v5977, 0
      %v6011 = vsel %vm2286, %v5978, 0
      %v6014 = vsel %vm2286, %v5979, 0
      %v6017 = vsel %vm2286, %v5980, 0
      %v6020 = vsel %vm2286, %v5981, 0
      %v6023 = vsel %vm2286, %v5982, 0
      %v6026 = vsel %vm2286, %v5983, 0
      %v6029 = vsel %vm2286, %v5984, 0
      %v6032 = vsel %vm2286, %v5985, 0
      %v6035 = vsel %vm2286, %v5986, 0
      %v6038 = vsel %vm2286, %v5987, 0
      %v6041 = vsel %vm2286, %v5988, 0
      %v6044 = vsel %vm2286, %v5989, 0
      %6046 = vmatprep.subr.mxu0 0.0
      %6047 = vmatpush1.msra.mxu0 %v5991
      %6048 = vmatprep.subr.mxu0 0.0
      %6049 = vmatpush1.msra.mxu0 0.0
      %6050 = vmatprep.subr.mxu0 0.0
      %6051 = vmatpush1.msra.mxu0 0.0
      %6052 = vmatprep.subr.mxu0 0.0
      %6053 = vmatpush1.msra.mxu0 0.0
      %6054 = vmatprep.subr.mxu0 0.0
      %6055 = vmatpush1.msra.mxu0 0.0
      %6056 = vmatprep.subr.mxu0 0.0
      %6057 = vmatpush1.msra.mxu0 0.0
      %6058 = vmatprep.subr.mxu0 0.0
      %6059 = vmatpush1.msra.mxu0 0.0
      %6060 = vmatprep.subr.mxu0 0.0
      %6061 = vmatpush1.msra.mxu0 0.0
      %6062 = vmatprep.subr.mxu0 0.0
      %6063 = vmatpush1.msra.mxu0 0.0
      %6064 = vmatprep.subr.mxu0 0.0
      %6065 = vmatpush1.msra.mxu0 0.0
      %6066 = vmatprep.subr.mxu0 0.0
      %6067 = vmatpush1.msra.mxu0 0.0
      %6068 = vmatprep.subr.mxu0 0.0
      %6069 = vmatpush1.msra.mxu0 0.0
      %6070 = vmatprep.subr.mxu0 0.0
      %6071 = vmatpush1.msra.mxu0 0.0
      %6072 = vmatprep.subr.mxu0 0.0
      %6073 = vmatpush1.msra.mxu0 0.0
      %6074 = vmatprep.subr.mxu0 0.0
      %6075 = vmatpush1.msra.mxu0 0.0
      %6076 = vmatprep.subr.mxu0 0.0
      %6077 = vmatpush1.msra.mxu0 0.0
      %6078 = vmatprep.subr.mxu0 0.0
      %6079 = vmatpush1.msra.mxu0 0.0
      %6080 = vmatprep.subr.mxu0 0.0
      %6081 = vmatpush1.msra.mxu0 0.0
      %6082 = vmatprep.subr.mxu0 0.0
      %6083 = vmatpush1.msra.mxu0 0.0
      %6084 = vmatprep.subr.mxu0 0.0
      %6085 = vmatpush1.msra.mxu0 0.0
      %6086 = vmatprep.subr.mxu0 0.0
      %6087 = vmatpush1.msra.mxu0 0.0
      %6088 = vmatprep.subr.mxu0 0.0
      %6089 = vmatpush1.msra.mxu0 0.0
      %6090 = vmatprep.subr.mxu0 0.0
      %6091 = vmatpush1.msra.mxu0 0.0
      %6092 = vmatprep.subr.mxu0 0.0
      %6093 = vmatpush1.msra.mxu0 0.0
      %6094 = vmatprep.subr.mxu0 0.0
      %6095 = vmatpush1.msra.mxu0 0.0
      %6096 = vmatprep.subr.mxu0 0.0
      %6097 = vmatpush1.msra.mxu0 0.0
      %6098 = vmatprep.subr.mxu0 0.0
      %6099 = vmatpush1.msra.mxu0 0.0
      %6100 = vmatprep.subr.mxu0 0.0
      %6101 = vmatpush1.msra.mxu0 0.0
      %6102 = vmatprep.subr.mxu0 0.0
      %6103 = vmatpush1.msra.mxu0 0.0
      %6104 = vmatprep.subr.mxu0 0.0
      %6105 = vmatpush1.msra.mxu0 0.0
      %6106 = vmatprep.subr.mxu0 0.0
      %6107 = vmatpush1.msra.mxu0 0.0
      %6108 = vmatprep.subr.mxu0 0.0
      %6109 = vmatpush1.msra.mxu0 0.0
      %6110 = vmatprep.mubr.f32.mxu0 0.0
      %6111 = vmatmul.mubr.f32.gmra.mrb[0].mxu0 %v5993
      %v6112 = vpop.f32.mrb[0].mxu0
      %v6113 = vadd.f32 0.0, %v6112
      %v6114 = vpop.f32.mrb[0].mxu0
      %6115 = vmatprep.mubr.f32.mxu0 0.0
      %6116 = vmatmul.mubr.f32.gmra.mrb[0].mxu0 %v5996
      %v6117 = vpop.f32.mrb[0].mxu0
      %v6118 = vadd.f32 0.0, %v6117
      %v6119 = vpop.f32.mrb[0].mxu0
      %6120 = vmatprep.mubr.f32.mxu0 0.0
      %6121 = vmatmul.mubr.f32.gmra.mrb[0].mxu0 %v5999
      %v6122 = vpop.f32.mrb[0].mxu0
      %v6123 = vadd.f32 0.0, %v6122
      %v6124 = vpop.f32.mrb[0].mxu0
      %6125 = vmatprep.mubr.f32.mxu0 0.0
      %6126 = vmatmul.mubr.f32.gmra.mrb[0].mxu0 %v6002
      %v6127 = vpop.f32.mrb[0].mxu0
      %v6128 = vadd.f32 0.0, %v6127
      %v6129 = vpop.f32.mrb[0].mxu0
      %6130 = vmatprep.mubr.f32.mxu0 0.0
      %6131 = vmatmul.mubr.f32.gmra.mrb[0].mxu0 %v6005
      %v6132 = vpop.f32.mrb[0].mxu0
      %v6133 = vadd.f32 0.0, %v6132
      %v6134 = vpop.f32.mrb[0].mxu0
      %6135 = vmatprep.mubr.f32.mxu0 0.0
      %6136 = vmatmul.mubr.f32.gmra.mrb[0].mxu0 %v6008
      %v6137 = vpop.f32.mrb[0].mxu0
      %v6138 = vadd.f32 0.0, %v6137
      %v6139 = vpop.f32.mrb[0].mxu0
      %6140 = vmatprep.mubr.f32.mxu0 0.0
      %6141 = vmatmul.mubr.f32.gmra.mrb[0].mxu0 %v6011
      %v6142 = vpop.f32.mrb[0].mxu0
      %v6143 = vadd.f32 0.0, %v6142
      %v6144 = vpop.f32.mrb[0].mxu0
      %6145 = vmatprep.mubr.f32.mxu0 0.0
      %6146 = vmatmul.mubr.f32.gmra.mrb[0].mxu0 %v6014
      %v6147 = vpop.f32.mrb[0].mxu0
      %v6148 = vadd.f32 0.0, %v6147
      %v6149 = vpop.f32.mrb[0].mxu0
      %6150 = vmatprep.mubr.f32.mxu0 0.0
      %6151 = vmatmul.mubr.f32.gmra.mrb[0].mxu0 %v6017
      %v6152 = vpop.f32.mrb[0].mxu0
      %v6153 = vadd.f32 0.0, %v6152
      %v6154 = vpop.f32.mrb[0].mxu0
      %6155 = vmatprep.mubr.f32.mxu0 0.0
      %6156 = vmatmul.mubr.f32.gmra.mrb[0].mxu0 %v6020
      %v6157 = vpop.f32.mrb[0].mxu0
      %v6158 = vadd.f32 0.0, %v6157
      %v6159 = vpop.f32.mrb[0].mxu0
      %6160 = vmatprep.mubr.f32.mxu0 0.0
      %6161 = vmatmul.mubr.f32.gmra.mrb[0].mxu0 %v6023
      %v6162 = vpop.f32.mrb[0].mxu0
      %v6163 = vadd.f32 0.0, %v6162
      %v6164 = vpop.f32.mrb[0].mxu0
      %6165 = vmatprep.mubr.f32.mxu0 0.0
      %6166 = vmatmul.mubr.f32.gmra.mrb[0].mxu0 %v6026
      %v6167 = vpop.f32.mrb[0].mxu0
      %v6168 = vadd.f32 0.0, %v6167
      %v6169 = vpop.f32.mrb[0].mxu0
      %6170 = vmatprep.mubr.f32.mxu0 0.0
      %6171 = vmatmul.mubr.f32.gmra.mrb[0].mxu0 %v6029
      %v6172 = vpop.f32.mrb[0].mxu0
      %v6173 = vadd.f32 0.0, %v6172
      %v6174 = vpop.f32.mrb[0].mxu0
      %6175 = vmatprep.mubr.f32.mxu0 0.0
      %6176 = vmatmul.mubr.f32.gmra.mrb[0].mxu0 %v6032
      %v6177 = vpop.f32.mrb[0].mxu0
      %v6178 = vadd.f32 0.0, %v6177
      %v6179 = vpop.f32.mrb[0].mxu0
      %6180 = vmatprep.mubr.f32.mxu0 0.0
      %6181 = vmatmul.mubr.f32.gmra.mrb[0].mxu0 %v6035
      %v6182 = vpop.f32.mrb[0].mxu0
      %v6183 = vadd.f32 0.0, %v6182
      %v6184 = vpop.f32.mrb[0].mxu0
      %6185 = vmatprep.mubr.f32.mxu0 0.0
      %6186 = vmatmul.mubr.f32.gmra.mrb[0].mxu0 %v6038
      %v6187 = vpop.f32.mrb[0].mxu0
      %v6188 = vadd.f32 0.0, %v6187
      %v6189 = vpop.f32.mrb[0].mxu0
      %6190 = vmatprep.mubr.f32.mxu0 0.0
      %6191 = vmatmul.mubr.f32.gmra.mrb[0].mxu0 %v6041
      %v6192 = vpop.f32.mrb[0].mxu0
      %v6193 = vadd.f32 0.0, %v6192
      %v6194 = vpop.f32.mrb[0].mxu0
      %6195 = vmatprep.mubr.f32.mxu0 0.0
      %6196 = vmatmul.mubr.f32.gmra.mrb[0].mxu0 %v6044
      %v6197 = vpop.f32.mrb[0].mxu0
      %v6198 = vadd.f32 0.0, %v6197
      %v6199 = vpop.f32.mrb[0].mxu0
      %6200 = vdwg.mxu0
      %v6201 = vadd.f32 %v5954, %v6113
      %v6202 = vadd.f32 %v5955, %v6118
      %v6203 = vadd.f32 %v5956, %v6123
      %v6204 = vadd.f32 %v5957, %v6128
      %v6205 = vadd.f32 %v5958, %v6133
      %v6206 = vadd.f32 %v5959, %v6138
      %v6207 = vadd.f32 %v5960, %v6143
      %v6208 = vadd.f32 %v5961, %v6148
      %v6209 = vadd.f32 %v5962, %v6153
      %v6210 = vadd.f32 %v5963, %v6158
      %v6211 = vadd.f32 %v5964, %v6163
      %v6212 = vadd.f32 %v5965, %v6168
      %v6213 = vadd.f32 %v5966, %v6173
      %v6214 = vadd.f32 %v5967, %v6178
      %v6215 = vadd.f32 %v5968, %v6183
      %v6216 = vadd.f32 %v5969, %v6188
      %v6217 = vadd.f32 %v5970, %v6193
      %v6218 = vadd.f32 %v5971, %v6198
      %v6219 = vld [vmem:[#allocation2 + $0x2b] sm:$0xff]
      %v6220 = vld [vmem:[#allocation2 + $0x33] sm:$0xff]
      %v6221 = vld [vmem:[#allocation2 + $0x3b] sm:$0xff]
      %v6222 = vld [vmem:[#allocation2 + $0x43] sm:$0xff]
      %v6223 = vld [vmem:[#allocation2 + $0x4b] sm:$0xff]
      %v6224 = vld [vmem:[#allocation2 + $0x53] sm:$0xff]
      %v6225 = vld [vmem:[#allocation2 + $0x5b] sm:$0xff]
      %v6226 = vld [vmem:[#allocation2 + $0x63] sm:$0xff]
      %v6227 = vld [vmem:[#allocation2 + $0x6b] sm:$0xff]
      %v6228 = vld [vmem:[#allocation2 + $0x73] sm:$0xff]
      %v6229 = vld [vmem:[#allocation2 + $0x7b] sm:$0xff]
      %v6230 = vld [vmem:[#allocation2 + $0x83] sm:$0xff]
      %v6231 = vld [vmem:[#allocation2 + $0x8b] sm:$0xff]
      %v6232 = vld [vmem:[#allocation2 + $0x93] sm:$0xff]
      %v6233 = vld [vmem:[#allocation2 + $0x9b] sm:$0xff]
      %v6234 = vld [vmem:[#allocation2 + $0xa3] sm:$0xff]
      %v6235 = vld [vmem:[#allocation2 + $0xab] sm:$0xff]
      %v6236 = vld [vmem:[#allocation2 + $0xb3] sm:$0xf]
      %s6237 = scalar_lea.vmem %s3, 128
      %v6238 = vld [vmem:[%s6237] sm:$0xff]
      %v6240 = vsel %vm2286, %v6219, 0
      %v6243 = vsel %vm2286, %v6220, 0
      %v6246 = vsel %vm2286, %v6221, 0
      %v6249 = vsel %vm2286, %v6222, 0
      %v6252 = vsel %vm2286, %v6223, 0
      %v6255 = vsel %vm2286, %v6224, 0
      %v6258 = vsel %vm2286, %v6225, 0
      %v6261 = vsel %vm2286, %v6226, 0
      %v6264 = vsel %vm2286, %v6227, 0
      %v6267 = vsel %vm2286, %v6228, 0
      %v6270 = vsel %vm2286, %v6229, 0
      %v6273 = vsel %vm2286, %v6230, 0
      %v6276 = vsel %vm2286, %v6231, 0
      %v6279 = vsel %vm2286, %v6232, 0
      %v6282 = vsel %vm2286, %v6233, 0
      %v6285 = vsel %vm2286, %v6234, 0
      %v6288 = vsel %vm2286, %v6235, 0
      %v6291 = vsel %vm2286, %v6236, 0
      %6293 = vmatprep.subr.mxu0 0.0
      %6294 = vmatpush1.msra.mxu0 %v6238
      %6295 = vmatprep.subr.mxu0 0.0
      %6296 = vmatpush1.msra.mxu0 0.0
      %6297 = vmatprep.subr.mxu0 0.0
      %6298 = vmatpush1.msra.mxu0 0.0
      %6299 = vmatprep.subr.mxu0 0.0
      %6300 = vmatpush1.msra.mxu0 0.0
      %6301 = vmatprep.subr.mxu0 0.0
      %6302 = vmatpush1.msra.mxu0 0.0
      %6303 = vmatprep.subr.mxu0 0.0
      %6304 = vmatpush1.msra.mxu0 0.0
      %6305 = vmatprep.subr.mxu0 0.0
      %6306 = vmatpush1.msra.mxu0 0.0
      %6307 = vmatprep.subr.mxu0 0.0
      %6308 = vmatpush1.msra.mxu0 0.0
      %6309 = vmatprep.subr.mxu0 0.0
      %6310 = vmatpush1.msra.mxu0 0.0
      %6311 = vmatprep.subr.mxu0 0.0
      %6312 = vmatpush1.msra.mxu0 0.0
      %6313 = vmatprep.subr.mxu0 0.0
      %6314 = vmatpush1.msra.mxu0 0.0
      %6315 = vmatprep.subr.mxu0 0.0
      %6316 = vmatpush1.msra.mxu0 0.0
      %6317 = vmatprep.subr.mxu0 0.0
      %6318 = vmatpush1.msra.mxu0 0.0
      %6319 = vmatprep.subr.mxu0 0.0
      %6320 = vmatpush1.msra.mxu0 0.0
      %6321 = vmatprep.subr.mxu0 0.0
      %6322 = vmatpush1.msra.mxu0 0.0
      %6323 = vmatprep.subr.mxu0 0.0
      %6324 = vmatpush1.msra.mxu0 0.0
      %6325 = vmatprep.subr.mxu0 0.0
      %6326 = vmatpush1.msra.mxu0 0.0
      %6327 = vmatprep.subr.mxu0 0.0
      %6328 = vmatpush1.msra.mxu0 0.0
      %6329 = vmatprep.subr.mxu0 0.0
      %6330 = vmatpush1.msra.mxu0 0.0
      %6331 = vmatprep.subr.mxu0 0.0
      %6332 = vmatpush1.msra.mxu0 0.0
      %6333 = vmatprep.subr.mxu0 0.0
      %6334 = vmatpush1.msra.mxu0 0.0
      %6335 = vmatprep.subr.mxu0 0.0
      %6336 = vmatpush1.msra.mxu0 0.0
      %6337 = vmatprep.subr.mxu0 0.0
      %6338 = vmatpush1.msra.mxu0 0.0
      %6339 = vmatprep.subr.mxu0 0.0
      %6340 = vmatpush1.msra.mxu0 0.0
      %6341 = vmatprep.subr.mxu0 0.0
      %6342 = vmatpush1.msra.mxu0 0.0
      %6343 = vmatprep.subr.mxu0 0.0
      %6344 = vmatpush1.msra.mxu0 0.0
      %6345 = vmatprep.subr.mxu0 0.0
      %6346 = vmatpush1.msra.mxu0 0.0
      %6347 = vmatprep.subr.mxu0 0.0
      %6348 = vmatpush1.msra.mxu0 0.0
      %6349 = vmatprep.subr.mxu0 0.0
      %6350 = vmatpush1.msra.mxu0 0.0
      %6351 = vmatprep.subr.mxu0 0.0
      %6352 = vmatpush1.msra.mxu0 0.0
      %6353 = vmatprep.subr.mxu0 0.0
      %6354 = vmatpush1.msra.mxu0 0.0
      %6355 = vmatprep.subr.mxu0 0.0
      %6356 = vmatpush1.msra.mxu0 0.0
      %6357 = vmatprep.mubr.f32.mxu0 0.0
      %6358 = vmatmul.mubr.f32.gmra.mrb[0].mxu0 %v6240
      %v6359 = vpop.f32.mrb[0].mxu0
      %v6360 = vadd.f32 0.0, %v6359
      %v6361 = vpop.f32.mrb[0].mxu0
      %6362 = vmatprep.mubr.f32.mxu0 0.0
      %6363 = vmatmul.mubr.f32.gmra.mrb[0].mxu0 %v6243
      %v6364 = vpop.f32.mrb[0].mxu0
      %v6365 = vadd.f32 0.0, %v6364
      %v6366 = vpop.f32.mrb[0].mxu0
      %6367 = vmatprep.mubr.f32.mxu0 0.0
      %6368 = vmatmul.mubr.f32.gmra.mrb[0].mxu0 %v6246
      %v6369 = vpop.f32.mrb[0].mxu0
      %v6370 = vadd.f32 0.0, %v6369
      %v6371 = vpop.f32.mrb[0].mxu0
      %6372 = vmatprep.mubr.f32.mxu0 0.0
      %6373 = vmatmul.mubr.f32.gmra.mrb[0].mxu0 %v6249
      %v6374 = vpop.f32.mrb[0].mxu0
      %v6375 = vadd.f32 0.0, %v6374
      %v6376 = vpop.f32.mrb[0].mxu0
      %6377 = vmatprep.mubr.f32.mxu0 0.0
      %6378 = vmatmul.mubr.f32.gmra.mrb[0].mxu0 %v6252
      %v6379 = vpop.f32.mrb[0].mxu0
      %v6380 = vadd.f32 0.0, %v6379
      %v6381 = vpop.f32.mrb[0].mxu0
      %6382 = vmatprep.mubr.f32.mxu0 0.0
      %6383 = vmatmul.mubr.f32.gmra.mrb[0].mxu0 %v6255
      %v6384 = vpop.f32.mrb[0].mxu0
      %v6385 = vadd.f32 0.0, %v6384
      %v6386 = vpop.f32.mrb[0].mxu0
      %6387 = vmatprep.mubr.f32.mxu0 0.0
      %6388 = vmatmul.mubr.f32.gmra.mrb[0].mxu0 %v6258
      %v6389 = vpop.f32.mrb[0].mxu0
      %v6390 = vadd.f32 0.0, %v6389
      %v6391 = vpop.f32.mrb[0].mxu0
      %6392 = vmatprep.mubr.f32.mxu0 0.0
      %6393 = vmatmul.mubr.f32.gmra.mrb[0].mxu0 %v6261
      %v6394 = vpop.f32.mrb[0].mxu0
      %v6395 = vadd.f32 0.0, %v6394
      %v6396 = vpop.f32.mrb[0].mxu0
      %6397 = vmatprep.mubr.f32.mxu0 0.0
      %6398 = vmatmul.mubr.f32.gmra.mrb[0].mxu0 %v6264
      %v6399 = vpop.f32.mrb[0].mxu0
      %v6400 = vadd.f32 0.0, %v6399
      %v6401 = vpop.f32.mrb[0].mxu0
      %6402 = vmatprep.mubr.f32.mxu0 0.0
      %6403 = vmatmul.mubr.f32.gmra.mrb[0].mxu0 %v6267
      %v6404 = vpop.f32.mrb[0].mxu0
      %v6405 = vadd.f32 0.0, %v6404
      %v6406 = vpop.f32.mrb[0].mxu0
      %6407 = vmatprep.mubr.f32.mxu0 0.0
      %6408 = vmatmul.mubr.f32.gmra.mrb[0].mxu0 %v6270
      %v6409 = vpop.f32.mrb[0].mxu0
      %v6410 = vadd.f32 0.0, %v6409
      %v6411 = vpop.f32.mrb[0].mxu0
      %6412 = vmatprep.mubr.f32.mxu0 0.0
      %6413 = vmatmul.mubr.f32.gmra.mrb[0].mxu0 %v6273
      %v6414 = vpop.f32.mrb[0].mxu0
      %v6415 = vadd.f32 0.0, %v6414
      %v6416 = vpop.f32.mrb[0].mxu0
      %6417 = vmatprep.mubr.f32.mxu0 0.0
      %6418 = vmatmul.mubr.f32.gmra.mrb[0].mxu0 %v6276
      %v6419 = vpop.f32.mrb[0].mxu0
      %v6420 = vadd.f32 0.0, %v6419
      %v6421 = vpop.f32.mrb[0].mxu0
      %6422 = vmatprep.mubr.f32.mxu0 0.0
      %6423 = vmatmul.mubr.f32.gmra.mrb[0].mxu0 %v6279
      %v6424 = vpop.f32.mrb[0].mxu0
      %v6425 = vadd.f32 0.0, %v6424
      %v6426 = vpop.f32.mrb[0].mxu0
      %6427 = vmatprep.mubr.f32.mxu0 0.0
      %6428 = vmatmul.mubr.f32.gmra.mrb[0].mxu0 %v6282
      %v6429 = vpop.f32.mrb[0].mxu0
      %v6430 = vadd.f32 0.0, %v6429
      %v6431 = vpop.f32.mrb[0].mxu0
      %6432 = vmatprep.mubr.f32.mxu0 0.0
      %6433 = vmatmul.mubr.f32.gmra.mrb[0].mxu0 %v6285
      %v6434 = vpop.f32.mrb[0].mxu0
      %v6435 = vadd.f32 0.0, %v6434
      %v6436 = vpop.f32.mrb[0].mxu0
      %6437 = vmatprep.mubr.f32.mxu0 0.0
      %6438 = vmatmul.mubr.f32.gmra.mrb[0].mxu0 %v6288
      %v6439 = vpop.f32.mrb[0].mxu0
      %v6440 = vadd.f32 0.0, %v6439
      %v6441 = vpop.f32.mrb[0].mxu0
      %6442 = vmatprep.mubr.f32.mxu0 0.0
      %6443 = vmatmul.mubr.f32.gmra.mrb[0].mxu0 %v6291
      %v6444 = vpop.f32.mrb[0].mxu0
      %v6445 = vadd.f32 0.0, %v6444
      %v6446 = vpop.f32.mrb[0].mxu0
      %6447 = vdwg.mxu0
      %v6448 = vadd.f32 %v6201, %v6360
      %v6449 = vadd.f32 %v6202, %v6365
      %v6450 = vadd.f32 %v6203, %v6370
      %v6451 = vadd.f32 %v6204, %v6375
      %v6452 = vadd.f32 %v6205, %v6380
      %v6453 = vadd.f32 %v6206, %v6385
      %v6454 = vadd.f32 %v6207, %v6390
      %v6455 = vadd.f32 %v6208, %v6395
      %v6456 = vadd.f32 %v6209, %v6400
      %v6457 = vadd.f32 %v6210, %v6405
      %v6458 = vadd.f32 %v6211, %v6410
      %v6459 = vadd.f32 %v6212, %v6415
      %v6460 = vadd.f32 %v6213, %v6420
      %v6461 = vadd.f32 %v6214, %v6425
      %v6462 = vadd.f32 %v6215, %v6430
      %v6463 = vadd.f32 %v6216, %v6435
      %v6464 = vadd.f32 %v6217, %v6440
      %v6465 = vadd.f32 %v6218, %v6445
      %v6466 = vld [vmem:[#allocation2 + $0x2c] sm:$0xff]
      %v6467 = vld [vmem:[#allocation2 + $0x34] sm:$0xff]
      %v6468 = vld [vmem:[#allocation2 + $0x3c] sm:$0xff]
      %v6469 = vld [vmem:[#allocation2 + $0x44] sm:$0xff]
      %v6470 = vld [vmem:[#allocation2 + $0x4c] sm:$0xff]
      %v6471 = vld [vmem:[#allocation2 + $0x54] sm:$0xff]
      %v6472 = vld [vmem:[#allocation2 + $0x5c] sm:$0xff]
      %v6473 = vld [vmem:[#allocation2 + $0x64] sm:$0xff]
      %v6474 = vld [vmem:[#allocation2 + $0x6c] sm:$0xff]
      %v6475 = vld [vmem:[#allocation2 + $0x74] sm:$0xff]
      %v6476 = vld [vmem:[#allocation2 + $0x7c] sm:$0xff]
      %v6477 = vld [vmem:[#allocation2 + $0x84] sm:$0xff]
      %v6478 = vld [vmem:[#allocation2 + $0x8c] sm:$0xff]
      %v6479 = vld [vmem:[#allocation2 + $0x94] sm:$0xff]
      %v6480 = vld [vmem:[#allocation2 + $0x9c] sm:$0xff]
      %v6481 = vld [vmem:[#allocation2 + $0xa4] sm:$0xff]
      %v6482 = vld [vmem:[#allocation2 + $0xac] sm:$0xff]
      %v6483 = vld [vmem:[#allocation2 + $0xb4] sm:$0xf]
      %s6484 = scalar_lea.vmem %s3, 136
      %v6485 = vld [vmem:[%s6484] sm:$0xff]
      %v6487 = vsel %vm2286, %v6466, 0
      %v6490 = vsel %vm2286, %v6467, 0
      %v6493 = vsel %vm2286, %v6468, 0
      %v6496 = vsel %vm2286, %v6469, 0
      %v6499 = vsel %vm2286, %v6470, 0
      %v6502 = vsel %vm2286, %v6471, 0
      %v6505 = vsel %vm2286, %v6472, 0
      %v6508 = vsel %vm2286, %v6473, 0
      %v6511 = vsel %vm2286, %v6474, 0
      %v6514 = vsel %vm2286, %v6475, 0
      %v6517 = vsel %vm2286, %v6476, 0
      %v6520 = vsel %vm2286, %v6477, 0
      %v6523 = vsel %vm2286, %v6478, 0
      %v6526 = vsel %vm2286, %v6479, 0
      %v6529 = vsel %vm2286, %v6480, 0
      %v6532 = vsel %vm2286, %v6481, 0
      %v6535 = vsel %vm2286, %v6482, 0
      %v6538 = vsel %vm2286, %v6483, 0
      %6540 = vmatprep.subr.mxu0 0.0
      %6541 = vmatpush1.msra.mxu0 %v6485
      %6542 = vmatprep.subr.mxu0 0.0
      %6543 = vmatpush1.msra.mxu0 0.0
      %6544 = vmatprep.subr.mxu0 0.0
      %6545 = vmatpush1.msra.mxu0 0.0
      %6546 = vmatprep.subr.mxu0 0.0
      %6547 = vmatpush1.msra.mxu0 0.0
      %6548 = vmatprep.subr.mxu0 0.0
      %6549 = vmatpush1.msra.mxu0 0.0
      %6550 = vmatprep.subr.mxu0 0.0
      %6551 = vmatpush1.msra.mxu0 0.0
      %6552 = vmatprep.subr.mxu0 0.0
      %6553 = vmatpush1.msra.mxu0 0.0
      %6554 = vmatprep.subr.mxu0 0.0
      %6555 = vmatpush1.msra.mxu0 0.0
      %6556 = vmatprep.subr.mxu0 0.0
      %6557 = vmatpush1.msra.mxu0 0.0
      %6558 = vmatprep.subr.mxu0 0.0
      %6559 = vmatpush1.msra.mxu0 0.0
      %6560 = vmatprep.subr.mxu0 0.0
      %6561 = vmatpush1.msra.mxu0 0.0
      %6562 = vmatprep.subr.mxu0 0.0
      %6563 = vmatpush1.msra.mxu0 0.0
      %6564 = vmatprep.subr.mxu0 0.0
      %6565 = vmatpush1.msra.mxu0 0.0
      %6566 = vmatprep.subr.mxu0 0.0
      %6567 = vmatpush1.msra.mxu0 0.0
      %6568 = vmatprep.subr.mxu0 0.0
      %6569 = vmatpush1.msra.mxu0 0.0
      %6570 = vmatprep.subr.mxu0 0.0
      %6571 = vmatpush1.msra.mxu0 0.0
      %6572 = vmatprep.subr.mxu0 0.0
      %6573 = vmatpush1.msra.mxu0 0.0
      %6574 = vmatprep.subr.mxu0 0.0
      %6575 = vmatpush1.msra.mxu0 0.0
      %6576 = vmatprep.subr.mxu0 0.0
      %6577 = vmatpush1.msra.mxu0 0.0
      %6578 = vmatprep.subr.mxu0 0.0
      %6579 = vmatpush1.msra.mxu0 0.0
      %6580 = vmatprep.subr.mxu0 0.0
      %6581 = vmatpush1.msra.mxu0 0.0
      %6582 = vmatprep.subr.mxu0 0.0
      %6583 = vmatpush1.msra.mxu0 0.0
      %6584 = vmatprep.subr.mxu0 0.0
      %6585 = vmatpush1.msra.mxu0 0.0
      %6586 = vmatprep.subr.mxu0 0.0
      %6587 = vmatpush1.msra.mxu0 0.0
      %6588 = vmatprep.subr.mxu0 0.0
      %6589 = vmatpush1.msra.mxu0 0.0
      %6590 = vmatprep.subr.mxu0 0.0
      %6591 = vmatpush1.msra.mxu0 0.0
      %6592 = vmatprep.subr.mxu0 0.0
      %6593 = vmatpush1.msra.mxu0 0.0
      %6594 = vmatprep.subr.mxu0 0.0
      %6595 = vmatpush1.msra.mxu0 0.0
      %6596 = vmatprep.subr.mxu0 0.0
      %6597 = vmatpush1.msra.mxu0 0.0
      %6598 = vmatprep.subr.mxu0 0.0
      %6599 = vmatpush1.msra.mxu0 0.0
      %6600 = vmatprep.subr.mxu0 0.0
      %6601 = vmatpush1.msra.mxu0 0.0
      %6602 = vmatprep.subr.mxu0 0.0
      %6603 = vmatpush1.msra.mxu0 0.0
      %6604 = vmatprep.mubr.f32.mxu0 0.0
      %6605 = vmatmul.mubr.f32.gmra.mrb[0].mxu0 %v6487
      %v6606 = vpop.f32.mrb[0].mxu0
      %v6607 = vadd.f32 0.0, %v6606
      %v6608 = vpop.f32.mrb[0].mxu0
      %6609 = vmatprep.mubr.f32.mxu0 0.0
      %6610 = vmatmul.mubr.f32.gmra.mrb[0].mxu0 %v6490
      %v6611 = vpop.f32.mrb[0].mxu0
      %v6612 = vadd.f32 0.0, %v6611
      %v6613 = vpop.f32.mrb[0].mxu0
      %6614 = vmatprep.mubr.f32.mxu0 0.0
      %6615 = vmatmul.mubr.f32.gmra.mrb[0].mxu0 %v6493
      %v6616 = vpop.f32.mrb[0].mxu0
      %v6617 = vadd.f32 0.0, %v6616
      %v6618 = vpop.f32.mrb[0].mxu0
      %6619 = vmatprep.mubr.f32.mxu0 0.0
      %6620 = vmatmul.mubr.f32.gmra.mrb[0].mxu0 %v6496
      %v6621 = vpop.f32.mrb[0].mxu0
      %v6622 = vadd.f32 0.0, %v6621
      %v6623 = vpop.f32.mrb[0].mxu0
      %6624 = vmatprep.mubr.f32.mxu0 0.0
      %6625 = vmatmul.mubr.f32.gmra.mrb[0].mxu0 %v6499
      %v6626 = vpop.f32.mrb[0].mxu0
      %v6627 = vadd.f32 0.0, %v6626
      %v6628 = vpop.f32.mrb[0].mxu0
      %6629 = vmatprep.mubr.f32.mxu0 0.0
      %6630 = vmatmul.mubr.f32.gmra.mrb[0].mxu0 %v6502
      %v6631 = vpop.f32.mrb[0].mxu0
      %v6632 = vadd.f32 0.0, %v6631
      %v6633 = vpop.f32.mrb[0].mxu0
      %6634 = vmatprep.mubr.f32.mxu0 0.0
      %6635 = vmatmul.mubr.f32.gmra.mrb[0].mxu0 %v6505
      %v6636 = vpop.f32.mrb[0].mxu0
      %v6637 = vadd.f32 0.0, %v6636
      %v6638 = vpop.f32.mrb[0].mxu0
      %6639 = vmatprep.mubr.f32.mxu0 0.0
      %6640 = vmatmul.mubr.f32.gmra.mrb[0].mxu0 %v6508
      %v6641 = vpop.f32.mrb[0].mxu0
      %v6642 = vadd.f32 0.0, %v6641
      %v6643 = vpop.f32.mrb[0].mxu0
      %6644 = vmatprep.mubr.f32.mxu0 0.0
      %6645 = vmatmul.mubr.f32.gmra.mrb[0].mxu0 %v6511
      %v6646 = vpop.f32.mrb[0].mxu0
      %v6647 = vadd.f32 0.0, %v6646
      %v6648 = vpop.f32.mrb[0].mxu0
      %6649 = vmatprep.mubr.f32.mxu0 0.0
      %6650 = vmatmul.mubr.f32.gmra.mrb[0].mxu0 %v6514
      %v6651 = vpop.f32.mrb[0].mxu0
      %v6652 = vadd.f32 0.0, %v6651
      %v6653 = vpop.f32.mrb[0].mxu0
      %6654 = vmatprep.mubr.f32.mxu0 0.0
      %6655 = vmatmul.mubr.f32.gmra.mrb[0].mxu0 %v6517
      %v6656 = vpop.f32.mrb[0].mxu0
      %v6657 = vadd.f32 0.0, %v6656
      %v6658 = vpop.f32.mrb[0].mxu0
      %6659 = vmatprep.mubr.f32.mxu0 0.0
      %6660 = vmatmul.mubr.f32.gmra.mrb[0].mxu0 %v6520
      %v6661 = vpop.f32.mrb[0].mxu0
      %v6662 = vadd.f32 0.0, %v6661
      %v6663 = vpop.f32.mrb[0].mxu0
      %6664 = vmatprep.mubr.f32.mxu0 0.0
      %6665 = vmatmul.mubr.f32.gmra.mrb[0].mxu0 %v6523
      %v6666 = vpop.f32.mrb[0].mxu0
      %v6667 = vadd.f32 0.0, %v6666
      %v6668 = vpop.f32.mrb[0].mxu0
      %6669 = vmatprep.mubr.f32.mxu0 0.0
      %6670 = vmatmul.mubr.f32.gmra.mrb[0].mxu0 %v6526
      %v6671 = vpop.f32.mrb[0].mxu0
      %v6672 = vadd.f32 0.0, %v6671
      %v6673 = vpop.f32.mrb[0].mxu0
      %6674 = vmatprep.mubr.f32.mxu0 0.0
      %6675 = vmatmul.mubr.f32.gmra.mrb[0].mxu0 %v6529
      %v6676 = vpop.f32.mrb[0].mxu0
      %v6677 = vadd.f32 0.0, %v6676
      %v6678 = vpop.f32.mrb[0].mxu0
      %6679 = vmatprep.mubr.f32.mxu0 0.0
      %6680 = vmatmul.mubr.f32.gmra.mrb[0].mxu0 %v6532
      %v6681 = vpop.f32.mrb[0].mxu0
      %v6682 = vadd.f32 0.0, %v6681
      %v6683 = vpop.f32.mrb[0].mxu0
      %6684 = vmatprep.mubr.f32.mxu0 0.0
      %6685 = vmatmul.mubr.f32.gmra.mrb[0].mxu0 %v6535
      %v6686 = vpop.f32.mrb[0].mxu0
      %v6687 = vadd.f32 0.0, %v6686
      %v6688 = vpop.f32.mrb[0].mxu0
      %6689 = vmatprep.mubr.f32.mxu0 0.0
      %6690 = vmatmul.mubr.f32.gmra.mrb[0].mxu0 %v6538
      %v6691 = vpop.f32.mrb[0].mxu0
      %v6692 = vadd.f32 0.0, %v6691
      %v6693 = vpop.f32.mrb[0].mxu0
      %6694 = vdwg.mxu0
      %v6695 = vadd.f32 %v6448, %v6607
      %v6696 = vadd.f32 %v6449, %v6612
      %v6697 = vadd.f32 %v6450, %v6617
      %v6698 = vadd.f32 %v6451, %v6622
      %v6699 = vadd.f32 %v6452, %v6627
      %v6700 = vadd.f32 %v6453, %v6632
      %v6701 = vadd.f32 %v6454, %v6637
      %v6702 = vadd.f32 %v6455, %v6642
      %v6703 = vadd.f32 %v6456, %v6647
      %v6704 = vadd.f32 %v6457, %v6652
      %v6705 = vadd.f32 %v6458, %v6657
      %v6706 = vadd.f32 %v6459, %v6662
      %v6707 = vadd.f32 %v6460, %v6667
      %v6708 = vadd.f32 %v6461, %v6672
      %v6709 = vadd.f32 %v6462, %v6677
      %v6710 = vadd.f32 %v6463, %v6682
      %v6711 = vadd.f32 %v6464, %v6687
      %v6712 = vadd.f32 %v6465, %v6692
      %v6713 = vld [vmem:[#allocation2 + $0x2d] sm:$0xff]
      %v6714 = vld [vmem:[#allocation2 + $0x35] sm:$0xff]
      %v6715 = vld [vmem:[#allocation2 + $0x3d] sm:$0xff]
      %v6716 = vld [vmem:[#allocation2 + $0x45] sm:$0xff]
      %v6717 = vld [vmem:[#allocation2 + $0x4d] sm:$0xff]
      %v6718 = vld [vmem:[#allocation2 + $0x55] sm:$0xff]
      %v6719 = vld [vmem:[#allocation2 + $0x5d] sm:$0xff]
      %v6720 = vld [vmem:[#allocation2 + $0x65] sm:$0xff]
      %v6721 = vld [vmem:[#allocation2 + $0x6d] sm:$0xff]
      %v6722 = vld [vmem:[#allocation2 + $0x75] sm:$0xff]
      %v6723 = vld [vmem:[#allocation2 + $0x7d] sm:$0xff]
      %v6724 = vld [vmem:[#allocation2 + $0x85] sm:$0xff]
      %v6725 = vld [vmem:[#allocation2 + $0x8d] sm:$0xff]
      %v6726 = vld [vmem:[#allocation2 + $0x95] sm:$0xff]
      %v6727 = vld [vmem:[#allocation2 + $0x9d] sm:$0xff]
      %v6728 = vld [vmem:[#allocation2 + $0xa5] sm:$0xff]
      %v6729 = vld [vmem:[#allocation2 + $0xad] sm:$0xff]
      %v6730 = vld [vmem:[#allocation2 + $0xb5] sm:$0xf]
      %s6731 = scalar_lea.vmem %s3, 144
      %v6732 = vld [vmem:[%s6731] sm:$0xff]
      %v6734 = vsel %vm2286, %v6713, 0
      %v6737 = vsel %vm2286, %v6714, 0
      %v6740 = vsel %vm2286, %v6715, 0
      %v6743 = vsel %vm2286, %v6716, 0
      %v6746 = vsel %vm2286, %v6717, 0
      %v6749 = vsel %vm2286, %v6718, 0
      %v6752 = vsel %vm2286, %v6719, 0
      %v6755 = vsel %vm2286, %v6720, 0
      %v6758 = vsel %vm2286, %v6721, 0
      %v6761 = vsel %vm2286, %v6722, 0
      %v6764 = vsel %vm2286, %v6723, 0
      %v6767 = vsel %vm2286, %v6724, 0
      %v6770 = vsel %vm2286, %v6725, 0
      %v6773 = vsel %vm2286, %v6726, 0
      %v6776 = vsel %vm2286, %v6727, 0
      %v6779 = vsel %vm2286, %v6728, 0
      %v6782 = vsel %vm2286, %v6729, 0
      %v6785 = vsel %vm2286, %v6730, 0
      %6787 = vmatprep.subr.mxu0 0.0
      %6788 = vmatpush1.msra.mxu0 %v6732
      %6789 = vmatprep.subr.mxu0 0.0
      %6790 = vmatpush1.msra.mxu0 0.0
      %6791 = vmatprep.subr.mxu0 0.0
      %6792 = vmatpush1.msra.mxu0 0.0
      %6793 = vmatprep.subr.mxu0 0.0
      %6794 = vmatpush1.msra.mxu0 0.0
      %6795 = vmatprep.subr.mxu0 0.0
      %6796 = vmatpush1.msra.mxu0 0.0
      %6797 = vmatprep.subr.mxu0 0.0
      %6798 = vmatpush1.msra.mxu0 0.0
      %6799 = vmatprep.subr.mxu0 0.0
      %6800 = vmatpush1.msra.mxu0 0.0
      %6801 = vmatprep.subr.mxu0 0.0
      %6802 = vmatpush1.msra.mxu0 0.0
      %6803 = vmatprep.subr.mxu0 0.0
      %6804 = vmatpush1.msra.mxu0 0.0
      %6805 = vmatprep.subr.mxu0 0.0
      %6806 = vmatpush1.msra.mxu0 0.0
      %6807 = vmatprep.subr.mxu0 0.0
      %6808 = vmatpush1.msra.mxu0 0.0
      %6809 = vmatprep.subr.mxu0 0.0
      %6810 = vmatpush1.msra.mxu0 0.0
      %6811 = vmatprep.subr.mxu0 0.0
      %6812 = vmatpush1.msra.mxu0 0.0
      %6813 = vmatprep.subr.mxu0 0.0
      %6814 = vmatpush1.msra.mxu0 0.0
      %6815 = vmatprep.subr.mxu0 0.0
      %6816 = vmatpush1.msra.mxu0 0.0
      %6817 = vmatprep.subr.mxu0 0.0
      %6818 = vmatpush1.msra.mxu0 0.0
      %6819 = vmatprep.subr.mxu0 0.0
      %6820 = vmatpush1.msra.mxu0 0.0
      %6821 = vmatprep.subr.mxu0 0.0
      %6822 = vmatpush1.msra.mxu0 0.0
      %6823 = vmatprep.subr.mxu0 0.0
      %6824 = vmatpush1.msra.mxu0 0.0
      %6825 = vmatprep.subr.mxu0 0.0
      %6826 = vmatpush1.msra.mxu0 0.0
      %6827 = vmatprep.subr.mxu0 0.0
      %6828 = vmatpush1.msra.mxu0 0.0
      %6829 = vmatprep.subr.mxu0 0.0
      %6830 = vmatpush1.msra.mxu0 0.0
      %6831 = vmatprep.subr.mxu0 0.0
      %6832 = vmatpush1.msra.mxu0 0.0
      %6833 = vmatprep.subr.mxu0 0.0
      %6834 = vmatpush1.msra.mxu0 0.0
      %6835 = vmatprep.subr.mxu0 0.0
      %6836 = vmatpush1.msra.mxu0 0.0
      %6837 = vmatprep.subr.mxu0 0.0
      %6838 = vmatpush1.msra.mxu0 0.0
      %6839 = vmatprep.subr.mxu0 0.0
      %6840 = vmatpush1.msra.mxu0 0.0
      %6841 = vmatprep.subr.mxu0 0.0
      %6842 = vmatpush1.msra.mxu0 0.0
      %6843 = vmatprep.subr.mxu0 0.0
      %6844 = vmatpush1.msra.mxu0 0.0
      %6845 = vmatprep.subr.mxu0 0.0
      %6846 = vmatpush1.msra.mxu0 0.0
      %6847 = vmatprep.subr.mxu0 0.0
      %6848 = vmatpush1.msra.mxu0 0.0
      %6849 = vmatprep.subr.mxu0 0.0
      %6850 = vmatpush1.msra.mxu0 0.0
      %6851 = vmatprep.mubr.f32.mxu0 0.0
      %6852 = vmatmul.mubr.f32.gmra.mrb[0].mxu0 %v6734
      %v6853 = vpop.f32.mrb[0].mxu0
      %v6854 = vadd.f32 0.0, %v6853
      %v6855 = vpop.f32.mrb[0].mxu0
      %6856 = vmatprep.mubr.f32.mxu0 0.0
      %6857 = vmatmul.mubr.f32.gmra.mrb[0].mxu0 %v6737
      %v6858 = vpop.f32.mrb[0].mxu0
      %v6859 = vadd.f32 0.0, %v6858
      %v6860 = vpop.f32.mrb[0].mxu0
      %6861 = vmatprep.mubr.f32.mxu0 0.0
      %6862 = vmatmul.mubr.f32.gmra.mrb[0].mxu0 %v6740
      %v6863 = vpop.f32.mrb[0].mxu0
      %v6864 = vadd.f32 0.0, %v6863
      %v6865 = vpop.f32.mrb[0].mxu0
      %6866 = vmatprep.mubr.f32.mxu0 0.0
      %6867 = vmatmul.mubr.f32.gmra.mrb[0].mxu0 %v6743
      %v6868 = vpop.f32.mrb[0].mxu0
      %v6869 = vadd.f32 0.0, %v6868
      %v6870 = vpop.f32.mrb[0].mxu0
      %6871 = vmatprep.mubr.f32.mxu0 0.0
      %6872 = vmatmul.mubr.f32.gmra.mrb[0].mxu0 %v6746
      %v6873 = vpop.f32.mrb[0].mxu0
      %v6874 = vadd.f32 0.0, %v6873
      %v6875 = vpop.f32.mrb[0].mxu0
      %6876 = vmatprep.mubr.f32.mxu0 0.0
      %6877 = vmatmul.mubr.f32.gmra.mrb[0].mxu0 %v6749
      %v6878 = vpop.f32.mrb[0].mxu0
      %v6879 = vadd.f32 0.0, %v6878
      %v6880 = vpop.f32.mrb[0].mxu0
      %6881 = vmatprep.mubr.f32.mxu0 0.0
      %6882 = vmatmul.mubr.f32.gmra.mrb[0].mxu0 %v6752
      %v6883 = vpop.f32.mrb[0].mxu0
      %v6884 = vadd.f32 0.0, %v6883
      %v6885 = vpop.f32.mrb[0].mxu0
      %6886 = vmatprep.mubr.f32.mxu0 0.0
      %6887 = vmatmul.mubr.f32.gmra.mrb[0].mxu0 %v6755
      %v6888 = vpop.f32.mrb[0].mxu0
      %v6889 = vadd.f32 0.0, %v6888
      %v6890 = vpop.f32.mrb[0].mxu0
      %6891 = vmatprep.mubr.f32.mxu0 0.0
      %6892 = vmatmul.mubr.f32.gmra.mrb[0].mxu0 %v6758
      %v6893 = vpop.f32.mrb[0].mxu0
      %v6894 = vadd.f32 0.0, %v6893
      %v6895 = vpop.f32.mrb[0].mxu0
      %6896 = vmatprep.mubr.f32.mxu0 0.0
      %6897 = vmatmul.mubr.f32.gmra.mrb[0].mxu0 %v6761
      %v6898 = vpop.f32.mrb[0].mxu0
      %v6899 = vadd.f32 0.0, %v6898
      %v6900 = vpop.f32.mrb[0].mxu0
      %6901 = vmatprep.mubr.f32.mxu0 0.0
      %6902 = vmatmul.mubr.f32.gmra.mrb[0].mxu0 %v6764
      %v6903 = vpop.f32.mrb[0].mxu0
      %v6904 = vadd.f32 0.0, %v6903
      %v6905 = vpop.f32.mrb[0].mxu0
      %6906 = vmatprep.mubr.f32.mxu0 0.0
      %6907 = vmatmul.mubr.f32.gmra.mrb[0].mxu0 %v6767
      %v6908 = vpop.f32.mrb[0].mxu0
      %v6909 = vadd.f32 0.0, %v6908
      %v6910 = vpop.f32.mrb[0].mxu0
      %6911 = vmatprep.mubr.f32.mxu0 0.0
      %6912 = vmatmul.mubr.f32.gmra.mrb[0].mxu0 %v6770
      %v6913 = vpop.f32.mrb[0].mxu0
      %v6914 = vadd.f32 0.0, %v6913
      %v6915 = vpop.f32.mrb[0].mxu0
      %6916 = vmatprep.mubr.f32.mxu0 0.0
      %6917 = vmatmul.mubr.f32.gmra.mrb[0].mxu0 %v6773
      %v6918 = vpop.f32.mrb[0].mxu0
      %v6919 = vadd.f32 0.0, %v6918
      %v6920 = vpop.f32.mrb[0].mxu0
      %6921 = vmatprep.mubr.f32.mxu0 0.0
      %6922 = vmatmul.mubr.f32.gmra.mrb[0].mxu0 %v6776
      %v6923 = vpop.f32.mrb[0].mxu0
      %v6924 = vadd.f32 0.0, %v6923
      %v6925 = vpop.f32.mrb[0].mxu0
      %6926 = vmatprep.mubr.f32.mxu0 0.0
      %6927 = vmatmul.mubr.f32.gmra.mrb[0].mxu0 %v6779
      %v6928 = vpop.f32.mrb[0].mxu0
      %v6929 = vadd.f32 0.0, %v6928
      %v6930 = vpop.f32.mrb[0].mxu0
      %6931 = vmatprep.mubr.f32.mxu0 0.0
      %6932 = vmatmul.mubr.f32.gmra.mrb[0].mxu0 %v6782
      %v6933 = vpop.f32.mrb[0].mxu0
      %v6934 = vadd.f32 0.0, %v6933
      %v6935 = vpop.f32.mrb[0].mxu0
      %6936 = vmatprep.mubr.f32.mxu0 0.0
      %6937 = vmatmul.mubr.f32.gmra.mrb[0].mxu0 %v6785
      %v6938 = vpop.f32.mrb[0].mxu0
      %v6939 = vadd.f32 0.0, %v6938
      %v6940 = vpop.f32.mrb[0].mxu0
      %6941 = vdwg.mxu0
      %v6942 = vadd.f32 %v6695, %v6854
      %v6943 = vadd.f32 %v6696, %v6859
      %v6944 = vadd.f32 %v6697, %v6864
      %v6945 = vadd.f32 %v6698, %v6869
      %v6946 = vadd.f32 %v6699, %v6874
      %v6947 = vadd.f32 %v6700, %v6879
      %v6948 = vadd.f32 %v6701, %v6884
      %v6949 = vadd.f32 %v6702, %v6889
      %v6950 = vadd.f32 %v6703, %v6894
      %v6951 = vadd.f32 %v6704, %v6899
      %v6952 = vadd.f32 %v6705, %v6904
      %v6953 = vadd.f32 %v6706, %v6909
      %v6954 = vadd.f32 %v6707, %v6914
      %v6955 = vadd.f32 %v6708, %v6919
      %v6956 = vadd.f32 %v6709, %v6924
      %v6957 = vadd.f32 %v6710, %v6929
      %v6958 = vadd.f32 %v6711, %v6934
      %v6959 = vadd.f32 %v6712, %v6939
      %v6960 = vld [vmem:[#allocation2 + $0x2e] sm:$0xff]
      %v6961 = vld [vmem:[#allocation2 + $0x36] sm:$0xff]
      %v6962 = vld [vmem:[#allocation2 + $0x3e] sm:$0xff]
      %v6963 = vld [vmem:[#allocation2 + $0x46] sm:$0xff]
      %v6964 = vld [vmem:[#allocation2 + $0x4e] sm:$0xff]
      %v6965 = vld [vmem:[#allocation2 + $0x56] sm:$0xff]
      %v6966 = vld [vmem:[#allocation2 + $0x5e] sm:$0xff]
      %v6967 = vld [vmem:[#allocation2 + $0x66] sm:$0xff]
      %v6968 = vld [vmem:[#allocation2 + $0x6e] sm:$0xff]
      %v6969 = vld [vmem:[#allocation2 + $0x76] sm:$0xff]
      %v6970 = vld [vmem:[#allocation2 + $0x7e] sm:$0xff]
      %v6971 = vld [vmem:[#allocation2 + $0x86] sm:$0xff]
      %v6972 = vld [vmem:[#allocation2 + $0x8e] sm:$0xff]
      %v6973 = vld [vmem:[#allocation2 + $0x96] sm:$0xff]
      %v6974 = vld [vmem:[#allocation2 + $0x9e] sm:$0xff]
      %v6975 = vld [vmem:[#allocation2 + $0xa6] sm:$0xff]
      %v6976 = vld [vmem:[#allocation2 + $0xae] sm:$0xff]
      %v6977 = vld [vmem:[#allocation2 + $0xb6] sm:$0xf]
      %s6978 = scalar_lea.vmem %s3, 152
      %v6979 = vld [vmem:[%s6978] sm:$0xff]
      %v6981 = vsel %vm2286, %v6960, 0
      %v6984 = vsel %vm2286, %v6961, 0
      %v6987 = vsel %vm2286, %v6962, 0
      %v6990 = vsel %vm2286, %v6963, 0
      %v6993 = vsel %vm2286, %v6964, 0
      %v6996 = vsel %vm2286, %v6965, 0
      %v6999 = vsel %vm2286, %v6966, 0
      %v7002 = vsel %vm2286, %v6967, 0
      %v7005 = vsel %vm2286, %v6968, 0
      %v7008 = vsel %vm2286, %v6969, 0
      %v7011 = vsel %vm2286, %v6970, 0
      %v7014 = vsel %vm2286, %v6971, 0
      %v7017 = vsel %vm2286, %v6972, 0
      %v7020 = vsel %vm2286, %v6973, 0
      %v7023 = vsel %vm2286, %v6974, 0
      %v7026 = vsel %vm2286, %v6975, 0
      %v7029 = vsel %vm2286, %v6976, 0
      %v7032 = vsel %vm2286, %v6977, 0
      %7034 = vmatprep.subr.mxu0 0.0
      %7035 = vmatpush1.msra.mxu0 %v6979
      %7036 = vmatprep.subr.mxu0 0.0
      %7037 = vmatpush1.msra.mxu0 0.0
      %7038 = vmatprep.subr.mxu0 0.0
      %7039 = vmatpush1.msra.mxu0 0.0
      %7040 = vmatprep.subr.mxu0 0.0
      %7041 = vmatpush1.msra.mxu0 0.0
      %7042 = vmatprep.subr.mxu0 0.0
      %7043 = vmatpush1.msra.mxu0 0.0
      %7044 = vmatprep.subr.mxu0 0.0
      %7045 = vmatpush1.msra.mxu0 0.0
      %7046 = vmatprep.subr.mxu0 0.0
      %7047 = vmatpush1.msra.mxu0 0.0
      %7048 = vmatprep.subr.mxu0 0.0
      %7049 = vmatpush1.msra.mxu0 0.0
      %7050 = vmatprep.subr.mxu0 0.0
      %7051 = vmatpush1.msra.mxu0 0.0
      %7052 = vmatprep.subr.mxu0 0.0
      %7053 = vmatpush1.msra.mxu0 0.0
      %7054 = vmatprep.subr.mxu0 0.0
      %7055 = vmatpush1.msra.mxu0 0.0
      %7056 = vmatprep.subr.mxu0 0.0
      %7057 = vmatpush1.msra.mxu0 0.0
      %7058 = vmatprep.subr.mxu0 0.0
      %7059 = vmatpush1.msra.mxu0 0.0
      %7060 = vmatprep.subr.mxu0 0.0
      %7061 = vmatpush1.msra.mxu0 0.0
      %7062 = vmatprep.subr.mxu0 0.0
      %7063 = vmatpush1.msra.mxu0 0.0
      %7064 = vmatprep.subr.mxu0 0.0
      %7065 = vmatpush1.msra.mxu0 0.0
      %7066 = vmatprep.subr.mxu0 0.0
      %7067 = vmatpush1.msra.mxu0 0.0
      %7068 = vmatprep.subr.mxu0 0.0
      %7069 = vmatpush1.msra.mxu0 0.0
      %7070 = vmatprep.subr.mxu0 0.0
      %7071 = vmatpush1.msra.mxu0 0.0
      %7072 = vmatprep.subr.mxu0 0.0
      %7073 = vmatpush1.msra.mxu0 0.0
      %7074 = vmatprep.subr.mxu0 0.0
      %7075 = vmatpush1.msra.mxu0 0.0
      %7076 = vmatprep.subr.mxu0 0.0
      %7077 = vmatpush1.msra.mxu0 0.0
      %7078 = vmatprep.subr.mxu0 0.0
      %7079 = vmatpush1.msra.mxu0 0.0
      %7080 = vmatprep.subr.mxu0 0.0
      %7081 = vmatpush1.msra.mxu0 0.0
      %7082 = vmatprep.subr.mxu0 0.0
      %7083 = vmatpush1.msra.mxu0 0.0
      %7084 = vmatprep.subr.mxu0 0.0
      %7085 = vmatpush1.msra.mxu0 0.0
      %7086 = vmatprep.subr.mxu0 0.0
      %7087 = vmatpush1.msra.mxu0 0.0
      %7088 = vmatprep.subr.mxu0 0.0
      %7089 = vmatpush1.msra.mxu0 0.0
      %7090 = vmatprep.subr.mxu0 0.0
      %7091 = vmatpush1.msra.mxu0 0.0
      %7092 = vmatprep.subr.mxu0 0.0
      %7093 = vmatpush1.msra.mxu0 0.0
      %7094 = vmatprep.subr.mxu0 0.0
      %7095 = vmatpush1.msra.mxu0 0.0
      %7096 = vmatprep.subr.mxu0 0.0
      %7097 = vmatpush1.msra.mxu0 0.0
      %7098 = vmatprep.mubr.f32.mxu0 0.0
      %7099 = vmatmul.mubr.f32.gmra.mrb[0].mxu0 %v6981
      %v7100 = vpop.f32.mrb[0].mxu0
      %v7101 = vadd.f32 0.0, %v7100
      %v7102 = vpop.f32.mrb[0].mxu0
      %7103 = vmatprep.mubr.f32.mxu0 0.0
      %7104 = vmatmul.mubr.f32.gmra.mrb[0].mxu0 %v6984
      %v7105 = vpop.f32.mrb[0].mxu0
      %v7106 = vadd.f32 0.0, %v7105
      %v7107 = vpop.f32.mrb[0].mxu0
      %7108 = vmatprep.mubr.f32.mxu0 0.0
      %7109 = vmatmul.mubr.f32.gmra.mrb[0].mxu0 %v6987
      %v7110 = vpop.f32.mrb[0].mxu0
      %v7111 = vadd.f32 0.0, %v7110
      %v7112 = vpop.f32.mrb[0].mxu0
      %7113 = vmatprep.mubr.f32.mxu0 0.0
      %7114 = vmatmul.mubr.f32.gmra.mrb[0].mxu0 %v6990
      %v7115 = vpop.f32.mrb[0].mxu0
      %v7116 = vadd.f32 0.0, %v7115
      %v7117 = vpop.f32.mrb[0].mxu0
      %7118 = vmatprep.mubr.f32.mxu0 0.0
      %7119 = vmatmul.mubr.f32.gmra.mrb[0].mxu0 %v6993
      %v7120 = vpop.f32.mrb[0].mxu0
      %v7121 = vadd.f32 0.0, %v7120
      %v7122 = vpop.f32.mrb[0].mxu0
      %7123 = vmatprep.mubr.f32.mxu0 0.0
      %7124 = vmatmul.mubr.f32.gmra.mrb[0].mxu0 %v6996
      %v7125 = vpop.f32.mrb[0].mxu0
      %v7126 = vadd.f32 0.0, %v7125
      %v7127 = vpop.f32.mrb[0].mxu0
      %7128 = vmatprep.mubr.f32.mxu0 0.0
      %7129 = vmatmul.mubr.f32.gmra.mrb[0].mxu0 %v6999
      %v7130 = vpop.f32.mrb[0].mxu0
      %v7131 = vadd.f32 0.0, %v7130
      %v7132 = vpop.f32.mrb[0].mxu0
      %7133 = vmatprep.mubr.f32.mxu0 0.0
      %7134 = vmatmul.mubr.f32.gmra.mrb[0].mxu0 %v7002
      %v7135 = vpop.f32.mrb[0].mxu0
      %v7136 = vadd.f32 0.0, %v7135
      %v7137 = vpop.f32.mrb[0].mxu0
      %7138 = vmatprep.mubr.f32.mxu0 0.0
      %7139 = vmatmul.mubr.f32.gmra.mrb[0].mxu0 %v7005
      %v7140 = vpop.f32.mrb[0].mxu0
      %v7141 = vadd.f32 0.0, %v7140
      %v7142 = vpop.f32.mrb[0].mxu0
      %7143 = vmatprep.mubr.f32.mxu0 0.0
      %7144 = vmatmul.mubr.f32.gmra.mrb[0].mxu0 %v7008
      %v7145 = vpop.f32.mrb[0].mxu0
      %v7146 = vadd.f32 0.0, %v7145
      %v7147 = vpop.f32.mrb[0].mxu0
      %7148 = vmatprep.mubr.f32.mxu0 0.0
      %7149 = vmatmul.mubr.f32.gmra.mrb[0].mxu0 %v7011
      %v7150 = vpop.f32.mrb[0].mxu0
      %v7151 = vadd.f32 0.0, %v7150
      %v7152 = vpop.f32.mrb[0].mxu0
      %7153 = vmatprep.mubr.f32.mxu0 0.0
      %7154 = vmatmul.mubr.f32.gmra.mrb[0].mxu0 %v7014
      %v7155 = vpop.f32.mrb[0].mxu0
      %v7156 = vadd.f32 0.0, %v7155
      %v7157 = vpop.f32.mrb[0].mxu0
      %7158 = vmatprep.mubr.f32.mxu0 0.0
      %7159 = vmatmul.mubr.f32.gmra.mrb[0].mxu0 %v7017
      %v7160 = vpop.f32.mrb[0].mxu0
      %v7161 = vadd.f32 0.0, %v7160
      %v7162 = vpop.f32.mrb[0].mxu0
      %7163 = vmatprep.mubr.f32.mxu0 0.0
      %7164 = vmatmul.mubr.f32.gmra.mrb[0].mxu0 %v7020
      %v7165 = vpop.f32.mrb[0].mxu0
      %v7166 = vadd.f32 0.0, %v7165
      %v7167 = vpop.f32.mrb[0].mxu0
      %7168 = vmatprep.mubr.f32.mxu0 0.0
      %7169 = vmatmul.mubr.f32.gmra.mrb[0].mxu0 %v7023
      %v7170 = vpop.f32.mrb[0].mxu0
      %v7171 = vadd.f32 0.0, %v7170
      %v7172 = vpop.f32.mrb[0].mxu0
      %7173 = vmatprep.mubr.f32.mxu0 0.0
      %7174 = vmatmul.mubr.f32.gmra.mrb[0].mxu0 %v7026
      %v7175 = vpop.f32.mrb[0].mxu0
      %v7176 = vadd.f32 0.0, %v7175
      %v7177 = vpop.f32.mrb[0].mxu0
      %7178 = vmatprep.mubr.f32.mxu0 0.0
      %7179 = vmatmul.mubr.f32.gmra.mrb[0].mxu0 %v7029
      %v7180 = vpop.f32.mrb[0].mxu0
      %v7181 = vadd.f32 0.0, %v7180
      %v7182 = vpop.f32.mrb[0].mxu0
      %7183 = vmatprep.mubr.f32.mxu0 0.0
      %7184 = vmatmul.mubr.f32.gmra.mrb[0].mxu0 %v7032
      %v7185 = vpop.f32.mrb[0].mxu0
      %v7186 = vadd.f32 0.0, %v7185
      %v7187 = vpop.f32.mrb[0].mxu0
      %7188 = vdwg.mxu0
      %v7189 = vadd.f32 %v6942, %v7101
      %v7190 = vadd.f32 %v6943, %v7106
      %v7191 = vadd.f32 %v6944, %v7111
      %v7192 = vadd.f32 %v6945, %v7116
      %v7193 = vadd.f32 %v6946, %v7121
      %v7194 = vadd.f32 %v6947, %v7126
      %v7195 = vadd.f32 %v6948, %v7131
      %v7196 = vadd.f32 %v6949, %v7136
      %v7197 = vadd.f32 %v6950, %v7141
      %v7198 = vadd.f32 %v6951, %v7146
      %v7199 = vadd.f32 %v6952, %v7151
      %v7200 = vadd.f32 %v6953, %v7156
      %v7201 = vadd.f32 %v6954, %v7161
      %v7202 = vadd.f32 %v6955, %v7166
      %v7203 = vadd.f32 %v6956, %v7171
      %v7204 = vadd.f32 %v6957, %v7176
      %v7205 = vadd.f32 %v6958, %v7181
      %v7206 = vadd.f32 %v6959, %v7186
      %v7207 = vld [vmem:[#allocation2 + $0x38] sm:$0xff]
      %v7208 = vld [vmem:[#allocation2 + $0x40] sm:$0xff]
      %v7209 = vld [vmem:[#allocation2 + $0x48] sm:$0xff]
      %v7210 = vld [vmem:[#allocation2 + $0x50] sm:$0xff]
      %v7211 = vld [vmem:[#allocation2 + $0x58] sm:$0xff]
      %v7212 = vld [vmem:[#allocation2 + $0x60] sm:$0xff]
      %v7213 = vld [vmem:[#allocation2 + $0x68] sm:$0xff]
      %v7214 = vld [vmem:[#allocation2 + $0x70] sm:$0xff]
      %v7215 = vld [vmem:[#allocation2 + $0x78] sm:$0xff]
      %v7216 = vld [vmem:[#allocation2 + $0x80] sm:$0xff]
      %v7217 = vld [vmem:[#allocation2 + $0x88] sm:$0xff]
      %v7218 = vld [vmem:[#allocation2 + $0x90] sm:$0xff]
      %v7219 = vld [vmem:[#allocation2 + $0x98] sm:$0xff]
      %v7220 = vld [vmem:[#allocation2 + $0xa0] sm:$0xff]
      %v7221 = vld [vmem:[#allocation2 + $0xa8] sm:$0xff]
      %v7222 = vld [vmem:[#allocation2 + $0xb0] sm:$0xff]
      %v7223 = vld [vmem:[#allocation2 + $0xb8] sm:$0xff]
      %v7224 = vld [vmem:[#allocation2 + $0xc0] sm:$0xf]
      %s7225 = scalar_lea.vmem %s3, 160
      %v7226 = vld [vmem:[%s7225] sm:$0xff]
      %v7228 = vsel %vm2286, %v7207, 0
      %v7231 = vsel %vm2286, %v7208, 0
      %v7234 = vsel %vm2286, %v7209, 0
      %v7237 = vsel %vm2286, %v7210, 0
      %v7240 = vsel %vm2286, %v7211, 0
      %v7243 = vsel %vm2286, %v7212, 0
      %v7246 = vsel %vm2286, %v7213, 0
      %v7249 = vsel %vm2286, %v7214, 0
      %v7252 = vsel %vm2286, %v7215, 0
      %v7255 = vsel %vm2286, %v7216, 0
      %v7258 = vsel %vm2286, %v7217, 0
      %v7261 = vsel %vm2286, %v7218, 0
      %v7264 = vsel %vm2286, %v7219, 0
      %v7267 = vsel %vm2286, %v7220, 0
      %v7270 = vsel %vm2286, %v7221, 0
      %v7273 = vsel %vm2286, %v7222, 0
      %v7276 = vsel %vm2286, %v7223, 0
      %v7279 = vsel %vm2286, %v7224, 0
      %7281 = vmatprep.subr.mxu0 0.0
      %7282 = vmatpush1.msra.mxu0 %v7226
      %7283 = vmatprep.subr.mxu0 0.0
      %7284 = vmatpush1.msra.mxu0 0.0
      %7285 = vmatprep.subr.mxu0 0.0
      %7286 = vmatpush1.msra.mxu0 0.0
      %7287 = vmatprep.subr.mxu0 0.0
      %7288 = vmatpush1.msra.mxu0 0.0
      %7289 = vmatprep.subr.mxu0 0.0
      %7290 = vmatpush1.msra.mxu0 0.0
      %7291 = vmatprep.subr.mxu0 0.0
      %7292 = vmatpush1.msra.mxu0 0.0
      %7293 = vmatprep.subr.mxu0 0.0
      %7294 = vmatpush1.msra.mxu0 0.0
      %7295 = vmatprep.subr.mxu0 0.0
      %7296 = vmatpush1.msra.mxu0 0.0
      %7297 = vmatprep.subr.mxu0 0.0
      %7298 = vmatpush1.msra.mxu0 0.0
      %7299 = vmatprep.subr.mxu0 0.0
      %7300 = vmatpush1.msra.mxu0 0.0
      %7301 = vmatprep.subr.mxu0 0.0
      %7302 = vmatpush1.msra.mxu0 0.0
      %7303 = vmatprep.subr.mxu0 0.0
      %7304 = vmatpush1.msra.mxu0 0.0
      %7305 = vmatprep.subr.mxu0 0.0
      %7306 = vmatpush1.msra.mxu0 0.0
      %7307 = vmatprep.subr.mxu0 0.0
      %7308 = vmatpush1.msra.mxu0 0.0
      %7309 = vmatprep.subr.mxu0 0.0
      %7310 = vmatpush1.msra.mxu0 0.0
      %7311 = vmatprep.subr.mxu0 0.0
      %7312 = vmatpush1.msra.mxu0 0.0
      %7313 = vmatprep.subr.mxu0 0.0
      %7314 = vmatpush1.msra.mxu0 0.0
      %7315 = vmatprep.subr.mxu0 0.0
      %7316 = vmatpush1.msra.mxu0 0.0
      %7317 = vmatprep.subr.mxu0 0.0
      %7318 = vmatpush1.msra.mxu0 0.0
      %7319 = vmatprep.subr.mxu0 0.0
      %7320 = vmatpush1.msra.mxu0 0.0
      %7321 = vmatprep.subr.mxu0 0.0
      %7322 = vmatpush1.msra.mxu0 0.0
      %7323 = vmatprep.subr.mxu0 0.0
      %7324 = vmatpush1.msra.mxu0 0.0
      %7325 = vmatprep.subr.mxu0 0.0
      %7326 = vmatpush1.msra.mxu0 0.0
      %7327 = vmatprep.subr.mxu0 0.0
      %7328 = vmatpush1.msra.mxu0 0.0
      %7329 = vmatprep.subr.mxu0 0.0
      %7330 = vmatpush1.msra.mxu0 0.0
      %7331 = vmatprep.subr.mxu0 0.0
      %7332 = vmatpush1.msra.mxu0 0.0
      %7333 = vmatprep.subr.mxu0 0.0
      %7334 = vmatpush1.msra.mxu0 0.0
      %7335 = vmatprep.subr.mxu0 0.0
      %7336 = vmatpush1.msra.mxu0 0.0
      %7337 = vmatprep.subr.mxu0 0.0
      %7338 = vmatpush1.msra.mxu0 0.0
      %7339 = vmatprep.subr.mxu0 0.0
      %7340 = vmatpush1.msra.mxu0 0.0
      %7341 = vmatprep.subr.mxu0 0.0
      %7342 = vmatpush1.msra.mxu0 0.0
      %7343 = vmatprep.subr.mxu0 0.0
      %7344 = vmatpush1.msra.mxu0 0.0
      %7345 = vmatprep.mubr.f32.mxu0 0.0
      %7346 = vmatmul.mubr.f32.gmra.mrb[0].mxu0 %v7228
      %v7347 = vpop.f32.mrb[0].mxu0
      %v7348 = vadd.f32 0.0, %v7347
      %v7349 = vpop.f32.mrb[0].mxu0
      %7350 = vmatprep.mubr.f32.mxu0 0.0
      %7351 = vmatmul.mubr.f32.gmra.mrb[0].mxu0 %v7231
      %v7352 = vpop.f32.mrb[0].mxu0
      %v7353 = vadd.f32 0.0, %v7352
      %v7354 = vpop.f32.mrb[0].mxu0
      %7355 = vmatprep.mubr.f32.mxu0 0.0
      %7356 = vmatmul.mubr.f32.gmra.mrb[0].mxu0 %v7234
      %v7357 = vpop.f32.mrb[0].mxu0
      %v7358 = vadd.f32 0.0, %v7357
      %v7359 = vpop.f32.mrb[0].mxu0
      %7360 = vmatprep.mubr.f32.mxu0 0.0
      %7361 = vmatmul.mubr.f32.gmra.mrb[0].mxu0 %v7237
      %v7362 = vpop.f32.mrb[0].mxu0
      %v7363 = vadd.f32 0.0, %v7362
      %v7364 = vpop.f32.mrb[0].mxu0
      %7365 = vmatprep.mubr.f32.mxu0 0.0
      %7366 = vmatmul.mubr.f32.gmra.mrb[0].mxu0 %v7240
      %v7367 = vpop.f32.mrb[0].mxu0
      %v7368 = vadd.f32 0.0, %v7367
      %v7369 = vpop.f32.mrb[0].mxu0
      %7370 = vmatprep.mubr.f32.mxu0 0.0
      %7371 = vmatmul.mubr.f32.gmra.mrb[0].mxu0 %v7243
      %v7372 = vpop.f32.mrb[0].mxu0
      %v7373 = vadd.f32 0.0, %v7372
      %v7374 = vpop.f32.mrb[0].mxu0
      %7375 = vmatprep.mubr.f32.mxu0 0.0
      %7376 = vmatmul.mubr.f32.gmra.mrb[0].mxu0 %v7246
      %v7377 = vpop.f32.mrb[0].mxu0
      %v7378 = vadd.f32 0.0, %v7377
      %v7379 = vpop.f32.mrb[0].mxu0
      %7380 = vmatprep.mubr.f32.mxu0 0.0
      %7381 = vmatmul.mubr.f32.gmra.mrb[0].mxu0 %v7249
      %v7382 = vpop.f32.mrb[0].mxu0
      %v7383 = vadd.f32 0.0, %v7382
      %v7384 = vpop.f32.mrb[0].mxu0
      %7385 = vmatprep.mubr.f32.mxu0 0.0
      %7386 = vmatmul.mubr.f32.gmra.mrb[0].mxu0 %v7252
      %v7387 = vpop.f32.mrb[0].mxu0
      %v7388 = vadd.f32 0.0, %v7387
      %v7389 = vpop.f32.mrb[0].mxu0
      %7390 = vmatprep.mubr.f32.mxu0 0.0
      %7391 = vmatmul.mubr.f32.gmra.mrb[0].mxu0 %v7255
      %v7392 = vpop.f32.mrb[0].mxu0
      %v7393 = vadd.f32 0.0, %v7392
      %v7394 = vpop.f32.mrb[0].mxu0
      %7395 = vmatprep.mubr.f32.mxu0 0.0
      %7396 = vmatmul.mubr.f32.gmra.mrb[0].mxu0 %v7258
      %v7397 = vpop.f32.mrb[0].mxu0
      %v7398 = vadd.f32 0.0, %v7397
      %v7399 = vpop.f32.mrb[0].mxu0
      %7400 = vmatprep.mubr.f32.mxu0 0.0
      %7401 = vmatmul.mubr.f32.gmra.mrb[0].mxu0 %v7261
      %v7402 = vpop.f32.mrb[0].mxu0
      %v7403 = vadd.f32 0.0, %v7402
      %v7404 = vpop.f32.mrb[0].mxu0
      %7405 = vmatprep.mubr.f32.mxu0 0.0
      %7406 = vmatmul.mubr.f32.gmra.mrb[0].mxu0 %v7264
      %v7407 = vpop.f32.mrb[0].mxu0
      %v7408 = vadd.f32 0.0, %v7407
      %v7409 = vpop.f32.mrb[0].mxu0
      %7410 = vmatprep.mubr.f32.mxu0 0.0
      %7411 = vmatmul.mubr.f32.gmra.mrb[0].mxu0 %v7267
      %v7412 = vpop.f32.mrb[0].mxu0
      %v7413 = vadd.f32 0.0, %v7412
      %v7414 = vpop.f32.mrb[0].mxu0
      %7415 = vmatprep.mubr.f32.mxu0 0.0
      %7416 = vmatmul.mubr.f32.gmra.mrb[0].mxu0 %v7270
      %v7417 = vpop.f32.mrb[0].mxu0
      %v7418 = vadd.f32 0.0, %v7417
      %v7419 = vpop.f32.mrb[0].mxu0
      %7420 = vmatprep.mubr.f32.mxu0 0.0
      %7421 = vmatmul.mubr.f32.gmra.mrb[0].mxu0 %v7273
      %v7422 = vpop.f32.mrb[0].mxu0
      %v7423 = vadd.f32 0.0, %v7422
      %v7424 = vpop.f32.mrb[0].mxu0
      %7425 = vmatprep.mubr.f32.mxu0 0.0
      %7426 = vmatmul.mubr.f32.gmra.mrb[0].mxu0 %v7276
      %v7427 = vpop.f32.mrb[0].mxu0
      %v7428 = vadd.f32 0.0, %v7427
      %v7429 = vpop.f32.mrb[0].mxu0
      %7430 = vmatprep.mubr.f32.mxu0 0.0
      %7431 = vmatmul.mubr.f32.gmra.mrb[0].mxu0 %v7279
      %v7432 = vpop.f32.mrb[0].mxu0
      %v7433 = vadd.f32 0.0, %v7432
      %v7434 = vpop.f32.mrb[0].mxu0
      %7435 = vdwg.mxu0
      %v7436 = vadd.f32 %v7189, %v7348
      %v7437 = vadd.f32 %v7190, %v7353
      %v7438 = vadd.f32 %v7191, %v7358
      %v7439 = vadd.f32 %v7192, %v7363
      %v7440 = vadd.f32 %v7193, %v7368
      %v7441 = vadd.f32 %v7194, %v7373
      %v7442 = vadd.f32 %v7195, %v7378
      %v7443 = vadd.f32 %v7196, %v7383
      %v7444 = vadd.f32 %v7197, %v7388
      %v7445 = vadd.f32 %v7198, %v7393
      %v7446 = vadd.f32 %v7199, %v7398
      %v7447 = vadd.f32 %v7200, %v7403
      %v7448 = vadd.f32 %v7201, %v7408
      %v7449 = vadd.f32 %v7202, %v7413
      %v7450 = vadd.f32 %v7203, %v7418
      %v7451 = vadd.f32 %v7204, %v7423
      %v7452 = vadd.f32 %v7205, %v7428
      %v7453 = vadd.f32 %v7206, %v7433
      %v7454 = vld [vmem:[#allocation2 + $0x39] sm:$0xff]
      %v7455 = vld [vmem:[#allocation2 + $0x41] sm:$0xff]
      %v7456 = vld [vmem:[#allocation2 + $0x49] sm:$0xff]
      %v7457 = vld [vmem:[#allocation2 + $0x51] sm:$0xff]
      %v7458 = vld [vmem:[#allocation2 + $0x59] sm:$0xff]
      %v7459 = vld [vmem:[#allocation2 + $0x61] sm:$0xff]
      %v7460 = vld [vmem:[#allocation2 + $0x69] sm:$0xff]
      %v7461 = vld [vmem:[#allocation2 + $0x71] sm:$0xff]
      %v7462 = vld [vmem:[#allocation2 + $0x79] sm:$0xff]
      %v7463 = vld [vmem:[#allocation2 + $0x81] sm:$0xff]
      %v7464 = vld [vmem:[#allocation2 + $0x89] sm:$0xff]
      %v7465 = vld [vmem:[#allocation2 + $0x91] sm:$0xff]
      %v7466 = vld [vmem:[#allocation2 + $0x99] sm:$0xff]
      %v7467 = vld [vmem:[#allocation2 + $0xa1] sm:$0xff]
      %v7468 = vld [vmem:[#allocation2 + $0xa9] sm:$0xff]
      %v7469 = vld [vmem:[#allocation2 + $0xb1] sm:$0xff]
      %v7470 = vld [vmem:[#allocation2 + $0xb9] sm:$0xff]
      %v7471 = vld [vmem:[#allocation2 + $0xc1] sm:$0xf]
      %s7472 = scalar_lea.vmem %s3, 168
      %v7473 = vld [vmem:[%s7472] sm:$0xff]
      %v7475 = vsel %vm2286, %v7454, 0
      %v7478 = vsel %vm2286, %v7455, 0
      %v7481 = vsel %vm2286, %v7456, 0
      %v7484 = vsel %vm2286, %v7457, 0
      %v7487 = vsel %vm2286, %v7458, 0
      %v7490 = vsel %vm2286, %v7459, 0
      %v7493 = vsel %vm2286, %v7460, 0
      %v7496 = vsel %vm2286, %v7461, 0
      %v7499 = vsel %vm2286, %v7462, 0
      %v7502 = vsel %vm2286, %v7463, 0
      %v7505 = vsel %vm2286, %v7464, 0
      %v7508 = vsel %vm2286, %v7465, 0
      %v7511 = vsel %vm2286, %v7466, 0
      %v7514 = vsel %vm2286, %v7467, 0
      %v7517 = vsel %vm2286, %v7468, 0
      %v7520 = vsel %vm2286, %v7469, 0
      %v7523 = vsel %vm2286, %v7470, 0
      %v7526 = vsel %vm2286, %v7471, 0
      %7528 = vmatprep.subr.mxu0 0.0
      %7529 = vmatpush1.msra.mxu0 %v7473
      %7530 = vmatprep.subr.mxu0 0.0
      %7531 = vmatpush1.msra.mxu0 0.0
      %7532 = vmatprep.subr.mxu0 0.0
      %7533 = vmatpush1.msra.mxu0 0.0
      %7534 = vmatprep.subr.mxu0 0.0
      %7535 = vmatpush1.msra.mxu0 0.0
      %7536 = vmatprep.subr.mxu0 0.0
      %7537 = vmatpush1.msra.mxu0 0.0
      %7538 = vmatprep.subr.mxu0 0.0
      %7539 = vmatpush1.msra.mxu0 0.0
      %7540 = vmatprep.subr.mxu0 0.0
      %7541 = vmatpush1.msra.mxu0 0.0
      %7542 = vmatprep.subr.mxu0 0.0
      %7543 = vmatpush1.msra.mxu0 0.0
      %7544 = vmatprep.subr.mxu0 0.0
      %7545 = vmatpush1.msra.mxu0 0.0
      %7546 = vmatprep.subr.mxu0 0.0
      %7547 = vmatpush1.msra.mxu0 0.0
      %7548 = vmatprep.subr.mxu0 0.0
      %7549 = vmatpush1.msra.mxu0 0.0
      %7550 = vmatprep.subr.mxu0 0.0
      %7551 = vmatpush1.msra.mxu0 0.0
      %7552 = vmatprep.subr.mxu0 0.0
      %7553 = vmatpush1.msra.mxu0 0.0
      %7554 = vmatprep.subr.mxu0 0.0
      %7555 = vmatpush1.msra.mxu0 0.0
      %7556 = vmatprep.subr.mxu0 0.0
      %7557 = vmatpush1.msra.mxu0 0.0
      %7558 = vmatprep.subr.mxu0 0.0
      %7559 = vmatpush1.msra.mxu0 0.0
      %7560 = vmatprep.subr.mxu0 0.0
      %7561 = vmatpush1.msra.mxu0 0.0
      %7562 = vmatprep.subr.mxu0 0.0
      %7563 = vmatpush1.msra.mxu0 0.0
      %7564 = vmatprep.subr.mxu0 0.0
      %7565 = vmatpush1.msra.mxu0 0.0
      %7566 = vmatprep.subr.mxu0 0.0
      %7567 = vmatpush1.msra.mxu0 0.0
      %7568 = vmatprep.subr.mxu0 0.0
      %7569 = vmatpush1.msra.mxu0 0.0
      %7570 = vmatprep.subr.mxu0 0.0
      %7571 = vmatpush1.msra.mxu0 0.0
      %7572 = vmatprep.subr.mxu0 0.0
      %7573 = vmatpush1.msra.mxu0 0.0
      %7574 = vmatprep.subr.mxu0 0.0
      %7575 = vmatpush1.msra.mxu0 0.0
      %7576 = vmatprep.subr.mxu0 0.0
      %7577 = vmatpush1.msra.mxu0 0.0
      %7578 = vmatprep.subr.mxu0 0.0
      %7579 = vmatpush1.msra.mxu0 0.0
      %7580 = vmatprep.subr.mxu0 0.0
      %7581 = vmatpush1.msra.mxu0 0.0
      %7582 = vmatprep.subr.mxu0 0.0
      %7583 = vmatpush1.msra.mxu0 0.0
      %7584 = vmatprep.subr.mxu0 0.0
      %7585 = vmatpush1.msra.mxu0 0.0
      %7586 = vmatprep.subr.mxu0 0.0
      %7587 = vmatpush1.msra.mxu0 0.0
      %7588 = vmatprep.subr.mxu0 0.0
      %7589 = vmatpush1.msra.mxu0 0.0
      %7590 = vmatprep.subr.mxu0 0.0
      %7591 = vmatpush1.msra.mxu0 0.0
      %7592 = vmatprep.mubr.f32.mxu0 0.0
      %7593 = vmatmul.mubr.f32.gmra.mrb[0].mxu0 %v7475
      %v7594 = vpop.f32.mrb[0].mxu0
      %v7595 = vadd.f32 0.0, %v7594
      %v7596 = vpop.f32.mrb[0].mxu0
      %7597 = vmatprep.mubr.f32.mxu0 0.0
      %7598 = vmatmul.mubr.f32.gmra.mrb[0].mxu0 %v7478
      %v7599 = vpop.f32.mrb[0].mxu0
      %v7600 = vadd.f32 0.0, %v7599
      %v7601 = vpop.f32.mrb[0].mxu0
      %7602 = vmatprep.mubr.f32.mxu0 0.0
      %7603 = vmatmul.mubr.f32.gmra.mrb[0].mxu0 %v7481
      %v7604 = vpop.f32.mrb[0].mxu0
      %v7605 = vadd.f32 0.0, %v7604
      %v7606 = vpop.f32.mrb[0].mxu0
      %7607 = vmatprep.mubr.f32.mxu0 0.0
      %7608 = vmatmul.mubr.f32.gmra.mrb[0].mxu0 %v7484
      %v7609 = vpop.f32.mrb[0].mxu0
      %v7610 = vadd.f32 0.0, %v7609
      %v7611 = vpop.f32.mrb[0].mxu0
      %7612 = vmatprep.mubr.f32.mxu0 0.0
      %7613 = vmatmul.mubr.f32.gmra.mrb[0].mxu0 %v7487
      %v7614 = vpop.f32.mrb[0].mxu0
      %v7615 = vadd.f32 0.0, %v7614
      %v7616 = vpop.f32.mrb[0].mxu0
      %7617 = vmatprep.mubr.f32.mxu0 0.0
      %7618 = vmatmul.mubr.f32.gmra.mrb[0].mxu0 %v7490
      %v7619 = vpop.f32.mrb[0].mxu0
      %v7620 = vadd.f32 0.0, %v7619
      %v7621 = vpop.f32.mrb[0].mxu0
      %7622 = vmatprep.mubr.f32.mxu0 0.0
      %7623 = vmatmul.mubr.f32.gmra.mrb[0].mxu0 %v7493
      %v7624 = vpop.f32.mrb[0].mxu0
      %v7625 = vadd.f32 0.0, %v7624
      %v7626 = vpop.f32.mrb[0].mxu0
      %7627 = vmatprep.mubr.f32.mxu0 0.0
      %7628 = vmatmul.mubr.f32.gmra.mrb[0].mxu0 %v7496
      %v7629 = vpop.f32.mrb[0].mxu0
      %v7630 = vadd.f32 0.0, %v7629
      %v7631 = vpop.f32.mrb[0].mxu0
      %7632 = vmatprep.mubr.f32.mxu0 0.0
      %7633 = vmatmul.mubr.f32.gmra.mrb[0].mxu0 %v7499
      %v7634 = vpop.f32.mrb[0].mxu0
      %v7635 = vadd.f32 0.0, %v7634
      %v7636 = vpop.f32.mrb[0].mxu0
      %7637 = vmatprep.mubr.f32.mxu0 0.0
      %7638 = vmatmul.mubr.f32.gmra.mrb[0].mxu0 %v7502
      %v7639 = vpop.f32.mrb[0].mxu0
      %v7640 = vadd.f32 0.0, %v7639
      %v7641 = vpop.f32.mrb[0].mxu0
      %7642 = vmatprep.mubr.f32.mxu0 0.0
      %7643 = vmatmul.mubr.f32.gmra.mrb[0].mxu0 %v7505
      %v7644 = vpop.f32.mrb[0].mxu0
      %v7645 = vadd.f32 0.0, %v7644
      %v7646 = vpop.f32.mrb[0].mxu0
      %7647 = vmatprep.mubr.f32.mxu0 0.0
      %7648 = vmatmul.mubr.f32.gmra.mrb[0].mxu0 %v7508
      %v7649 = vpop.f32.mrb[0].mxu0
      %v7650 = vadd.f32 0.0, %v7649
      %v7651 = vpop.f32.mrb[0].mxu0
      %7652 = vmatprep.mubr.f32.mxu0 0.0
      %7653 = vmatmul.mubr.f32.gmra.mrb[0].mxu0 %v7511
      %v7654 = vpop.f32.mrb[0].mxu0
      %v7655 = vadd.f32 0.0, %v7654
      %v7656 = vpop.f32.mrb[0].mxu0
      %7657 = vmatprep.mubr.f32.mxu0 0.0
      %7658 = vmatmul.mubr.f32.gmra.mrb[0].mxu0 %v7514
      %v7659 = vpop.f32.mrb[0].mxu0
      %v7660 = vadd.f32 0.0, %v7659
      %v7661 = vpop.f32.mrb[0].mxu0
      %7662 = vmatprep.mubr.f32.mxu0 0.0
      %7663 = vmatmul.mubr.f32.gmra.mrb[0].mxu0 %v7517
      %v7664 = vpop.f32.mrb[0].mxu0
      %v7665 = vadd.f32 0.0, %v7664
      %v7666 = vpop.f32.mrb[0].mxu0
      %7667 = vmatprep.mubr.f32.mxu0 0.0
      %7668 = vmatmul.mubr.f32.gmra.mrb[0].mxu0 %v7520
      %v7669 = vpop.f32.mrb[0].mxu0
      %v7670 = vadd.f32 0.0, %v7669
      %v7671 = vpop.f32.mrb[0].mxu0
      %7672 = vmatprep.mubr.f32.mxu0 0.0
      %7673 = vmatmul.mubr.f32.gmra.mrb[0].mxu0 %v7523
      %v7674 = vpop.f32.mrb[0].mxu0
      %v7675 = vadd.f32 0.0, %v7674
      %v7676 = vpop.f32.mrb[0].mxu0
      %7677 = vmatprep.mubr.f32.mxu0 0.0
      %7678 = vmatmul.mubr.f32.gmra.mrb[0].mxu0 %v7526
      %v7679 = vpop.f32.mrb[0].mxu0
      %v7680 = vadd.f32 0.0, %v7679
      %v7681 = vpop.f32.mrb[0].mxu0
      %7682 = vdwg.mxu0
      %v7683 = vadd.f32 %v7436, %v7595
      %v7684 = vadd.f32 %v7437, %v7600
      %v7685 = vadd.f32 %v7438, %v7605
      %v7686 = vadd.f32 %v7439, %v7610
      %v7687 = vadd.f32 %v7440, %v7615
      %v7688 = vadd.f32 %v7441, %v7620
      %v7689 = vadd.f32 %v7442, %v7625
      %v7690 = vadd.f32 %v7443, %v7630
      %v7691 = vadd.f32 %v7444, %v7635
      %v7692 = vadd.f32 %v7445, %v7640
      %v7693 = vadd.f32 %v7446, %v7645
      %v7694 = vadd.f32 %v7447, %v7650
      %v7695 = vadd.f32 %v7448, %v7655
      %v7696 = vadd.f32 %v7449, %v7660
      %v7697 = vadd.f32 %v7450, %v7665
      %v7698 = vadd.f32 %v7451, %v7670
      %v7699 = vadd.f32 %v7452, %v7675
      %v7700 = vadd.f32 %v7453, %v7680
      %v7701 = vld [vmem:[#allocation2 + $0x3a] sm:$0xff]
      %v7702 = vld [vmem:[#allocation2 + $0x42] sm:$0xff]
      %v7703 = vld [vmem:[#allocation2 + $0x4a] sm:$0xff]
      %v7704 = vld [vmem:[#allocation2 + $0x52] sm:$0xff]
      %v7705 = vld [vmem:[#allocation2 + $0x5a] sm:$0xff]
      %v7706 = vld [vmem:[#allocation2 + $0x62] sm:$0xff]
      %v7707 = vld [vmem:[#allocation2 + $0x6a] sm:$0xff]
      %v7708 = vld [vmem:[#allocation2 + $0x72] sm:$0xff]
      %v7709 = vld [vmem:[#allocation2 + $0x7a] sm:$0xff]
      %v7710 = vld [vmem:[#allocation2 + $0x82] sm:$0xff]
      %v7711 = vld [vmem:[#allocation2 + $0x8a] sm:$0xff]
      %v7712 = vld [vmem:[#allocation2 + $0x92] sm:$0xff]
      %v7713 = vld [vmem:[#allocation2 + $0x9a] sm:$0xff]
      %v7714 = vld [vmem:[#allocation2 + $0xa2] sm:$0xff]
      %v7715 = vld [vmem:[#allocation2 + $0xaa] sm:$0xff]
      %v7716 = vld [vmem:[#allocation2 + $0xb2] sm:$0xff]
      %v7717 = vld [vmem:[#allocation2 + $0xba] sm:$0xff]
      %v7718 = vld [vmem:[#allocation2 + $0xc2] sm:$0xf]
      %s7719 = scalar_lea.vmem %s3, 176
      %v7720 = vld [vmem:[%s7719] sm:$0xff]
      %v7722 = vsel %vm2286, %v7701, 0
      %v7725 = vsel %vm2286, %v7702, 0
      %v7728 = vsel %vm2286, %v7703, 0
      %v7731 = vsel %vm2286, %v7704, 0
      %v7734 = vsel %vm2286, %v7705, 0
      %v7737 = vsel %vm2286, %v7706, 0
      %v7740 = vsel %vm2286, %v7707, 0
      %v7743 = vsel %vm2286, %v7708, 0
      %v7746 = vsel %vm2286, %v7709, 0
      %v7749 = vsel %vm2286, %v7710, 0
      %v7752 = vsel %vm2286, %v7711, 0
      %v7755 = vsel %vm2286, %v7712, 0
      %v7758 = vsel %vm2286, %v7713, 0
      %v7761 = vsel %vm2286, %v7714, 0
      %v7764 = vsel %vm2286, %v7715, 0
      %v7767 = vsel %vm2286, %v7716, 0
      %v7770 = vsel %vm2286, %v7717, 0
      %v7773 = vsel %vm2286, %v7718, 0
      %7775 = vmatprep.subr.mxu0 0.0
      %7776 = vmatpush1.msra.mxu0 %v7720
      %7777 = vmatprep.subr.mxu0 0.0
      %7778 = vmatpush1.msra.mxu0 0.0
      %7779 = vmatprep.subr.mxu0 0.0
      %7780 = vmatpush1.msra.mxu0 0.0
      %7781 = vmatprep.subr.mxu0 0.0
      %7782 = vmatpush1.msra.mxu0 0.0
      %7783 = vmatprep.subr.mxu0 0.0
      %7784 = vmatpush1.msra.mxu0 0.0
      %7785 = vmatprep.subr.mxu0 0.0
      %7786 = vmatpush1.msra.mxu0 0.0
      %7787 = vmatprep.subr.mxu0 0.0
      %7788 = vmatpush1.msra.mxu0 0.0
      %7789 = vmatprep.subr.mxu0 0.0
      %7790 = vmatpush1.msra.mxu0 0.0
      %7791 = vmatprep.subr.mxu0 0.0
      %7792 = vmatpush1.msra.mxu0 0.0
      %7793 = vmatprep.subr.mxu0 0.0
      %7794 = vmatpush1.msra.mxu0 0.0
      %7795 = vmatprep.subr.mxu0 0.0
      %7796 = vmatpush1.msra.mxu0 0.0
      %7797 = vmatprep.subr.mxu0 0.0
      %7798 = vmatpush1.msra.mxu0 0.0
      %7799 = vmatprep.subr.mxu0 0.0
      %7800 = vmatpush1.msra.mxu0 0.0
      %7801 = vmatprep.subr.mxu0 0.0
      %7802 = vmatpush1.msra.mxu0 0.0
      %7803 = vmatprep.subr.mxu0 0.0
      %7804 = vmatpush1.msra.mxu0 0.0
      %7805 = vmatprep.subr.mxu0 0.0
      %7806 = vmatpush1.msra.mxu0 0.0
      %7807 = vmatprep.subr.mxu0 0.0
      %7808 = vmatpush1.msra.mxu0 0.0
      %7809 = vmatprep.subr.mxu0 0.0
      %7810 = vmatpush1.msra.mxu0 0.0
      %7811 = vmatprep.subr.mxu0 0.0
      %7812 = vmatpush1.msra.mxu0 0.0
      %7813 = vmatprep.subr.mxu0 0.0
      %7814 = vmatpush1.msra.mxu0 0.0
      %7815 = vmatprep.subr.mxu0 0.0
      %7816 = vmatpush1.msra.mxu0 0.0
      %7817 = vmatprep.subr.mxu0 0.0
      %7818 = vmatpush1.msra.mxu0 0.0
      %7819 = vmatprep.subr.mxu0 0.0
      %7820 = vmatpush1.msra.mxu0 0.0
      %7821 = vmatprep.subr.mxu0 0.0
      %7822 = vmatpush1.msra.mxu0 0.0
      %7823 = vmatprep.subr.mxu0 0.0
      %7824 = vmatpush1.msra.mxu0 0.0
      %7825 = vmatprep.subr.mxu0 0.0
      %7826 = vmatpush1.msra.mxu0 0.0
      %7827 = vmatprep.subr.mxu0 0.0
      %7828 = vmatpush1.msra.mxu0 0.0
      %7829 = vmatprep.subr.mxu0 0.0
      %7830 = vmatpush1.msra.mxu0 0.0
      %7831 = vmatprep.subr.mxu0 0.0
      %7832 = vmatpush1.msra.mxu0 0.0
      %7833 = vmatprep.subr.mxu0 0.0
      %7834 = vmatpush1.msra.mxu0 0.0
      %7835 = vmatprep.subr.mxu0 0.0
      %7836 = vmatpush1.msra.mxu0 0.0
      %7837 = vmatprep.subr.mxu0 0.0
      %7838 = vmatpush1.msra.mxu0 0.0
      %7839 = vmatprep.mubr.f32.mxu0 0.0
      %7840 = vmatmul.mubr.f32.gmra.mrb[0].mxu0 %v7722
      %v7841 = vpop.f32.mrb[0].mxu0
      %v7842 = vadd.f32 0.0, %v7841
      %v7843 = vpop.f32.mrb[0].mxu0
      %7844 = vmatprep.mubr.f32.mxu0 0.0
      %7845 = vmatmul.mubr.f32.gmra.mrb[0].mxu0 %v7725
      %v7846 = vpop.f32.mrb[0].mxu0
      %v7847 = vadd.f32 0.0, %v7846
      %v7848 = vpop.f32.mrb[0].mxu0
      %7849 = vmatprep.mubr.f32.mxu0 0.0
      %7850 = vmatmul.mubr.f32.gmra.mrb[0].mxu0 %v7728
      %v7851 = vpop.f32.mrb[0].mxu0
      %v7852 = vadd.f32 0.0, %v7851
      %v7853 = vpop.f32.mrb[0].mxu0
      %7854 = vmatprep.mubr.f32.mxu0 0.0
      %7855 = vmatmul.mubr.f32.gmra.mrb[0].mxu0 %v7731
      %v7856 = vpop.f32.mrb[0].mxu0
      %v7857 = vadd.f32 0.0, %v7856
      %v7858 = vpop.f32.mrb[0].mxu0
      %7859 = vmatprep.mubr.f32.mxu0 0.0
      %7860 = vmatmul.mubr.f32.gmra.mrb[0].mxu0 %v7734
      %v7861 = vpop.f32.mrb[0].mxu0
      %v7862 = vadd.f32 0.0, %v7861
      %v7863 = vpop.f32.mrb[0].mxu0
      %7864 = vmatprep.mubr.f32.mxu0 0.0
      %7865 = vmatmul.mubr.f32.gmra.mrb[0].mxu0 %v7737
      %v7866 = vpop.f32.mrb[0].mxu0
      %v7867 = vadd.f32 0.0, %v7866
      %v7868 = vpop.f32.mrb[0].mxu0
      %7869 = vmatprep.mubr.f32.mxu0 0.0
      %7870 = vmatmul.mubr.f32.gmra.mrb[0].mxu0 %v7740
      %v7871 = vpop.f32.mrb[0].mxu0
      %v7872 = vadd.f32 0.0, %v7871
      %v7873 = vpop.f32.mrb[0].mxu0
      %7874 = vmatprep.mubr.f32.mxu0 0.0
      %7875 = vmatmul.mubr.f32.gmra.mrb[0].mxu0 %v7743
      %v7876 = vpop.f32.mrb[0].mxu0
      %v7877 = vadd.f32 0.0, %v7876
      %v7878 = vpop.f32.mrb[0].mxu0
      %7879 = vmatprep.mubr.f32.mxu0 0.0
      %7880 = vmatmul.mubr.f32.gmra.mrb[0].mxu0 %v7746
      %v7881 = vpop.f32.mrb[0].mxu0
      %v7882 = vadd.f32 0.0, %v7881
      %v7883 = vpop.f32.mrb[0].mxu0
      %7884 = vmatprep.mubr.f32.mxu0 0.0
      %7885 = vmatmul.mubr.f32.gmra.mrb[0].mxu0 %v7749
      %v7886 = vpop.f32.mrb[0].mxu0
      %v7887 = vadd.f32 0.0, %v7886
      %v7888 = vpop.f32.mrb[0].mxu0
      %7889 = vmatprep.mubr.f32.mxu0 0.0
      %7890 = vmatmul.mubr.f32.gmra.mrb[0].mxu0 %v7752
      %v7891 = vpop.f32.mrb[0].mxu0
      %v7892 = vadd.f32 0.0, %v7891
      %v7893 = vpop.f32.mrb[0].mxu0
      %7894 = vmatprep.mubr.f32.mxu0 0.0
      %7895 = vmatmul.mubr.f32.gmra.mrb[0].mxu0 %v7755
      %v7896 = vpop.f32.mrb[0].mxu0
      %v7897 = vadd.f32 0.0, %v7896
      %v7898 = vpop.f32.mrb[0].mxu0
      %7899 = vmatprep.mubr.f32.mxu0 0.0
      %7900 = vmatmul.mubr.f32.gmra.mrb[0].mxu0 %v7758
      %v7901 = vpop.f32.mrb[0].mxu0
      %v7902 = vadd.f32 0.0, %v7901
      %v7903 = vpop.f32.mrb[0].mxu0
      %7904 = vmatprep.mubr.f32.mxu0 0.0
      %7905 = vmatmul.mubr.f32.gmra.mrb[0].mxu0 %v7761
      %v7906 = vpop.f32.mrb[0].mxu0
      %v7907 = vadd.f32 0.0, %v7906
      %v7908 = vpop.f32.mrb[0].mxu0
      %7909 = vmatprep.mubr.f32.mxu0 0.0
      %7910 = vmatmul.mubr.f32.gmra.mrb[0].mxu0 %v7764
      %v7911 = vpop.f32.mrb[0].mxu0
      %v7912 = vadd.f32 0.0, %v7911
      %v7913 = vpop.f32.mrb[0].mxu0
      %7914 = vmatprep.mubr.f32.mxu0 0.0
      %7915 = vmatmul.mubr.f32.gmra.mrb[0].mxu0 %v7767
      %v7916 = vpop.f32.mrb[0].mxu0
      %v7917 = vadd.f32 0.0, %v7916
      %v7918 = vpop.f32.mrb[0].mxu0
      %7919 = vmatprep.mubr.f32.mxu0 0.0
      %7920 = vmatmul.mubr.f32.gmra.mrb[0].mxu0 %v7770
      %v7921 = vpop.f32.mrb[0].mxu0
      %v7922 = vadd.f32 0.0, %v7921
      %v7923 = vpop.f32.mrb[0].mxu0
      %7924 = vmatprep.mubr.f32.mxu0 0.0
      %7925 = vmatmul.mubr.f32.gmra.mrb[0].mxu0 %v7773
      %v7926 = vpop.f32.mrb[0].mxu0
      %v7927 = vadd.f32 0.0, %v7926
      %v7928 = vpop.f32.mrb[0].mxu0
      %7929 = vdwg.mxu0
      %v7930 = vadd.f32 %v7683, %v7842
      %v7931 = vadd.f32 %v7684, %v7847
      %v7932 = vadd.f32 %v7685, %v7852
      %v7933 = vadd.f32 %v7686, %v7857
      %v7934 = vadd.f32 %v7687, %v7862
      %v7935 = vadd.f32 %v7688, %v7867
      %v7936 = vadd.f32 %v7689, %v7872
      %v7937 = vadd.f32 %v7690, %v7877
      %v7938 = vadd.f32 %v7691, %v7882
      %v7939 = vadd.f32 %v7692, %v7887
      %v7940 = vadd.f32 %v7693, %v7892
      %v7941 = vadd.f32 %v7694, %v7897
      %v7942 = vadd.f32 %v7695, %v7902
      %v7943 = vadd.f32 %v7696, %v7907
      %v7944 = vadd.f32 %v7697, %v7912
      %v7945 = vadd.f32 %v7698, %v7917
      %v7946 = vadd.f32 %v7699, %v7922
      %v7947 = vadd.f32 %v7700, %v7927
      %v7948 = vld [vmem:[#allocation2 + $0x3b] sm:$0xff]
      %v7949 = vld [vmem:[#allocation2 + $0x43] sm:$0xff]
      %v7950 = vld [vmem:[#allocation2 + $0x4b] sm:$0xff]
      %v7951 = vld [vmem:[#allocation2 + $0x53] sm:$0xff]
      %v7952 = vld [vmem:[#allocation2 + $0x5b] sm:$0xff]
      %v7953 = vld [vmem:[#allocation2 + $0x63] sm:$0xff]
      %v7954 = vld [vmem:[#allocation2 + $0x6b] sm:$0xff]
      %v7955 = vld [vmem:[#allocation2 + $0x73] sm:$0xff]
      %v7956 = vld [vmem:[#allocation2 + $0x7b] sm:$0xff]
      %v7957 = vld [vmem:[#allocation2 + $0x83] sm:$0xff]
      %v7958 = vld [vmem:[#allocation2 + $0x8b] sm:$0xff]
      %v7959 = vld [vmem:[#allocation2 + $0x93] sm:$0xff]
      %v7960 = vld [vmem:[#allocation2 + $0x9b] sm:$0xff]
      %v7961 = vld [vmem:[#allocation2 + $0xa3] sm:$0xff]
      %v7962 = vld [vmem:[#allocation2 + $0xab] sm:$0xff]
      %v7963 = vld [vmem:[#allocation2 + $0xb3] sm:$0xff]
      %v7964 = vld [vmem:[#allocation2 + $0xbb] sm:$0xff]
      %v7965 = vld [vmem:[#allocation2 + $0xc3] sm:$0xf]
      %s7966 = scalar_lea.vmem %s3, 184
      %v7967 = vld [vmem:[%s7966] sm:$0xff]
      %v7969 = vsel %vm2286, %v7948, 0
      %v7972 = vsel %vm2286, %v7949, 0
      %v7975 = vsel %vm2286, %v7950, 0
      %v7978 = vsel %vm2286, %v7951, 0
      %v7981 = vsel %vm2286, %v7952, 0
      %v7984 = vsel %vm2286, %v7953, 0
      %v7987 = vsel %vm2286, %v7954, 0
      %v7990 = vsel %vm2286, %v7955, 0
      %v7993 = vsel %vm2286, %v7956, 0
      %v7996 = vsel %vm2286, %v7957, 0
      %v7999 = vsel %vm2286, %v7958, 0
      %v8002 = vsel %vm2286, %v7959, 0
      %v8005 = vsel %vm2286, %v7960, 0
      %v8008 = vsel %vm2286, %v7961, 0
      %v8011 = vsel %vm2286, %v7962, 0
      %v8014 = vsel %vm2286, %v7963, 0
      %v8017 = vsel %vm2286, %v7964, 0
      %v8020 = vsel %vm2286, %v7965, 0
      %8022 = vmatprep.subr.mxu0 0.0
      %8023 = vmatpush1.msra.mxu0 %v7967
      %8024 = vmatprep.subr.mxu0 0.0
      %8025 = vmatpush1.msra.mxu0 0.0
      %8026 = vmatprep.subr.mxu0 0.0
      %8027 = vmatpush1.msra.mxu0 0.0
      %8028 = vmatprep.subr.mxu0 0.0
      %8029 = vmatpush1.msra.mxu0 0.0
      %8030 = vmatprep.subr.mxu0 0.0
      %8031 = vmatpush1.msra.mxu0 0.0
      %8032 = vmatprep.subr.mxu0 0.0
      %8033 = vmatpush1.msra.mxu0 0.0
      %8034 = vmatprep.subr.mxu0 0.0
      %8035 = vmatpush1.msra.mxu0 0.0
      %8036 = vmatprep.subr.mxu0 0.0
      %8037 = vmatpush1.msra.mxu0 0.0
      %8038 = vmatprep.subr.mxu0 0.0
      %8039 = vmatpush1.msra.mxu0 0.0
      %8040 = vmatprep.subr.mxu0 0.0
      %8041 = vmatpush1.msra.mxu0 0.0
      %8042 = vmatprep.subr.mxu0 0.0
      %8043 = vmatpush1.msra.mxu0 0.0
      %8044 = vmatprep.subr.mxu0 0.0
      %8045 = vmatpush1.msra.mxu0 0.0
      %8046 = vmatprep.subr.mxu0 0.0
      %8047 = vmatpush1.msra.mxu0 0.0
      %8048 = vmatprep.subr.mxu0 0.0
      %8049 = vmatpush1.msra.mxu0 0.0
      %8050 = vmatprep.subr.mxu0 0.0
      %8051 = vmatpush1.msra.mxu0 0.0
      %8052 = vmatprep.subr.mxu0 0.0
      %8053 = vmatpush1.msra.mxu0 0.0
      %8054 = vmatprep.subr.mxu0 0.0
      %8055 = vmatpush1.msra.mxu0 0.0
      %8056 = vmatprep.subr.mxu0 0.0
      %8057 = vmatpush1.msra.mxu0 0.0
      %8058 = vmatprep.subr.mxu0 0.0
      %8059 = vmatpush1.msra.mxu0 0.0
      %8060 = vmatprep.subr.mxu0 0.0
      %8061 = vmatpush1.msra.mxu0 0.0
      %8062 = vmatprep.subr.mxu0 0.0
      %8063 = vmatpush1.msra.mxu0 0.0
      %8064 = vmatprep.subr.mxu0 0.0
      %8065 = vmatpush1.msra.mxu0 0.0
      %8066 = vmatprep.subr.mxu0 0.0
      %8067 = vmatpush1.msra.mxu0 0.0
      %8068 = vmatprep.subr.mxu0 0.0
      %8069 = vmatpush1.msra.mxu0 0.0
      %8070 = vmatprep.subr.mxu0 0.0
      %8071 = vmatpush1.msra.mxu0 0.0
      %8072 = vmatprep.subr.mxu0 0.0
      %8073 = vmatpush1.msra.mxu0 0.0
      %8074 = vmatprep.subr.mxu0 0.0
      %8075 = vmatpush1.msra.mxu0 0.0
      %8076 = vmatprep.subr.mxu0 0.0
      %8077 = vmatpush1.msra.mxu0 0.0
      %8078 = vmatprep.subr.mxu0 0.0
      %8079 = vmatpush1.msra.mxu0 0.0
      %8080 = vmatprep.subr.mxu0 0.0
      %8081 = vmatpush1.msra.mxu0 0.0
      %8082 = vmatprep.subr.mxu0 0.0
      %8083 = vmatpush1.msra.mxu0 0.0
      %8084 = vmatprep.subr.mxu0 0.0
      %8085 = vmatpush1.msra.mxu0 0.0
      %8086 = vmatprep.mubr.f32.mxu0 0.0
      %8087 = vmatmul.mubr.f32.gmra.mrb[0].mxu0 %v7969
      %v8088 = vpop.f32.mrb[0].mxu0
      %v8089 = vadd.f32 0.0, %v8088
      %v8090 = vpop.f32.mrb[0].mxu0
      %8091 = vmatprep.mubr.f32.mxu0 0.0
      %8092 = vmatmul.mubr.f32.gmra.mrb[0].mxu0 %v7972
      %v8093 = vpop.f32.mrb[0].mxu0
      %v8094 = vadd.f32 0.0, %v8093
      %v8095 = vpop.f32.mrb[0].mxu0
      %8096 = vmatprep.mubr.f32.mxu0 0.0
      %8097 = vmatmul.mubr.f32.gmra.mrb[0].mxu0 %v7975
      %v8098 = vpop.f32.mrb[0].mxu0
      %v8099 = vadd.f32 0.0, %v8098
      %v8100 = vpop.f32.mrb[0].mxu0
      %8101 = vmatprep.mubr.f32.mxu0 0.0
      %8102 = vmatmul.mubr.f32.gmra.mrb[0].mxu0 %v7978
      %v8103 = vpop.f32.mrb[0].mxu0
      %v8104 = vadd.f32 0.0, %v8103
      %v8105 = vpop.f32.mrb[0].mxu0
      %8106 = vmatprep.mubr.f32.mxu0 0.0
      %8107 = vmatmul.mubr.f32.gmra.mrb[0].mxu0 %v7981
      %v8108 = vpop.f32.mrb[0].mxu0
      %v8109 = vadd.f32 0.0, %v8108
      %v8110 = vpop.f32.mrb[0].mxu0
      %8111 = vmatprep.mubr.f32.mxu0 0.0
      %8112 = vmatmul.mubr.f32.gmra.mrb[0].mxu0 %v7984
      %v8113 = vpop.f32.mrb[0].mxu0
      %v8114 = vadd.f32 0.0, %v8113
      %v8115 = vpop.f32.mrb[0].mxu0
      %8116 = vmatprep.mubr.f32.mxu0 0.0
      %8117 = vmatmul.mubr.f32.gmra.mrb[0].mxu0 %v7987
      %v8118 = vpop.f32.mrb[0].mxu0
      %v8119 = vadd.f32 0.0, %v8118
      %v8120 = vpop.f32.mrb[0].mxu0
      %8121 = vmatprep.mubr.f32.mxu0 0.0
      %8122 = vmatmul.mubr.f32.gmra.mrb[0].mxu0 %v7990
      %v8123 = vpop.f32.mrb[0].mxu0
      %v8124 = vadd.f32 0.0, %v8123
      %v8125 = vpop.f32.mrb[0].mxu0
      %8126 = vmatprep.mubr.f32.mxu0 0.0
      %8127 = vmatmul.mubr.f32.gmra.mrb[0].mxu0 %v7993
      %v8128 = vpop.f32.mrb[0].mxu0
      %v8129 = vadd.f32 0.0, %v8128
      %v8130 = vpop.f32.mrb[0].mxu0
      %8131 = vmatprep.mubr.f32.mxu0 0.0
      %8132 = vmatmul.mubr.f32.gmra.mrb[0].mxu0 %v7996
      %v8133 = vpop.f32.mrb[0].mxu0
      %v8134 = vadd.f32 0.0, %v8133
      %v8135 = vpop.f32.mrb[0].mxu0
      %8136 = vmatprep.mubr.f32.mxu0 0.0
      %8137 = vmatmul.mubr.f32.gmra.mrb[0].mxu0 %v7999
      %v8138 = vpop.f32.mrb[0].mxu0
      %v8139 = vadd.f32 0.0, %v8138
      %v8140 = vpop.f32.mrb[0].mxu0
      %8141 = vmatprep.mubr.f32.mxu0 0.0
      %8142 = vmatmul.mubr.f32.gmra.mrb[0].mxu0 %v8002
      %v8143 = vpop.f32.mrb[0].mxu0
      %v8144 = vadd.f32 0.0, %v8143
      %v8145 = vpop.f32.mrb[0].mxu0
      %8146 = vmatprep.mubr.f32.mxu0 0.0
      %8147 = vmatmul.mubr.f32.gmra.mrb[0].mxu0 %v8005
      %v8148 = vpop.f32.mrb[0].mxu0
      %v8149 = vadd.f32 0.0, %v8148
      %v8150 = vpop.f32.mrb[0].mxu0
      %8151 = vmatprep.mubr.f32.mxu0 0.0
      %8152 = vmatmul.mubr.f32.gmra.mrb[0].mxu0 %v8008
      %v8153 = vpop.f32.mrb[0].mxu0
      %v8154 = vadd.f32 0.0, %v8153
      %v8155 = vpop.f32.mrb[0].mxu0
      %8156 = vmatprep.mubr.f32.mxu0 0.0
      %8157 = vmatmul.mubr.f32.gmra.mrb[0].mxu0 %v8011
      %v8158 = vpop.f32.mrb[0].mxu0
      %v8159 = vadd.f32 0.0, %v8158
      %v8160 = vpop.f32.mrb[0].mxu0
      %8161 = vmatprep.mubr.f32.mxu0 0.0
      %8162 = vmatmul.mubr.f32.gmra.mrb[0].mxu0 %v8014
      %v8163 = vpop.f32.mrb[0].mxu0
      %v8164 = vadd.f32 0.0, %v8163
      %v8165 = vpop.f32.mrb[0].mxu0
      %8166 = vmatprep.mubr.f32.mxu0 0.0
      %8167 = vmatmul.mubr.f32.gmra.mrb[0].mxu0 %v8017
      %v8168 = vpop.f32.mrb[0].mxu0
      %v8169 = vadd.f32 0.0, %v8168
      %v8170 = vpop.f32.mrb[0].mxu0
      %8171 = vmatprep.mubr.f32.mxu0 0.0
      %8172 = vmatmul.mubr.f32.gmra.mrb[0].mxu0 %v8020
      %v8173 = vpop.f32.mrb[0].mxu0
      %v8174 = vadd.f32 0.0, %v8173
      %v8175 = vpop.f32.mrb[0].mxu0
      %8176 = vdwg.mxu0
      %v8177 = vadd.f32 %v7930, %v8089
      %v8178 = vadd.f32 %v7931, %v8094
      %v8179 = vadd.f32 %v7932, %v8099
      %v8180 = vadd.f32 %v7933, %v8104
      %v8181 = vadd.f32 %v7934, %v8109
      %v8182 = vadd.f32 %v7935, %v8114
      %v8183 = vadd.f32 %v7936, %v8119
      %v8184 = vadd.f32 %v7937, %v8124
      %v8185 = vadd.f32 %v7938, %v8129
      %v8186 = vadd.f32 %v7939, %v8134
      %v8187 = vadd.f32 %v7940, %v8139
      %v8188 = vadd.f32 %v7941, %v8144
      %v8189 = vadd.f32 %v7942, %v8149
      %v8190 = vadd.f32 %v7943, %v8154
      %v8191 = vadd.f32 %v7944, %v8159
      %v8192 = vadd.f32 %v7945, %v8164
      %v8193 = vadd.f32 %v7946, %v8169
      %v8194 = vadd.f32 %v7947, %v8174
      %v8195 = vld [vmem:[#allocation2 + $0x3c] sm:$0xff]
      %v8196 = vld [vmem:[#allocation2 + $0x44] sm:$0xff]
      %v8197 = vld [vmem:[#allocation2 + $0x4c] sm:$0xff]
      %v8198 = vld [vmem:[#allocation2 + $0x54] sm:$0xff]
      %v8199 = vld [vmem:[#allocation2 + $0x5c] sm:$0xff]
      %v8200 = vld [vmem:[#allocation2 + $0x64] sm:$0xff]
      %v8201 = vld [vmem:[#allocation2 + $0x6c] sm:$0xff]
      %v8202 = vld [vmem:[#allocation2 + $0x74] sm:$0xff]
      %v8203 = vld [vmem:[#allocation2 + $0x7c] sm:$0xff]
      %v8204 = vld [vmem:[#allocation2 + $0x84] sm:$0xff]
      %v8205 = vld [vmem:[#allocation2 + $0x8c] sm:$0xff]
      %v8206 = vld [vmem:[#allocation2 + $0x94] sm:$0xff]
      %v8207 = vld [vmem:[#allocation2 + $0x9c] sm:$0xff]
      %v8208 = vld [vmem:[#allocation2 + $0xa4] sm:$0xff]
      %v8209 = vld [vmem:[#allocation2 + $0xac] sm:$0xff]
      %v8210 = vld [vmem:[#allocation2 + $0xb4] sm:$0xff]
      %v8211 = vld [vmem:[#allocation2 + $0xbc] sm:$0xff]
      %v8212 = vld [vmem:[#allocation2 + $0xc4] sm:$0xf]
      %s8213 = scalar_lea.vmem %s3, 192
      %v8214 = vld [vmem:[%s8213] sm:$0xff]
      %v8216 = vsel %vm2286, %v8195, 0
      %v8219 = vsel %vm2286, %v8196, 0
      %v8222 = vsel %vm2286, %v8197, 0
      %v8225 = vsel %vm2286, %v8198, 0
      %v8228 = vsel %vm2286, %v8199, 0
      %v8231 = vsel %vm2286, %v8200, 0
      %v8234 = vsel %vm2286, %v8201, 0
      %v8237 = vsel %vm2286, %v8202, 0
      %v8240 = vsel %vm2286, %v8203, 0
      %v8243 = vsel %vm2286, %v8204, 0
      %v8246 = vsel %vm2286, %v8205, 0
      %v8249 = vsel %vm2286, %v8206, 0
      %v8252 = vsel %vm2286, %v8207, 0
      %v8255 = vsel %vm2286, %v8208, 0
      %v8258 = vsel %vm2286, %v8209, 0
      %v8261 = vsel %vm2286, %v8210, 0
      %v8264 = vsel %vm2286, %v8211, 0
      %v8267 = vsel %vm2286, %v8212, 0
      %8269 = vmatprep.subr.mxu0 0.0
      %8270 = vmatpush1.msra.mxu0 %v8214
      %8271 = vmatprep.subr.mxu0 0.0
      %8272 = vmatpush1.msra.mxu0 0.0
      %8273 = vmatprep.subr.mxu0 0.0
      %8274 = vmatpush1.msra.mxu0 0.0
      %8275 = vmatprep.subr.mxu0 0.0
      %8276 = vmatpush1.msra.mxu0 0.0
      %8277 = vmatprep.subr.mxu0 0.0
      %8278 = vmatpush1.msra.mxu0 0.0
      %8279 = vmatprep.subr.mxu0 0.0
      %8280 = vmatpush1.msra.mxu0 0.0
      %8281 = vmatprep.subr.mxu0 0.0
      %8282 = vmatpush1.msra.mxu0 0.0
      %8283 = vmatprep.subr.mxu0 0.0
      %8284 = vmatpush1.msra.mxu0 0.0
      %8285 = vmatprep.subr.mxu0 0.0
      %8286 = vmatpush1.msra.mxu0 0.0
      %8287 = vmatprep.subr.mxu0 0.0
      %8288 = vmatpush1.msra.mxu0 0.0
      %8289 = vmatprep.subr.mxu0 0.0
      %8290 = vmatpush1.msra.mxu0 0.0
      %8291 = vmatprep.subr.mxu0 0.0
      %8292 = vmatpush1.msra.mxu0 0.0
      %8293 = vmatprep.subr.mxu0 0.0
      %8294 = vmatpush1.msra.mxu0 0.0
      %8295 = vmatprep.subr.mxu0 0.0
      %8296 = vmatpush1.msra.mxu0 0.0
      %8297 = vmatprep.subr.mxu0 0.0
      %8298 = vmatpush1.msra.mxu0 0.0
      %8299 = vmatprep.subr.mxu0 0.0
      %8300 = vmatpush1.msra.mxu0 0.0
      %8301 = vmatprep.subr.mxu0 0.0
      %8302 = vmatpush1.msra.mxu0 0.0
      %8303 = vmatprep.subr.mxu0 0.0
      %8304 = vmatpush1.msra.mxu0 0.0
      %8305 = vmatprep.subr.mxu0 0.0
      %8306 = vmatpush1.msra.mxu0 0.0
      %8307 = vmatprep.subr.mxu0 0.0
      %8308 = vmatpush1.msra.mxu0 0.0
      %8309 = vmatprep.subr.mxu0 0.0
      %8310 = vmatpush1.msra.mxu0 0.0
      %8311 = vmatprep.subr.mxu0 0.0
      %8312 = vmatpush1.msra.mxu0 0.0
      %8313 = vmatprep.subr.mxu0 0.0
      %8314 = vmatpush1.msra.mxu0 0.0
      %8315 = vmatprep.subr.mxu0 0.0
      %8316 = vmatpush1.msra.mxu0 0.0
      %8317 = vmatprep.subr.mxu0 0.0
      %8318 = vmatpush1.msra.mxu0 0.0
      %8319 = vmatprep.subr.mxu0 0.0
      %8320 = vmatpush1.msra.mxu0 0.0
      %8321 = vmatprep.subr.mxu0 0.0
      %8322 = vmatpush1.msra.mxu0 0.0
      %8323 = vmatprep.subr.mxu0 0.0
      %8324 = vmatpush1.msra.mxu0 0.0
      %8325 = vmatprep.subr.mxu0 0.0
      %8326 = vmatpush1.msra.mxu0 0.0
      %8327 = vmatprep.subr.mxu0 0.0
      %8328 = vmatpush1.msra.mxu0 0.0
      %8329 = vmatprep.subr.mxu0 0.0
      %8330 = vmatpush1.msra.mxu0 0.0
      %8331 = vmatprep.subr.mxu0 0.0
      %8332 = vmatpush1.msra.mxu0 0.0
      %8333 = vmatprep.mubr.f32.mxu0 0.0
      %8334 = vmatmul.mubr.f32.gmra.mrb[0].mxu0 %v8216
      %v8335 = vpop.f32.mrb[0].mxu0
      %v8336 = vadd.f32 0.0, %v8335
      %v8337 = vpop.f32.mrb[0].mxu0
      %8338 = vmatprep.mubr.f32.mxu0 0.0
      %8339 = vmatmul.mubr.f32.gmra.mrb[0].mxu0 %v8219
      %v8340 = vpop.f32.mrb[0].mxu0
      %v8341 = vadd.f32 0.0, %v8340
      %v8342 = vpop.f32.mrb[0].mxu0
      %8343 = vmatprep.mubr.f32.mxu0 0.0
      %8344 = vmatmul.mubr.f32.gmra.mrb[0].mxu0 %v8222
      %v8345 = vpop.f32.mrb[0].mxu0
      %v8346 = vadd.f32 0.0, %v8345
      %v8347 = vpop.f32.mrb[0].mxu0
      %8348 = vmatprep.mubr.f32.mxu0 0.0
      %8349 = vmatmul.mubr.f32.gmra.mrb[0].mxu0 %v8225
      %v8350 = vpop.f32.mrb[0].mxu0
      %v8351 = vadd.f32 0.0, %v8350
      %v8352 = vpop.f32.mrb[0].mxu0
      %8353 = vmatprep.mubr.f32.mxu0 0.0
      %8354 = vmatmul.mubr.f32.gmra.mrb[0].mxu0 %v8228
      %v8355 = vpop.f32.mrb[0].mxu0
      %v8356 = vadd.f32 0.0, %v8355
      %v8357 = vpop.f32.mrb[0].mxu0
      %8358 = vmatprep.mubr.f32.mxu0 0.0
      %8359 = vmatmul.mubr.f32.gmra.mrb[0].mxu0 %v8231
      %v8360 = vpop.f32.mrb[0].mxu0
      %v8361 = vadd.f32 0.0, %v8360
      %v8362 = vpop.f32.mrb[0].mxu0
      %8363 = vmatprep.mubr.f32.mxu0 0.0
      %8364 = vmatmul.mubr.f32.gmra.mrb[0].mxu0 %v8234
      %v8365 = vpop.f32.mrb[0].mxu0
      %v8366 = vadd.f32 0.0, %v8365
      %v8367 = vpop.f32.mrb[0].mxu0
      %8368 = vmatprep.mubr.f32.mxu0 0.0
      %8369 = vmatmul.mubr.f32.gmra.mrb[0].mxu0 %v8237
      %v8370 = vpop.f32.mrb[0].mxu0
      %v8371 = vadd.f32 0.0, %v8370
      %v8372 = vpop.f32.mrb[0].mxu0
      %8373 = vmatprep.mubr.f32.mxu0 0.0
      %8374 = vmatmul.mubr.f32.gmra.mrb[0].mxu0 %v8240
      %v8375 = vpop.f32.mrb[0].mxu0
      %v8376 = vadd.f32 0.0, %v8375
      %v8377 = vpop.f32.mrb[0].mxu0
      %8378 = vmatprep.mubr.f32.mxu0 0.0
      %8379 = vmatmul.mubr.f32.gmra.mrb[0].mxu0 %v8243
      %v8380 = vpop.f32.mrb[0].mxu0
      %v8381 = vadd.f32 0.0, %v8380
      %v8382 = vpop.f32.mrb[0].mxu0
      %8383 = vmatprep.mubr.f32.mxu0 0.0
      %8384 = vmatmul.mubr.f32.gmra.mrb[0].mxu0 %v8246
      %v8385 = vpop.f32.mrb[0].mxu0
      %v8386 = vadd.f32 0.0, %v8385
      %v8387 = vpop.f32.mrb[0].mxu0
      %8388 = vmatprep.mubr.f32.mxu0 0.0
      %8389 = vmatmul.mubr.f32.gmra.mrb[0].mxu0 %v8249
      %v8390 = vpop.f32.mrb[0].mxu0
      %v8391 = vadd.f32 0.0, %v8390
      %v8392 = vpop.f32.mrb[0].mxu0
      %8393 = vmatprep.mubr.f32.mxu0 0.0
      %8394 = vmatmul.mubr.f32.gmra.mrb[0].mxu0 %v8252
      %v8395 = vpop.f32.mrb[0].mxu0
      %v8396 = vadd.f32 0.0, %v8395
      %v8397 = vpop.f32.mrb[0].mxu0
      %8398 = vmatprep.mubr.f32.mxu0 0.0
      %8399 = vmatmul.mubr.f32.gmra.mrb[0].mxu0 %v8255
      %v8400 = vpop.f32.mrb[0].mxu0
      %v8401 = vadd.f32 0.0, %v8400
      %v8402 = vpop.f32.mrb[0].mxu0
      %8403 = vmatprep.mubr.f32.mxu0 0.0
      %8404 = vmatmul.mubr.f32.gmra.mrb[0].mxu0 %v8258
      %v8405 = vpop.f32.mrb[0].mxu0
      %v8406 = vadd.f32 0.0, %v8405
      %v8407 = vpop.f32.mrb[0].mxu0
      %8408 = vmatprep.mubr.f32.mxu0 0.0
      %8409 = vmatmul.mubr.f32.gmra.mrb[0].mxu0 %v8261
      %v8410 = vpop.f32.mrb[0].mxu0
      %v8411 = vadd.f32 0.0, %v8410
      %v8412 = vpop.f32.mrb[0].mxu0
      %8413 = vmatprep.mubr.f32.mxu0 0.0
      %8414 = vmatmul.mubr.f32.gmra.mrb[0].mxu0 %v8264
      %v8415 = vpop.f32.mrb[0].mxu0
      %v8416 = vadd.f32 0.0, %v8415
      %v8417 = vpop.f32.mrb[0].mxu0
      %8418 = vmatprep.mubr.f32.mxu0 0.0
      %8419 = vmatmul.mubr.f32.gmra.mrb[0].mxu0 %v8267
      %v8420 = vpop.f32.mrb[0].mxu0
      %v8421 = vadd.f32 0.0, %v8420
      %v8422 = vpop.f32.mrb[0].mxu0
      %8423 = vdwg.mxu0
      %v8424 = vadd.f32 %v8177, %v8336
      %v8425 = vadd.f32 %v8178, %v8341
      %v8426 = vadd.f32 %v8179, %v8346
      %v8427 = vadd.f32 %v8180, %v8351
      %v8428 = vadd.f32 %v8181, %v8356
      %v8429 = vadd.f32 %v8182, %v8361
      %v8430 = vadd.f32 %v8183, %v8366
      %v8431 = vadd.f32 %v8184, %v8371
      %v8432 = vadd.f32 %v8185, %v8376
      %v8433 = vadd.f32 %v8186, %v8381
      %v8434 = vadd.f32 %v8187, %v8386
      %v8435 = vadd.f32 %v8188, %v8391
      %v8436 = vadd.f32 %v8189, %v8396
      %v8437 = vadd.f32 %v8190, %v8401
      %v8438 = vadd.f32 %v8191, %v8406
      %v8439 = vadd.f32 %v8192, %v8411
      %v8440 = vadd.f32 %v8193, %v8416
      %v8441 = vadd.f32 %v8194, %v8421
      %v8442 = vxor.u32 %v8424, 2147483648
      %v8443 = vxor.u32 %v8425, 2147483648
      %v8444 = vxor.u32 %v8426, 2147483648
      %v8445 = vxor.u32 %v8427, 2147483648
      %v8446 = vxor.u32 %v8428, 2147483648
      %v8447 = vxor.u32 %v8429, 2147483648
      %v8448 = vxor.u32 %v8430, 2147483648
      %v8449 = vxor.u32 %v8431, 2147483648
      %v8450 = vxor.u32 %v8432, 2147483648
      %v8451 = vxor.u32 %v8433, 2147483648
      %v8452 = vxor.u32 %v8434, 2147483648
      %v8453 = vxor.u32 %v8435, 2147483648
      %v8454 = vxor.u32 %v8436, 2147483648
      %v8455 = vxor.u32 %v8437, 2147483648
      %v8456 = vxor.u32 %v8438, 2147483648
      %v8457 = vxor.u32 %v8439, 2147483648
      %v8458 = vxor.u32 %v8440, 2147483648
      %v8459 = vxor.u32 %v8441, 2147483648
      %v8460 = vmul.f32 %v8442, 1.442695
      %v8461 = vpow.pop %v8460
      %v8462 = vmul.f32 %v8443, 1.442695
      %v8463 = vpow.pop %v8462
      %v8464 = vmul.f32 %v8444, 1.442695
      %v8465 = vpow.pop %v8464
      %v8466 = vmul.f32 %v8445, 1.442695
      %v8467 = vpow.pop %v8466
      %v8468 = vmul.f32 %v8446, 1.442695
      %v8469 = vpow.pop %v8468
      %v8470 = vmul.f32 %v8447, 1.442695
      %v8471 = vpow.pop %v8470
      %v8472 = vmul.f32 %v8448, 1.442695
      %v8473 = vpow.pop %v8472
      %v8474 = vmul.f32 %v8449, 1.442695
      %v8475 = vpow.pop %v8474
      %v8476 = vmul.f32 %v8450, 1.442695
      %v8477 = vpow.pop %v8476
      %v8478 = vmul.f32 %v8451, 1.442695
      %v8479 = vpow.pop %v8478
      %v8480 = vmul.f32 %v8452, 1.442695
      %v8481 = vpow.pop %v8480
      %v8482 = vmul.f32 %v8453, 1.442695
      %v8483 = vpow.pop %v8482
      %v8484 = vmul.f32 %v8454, 1.442695
      %v8485 = vpow.pop %v8484
      %v8486 = vmul.f32 %v8455, 1.442695
      %v8487 = vpow.pop %v8486
      %v8488 = vmul.f32 %v8456, 1.442695
      %v8489 = vpow.pop %v8488
      %v8490 = vmul.f32 %v8457, 1.442695
      %v8491 = vpow.pop %v8490
      %v8492 = vmul.f32 %v8458, 1.442695
      %v8493 = vpow.pop %v8492
      %v8494 = vmul.f32 %v8459, 1.442695
      %v8495 = vpow.pop %v8494
      %v8496 = vadd.f32 %v8461, 1.0
      %v8497 = vadd.f32 %v8463, 1.0
      %v8498 = vadd.f32 %v8465, 1.0
      %v8499 = vadd.f32 %v8467, 1.0
      %v8500 = vadd.f32 %v8469, 1.0
      %v8501 = vadd.f32 %v8471, 1.0
      %v8502 = vadd.f32 %v8473, 1.0
      %v8503 = vadd.f32 %v8475, 1.0
      %v8504 = vadd.f32 %v8477, 1.0
      %v8505 = vadd.f32 %v8479, 1.0
      %v8506 = vadd.f32 %v8481, 1.0
      %v8507 = vadd.f32 %v8483, 1.0
      %v8508 = vadd.f32 %v8485, 1.0
      %v8509 = vadd.f32 %v8487, 1.0
      %v8510 = vadd.f32 %v8489, 1.0
      %v8511 = vadd.f32 %v8491, 1.0
      %v8512 = vadd.f32 %v8493, 1.0
      %v8513 = vadd.f32 %v8495, 1.0
      %v8514 = vrcp.pop %v8496
      %v8515 = vmul.f32 1.0, %v8514
      %v8516 = vrcp.pop %v8497
      %v8517 = vmul.f32 1.0, %v8516
      %v8518 = vrcp.pop %v8498
      %v8519 = vmul.f32 1.0, %v8518
      %v8520 = vrcp.pop %v8499
      %v8521 = vmul.f32 1.0, %v8520
      %v8522 = vrcp.pop %v8500
      %v8523 = vmul.f32 1.0, %v8522
      %v8524 = vrcp.pop %v8501
      %v8525 = vmul.f32 1.0, %v8524
      %v8526 = vrcp.pop %v8502
      %v8527 = vmul.f32 1.0, %v8526
      %v8528 = vrcp.pop %v8503
      %v8529 = vmul.f32 1.0, %v8528
      %v8530 = vrcp.pop %v8504
      %v8531 = vmul.f32 1.0, %v8530
      %v8532 = vrcp.pop %v8505
      %v8533 = vmul.f32 1.0, %v8532
      %v8534 = vrcp.pop %v8506
      %v8535 = vmul.f32 1.0, %v8534
      %v8536 = vrcp.pop %v8507
      %v8537 = vmul.f32 1.0, %v8536
      %v8538 = vrcp.pop %v8508
      %v8539 = vmul.f32 1.0, %v8538
      %v8540 = vrcp.pop %v8509
      %v8541 = vmul.f32 1.0, %v8540
      %v8542 = vrcp.pop %v8510
      %v8543 = vmul.f32 1.0, %v8542
      %v8544 = vrcp.pop %v8511
      %v8545 = vmul.f32 1.0, %v8544
      %v8546 = vrcp.pop %v8512
      %v8547 = vmul.f32 1.0, %v8546
      %v8548 = vrcp.pop %v8513
      %v8549 = vmul.f32 1.0, %v8548
      %8550 = vst [vmem:[#allocation3] sm:$0xff] %v8515
      %8551 = vst [vmem:[#allocation3 + $0x8] sm:$0xff] %v8517
      %8552 = vst [vmem:[#allocation3 + $0x10] sm:$0xff] %v8519
      %8553 = vst [vmem:[#allocation3 + $0x18] sm:$0xff] %v8521
      %8554 = vst [vmem:[#allocation3 + $0x20] sm:$0xff] %v8523
      %8555 = vst [vmem:[#allocation3 + $0x28] sm:$0xff] %v8525
      %8556 = vst [vmem:[#allocation3 + $0x30] sm:$0xff] %v8527
      %8557 = vst [vmem:[#allocation3 + $0x38] sm:$0xff] %v8529
      %8558 = vst [vmem:[#allocation3 + $0x40] sm:$0xff] %v8531
      %8559 = vst [vmem:[#allocation3 + $0x48] sm:$0xff] %v8533
      %8560 = vst [vmem:[#allocation3 + $0x50] sm:$0xff] %v8535
      %8561 = vst [vmem:[#allocation3 + $0x58] sm:$0xff] %v8537
      %8562 = vst [vmem:[#allocation3 + $0x60] sm:$0xff] %v8539
      %8563 = vst [vmem:[#allocation3 + $0x68] sm:$0xff] %v8541
      %8564 = vst [vmem:[#allocation3 + $0x70] sm:$0xff] %v8543
      %8565 = vst [vmem:[#allocation3 + $0x78] sm:$0xff] %v8545
      %8566 = vst [vmem:[#allocation3 + $0x80] sm:$0xff] %v8547
      %8567 = vst [vmem:[#allocation3 + $0x88] sm:$0xf] %v8549
      %v8568 = vld [vmem:[#allocation3] sm:$0xff]
      %v8569 = vld [vmem:[#allocation3 + $0x8] sm:$0xff]
      %v8570 = vld [vmem:[#allocation3 + $0x10] sm:$0xff]
      %v8571 = vld [vmem:[#allocation3 + $0x18] sm:$0xff]
      %v8572 = vld [vmem:[#allocation3 + $0x20] sm:$0xff]
      %v8573 = vld [vmem:[#allocation3 + $0x28] sm:$0xff]
      %v8574 = vld [vmem:[#allocation3 + $0x30] sm:$0xff]
      %v8575 = vld [vmem:[#allocation3 + $0x38] sm:$0xff]
      %v8576 = vld [vmem:[#allocation3 + $0x40] sm:$0xff]
      %v8577 = vld [vmem:[#allocation3 + $0x48] sm:$0xff]
      %v8578 = vld [vmem:[#allocation3 + $0x50] sm:$0xff]
      %v8579 = vld [vmem:[#allocation3 + $0x58] sm:$0xff]
      %v8580 = vld [vmem:[#allocation3 + $0x60] sm:$0xff]
      %v8581 = vld [vmem:[#allocation3 + $0x68] sm:$0xff]
      %v8582 = vld [vmem:[#allocation3 + $0x70] sm:$0xff]
      %v8583 = vld [vmem:[#allocation3 + $0x78] sm:$0x1f]
      %v8584 = vld [vmem:[#allocation3 + $0x1] sm:$0xff]
      %v8585 = vld [vmem:[#allocation3 + $0x9] sm:$0xff]
      %v8586 = vld [vmem:[#allocation3 + $0x11] sm:$0xff]
      %v8587 = vld [vmem:[#allocation3 + $0x19] sm:$0xff]
      %v8588 = vld [vmem:[#allocation3 + $0x21] sm:$0xff]
      %v8589 = vld [vmem:[#allocation3 + $0x29] sm:$0xff]
      %v8590 = vld [vmem:[#allocation3 + $0x31] sm:$0xff]
      %v8591 = vld [vmem:[#allocation3 + $0x39] sm:$0xff]
      %v8592 = vld [vmem:[#allocation3 + $0x41] sm:$0xff]
      %v8593 = vld [vmem:[#allocation3 + $0x49] sm:$0xff]
      %v8594 = vld [vmem:[#allocation3 + $0x51] sm:$0xff]
      %v8595 = vld [vmem:[#allocation3 + $0x59] sm:$0xff]
      %v8596 = vld [vmem:[#allocation3 + $0x61] sm:$0xff]
      %v8597 = vld [vmem:[#allocation3 + $0x69] sm:$0xff]
      %v8598 = vld [vmem:[#allocation3 + $0x71] sm:$0xff]
      %v8599 = vld [vmem:[#allocation3 + $0x79] sm:$0x1f]
      %v8600 = vmax.f32 %v8568, %v8584
      %v8601 = vmax.f32 %v8569, %v8585
      %v8602 = vmax.f32 %v8570, %v8586
      %v8603 = vmax.f32 %v8571, %v8587
      %v8604 = vmax.f32 %v8572, %v8588
      %v8605 = vmax.f32 %v8573, %v8589
      %v8606 = vmax.f32 %v8574, %v8590
      %v8607 = vmax.f32 %v8575, %v8591
      %v8608 = vmax.f32 %v8576, %v8592
      %v8609 = vmax.f32 %v8577, %v8593
      %v8610 = vmax.f32 %v8578, %v8594
      %v8611 = vmax.f32 %v8579, %v8595
      %v8612 = vmax.f32 %v8580, %v8596
      %v8613 = vmax.f32 %v8581, %v8597
      %v8614 = vmax.f32 %v8582, %v8598
      %v8615 = vmax.f32 %v8583, %v8599
      %v8616 = vld [vmem:[#allocation3 + $0xe] sm:$0xff]
      %v8617 = vld [vmem:[#allocation3 + $0x16] sm:$0xff]
      %v8618 = vld [vmem:[#allocation3 + $0x1e] sm:$0xff]
      %v8619 = vld [vmem:[#allocation3 + $0x26] sm:$0xff]
      %v8620 = vld [vmem:[#allocation3 + $0x2e] sm:$0xff]
      %v8621 = vld [vmem:[#allocation3 + $0x36] sm:$0xff]
      %v8622 = vld [vmem:[#allocation3 + $0x3e] sm:$0xff]
      %v8623 = vld [vmem:[#allocation3 + $0x46] sm:$0xff]
      %v8624 = vld [vmem:[#allocation3 + $0x4e] sm:$0xff]
      %v8625 = vld [vmem:[#allocation3 + $0x56] sm:$0xff]
      %v8626 = vld [vmem:[#allocation3 + $0x5e] sm:$0xff]
      %v8627 = vld [vmem:[#allocation3 + $0x66] sm:$0xff]
      %v8628 = vld [vmem:[#allocation3 + $0x6e] sm:$0xff]
      %v8629 = vld [vmem:[#allocation3 + $0x76] sm:$0xff]
      %v8630 = vld [vmem:[#allocation3 + $0x7e] sm:$0xff]
      %v8631 = vld [vmem:[#allocation3 + $0x86] sm:$0x1f]
      %v8632 = vld [vmem:[#allocation3 + $0xf] sm:$0xff]
      %v8633 = vld [vmem:[#allocation3 + $0x17] sm:$0xff]
      %v8634 = vld [vmem:[#allocation3 + $0x1f] sm:$0xff]
      %v8635 = vld [vmem:[#allocation3 + $0x27] sm:$0xff]
      %v8636 = vld [vmem:[#allocation3 + $0x2f] sm:$0xff]
      %v8637 = vld [vmem:[#allocation3 + $0x37] sm:$0xff]
      %v8638 = vld [vmem:[#allocation3 + $0x3f] sm:$0xff]
      %v8639 = vld [vmem:[#allocation3 + $0x47] sm:$0xff]
      %v8640 = vld [vmem:[#allocation3 + $0x4f] sm:$0xff]
      %v8641 = vld [vmem:[#allocation3 + $0x57] sm:$0xff]
      %v8642 = vld [vmem:[#allocation3 + $0x5f] sm:$0xff]
      %v8643 = vld [vmem:[#allocation3 + $0x67] sm:$0xff]
      %v8644 = vld [vmem:[#allocation3 + $0x6f] sm:$0xff]
      %v8645 = vld [vmem:[#allocation3 + $0x77] sm:$0xff]
      %v8646 = vld [vmem:[#allocation3 + $0x7f] sm:$0xff]
      %v8647 = vld [vmem:[#allocation3 + $0x87] sm:$0x1f]
      %v8648 = vmax.f32 %v8616, %v8632
      %v8649 = vmax.f32 %v8617, %v8633
      %v8650 = vmax.f32 %v8618, %v8634
      %v8651 = vmax.f32 %v8619, %v8635
      %v8652 = vmax.f32 %v8620, %v8636
      %v8653 = vmax.f32 %v8621, %v8637
      %v8654 = vmax.f32 %v8622, %v8638
      %v8655 = vmax.f32 %v8623, %v8639
      %v8656 = vmax.f32 %v8624, %v8640
      %v8657 = vmax.f32 %v8625, %v8641
      %v8658 = vmax.f32 %v8626, %v8642
      %v8659 = vmax.f32 %v8627, %v8643
      %v8660 = vmax.f32 %v8628, %v8644
      %v8661 = vmax.f32 %v8629, %v8645
      %v8662 = vmax.f32 %v8630, %v8646
      %v8663 = vmax.f32 %v8631, %v8647
      %v8664 = vmax.f32 %v8600, %v8648
      %v8665 = vmax.f32 %v8601, %v8649
      %v8666 = vmax.f32 %v8602, %v8650
      %v8667 = vmax.f32 %v8603, %v8651
      %v8668 = vmax.f32 %v8604, %v8652
      %v8669 = vmax.f32 %v8605, %v8653
      %v8670 = vmax.f32 %v8606, %v8654
      %v8671 = vmax.f32 %v8607, %v8655
      %v8672 = vmax.f32 %v8608, %v8656
      %v8673 = vmax.f32 %v8609, %v8657
      %v8674 = vmax.f32 %v8610, %v8658
      %v8675 = vmax.f32 %v8611, %v8659
      %v8676 = vmax.f32 %v8612, %v8660
      %v8677 = vmax.f32 %v8613, %v8661
      %v8678 = vmax.f32 %v8614, %v8662
      %v8679 = vmax.f32 %v8615, %v8663
      %8680 = vst [vmem:[#allocation4] sm:$0xff] %v8664
      %8681 = vst [vmem:[#allocation4 + $0x8] sm:$0xff] %v8665
      %8682 = vst [vmem:[#allocation4 + $0x10] sm:$0xff] %v8666
      %8683 = vst [vmem:[#allocation4 + $0x18] sm:$0xff] %v8667
      %8684 = vst [vmem:[#allocation4 + $0x20] sm:$0xff] %v8668
      %8685 = vst [vmem:[#allocation4 + $0x28] sm:$0xff] %v8669
      %8686 = vst [vmem:[#allocation4 + $0x30] sm:$0xff] %v8670
      %8687 = vst [vmem:[#allocation4 + $0x38] sm:$0xff] %v8671
      %8688 = vst [vmem:[#allocation4 + $0x40] sm:$0xff] %v8672
      %8689 = vst [vmem:[#allocation4 + $0x48] sm:$0xff] %v8673
      %8690 = vst [vmem:[#allocation4 + $0x50] sm:$0xff] %v8674
      %8691 = vst [vmem:[#allocation4 + $0x58] sm:$0xff] %v8675
      %8692 = vst [vmem:[#allocation4 + $0x60] sm:$0xff] %v8676
      %8693 = vst [vmem:[#allocation4 + $0x68] sm:$0xff] %v8677
      %8694 = vst [vmem:[#allocation4 + $0x70] sm:$0xff] %v8678
      %8695 = vst [vmem:[#allocation4 + $0x78] sm:$0x1f] %v8679
      %v8696 = vld [vmem:[%s6] sm:$0x1]
      %v8697 = vld [vmem:[#allocation4] sm:$0x1]
      %v8698 = vld [vmem:[%s5] sm:$0xff]
      %v8699 = vld [vmem:[%s5 + $0x8] sm:$0xff]
      %vm8700 = vcmask 130048
      %v8702 = vsel %vm8700, %v8697, 0
      %8704 = vmatprep.subr.mxu0 0.0
      %8705 = vmatpush1.msra.mxu0 %v8698
      %8706 = vmatprep.subr.mxu0 0.0
      %8707 = vmatpush1.msra.mxu0 %v8699
      %8708 = vmatprep.subr.mxu0 0.0
      %8709 = vmatpush1.msra.mxu0 0.0
      %8710 = vmatprep.subr.mxu0 0.0
      %8711 = vmatpush1.msra.mxu0 0.0
      %8712 = vmatprep.subr.mxu0 0.0
      %8713 = vmatpush1.msra.mxu0 0.0
      %8714 = vmatprep.subr.mxu0 0.0
      %8715 = vmatpush1.msra.mxu0 0.0
      %8716 = vmatprep.subr.mxu0 0.0
      %8717 = vmatpush1.msra.mxu0 0.0
      %8718 = vmatprep.subr.mxu0 0.0
      %8719 = vmatpush1.msra.mxu0 0.0
      %8720 = vmatprep.subr.mxu0 0.0
      %8721 = vmatpush1.msra.mxu0 0.0
      %8722 = vmatprep.subr.mxu0 0.0
      %8723 = vmatpush1.msra.mxu0 0.0
      %8724 = vmatprep.subr.mxu0 0.0
      %8725 = vmatpush1.msra.mxu0 0.0
      %8726 = vmatprep.subr.mxu0 0.0
      %8727 = vmatpush1.msra.mxu0 0.0
      %8728 = vmatprep.subr.mxu0 0.0
      %8729 = vmatpush1.msra.mxu0 0.0
      %8730 = vmatprep.subr.mxu0 0.0
      %8731 = vmatpush1.msra.mxu0 0.0
      %8732 = vmatprep.subr.mxu0 0.0
      %8733 = vmatpush1.msra.mxu0 0.0
      %8734 = vmatprep.subr.mxu0 0.0
      %8735 = vmatpush1.msra.mxu0 0.0
      %8736 = vmatprep.subr.mxu0 0.0
      %8737 = vmatpush1.msra.mxu0 0.0
      %8738 = vmatprep.subr.mxu0 0.0
      %8739 = vmatpush1.msra.mxu0 0.0
      %8740 = vmatprep.subr.mxu0 0.0
      %8741 = vmatpush1.msra.mxu0 0.0
      %8742 = vmatprep.subr.mxu0 0.0
      %8743 = vmatpush1.msra.mxu0 0.0
      %8744 = vmatprep.subr.mxu0 0.0
      %8745 = vmatpush1.msra.mxu0 0.0
      %8746 = vmatprep.subr.mxu0 0.0
      %8747 = vmatpush1.msra.mxu0 0.0
      %8748 = vmatprep.subr.mxu0 0.0
      %8749 = vmatpush1.msra.mxu0 0.0
      %8750 = vmatprep.subr.mxu0 0.0
      %8751 = vmatpush1.msra.mxu0 0.0
      %8752 = vmatprep.subr.mxu0 0.0
      %8753 = vmatpush1.msra.mxu0 0.0
      %8754 = vmatprep.subr.mxu0 0.0
      %8755 = vmatpush1.msra.mxu0 0.0
      %8756 = vmatprep.subr.mxu0 0.0
      %8757 = vmatpush1.msra.mxu0 0.0
      %8758 = vmatprep.subr.mxu0 0.0
      %8759 = vmatpush1.msra.mxu0 0.0
      %8760 = vmatprep.subr.mxu0 0.0
      %8761 = vmatpush1.msra.mxu0 0.0
      %8762 = vmatprep.subr.mxu0 0.0
      %8763 = vmatpush1.msra.mxu0 0.0
      %8764 = vmatprep.subr.mxu0 0.0
      %8765 = vmatpush1.msra.mxu0 0.0
      %8766 = vmatprep.subr.mxu0 0.0
      %8767 = vmatpush1.msra.mxu0 0.0
      %8768 = vmatprep.mubr.f32.mxu0 0.0
      %8769 = vmatmul.mubr.f32.gmra.mrb[0].mxu0 %v8702
      %v8770 = vpop.f32.mrb[0].mxu0
      %v8771 = vadd.f32 0.0, %v8770
      %v8772 = vpop.f32.mrb[0].mxu0
      %8773 = vdwg.mxu0
      %v8774 = vadd.f32 %v8696, %v8771
      %v8775 = vld [vmem:[#allocation4 + $0x2] sm:$0x1]
      %s8776 = scalar_lea.vmem %s5, 16
      %v8777 = vld [vmem:[%s8776] sm:$0xff]
      %v8778 = vld [vmem:[%s8776 + $0x8] sm:$0xff]
      %v8780 = vsel %vm8700, %v8775, 0
      %8782 = vmatprep.subr.mxu0 0.0
      %8783 = vmatpush1.msra.mxu0 %v8777
      %8784 = vmatprep.subr.mxu0 0.0
      %8785 = vmatpush1.msra.mxu0 %v8778
      %8786 = vmatprep.subr.mxu0 0.0
      %8787 = vmatpush1.msra.mxu0 0.0
      %8788 = vmatprep.subr.mxu0 0.0
      %8789 = vmatpush1.msra.mxu0 0.0
      %8790 = vmatprep.subr.mxu0 0.0
      %8791 = vmatpush1.msra.mxu0 0.0
      %8792 = vmatprep.subr.mxu0 0.0
      %8793 = vmatpush1.msra.mxu0 0.0
      %8794 = vmatprep.subr.mxu0 0.0
      %8795 = vmatpush1.msra.mxu0 0.0
      %8796 = vmatprep.subr.mxu0 0.0
      %8797 = vmatpush1.msra.mxu0 0.0
      %8798 = vmatprep.subr.mxu0 0.0
      %8799 = vmatpush1.msra.mxu0 0.0
      %8800 = vmatprep.subr.mxu0 0.0
      %8801 = vmatpush1.msra.mxu0 0.0
      %8802 = vmatprep.subr.mxu0 0.0
      %8803 = vmatpush1.msra.mxu0 0.0
      %8804 = vmatprep.subr.mxu0 0.0
      %8805 = vmatpush1.msra.mxu0 0.0
      %8806 = vmatprep.subr.mxu0 0.0
      %8807 = vmatpush1.msra.mxu0 0.0
      %8808 = vmatprep.subr.mxu0 0.0
      %8809 = vmatpush1.msra.mxu0 0.0
      %8810 = vmatprep.subr.mxu0 0.0
      %8811 = vmatpush1.msra.mxu0 0.0
      %8812 = vmatprep.subr.mxu0 0.0
      %8813 = vmatpush1.msra.mxu0 0.0
      %8814 = vmatprep.subr.mxu0 0.0
      %8815 = vmatpush1.msra.mxu0 0.0
      %8816 = vmatprep.subr.mxu0 0.0
      %8817 = vmatpush1.msra.mxu0 0.0
      %8818 = vmatprep.subr.mxu0 0.0
      %8819 = vmatpush1.msra.mxu0 0.0
      %8820 = vmatprep.subr.mxu0 0.0
      %8821 = vmatpush1.msra.mxu0 0.0
      %8822 = vmatprep.subr.mxu0 0.0
      %8823 = vmatpush1.msra.mxu0 0.0
      %8824 = vmatprep.subr.mxu0 0.0
      %8825 = vmatpush1.msra.mxu0 0.0
      %8826 = vmatprep.subr.mxu0 0.0
      %8827 = vmatpush1.msra.mxu0 0.0
      %8828 = vmatprep.subr.mxu0 0.0
      %8829 = vmatpush1.msra.mxu0 0.0
      %8830 = vmatprep.subr.mxu0 0.0
      %8831 = vmatpush1.msra.mxu0 0.0
      %8832 = vmatprep.subr.mxu0 0.0
      %8833 = vmatpush1.msra.mxu0 0.0
      %8834 = vmatprep.subr.mxu0 0.0
      %8835 = vmatpush1.msra.mxu0 0.0
      %8836 = vmatprep.subr.mxu0 0.0
      %8837 = vmatpush1.msra.mxu0 0.0
      %8838 = vmatprep.subr.mxu0 0.0
      %8839 = vmatpush1.msra.mxu0 0.0
      %8840 = vmatprep.subr.mxu0 0.0
      %8841 = vmatpush1.msra.mxu0 0.0
      %8842 = vmatprep.subr.mxu0 0.0
      %8843 = vmatpush1.msra.mxu0 0.0
      %8844 = vmatprep.subr.mxu0 0.0
      %8845 = vmatpush1.msra.mxu0 0.0
      %8846 = vmatprep.mubr.f32.mxu0 0.0
      %8847 = vmatmul.mubr.f32.gmra.mrb[0].mxu0 %v8780
      %v8848 = vpop.f32.mrb[0].mxu0
      %v8849 = vadd.f32 0.0, %v8848
      %v8850 = vpop.f32.mrb[0].mxu0
      %8851 = vdwg.mxu0
      %v8852 = vadd.f32 %v8774, %v8849
      %v8853 = vld [vmem:[#allocation4 + $0x4] sm:$0x1]
      %s8854 = scalar_lea.vmem %s5, 32
      %v8855 = vld [vmem:[%s8854] sm:$0xff]
      %v8856 = vld [vmem:[%s8854 + $0x8] sm:$0xff]
      %v8858 = vsel %vm8700, %v8853, 0
      %8860 = vmatprep.subr.mxu0 0.0
      %8861 = vmatpush1.msra.mxu0 %v8855
      %8862 = vmatprep.subr.mxu0 0.0
      %8863 = vmatpush1.msra.mxu0 %v8856
      %8864 = vmatprep.subr.mxu0 0.0
      %8865 = vmatpush1.msra.mxu0 0.0
      %8866 = vmatprep.subr.mxu0 0.0
      %8867 = vmatpush1.msra.mxu0 0.0
      %8868 = vmatprep.subr.mxu0 0.0
      %8869 = vmatpush1.msra.mxu0 0.0
      %8870 = vmatprep.subr.mxu0 0.0
      %8871 = vmatpush1.msra.mxu0 0.0
      %8872 = vmatprep.subr.mxu0 0.0
      %8873 = vmatpush1.msra.mxu0 0.0
      %8874 = vmatprep.subr.mxu0 0.0
      %8875 = vmatpush1.msra.mxu0 0.0
      %8876 = vmatprep.subr.mxu0 0.0
      %8877 = vmatpush1.msra.mxu0 0.0
      %8878 = vmatprep.subr.mxu0 0.0
      %8879 = vmatpush1.msra.mxu0 0.0
      %8880 = vmatprep.subr.mxu0 0.0
      %8881 = vmatpush1.msra.mxu0 0.0
      %8882 = vmatprep.subr.mxu0 0.0
      %8883 = vmatpush1.msra.mxu0 0.0
      %8884 = vmatprep.subr.mxu0 0.0
      %8885 = vmatpush1.msra.mxu0 0.0
      %8886 = vmatprep.subr.mxu0 0.0
      %8887 = vmatpush1.msra.mxu0 0.0
      %8888 = vmatprep.subr.mxu0 0.0
      %8889 = vmatpush1.msra.mxu0 0.0
      %8890 = vmatprep.subr.mxu0 0.0
      %8891 = vmatpush1.msra.mxu0 0.0
      %8892 = vmatprep.subr.mxu0 0.0
      %8893 = vmatpush1.msra.mxu0 0.0
      %8894 = vmatprep.subr.mxu0 0.0
      %8895 = vmatpush1.msra.mxu0 0.0
      %8896 = vmatprep.subr.mxu0 0.0
      %8897 = vmatpush1.msra.mxu0 0.0
      %8898 = vmatprep.subr.mxu0 0.0
      %8899 = vmatpush1.msra.mxu0 0.0
      %8900 = vmatprep.subr.mxu0 0.0
      %8901 = vmatpush1.msra.mxu0 0.0
      %8902 = vmatprep.subr.mxu0 0.0
      %8903 = vmatpush1.msra.mxu0 0.0
      %8904 = vmatprep.subr.mxu0 0.0
      %8905 = vmatpush1.msra.mxu0 0.0
      %8906 = vmatprep.subr.mxu0 0.0
      %8907 = vmatpush1.msra.mxu0 0.0
      %8908 = vmatprep.subr.mxu0 0.0
      %8909 = vmatpush1.msra.mxu0 0.0
      %8910 = vmatprep.subr.mxu0 0.0
      %8911 = vmatpush1.msra.mxu0 0.0
      %8912 = vmatprep.subr.mxu0 0.0
      %8913 = vmatpush1.msra.mxu0 0.0
      %8914 = vmatprep.subr.mxu0 0.0
      %8915 = vmatpush1.msra.mxu0 0.0
      %8916 = vmatprep.subr.mxu0 0.0
      %8917 = vmatpush1.msra.mxu0 0.0
      %8918 = vmatprep.subr.mxu0 0.0
      %8919 = vmatpush1.msra.mxu0 0.0
      %8920 = vmatprep.subr.mxu0 0.0
      %8921 = vmatpush1.msra.mxu0 0.0
      %8922 = vmatprep.subr.mxu0 0.0
      %8923 = vmatpush1.msra.mxu0 0.0
      %8924 = vmatprep.mubr.f32.mxu0 0.0
      %8925 = vmatmul.mubr.f32.gmra.mrb[0].mxu0 %v8858
      %v8926 = vpop.f32.mrb[0].mxu0
      %v8927 = vadd.f32 0.0, %v8926
      %v8928 = vpop.f32.mrb[0].mxu0
      %8929 = vdwg.mxu0
      %v8930 = vadd.f32 %v8852, %v8927
      %v8931 = vld [vmem:[#allocation4 + $0x6] sm:$0x1]
      %s8932 = scalar_lea.vmem %s5, 48
      %v8933 = vld [vmem:[%s8932] sm:$0xff]
      %v8934 = vld [vmem:[%s8932 + $0x8] sm:$0xff]
      %v8936 = vsel %vm8700, %v8931, 0
      %8938 = vmatprep.subr.mxu0 0.0
      %8939 = vmatpush1.msra.mxu0 %v8933
      %8940 = vmatprep.subr.mxu0 0.0
      %8941 = vmatpush1.msra.mxu0 %v8934
      %8942 = vmatprep.subr.mxu0 0.0
      %8943 = vmatpush1.msra.mxu0 0.0
      %8944 = vmatprep.subr.mxu0 0.0
      %8945 = vmatpush1.msra.mxu0 0.0
      %8946 = vmatprep.subr.mxu0 0.0
      %8947 = vmatpush1.msra.mxu0 0.0
      %8948 = vmatprep.subr.mxu0 0.0
      %8949 = vmatpush1.msra.mxu0 0.0
      %8950 = vmatprep.subr.mxu0 0.0
      %8951 = vmatpush1.msra.mxu0 0.0
      %8952 = vmatprep.subr.mxu0 0.0
      %8953 = vmatpush1.msra.mxu0 0.0
      %8954 = vmatprep.subr.mxu0 0.0
      %8955 = vmatpush1.msra.mxu0 0.0
      %8956 = vmatprep.subr.mxu0 0.0
      %8957 = vmatpush1.msra.mxu0 0.0
      %8958 = vmatprep.subr.mxu0 0.0
      %8959 = vmatpush1.msra.mxu0 0.0
      %8960 = vmatprep.subr.mxu0 0.0
      %8961 = vmatpush1.msra.mxu0 0.0
      %8962 = vmatprep.subr.mxu0 0.0
      %8963 = vmatpush1.msra.mxu0 0.0
      %8964 = vmatprep.subr.mxu0 0.0
      %8965 = vmatpush1.msra.mxu0 0.0
      %8966 = vmatprep.subr.mxu0 0.0
      %8967 = vmatpush1.msra.mxu0 0.0
      %8968 = vmatprep.subr.mxu0 0.0
      %8969 = vmatpush1.msra.mxu0 0.0
      %8970 = vmatprep.subr.mxu0 0.0
      %8971 = vmatpush1.msra.mxu0 0.0
      %8972 = vmatprep.subr.mxu0 0.0
      %8973 = vmatpush1.msra.mxu0 0.0
      %8974 = vmatprep.subr.mxu0 0.0
      %8975 = vmatpush1.msra.mxu0 0.0
      %8976 = vmatprep.subr.mxu0 0.0
      %8977 = vmatpush1.msra.mxu0 0.0
      %8978 = vmatprep.subr.mxu0 0.0
      %8979 = vmatpush1.msra.mxu0 0.0
      %8980 = vmatprep.subr.mxu0 0.0
      %8981 = vmatpush1.msra.mxu0 0.0
      %8982 = vmatprep.subr.mxu0 0.0
      %8983 = vmatpush1.msra.mxu0 0.0
      %8984 = vmatprep.subr.mxu0 0.0
      %8985 = vmatpush1.msra.mxu0 0.0
      %8986 = vmatprep.subr.mxu0 0.0
      %8987 = vmatpush1.msra.mxu0 0.0
      %8988 = vmatprep.subr.mxu0 0.0
      %8989 = vmatpush1.msra.mxu0 0.0
      %8990 = vmatprep.subr.mxu0 0.0
      %8991 = vmatpush1.msra.mxu0 0.0
      %8992 = vmatprep.subr.mxu0 0.0
      %8993 = vmatpush1.msra.mxu0 0.0
      %8994 = vmatprep.subr.mxu0 0.0
      %8995 = vmatpush1.msra.mxu0 0.0
      %8996 = vmatprep.subr.mxu0 0.0
      %8997 = vmatpush1.msra.mxu0 0.0
      %8998 = vmatprep.subr.mxu0 0.0
      %8999 = vmatpush1.msra.mxu0 0.0
      %9000 = vmatprep.subr.mxu0 0.0
      %9001 = vmatpush1.msra.mxu0 0.0
      %9002 = vmatprep.mubr.f32.mxu0 0.0
      %9003 = vmatmul.mubr.f32.gmra.mrb[0].mxu0 %v8936
      %v9004 = vpop.f32.mrb[0].mxu0
      %v9005 = vadd.f32 0.0, %v9004
      %v9006 = vpop.f32.mrb[0].mxu0
      %9007 = vdwg.mxu0
      %v9008 = vadd.f32 %v8930, %v9005
      %v9009 = vld [vmem:[#allocation4 + $0x8] sm:$0x1]
      %s9010 = scalar_lea.vmem %s5, 64
      %v9011 = vld [vmem:[%s9010] sm:$0xff]
      %v9012 = vld [vmem:[%s9010 + $0x8] sm:$0xff]
      %v9014 = vsel %vm8700, %v9009, 0
      %9016 = vmatprep.subr.mxu0 0.0
      %9017 = vmatpush1.msra.mxu0 %v9011
      %9018 = vmatprep.subr.mxu0 0.0
      %9019 = vmatpush1.msra.mxu0 %v9012
      %9020 = vmatprep.subr.mxu0 0.0
      %9021 = vmatpush1.msra.mxu0 0.0
      %9022 = vmatprep.subr.mxu0 0.0
      %9023 = vmatpush1.msra.mxu0 0.0
      %9024 = vmatprep.subr.mxu0 0.0
      %9025 = vmatpush1.msra.mxu0 0.0
      %9026 = vmatprep.subr.mxu0 0.0
      %9027 = vmatpush1.msra.mxu0 0.0
      %9028 = vmatprep.subr.mxu0 0.0
      %9029 = vmatpush1.msra.mxu0 0.0
      %9030 = vmatprep.subr.mxu0 0.0
      %9031 = vmatpush1.msra.mxu0 0.0
      %9032 = vmatprep.subr.mxu0 0.0
      %9033 = vmatpush1.msra.mxu0 0.0
      %9034 = vmatprep.subr.mxu0 0.0
      %9035 = vmatpush1.msra.mxu0 0.0
      %9036 = vmatprep.subr.mxu0 0.0
      %9037 = vmatpush1.msra.mxu0 0.0
      %9038 = vmatprep.subr.mxu0 0.0
      %9039 = vmatpush1.msra.mxu0 0.0
      %9040 = vmatprep.subr.mxu0 0.0
      %9041 = vmatpush1.msra.mxu0 0.0
      %9042 = vmatprep.subr.mxu0 0.0
      %9043 = vmatpush1.msra.mxu0 0.0
      %9044 = vmatprep.subr.mxu0 0.0
      %9045 = vmatpush1.msra.mxu0 0.0
      %9046 = vmatprep.subr.mxu0 0.0
      %9047 = vmatpush1.msra.mxu0 0.0
      %9048 = vmatprep.subr.mxu0 0.0
      %9049 = vmatpush1.msra.mxu0 0.0
      %9050 = vmatprep.subr.mxu0 0.0
      %9051 = vmatpush1.msra.mxu0 0.0
      %9052 = vmatprep.subr.mxu0 0.0
      %9053 = vmatpush1.msra.mxu0 0.0
      %9054 = vmatprep.subr.mxu0 0.0
      %9055 = vmatpush1.msra.mxu0 0.0
      %9056 = vmatprep.subr.mxu0 0.0
      %9057 = vmatpush1.msra.mxu0 0.0
      %9058 = vmatprep.subr.mxu0 0.0
      %9059 = vmatpush1.msra.mxu0 0.0
      %9060 = vmatprep.subr.mxu0 0.0
      %9061 = vmatpush1.msra.mxu0 0.0
      %9062 = vmatprep.subr.mxu0 0.0
      %9063 = vmatpush1.msra.mxu0 0.0
      %9064 = vmatprep.subr.mxu0 0.0
      %9065 = vmatpush1.msra.mxu0 0.0
      %9066 = vmatprep.subr.mxu0 0.0
      %9067 = vmatpush1.msra.mxu0 0.0
      %9068 = vmatprep.subr.mxu0 0.0
      %9069 = vmatpush1.msra.mxu0 0.0
      %9070 = vmatprep.subr.mxu0 0.0
      %9071 = vmatpush1.msra.mxu0 0.0
      %9072 = vmatprep.subr.mxu0 0.0
      %9073 = vmatpush1.msra.mxu0 0.0
      %9074 = vmatprep.subr.mxu0 0.0
      %9075 = vmatpush1.msra.mxu0 0.0
      %9076 = vmatprep.subr.mxu0 0.0
      %9077 = vmatpush1.msra.mxu0 0.0
      %9078 = vmatprep.subr.mxu0 0.0
      %9079 = vmatpush1.msra.mxu0 0.0
      %9080 = vmatprep.mubr.f32.mxu0 0.0
      %9081 = vmatmul.mubr.f32.gmra.mrb[0].mxu0 %v9014
      %v9082 = vpop.f32.mrb[0].mxu0
      %v9083 = vadd.f32 0.0, %v9082
      %v9084 = vpop.f32.mrb[0].mxu0
      %9085 = vdwg.mxu0
      %v9086 = vadd.f32 %v9008, %v9083
      %v9087 = vld [vmem:[#allocation4 + $0x1c] sm:$0x1]
      %s9088 = scalar_lea.vmem %s5, 80
      %v9089 = vld [vmem:[%s9088] sm:$0xff]
      %v9090 = vld [vmem:[%s9088 + $0x8] sm:$0xff]
      %v9092 = vsel %vm8700, %v9087, 0
      %9094 = vmatprep.subr.mxu0 0.0
      %9095 = vmatpush1.msra.mxu0 %v9089
      %9096 = vmatprep.subr.mxu0 0.0
      %9097 = vmatpush1.msra.mxu0 %v9090
      %9098 = vmatprep.subr.mxu0 0.0
      %9099 = vmatpush1.msra.mxu0 0.0
      %9100 = vmatprep.subr.mxu0 0.0
      %9101 = vmatpush1.msra.mxu0 0.0
      %9102 = vmatprep.subr.mxu0 0.0
      %9103 = vmatpush1.msra.mxu0 0.0
      %9104 = vmatprep.subr.mxu0 0.0
      %9105 = vmatpush1.msra.mxu0 0.0
      %9106 = vmatprep.subr.mxu0 0.0
      %9107 = vmatpush1.msra.mxu0 0.0
      %9108 = vmatprep.subr.mxu0 0.0
      %9109 = vmatpush1.msra.mxu0 0.0
      %9110 = vmatprep.subr.mxu0 0.0
      %9111 = vmatpush1.msra.mxu0 0.0
      %9112 = vmatprep.subr.mxu0 0.0
      %9113 = vmatpush1.msra.mxu0 0.0
      %9114 = vmatprep.subr.mxu0 0.0
      %9115 = vmatpush1.msra.mxu0 0.0
      %9116 = vmatprep.subr.mxu0 0.0
      %9117 = vmatpush1.msra.mxu0 0.0
      %9118 = vmatprep.subr.mxu0 0.0
      %9119 = vmatpush1.msra.mxu0 0.0
      %9120 = vmatprep.subr.mxu0 0.0
      %9121 = vmatpush1.msra.mxu0 0.0
      %9122 = vmatprep.subr.mxu0 0.0
      %9123 = vmatpush1.msra.mxu0 0.0
      %9124 = vmatprep.subr.mxu0 0.0
      %9125 = vmatpush1.msra.mxu0 0.0
      %9126 = vmatprep.subr.mxu0 0.0
      %9127 = vmatpush1.msra.mxu0 0.0
      %9128 = vmatprep.subr.mxu0 0.0
      %9129 = vmatpush1.msra.mxu0 0.0
      %9130 = vmatprep.subr.mxu0 0.0
      %9131 = vmatpush1.msra.mxu0 0.0
      %9132 = vmatprep.subr.mxu0 0.0
      %9133 = vmatpush1.msra.mxu0 0.0
      %9134 = vmatprep.subr.mxu0 0.0
      %9135 = vmatpush1.msra.mxu0 0.0
      %9136 = vmatprep.subr.mxu0 0.0
      %9137 = vmatpush1.msra.mxu0 0.0
      %9138 = vmatprep.subr.mxu0 0.0
      %9139 = vmatpush1.msra.mxu0 0.0
      %9140 = vmatprep.subr.mxu0 0.0
      %9141 = vmatpush1.msra.mxu0 0.0
      %9142 = vmatprep.subr.mxu0 0.0
      %9143 = vmatpush1.msra.mxu0 0.0
      %9144 = vmatprep.subr.mxu0 0.0
      %9145 = vmatpush1.msra.mxu0 0.0
      %9146 = vmatprep.subr.mxu0 0.0
      %9147 = vmatpush1.msra.mxu0 0.0
      %9148 = vmatprep.subr.mxu0 0.0
      %9149 = vmatpush1.msra.mxu0 0.0
      %9150 = vmatprep.subr.mxu0 0.0
      %9151 = vmatpush1.msra.mxu0 0.0
      %9152 = vmatprep.subr.mxu0 0.0
      %9153 = vmatpush1.msra.mxu0 0.0
      %9154 = vmatprep.subr.mxu0 0.0
      %9155 = vmatpush1.msra.mxu0 0.0
      %9156 = vmatprep.subr.mxu0 0.0
      %9157 = vmatpush1.msra.mxu0 0.0
      %9158 = vmatprep.mubr.f32.mxu0 0.0
      %9159 = vmatmul.mubr.f32.gmra.mrb[0].mxu0 %v9092
      %v9160 = vpop.f32.mrb[0].mxu0
      %v9161 = vadd.f32 0.0, %v9160
      %v9162 = vpop.f32.mrb[0].mxu0
      %9163 = vdwg.mxu0
      %v9164 = vadd.f32 %v9086, %v9161
      %v9165 = vld [vmem:[#allocation4 + $0x1e] sm:$0x1]
      %s9166 = scalar_lea.vmem %s5, 96
      %v9167 = vld [vmem:[%s9166] sm:$0xff]
      %v9168 = vld [vmem:[%s9166 + $0x8] sm:$0xff]
      %v9170 = vsel %vm8700, %v9165, 0
      %9172 = vmatprep.subr.mxu0 0.0
      %9173 = vmatpush1.msra.mxu0 %v9167
      %9174 = vmatprep.subr.mxu0 0.0
      %9175 = vmatpush1.msra.mxu0 %v9168
      %9176 = vmatprep.subr.mxu0 0.0
      %9177 = vmatpush1.msra.mxu0 0.0
      %9178 = vmatprep.subr.mxu0 0.0
      %9179 = vmatpush1.msra.mxu0 0.0
      %9180 = vmatprep.subr.mxu0 0.0
      %9181 = vmatpush1.msra.mxu0 0.0
      %9182 = vmatprep.subr.mxu0 0.0
      %9183 = vmatpush1.msra.mxu0 0.0
      %9184 = vmatprep.subr.mxu0 0.0
      %9185 = vmatpush1.msra.mxu0 0.0
      %9186 = vmatprep.subr.mxu0 0.0
      %9187 = vmatpush1.msra.mxu0 0.0
      %9188 = vmatprep.subr.mxu0 0.0
      %9189 = vmatpush1.msra.mxu0 0.0
      %9190 = vmatprep.subr.mxu0 0.0
      %9191 = vmatpush1.msra.mxu0 0.0
      %9192 = vmatprep.subr.mxu0 0.0
      %9193 = vmatpush1.msra.mxu0 0.0
      %9194 = vmatprep.subr.mxu0 0.0
      %9195 = vmatpush1.msra.mxu0 0.0
      %9196 = vmatprep.subr.mxu0 0.0
      %9197 = vmatpush1.msra.mxu0 0.0
      %9198 = vmatprep.subr.mxu0 0.0
      %9199 = vmatpush1.msra.mxu0 0.0
      %9200 = vmatprep.subr.mxu0 0.0
      %9201 = vmatpush1.msra.mxu0 0.0
      %9202 = vmatprep.subr.mxu0 0.0
      %9203 = vmatpush1.msra.mxu0 0.0
      %9204 = vmatprep.subr.mxu0 0.0
      %9205 = vmatpush1.msra.mxu0 0.0
      %9206 = vmatprep.subr.mxu0 0.0
      %9207 = vmatpush1.msra.mxu0 0.0
      %9208 = vmatprep.subr.mxu0 0.0
      %9209 = vmatpush1.msra.mxu0 0.0
      %9210 = vmatprep.subr.mxu0 0.0
      %9211 = vmatpush1.msra.mxu0 0.0
      %9212 = vmatprep.subr.mxu0 0.0
      %9213 = vmatpush1.msra.mxu0 0.0
      %9214 = vmatprep.subr.mxu0 0.0
      %9215 = vmatpush1.msra.mxu0 0.0
      %9216 = vmatprep.subr.mxu0 0.0
      %9217 = vmatpush1.msra.mxu0 0.0
      %9218 = vmatprep.subr.mxu0 0.0
      %9219 = vmatpush1.msra.mxu0 0.0
      %9220 = vmatprep.subr.mxu0 0.0
      %9221 = vmatpush1.msra.mxu0 0.0
      %9222 = vmatprep.subr.mxu0 0.0
      %9223 = vmatpush1.msra.mxu0 0.0
      %9224 = vmatprep.subr.mxu0 0.0
      %9225 = vmatpush1.msra.mxu0 0.0
      %9226 = vmatprep.subr.mxu0 0.0
      %9227 = vmatpush1.msra.mxu0 0.0
      %9228 = vmatprep.subr.mxu0 0.0
      %9229 = vmatpush1.msra.mxu0 0.0
      %9230 = vmatprep.subr.mxu0 0.0
      %9231 = vmatpush1.msra.mxu0 0.0
      %9232 = vmatprep.subr.mxu0 0.0
      %9233 = vmatpush1.msra.mxu0 0.0
      %9234 = vmatprep.subr.mxu0 0.0
      %9235 = vmatpush1.msra.mxu0 0.0
      %9236 = vmatprep.mubr.f32.mxu0 0.0
      %9237 = vmatmul.mubr.f32.gmra.mrb[0].mxu0 %v9170
      %v9238 = vpop.f32.mrb[0].mxu0
      %v9239 = vadd.f32 0.0, %v9238
      %v9240 = vpop.f32.mrb[0].mxu0
      %9241 = vdwg.mxu0
      %v9242 = vadd.f32 %v9164, %v9239
      %v9243 = vld [vmem:[#allocation4 + $0x20] sm:$0x1]
      %s9244 = scalar_lea.vmem %s5, 112
      %v9245 = vld [vmem:[%s9244] sm:$0xff]
      %v9246 = vld [vmem:[%s9244 + $0x8] sm:$0xff]
      %v9248 = vsel %vm8700, %v9243, 0
      %9250 = vmatprep.subr.mxu0 0.0
      %9251 = vmatpush1.msra.mxu0 %v9245
      %9252 = vmatprep.subr.mxu0 0.0
      %9253 = vmatpush1.msra.mxu0 %v9246
      %9254 = vmatprep.subr.mxu0 0.0
      %9255 = vmatpush1.msra.mxu0 0.0
      %9256 = vmatprep.subr.mxu0 0.0
      %9257 = vmatpush1.msra.mxu0 0.0
      %9258 = vmatprep.subr.mxu0 0.0
      %9259 = vmatpush1.msra.mxu0 0.0
      %9260 = vmatprep.subr.mxu0 0.0
      %9261 = vmatpush1.msra.mxu0 0.0
      %9262 = vmatprep.subr.mxu0 0.0
      %9263 = vmatpush1.msra.mxu0 0.0
      %9264 = vmatprep.subr.mxu0 0.0
      %9265 = vmatpush1.msra.mxu0 0.0
      %9266 = vmatprep.subr.mxu0 0.0
      %9267 = vmatpush1.msra.mxu0 0.0
      %9268 = vmatprep.subr.mxu0 0.0
      %9269 = vmatpush1.msra.mxu0 0.0
      %9270 = vmatprep.subr.mxu0 0.0
      %9271 = vmatpush1.msra.mxu0 0.0
      %9272 = vmatprep.subr.mxu0 0.0
      %9273 = vmatpush1.msra.mxu0 0.0
      %9274 = vmatprep.subr.mxu0 0.0
      %9275 = vmatpush1.msra.mxu0 0.0
      %9276 = vmatprep.subr.mxu0 0.0
      %9277 = vmatpush1.msra.mxu0 0.0
      %9278 = vmatprep.subr.mxu0 0.0
      %9279 = vmatpush1.msra.mxu0 0.0
      %9280 = vmatprep.subr.mxu0 0.0
      %9281 = vmatpush1.msra.mxu0 0.0
      %9282 = vmatprep.subr.mxu0 0.0
      %9283 = vmatpush1.msra.mxu0 0.0
      %9284 = vmatprep.subr.mxu0 0.0
      %9285 = vmatpush1.msra.mxu0 0.0
      %9286 = vmatprep.subr.mxu0 0.0
      %9287 = vmatpush1.msra.mxu0 0.0
      %9288 = vmatprep.subr.mxu0 0.0
      %9289 = vmatpush1.msra.mxu0 0.0
      %9290 = vmatprep.subr.mxu0 0.0
      %9291 = vmatpush1.msra.mxu0 0.0
      %9292 = vmatprep.subr.mxu0 0.0
      %9293 = vmatpush1.msra.mxu0 0.0
      %9294 = vmatprep.subr.mxu0 0.0
      %9295 = vmatpush1.msra.mxu0 0.0
      %9296 = vmatprep.subr.mxu0 0.0
      %9297 = vmatpush1.msra.mxu0 0.0
      %9298 = vmatprep.subr.mxu0 0.0
      %9299 = vmatpush1.msra.mxu0 0.0
      %9300 = vmatprep.subr.mxu0 0.0
      %9301 = vmatpush1.msra.mxu0 0.0
      %9302 = vmatprep.subr.mxu0 0.0
      %9303 = vmatpush1.msra.mxu0 0.0
      %9304 = vmatprep.subr.mxu0 0.0
      %9305 = vmatpush1.msra.mxu0 0.0
      %9306 = vmatprep.subr.mxu0 0.0
      %9307 = vmatpush1.msra.mxu0 0.0
      %9308 = vmatprep.subr.mxu0 0.0
      %9309 = vmatpush1.msra.mxu0 0.0
      %9310 = vmatprep.subr.mxu0 0.0
      %9311 = vmatpush1.msra.mxu0 0.0
      %9312 = vmatprep.subr.mxu0 0.0
      %9313 = vmatpush1.msra.mxu0 0.0
      %9314 = vmatprep.mubr.f32.mxu0 0.0
      %9315 = vmatmul.mubr.f32.gmra.mrb[0].mxu0 %v9248
      %v9316 = vpop.f32.mrb[0].mxu0
      %v9317 = vadd.f32 0.0, %v9316
      %v9318 = vpop.f32.mrb[0].mxu0
      %9319 = vdwg.mxu0
      %v9320 = vadd.f32 %v9242, %v9317
      %v9321 = vld [vmem:[#allocation4 + $0x22] sm:$0x1]
      %s9322 = scalar_lea.vmem %s5, 128
      %v9323 = vld [vmem:[%s9322] sm:$0xff]
      %v9324 = vld [vmem:[%s9322 + $0x8] sm:$0xff]
      %v9326 = vsel %vm8700, %v9321, 0
      %9328 = vmatprep.subr.mxu0 0.0
      %9329 = vmatpush1.msra.mxu0 %v9323
      %9330 = vmatprep.subr.mxu0 0.0
      %9331 = vmatpush1.msra.mxu0 %v9324
      %9332 = vmatprep.subr.mxu0 0.0
      %9333 = vmatpush1.msra.mxu0 0.0
      %9334 = vmatprep.subr.mxu0 0.0
      %9335 = vmatpush1.msra.mxu0 0.0
      %9336 = vmatprep.subr.mxu0 0.0
      %9337 = vmatpush1.msra.mxu0 0.0
      %9338 = vmatprep.subr.mxu0 0.0
      %9339 = vmatpush1.msra.mxu0 0.0
      %9340 = vmatprep.subr.mxu0 0.0
      %9341 = vmatpush1.msra.mxu0 0.0
      %9342 = vmatprep.subr.mxu0 0.0
      %9343 = vmatpush1.msra.mxu0 0.0
      %9344 = vmatprep.subr.mxu0 0.0
      %9345 = vmatpush1.msra.mxu0 0.0
      %9346 = vmatprep.subr.mxu0 0.0
      %9347 = vmatpush1.msra.mxu0 0.0
      %9348 = vmatprep.subr.mxu0 0.0
      %9349 = vmatpush1.msra.mxu0 0.0
      %9350 = vmatprep.subr.mxu0 0.0
      %9351 = vmatpush1.msra.mxu0 0.0
      %9352 = vmatprep.subr.mxu0 0.0
      %9353 = vmatpush1.msra.mxu0 0.0
      %9354 = vmatprep.subr.mxu0 0.0
      %9355 = vmatpush1.msra.mxu0 0.0
      %9356 = vmatprep.subr.mxu0 0.0
      %9357 = vmatpush1.msra.mxu0 0.0
      %9358 = vmatprep.subr.mxu0 0.0
      %9359 = vmatpush1.msra.mxu0 0.0
      %9360 = vmatprep.subr.mxu0 0.0
      %9361 = vmatpush1.msra.mxu0 0.0
      %9362 = vmatprep.subr.mxu0 0.0
      %9363 = vmatpush1.msra.mxu0 0.0
      %9364 = vmatprep.subr.mxu0 0.0
      %9365 = vmatpush1.msra.mxu0 0.0
      %9366 = vmatprep.subr.mxu0 0.0
      %9367 = vmatpush1.msra.mxu0 0.0
      %9368 = vmatprep.subr.mxu0 0.0
      %9369 = vmatpush1.msra.mxu0 0.0
      %9370 = vmatprep.subr.mxu0 0.0
      %9371 = vmatpush1.msra.mxu0 0.0
      %9372 = vmatprep.subr.mxu0 0.0
      %9373 = vmatpush1.msra.mxu0 0.0
      %9374 = vmatprep.subr.mxu0 0.0
      %9375 = vmatpush1.msra.mxu0 0.0
      %9376 = vmatprep.subr.mxu0 0.0
      %9377 = vmatpush1.msra.mxu0 0.0
      %9378 = vmatprep.subr.mxu0 0.0
      %9379 = vmatpush1.msra.mxu0 0.0
      %9380 = vmatprep.subr.mxu0 0.0
      %9381 = vmatpush1.msra.mxu0 0.0
      %9382 = vmatprep.subr.mxu0 0.0
      %9383 = vmatpush1.msra.mxu0 0.0
      %9384 = vmatprep.subr.mxu0 0.0
      %9385 = vmatpush1.msra.mxu0 0.0
      %9386 = vmatprep.subr.mxu0 0.0
      %9387 = vmatpush1.msra.mxu0 0.0
      %9388 = vmatprep.subr.mxu0 0.0
      %9389 = vmatpush1.msra.mxu0 0.0
      %9390 = vmatprep.subr.mxu0 0.0
      %9391 = vmatpush1.msra.mxu0 0.0
      %9392 = vmatprep.mubr.f32.mxu0 0.0
      %9393 = vmatmul.mubr.f32.gmra.mrb[0].mxu0 %v9326
      %v9394 = vpop.f32.mrb[0].mxu0
      %v9395 = vadd.f32 0.0, %v9394
      %v9396 = vpop.f32.mrb[0].mxu0
      %9397 = vdwg.mxu0
      %v9398 = vadd.f32 %v9320, %v9395
      %v9399 = vld [vmem:[#allocation4 + $0x24] sm:$0x1]
      %s9400 = scalar_lea.vmem %s5, 144
      %v9401 = vld [vmem:[%s9400] sm:$0xff]
      %v9402 = vld [vmem:[%s9400 + $0x8] sm:$0xff]
      %v9404 = vsel %vm8700, %v9399, 0
      %9406 = vmatprep.subr.mxu0 0.0
      %9407 = vmatpush1.msra.mxu0 %v9401
      %9408 = vmatprep.subr.mxu0 0.0
      %9409 = vmatpush1.msra.mxu0 %v9402
      %9410 = vmatprep.subr.mxu0 0.0
      %9411 = vmatpush1.msra.mxu0 0.0
      %9412 = vmatprep.subr.mxu0 0.0
      %9413 = vmatpush1.msra.mxu0 0.0
      %9414 = vmatprep.subr.mxu0 0.0
      %9415 = vmatpush1.msra.mxu0 0.0
      %9416 = vmatprep.subr.mxu0 0.0
      %9417 = vmatpush1.msra.mxu0 0.0
      %9418 = vmatprep.subr.mxu0 0.0
      %9419 = vmatpush1.msra.mxu0 0.0
      %9420 = vmatprep.subr.mxu0 0.0
      %9421 = vmatpush1.msra.mxu0 0.0
      %9422 = vmatprep.subr.mxu0 0.0
      %9423 = vmatpush1.msra.mxu0 0.0
      %9424 = vmatprep.subr.mxu0 0.0
      %9425 = vmatpush1.msra.mxu0 0.0
      %9426 = vmatprep.subr.mxu0 0.0
      %9427 = vmatpush1.msra.mxu0 0.0
      %9428 = vmatprep.subr.mxu0 0.0
      %9429 = vmatpush1.msra.mxu0 0.0
      %9430 = vmatprep.subr.mxu0 0.0
      %9431 = vmatpush1.msra.mxu0 0.0
      %9432 = vmatprep.subr.mxu0 0.0
      %9433 = vmatpush1.msra.mxu0 0.0
      %9434 = vmatprep.subr.mxu0 0.0
      %9435 = vmatpush1.msra.mxu0 0.0
      %9436 = vmatprep.subr.mxu0 0.0
      %9437 = vmatpush1.msra.mxu0 0.0
      %9438 = vmatprep.subr.mxu0 0.0
      %9439 = vmatpush1.msra.mxu0 0.0
      %9440 = vmatprep.subr.mxu0 0.0
      %9441 = vmatpush1.msra.mxu0 0.0
      %9442 = vmatprep.subr.mxu0 0.0
      %9443 = vmatpush1.msra.mxu0 0.0
      %9444 = vmatprep.subr.mxu0 0.0
      %9445 = vmatpush1.msra.mxu0 0.0
      %9446 = vmatprep.subr.mxu0 0.0
      %9447 = vmatpush1.msra.mxu0 0.0
      %9448 = vmatprep.subr.mxu0 0.0
      %9449 = vmatpush1.msra.mxu0 0.0
      %9450 = vmatprep.subr.mxu0 0.0
      %9451 = vmatpush1.msra.mxu0 0.0
      %9452 = vmatprep.subr.mxu0 0.0
      %9453 = vmatpush1.msra.mxu0 0.0
      %9454 = vmatprep.subr.mxu0 0.0
      %9455 = vmatpush1.msra.mxu0 0.0
      %9456 = vmatprep.subr.mxu0 0.0
      %9457 = vmatpush1.msra.mxu0 0.0
      %9458 = vmatprep.subr.mxu0 0.0
      %9459 = vmatpush1.msra.mxu0 0.0
      %9460 = vmatprep.subr.mxu0 0.0
      %9461 = vmatpush1.msra.mxu0 0.0
      %9462 = vmatprep.subr.mxu0 0.0
      %9463 = vmatpush1.msra.mxu0 0.0
      %9464 = vmatprep.subr.mxu0 0.0
      %9465 = vmatpush1.msra.mxu0 0.0
      %9466 = vmatprep.subr.mxu0 0.0
      %9467 = vmatpush1.msra.mxu0 0.0
      %9468 = vmatprep.subr.mxu0 0.0
      %9469 = vmatpush1.msra.mxu0 0.0
      %9470 = vmatprep.mubr.f32.mxu0 0.0
      %9471 = vmatmul.mubr.f32.gmra.mrb[0].mxu0 %v9404
      %v9472 = vpop.f32.mrb[0].mxu0
      %v9473 = vadd.f32 0.0, %v9472
      %v9474 = vpop.f32.mrb[0].mxu0
      %9475 = vdwg.mxu0
      %v9476 = vadd.f32 %v9398, %v9473
      %v9477 = vld [vmem:[#allocation4 + $0x38] sm:$0x1]
      %s9478 = scalar_lea.vmem %s5, 160
      %v9479 = vld [vmem:[%s9478] sm:$0xff]
      %v9480 = vld [vmem:[%s9478 + $0x8] sm:$0xff]
      %v9482 = vsel %vm8700, %v9477, 0
      %9484 = vmatprep.subr.mxu0 0.0
      %9485 = vmatpush1.msra.mxu0 %v9479
      %9486 = vmatprep.subr.mxu0 0.0
      %9487 = vmatpush1.msra.mxu0 %v9480
      %9488 = vmatprep.subr.mxu0 0.0
      %9489 = vmatpush1.msra.mxu0 0.0
      %9490 = vmatprep.subr.mxu0 0.0
      %9491 = vmatpush1.msra.mxu0 0.0
      %9492 = vmatprep.subr.mxu0 0.0
      %9493 = vmatpush1.msra.mxu0 0.0
      %9494 = vmatprep.subr.mxu0 0.0
      %9495 = vmatpush1.msra.mxu0 0.0
      %9496 = vmatprep.subr.mxu0 0.0
      %9497 = vmatpush1.msra.mxu0 0.0
      %9498 = vmatprep.subr.mxu0 0.0
      %9499 = vmatpush1.msra.mxu0 0.0
      %9500 = vmatprep.subr.mxu0 0.0
      %9501 = vmatpush1.msra.mxu0 0.0
      %9502 = vmatprep.subr.mxu0 0.0
      %9503 = vmatpush1.msra.mxu0 0.0
      %9504 = vmatprep.subr.mxu0 0.0
      %9505 = vmatpush1.msra.mxu0 0.0
      %9506 = vmatprep.subr.mxu0 0.0
      %9507 = vmatpush1.msra.mxu0 0.0
      %9508 = vmatprep.subr.mxu0 0.0
      %9509 = vmatpush1.msra.mxu0 0.0
      %9510 = vmatprep.subr.mxu0 0.0
      %9511 = vmatpush1.msra.mxu0 0.0
      %9512 = vmatprep.subr.mxu0 0.0
      %9513 = vmatpush1.msra.mxu0 0.0
      %9514 = vmatprep.subr.mxu0 0.0
      %9515 = vmatpush1.msra.mxu0 0.0
      %9516 = vmatprep.subr.mxu0 0.0
      %9517 = vmatpush1.msra.mxu0 0.0
      %9518 = vmatprep.subr.mxu0 0.0
      %9519 = vmatpush1.msra.mxu0 0.0
      %9520 = vmatprep.subr.mxu0 0.0
      %9521 = vmatpush1.msra.mxu0 0.0
      %9522 = vmatprep.subr.mxu0 0.0
      %9523 = vmatpush1.msra.mxu0 0.0
      %9524 = vmatprep.subr.mxu0 0.0
      %9525 = vmatpush1.msra.mxu0 0.0
      %9526 = vmatprep.subr.mxu0 0.0
      %9527 = vmatpush1.msra.mxu0 0.0
      %9528 = vmatprep.subr.mxu0 0.0
      %9529 = vmatpush1.msra.mxu0 0.0
      %9530 = vmatprep.subr.mxu0 0.0
      %9531 = vmatpush1.msra.mxu0 0.0
      %9532 = vmatprep.subr.mxu0 0.0
      %9533 = vmatpush1.msra.mxu0 0.0
      %9534 = vmatprep.subr.mxu0 0.0
      %9535 = vmatpush1.msra.mxu0 0.0
      %9536 = vmatprep.subr.mxu0 0.0
      %9537 = vmatpush1.msra.mxu0 0.0
      %9538 = vmatprep.subr.mxu0 0.0
      %9539 = vmatpush1.msra.mxu0 0.0
      %9540 = vmatprep.subr.mxu0 0.0
      %9541 = vmatpush1.msra.mxu0 0.0
      %9542 = vmatprep.subr.mxu0 0.0
      %9543 = vmatpush1.msra.mxu0 0.0
      %9544 = vmatprep.subr.mxu0 0.0
      %9545 = vmatpush1.msra.mxu0 0.0
      %9546 = vmatprep.subr.mxu0 0.0
      %9547 = vmatpush1.msra.mxu0 0.0
      %9548 = vmatprep.mubr.f32.mxu0 0.0
      %9549 = vmatmul.mubr.f32.gmra.mrb[0].mxu0 %v9482
      %v9550 = vpop.f32.mrb[0].mxu0
      %v9551 = vadd.f32 0.0, %v9550
      %v9552 = vpop.f32.mrb[0].mxu0
      %9553 = vdwg.mxu0
      %v9554 = vadd.f32 %v9476, %v9551
      %v9555 = vld [vmem:[#allocation4 + $0x3a] sm:$0x1]
      %s9556 = scalar_lea.vmem %s5, 176
      %v9557 = vld [vmem:[%s9556] sm:$0xff]
      %v9558 = vld [vmem:[%s9556 + $0x8] sm:$0xff]
      %v9560 = vsel %vm8700, %v9555, 0
      %9562 = vmatprep.subr.mxu0 0.0
      %9563 = vmatpush1.msra.mxu0 %v9557
      %9564 = vmatprep.subr.mxu0 0.0
      %9565 = vmatpush1.msra.mxu0 %v9558
      %9566 = vmatprep.subr.mxu0 0.0
      %9567 = vmatpush1.msra.mxu0 0.0
      %9568 = vmatprep.subr.mxu0 0.0
      %9569 = vmatpush1.msra.mxu0 0.0
      %9570 = vmatprep.subr.mxu0 0.0
      %9571 = vmatpush1.msra.mxu0 0.0
      %9572 = vmatprep.subr.mxu0 0.0
      %9573 = vmatpush1.msra.mxu0 0.0
      %9574 = vmatprep.subr.mxu0 0.0
      %9575 = vmatpush1.msra.mxu0 0.0
      %9576 = vmatprep.subr.mxu0 0.0
      %9577 = vmatpush1.msra.mxu0 0.0
      %9578 = vmatprep.subr.mxu0 0.0
      %9579 = vmatpush1.msra.mxu0 0.0
      %9580 = vmatprep.subr.mxu0 0.0
      %9581 = vmatpush1.msra.mxu0 0.0
      %9582 = vmatprep.subr.mxu0 0.0
      %9583 = vmatpush1.msra.mxu0 0.0
      %9584 = vmatprep.subr.mxu0 0.0
      %9585 = vmatpush1.msra.mxu0 0.0
      %9586 = vmatprep.subr.mxu0 0.0
      %9587 = vmatpush1.msra.mxu0 0.0
      %9588 = vmatprep.subr.mxu0 0.0
      %9589 = vmatpush1.msra.mxu0 0.0
      %9590 = vmatprep.subr.mxu0 0.0
      %9591 = vmatpush1.msra.mxu0 0.0
      %9592 = vmatprep.subr.mxu0 0.0
      %9593 = vmatpush1.msra.mxu0 0.0
      %9594 = vmatprep.subr.mxu0 0.0
      %9595 = vmatpush1.msra.mxu0 0.0
      %9596 = vmatprep.subr.mxu0 0.0
      %9597 = vmatpush1.msra.mxu0 0.0
      %9598 = vmatprep.subr.mxu0 0.0
      %9599 = vmatpush1.msra.mxu0 0.0
      %9600 = vmatprep.subr.mxu0 0.0
      %9601 = vmatpush1.msra.mxu0 0.0
      %9602 = vmatprep.subr.mxu0 0.0
      %9603 = vmatpush1.msra.mxu0 0.0
      %9604 = vmatprep.subr.mxu0 0.0
      %9605 = vmatpush1.msra.mxu0 0.0
      %9606 = vmatprep.subr.mxu0 0.0
      %9607 = vmatpush1.msra.mxu0 0.0
      %9608 = vmatprep.subr.mxu0 0.0
      %9609 = vmatpush1.msra.mxu0 0.0
      %9610 = vmatprep.subr.mxu0 0.0
      %9611 = vmatpush1.msra.mxu0 0.0
      %9612 = vmatprep.subr.mxu0 0.0
      %9613 = vmatpush1.msra.mxu0 0.0
      %9614 = vmatprep.subr.mxu0 0.0
      %9615 = vmatpush1.msra.mxu0 0.0
      %9616 = vmatprep.subr.mxu0 0.0
      %9617 = vmatpush1.msra.mxu0 0.0
      %9618 = vmatprep.subr.mxu0 0.0
      %9619 = vmatpush1.msra.mxu0 0.0
      %9620 = vmatprep.subr.mxu0 0.0
      %9621 = vmatpush1.msra.mxu0 0.0
      %9622 = vmatprep.subr.mxu0 0.0
      %9623 = vmatpush1.msra.mxu0 0.0
      %9624 = vmatprep.subr.mxu0 0.0
      %9625 = vmatpush1.msra.mxu0 0.0
      %9626 = vmatprep.mubr.f32.mxu0 0.0
      %9627 = vmatmul.mubr.f32.gmra.mrb[0].mxu0 %v9560
      %v9628 = vpop.f32.mrb[0].mxu0
      %v9629 = vadd.f32 0.0, %v9628
      %v9630 = vpop.f32.mrb[0].mxu0
      %9631 = vdwg.mxu0
      %v9632 = vadd.f32 %v9554, %v9629
      %v9633 = vld [vmem:[#allocation4 + $0x3c] sm:$0x1]
      %s9634 = scalar_lea.vmem %s5, 192
      %v9635 = vld [vmem:[%s9634] sm:$0xff]
      %v9636 = vld [vmem:[%s9634 + $0x8] sm:$0xff]
      %v9638 = vsel %vm8700, %v9633, 0
      %9640 = vmatprep.subr.mxu0 0.0
      %9641 = vmatpush1.msra.mxu0 %v9635
      %9642 = vmatprep.subr.mxu0 0.0
      %9643 = vmatpush1.msra.mxu0 %v9636
      %9644 = vmatprep.subr.mxu0 0.0
      %9645 = vmatpush1.msra.mxu0 0.0
      %9646 = vmatprep.subr.mxu0 0.0
      %9647 = vmatpush1.msra.mxu0 0.0
      %9648 = vmatprep.subr.mxu0 0.0
      %9649 = vmatpush1.msra.mxu0 0.0
      %9650 = vmatprep.subr.mxu0 0.0
      %9651 = vmatpush1.msra.mxu0 0.0
      %9652 = vmatprep.subr.mxu0 0.0
      %9653 = vmatpush1.msra.mxu0 0.0
      %9654 = vmatprep.subr.mxu0 0.0
      %9655 = vmatpush1.msra.mxu0 0.0
      %9656 = vmatprep.subr.mxu0 0.0
      %9657 = vmatpush1.msra.mxu0 0.0
      %9658 = vmatprep.subr.mxu0 0.0
      %9659 = vmatpush1.msra.mxu0 0.0
      %9660 = vmatprep.subr.mxu0 0.0
      %9661 = vmatpush1.msra.mxu0 0.0
      %9662 = vmatprep.subr.mxu0 0.0
      %9663 = vmatpush1.msra.mxu0 0.0
      %9664 = vmatprep.subr.mxu0 0.0
      %9665 = vmatpush1.msra.mxu0 0.0
      %9666 = vmatprep.subr.mxu0 0.0
      %9667 = vmatpush1.msra.mxu0 0.0
      %9668 = vmatprep.subr.mxu0 0.0
      %9669 = vmatpush1.msra.mxu0 0.0
      %9670 = vmatprep.subr.mxu0 0.0
      %9671 = vmatpush1.msra.mxu0 0.0
      %9672 = vmatprep.subr.mxu0 0.0
      %9673 = vmatpush1.msra.mxu0 0.0
      %9674 = vmatprep.subr.mxu0 0.0
      %9675 = vmatpush1.msra.mxu0 0.0
      %9676 = vmatprep.subr.mxu0 0.0
      %9677 = vmatpush1.msra.mxu0 0.0
      %9678 = vmatprep.subr.mxu0 0.0
      %9679 = vmatpush1.msra.mxu0 0.0
      %9680 = vmatprep.subr.mxu0 0.0
      %9681 = vmatpush1.msra.mxu0 0.0
      %9682 = vmatprep.subr.mxu0 0.0
      %9683 = vmatpush1.msra.mxu0 0.0
      %9684 = vmatprep.subr.mxu0 0.0
      %9685 = vmatpush1.msra.mxu0 0.0
      %9686 = vmatprep.subr.mxu0 0.0
      %9687 = vmatpush1.msra.mxu0 0.0
      %9688 = vmatprep.subr.mxu0 0.0
      %9689 = vmatpush1.msra.mxu0 0.0
      %9690 = vmatprep.subr.mxu0 0.0
      %9691 = vmatpush1.msra.mxu0 0.0
      %9692 = vmatprep.subr.mxu0 0.0
      %9693 = vmatpush1.msra.mxu0 0.0
      %9694 = vmatprep.subr.mxu0 0.0
      %9695 = vmatpush1.msra.mxu0 0.0
      %9696 = vmatprep.subr.mxu0 0.0
      %9697 = vmatpush1.msra.mxu0 0.0
      %9698 = vmatprep.subr.mxu0 0.0
      %9699 = vmatpush1.msra.mxu0 0.0
      %9700 = vmatprep.subr.mxu0 0.0
      %9701 = vmatpush1.msra.mxu0 0.0
      %9702 = vmatprep.subr.mxu0 0.0
      %9703 = vmatpush1.msra.mxu0 0.0
      %9704 = vmatprep.mubr.f32.mxu0 0.0
      %9705 = vmatmul.mubr.f32.gmra.mrb[0].mxu0 %v9638
      %v9706 = vpop.f32.mrb[0].mxu0
      %v9707 = vadd.f32 0.0, %v9706
      %v9708 = vpop.f32.mrb[0].mxu0
      %9709 = vdwg.mxu0
      %v9710 = vadd.f32 %v9632, %v9707
      %v9711 = vld [vmem:[#allocation4 + $0x3e] sm:$0x1]
      %s9712 = scalar_lea.vmem %s5, 208
      %v9713 = vld [vmem:[%s9712] sm:$0xff]
      %v9714 = vld [vmem:[%s9712 + $0x8] sm:$0xff]
      %v9716 = vsel %vm8700, %v9711, 0
      %9718 = vmatprep.subr.mxu0 0.0
      %9719 = vmatpush1.msra.mxu0 %v9713
      %9720 = vmatprep.subr.mxu0 0.0
      %9721 = vmatpush1.msra.mxu0 %v9714
      %9722 = vmatprep.subr.mxu0 0.0
      %9723 = vmatpush1.msra.mxu0 0.0
      %9724 = vmatprep.subr.mxu0 0.0
      %9725 = vmatpush1.msra.mxu0 0.0
      %9726 = vmatprep.subr.mxu0 0.0
      %9727 = vmatpush1.msra.mxu0 0.0
      %9728 = vmatprep.subr.mxu0 0.0
      %9729 = vmatpush1.msra.mxu0 0.0
      %9730 = vmatprep.subr.mxu0 0.0
      %9731 = vmatpush1.msra.mxu0 0.0
      %9732 = vmatprep.subr.mxu0 0.0
      %9733 = vmatpush1.msra.mxu0 0.0
      %9734 = vmatprep.subr.mxu0 0.0
      %9735 = vmatpush1.msra.mxu0 0.0
      %9736 = vmatprep.subr.mxu0 0.0
      %9737 = vmatpush1.msra.mxu0 0.0
      %9738 = vmatprep.subr.mxu0 0.0
      %9739 = vmatpush1.msra.mxu0 0.0
      %9740 = vmatprep.subr.mxu0 0.0
      %9741 = vmatpush1.msra.mxu0 0.0
      %9742 = vmatprep.subr.mxu0 0.0
      %9743 = vmatpush1.msra.mxu0 0.0
      %9744 = vmatprep.subr.mxu0 0.0
      %9745 = vmatpush1.msra.mxu0 0.0
      %9746 = vmatprep.subr.mxu0 0.0
      %9747 = vmatpush1.msra.mxu0 0.0
      %9748 = vmatprep.subr.mxu0 0.0
      %9749 = vmatpush1.msra.mxu0 0.0
      %9750 = vmatprep.subr.mxu0 0.0
      %9751 = vmatpush1.msra.mxu0 0.0
      %9752 = vmatprep.subr.mxu0 0.0
      %9753 = vmatpush1.msra.mxu0 0.0
      %9754 = vmatprep.subr.mxu0 0.0
      %9755 = vmatpush1.msra.mxu0 0.0
      %9756 = vmatprep.subr.mxu0 0.0
      %9757 = vmatpush1.msra.mxu0 0.0
      %9758 = vmatprep.subr.mxu0 0.0
      %9759 = vmatpush1.msra.mxu0 0.0
      %9760 = vmatprep.subr.mxu0 0.0
      %9761 = vmatpush1.msra.mxu0 0.0
      %9762 = vmatprep.subr.mxu0 0.0
      %9763 = vmatpush1.msra.mxu0 0.0
      %9764 = vmatprep.subr.mxu0 0.0
      %9765 = vmatpush1.msra.mxu0 0.0
      %9766 = vmatprep.subr.mxu0 0.0
      %9767 = vmatpush1.msra.mxu0 0.0
      %9768 = vmatprep.subr.mxu0 0.0
      %9769 = vmatpush1.msra.mxu0 0.0
      %9770 = vmatprep.subr.mxu0 0.0
      %9771 = vmatpush1.msra.mxu0 0.0
      %9772 = vmatprep.subr.mxu0 0.0
      %9773 = vmatpush1.msra.mxu0 0.0
      %9774 = vmatprep.subr.mxu0 0.0
      %9775 = vmatpush1.msra.mxu0 0.0
      %9776 = vmatprep.subr.mxu0 0.0
      %9777 = vmatpush1.msra.mxu0 0.0
      %9778 = vmatprep.subr.mxu0 0.0
      %9779 = vmatpush1.msra.mxu0 0.0
      %9780 = vmatprep.subr.mxu0 0.0
      %9781 = vmatpush1.msra.mxu0 0.0
      %9782 = vmatprep.mubr.f32.mxu0 0.0
      %9783 = vmatmul.mubr.f32.gmra.mrb[0].mxu0 %v9716
      %v9784 = vpop.f32.mrb[0].mxu0
      %v9785 = vadd.f32 0.0, %v9784
      %v9786 = vpop.f32.mrb[0].mxu0
      %9787 = vdwg.mxu0
      %v9788 = vadd.f32 %v9710, %v9785
      %v9789 = vld [vmem:[#allocation4 + $0x40] sm:$0x1]
      %s9790 = scalar_lea.vmem %s5, 224
      %v9791 = vld [vmem:[%s9790] sm:$0xff]
      %v9792 = vld [vmem:[%s9790 + $0x8] sm:$0xff]
      %v9794 = vsel %vm8700, %v9789, 0
      %9796 = vmatprep.subr.mxu0 0.0
      %9797 = vmatpush1.msra.mxu0 %v9791
      %9798 = vmatprep.subr.mxu0 0.0
      %9799 = vmatpush1.msra.mxu0 %v9792
      %9800 = vmatprep.subr.mxu0 0.0
      %9801 = vmatpush1.msra.mxu0 0.0
      %9802 = vmatprep.subr.mxu0 0.0
      %9803 = vmatpush1.msra.mxu0 0.0
      %9804 = vmatprep.subr.mxu0 0.0
      %9805 = vmatpush1.msra.mxu0 0.0
      %9806 = vmatprep.subr.mxu0 0.0
      %9807 = vmatpush1.msra.mxu0 0.0
      %9808 = vmatprep.subr.mxu0 0.0
      %9809 = vmatpush1.msra.mxu0 0.0
      %9810 = vmatprep.subr.mxu0 0.0
      %9811 = vmatpush1.msra.mxu0 0.0
      %9812 = vmatprep.subr.mxu0 0.0
      %9813 = vmatpush1.msra.mxu0 0.0
      %9814 = vmatprep.subr.mxu0 0.0
      %9815 = vmatpush1.msra.mxu0 0.0
      %9816 = vmatprep.subr.mxu0 0.0
      %9817 = vmatpush1.msra.mxu0 0.0
      %9818 = vmatprep.subr.mxu0 0.0
      %9819 = vmatpush1.msra.mxu0 0.0
      %9820 = vmatprep.subr.mxu0 0.0
      %9821 = vmatpush1.msra.mxu0 0.0
      %9822 = vmatprep.subr.mxu0 0.0
      %9823 = vmatpush1.msra.mxu0 0.0
      %9824 = vmatprep.subr.mxu0 0.0
      %9825 = vmatpush1.msra.mxu0 0.0
      %9826 = vmatprep.subr.mxu0 0.0
      %9827 = vmatpush1.msra.mxu0 0.0
      %9828 = vmatprep.subr.mxu0 0.0
      %9829 = vmatpush1.msra.mxu0 0.0
      %9830 = vmatprep.subr.mxu0 0.0
      %9831 = vmatpush1.msra.mxu0 0.0
      %9832 = vmatprep.subr.mxu0 0.0
      %9833 = vmatpush1.msra.mxu0 0.0
      %9834 = vmatprep.subr.mxu0 0.0
      %9835 = vmatpush1.msra.mxu0 0.0
      %9836 = vmatprep.subr.mxu0 0.0
      %9837 = vmatpush1.msra.mxu0 0.0
      %9838 = vmatprep.subr.mxu0 0.0
      %9839 = vmatpush1.msra.mxu0 0.0
      %9840 = vmatprep.subr.mxu0 0.0
      %9841 = vmatpush1.msra.mxu0 0.0
      %9842 = vmatprep.subr.mxu0 0.0
      %9843 = vmatpush1.msra.mxu0 0.0
      %9844 = vmatprep.subr.mxu0 0.0
      %9845 = vmatpush1.msra.mxu0 0.0
      %9846 = vmatprep.subr.mxu0 0.0
      %9847 = vmatpush1.msra.mxu0 0.0
      %9848 = vmatprep.subr.mxu0 0.0
      %9849 = vmatpush1.msra.mxu0 0.0
      %9850 = vmatprep.subr.mxu0 0.0
      %9851 = vmatpush1.msra.mxu0 0.0
      %9852 = vmatprep.subr.mxu0 0.0
      %9853 = vmatpush1.msra.mxu0 0.0
      %9854 = vmatprep.subr.mxu0 0.0
      %9855 = vmatpush1.msra.mxu0 0.0
      %9856 = vmatprep.subr.mxu0 0.0
      %9857 = vmatpush1.msra.mxu0 0.0
      %9858 = vmatprep.subr.mxu0 0.0
      %9859 = vmatpush1.msra.mxu0 0.0
      %9860 = vmatprep.mubr.f32.mxu0 0.0
      %9861 = vmatmul.mubr.f32.gmra.mrb[0].mxu0 %v9794
      %v9862 = vpop.f32.mrb[0].mxu0
      %v9863 = vadd.f32 0.0, %v9862
      %v9864 = vpop.f32.mrb[0].mxu0
      %9865 = vdwg.mxu0
      %v9866 = vadd.f32 %v9788, %v9863
      %v9867 = vld [vmem:[#allocation4 + $0x54] sm:$0x1]
      %s9868 = scalar_lea.vmem %s5, 240
      %v9869 = vld [vmem:[%s9868] sm:$0xff]
      %v9870 = vld [vmem:[%s9868 + $0x8] sm:$0xff]
      %v9872 = vsel %vm8700, %v9867, 0
      %9874 = vmatprep.subr.mxu0 0.0
      %9875 = vmatpush1.msra.mxu0 %v9869
      %9876 = vmatprep.subr.mxu0 0.0
      %9877 = vmatpush1.msra.mxu0 %v9870
      %9878 = vmatprep.subr.mxu0 0.0
      %9879 = vmatpush1.msra.mxu0 0.0
      %9880 = vmatprep.subr.mxu0 0.0
      %9881 = vmatpush1.msra.mxu0 0.0
      %9882 = vmatprep.subr.mxu0 0.0
      %9883 = vmatpush1.msra.mxu0 0.0
      %9884 = vmatprep.subr.mxu0 0.0
      %9885 = vmatpush1.msra.mxu0 0.0
      %9886 = vmatprep.subr.mxu0 0.0
      %9887 = vmatpush1.msra.mxu0 0.0
      %9888 = vmatprep.subr.mxu0 0.0
      %9889 = vmatpush1.msra.mxu0 0.0
      %9890 = vmatprep.subr.mxu0 0.0
      %9891 = vmatpush1.msra.mxu0 0.0
      %9892 = vmatprep.subr.mxu0 0.0
      %9893 = vmatpush1.msra.mxu0 0.0
      %9894 = vmatprep.subr.mxu0 0.0
      %9895 = vmatpush1.msra.mxu0 0.0
      %9896 = vmatprep.subr.mxu0 0.0
      %9897 = vmatpush1.msra.mxu0 0.0
      %9898 = vmatprep.subr.mxu0 0.0
      %9899 = vmatpush1.msra.mxu0 0.0
      %9900 = vmatprep.subr.mxu0 0.0
      %9901 = vmatpush1.msra.mxu0 0.0
      %9902 = vmatprep.subr.mxu0 0.0
      %9903 = vmatpush1.msra.mxu0 0.0
      %9904 = vmatprep.subr.mxu0 0.0
      %9905 = vmatpush1.msra.mxu0 0.0
      %9906 = vmatprep.subr.mxu0 0.0
      %9907 = vmatpush1.msra.mxu0 0.0
      %9908 = vmatprep.subr.mxu0 0.0
      %9909 = vmatpush1.msra.mxu0 0.0
      %9910 = vmatprep.subr.mxu0 0.0
      %9911 = vmatpush1.msra.mxu0 0.0
      %9912 = vmatprep.subr.mxu0 0.0
      %9913 = vmatpush1.msra.mxu0 0.0
      %9914 = vmatprep.subr.mxu0 0.0
      %9915 = vmatpush1.msra.mxu0 0.0
      %9916 = vmatprep.subr.mxu0 0.0
      %9917 = vmatpush1.msra.mxu0 0.0
      %9918 = vmatprep.subr.mxu0 0.0
      %9919 = vmatpush1.msra.mxu0 0.0
      %9920 = vmatprep.subr.mxu0 0.0
      %9921 = vmatpush1.msra.mxu0 0.0
      %9922 = vmatprep.subr.mxu0 0.0
      %9923 = vmatpush1.msra.mxu0 0.0
      %9924 = vmatprep.subr.mxu0 0.0
      %9925 = vmatpush1.msra.mxu0 0.0
      %9926 = vmatprep.subr.mxu0 0.0
      %9927 = vmatpush1.msra.mxu0 0.0
      %9928 = vmatprep.subr.mxu0 0.0
      %9929 = vmatpush1.msra.mxu0 0.0
      %9930 = vmatprep.subr.mxu0 0.0
      %9931 = vmatpush1.msra.mxu0 0.0
      %9932 = vmatprep.subr.mxu0 0.0
      %9933 = vmatpush1.msra.mxu0 0.0
      %9934 = vmatprep.subr.mxu0 0.0
      %9935 = vmatpush1.msra.mxu0 0.0
      %9936 = vmatprep.subr.mxu0 0.0
      %9937 = vmatpush1.msra.mxu0 0.0
      %9938 = vmatprep.mubr.f32.mxu0 0.0
      %9939 = vmatmul.mubr.f32.gmra.mrb[0].mxu0 %v9872
      %v9940 = vpop.f32.mrb[0].mxu0
      %v9941 = vadd.f32 0.0, %v9940
      %v9942 = vpop.f32.mrb[0].mxu0
      %9943 = vdwg.mxu0
      %v9944 = vadd.f32 %v9866, %v9941
      %v9945 = vld [vmem:[#allocation4 + $0x56] sm:$0x1]
      %s9946 = scalar_lea.vmem %s5, 256
      %v9947 = vld [vmem:[%s9946] sm:$0xff]
      %v9948 = vld [vmem:[%s9946 + $0x8] sm:$0xff]
      %v9950 = vsel %vm8700, %v9945, 0
      %9952 = vmatprep.subr.mxu0 0.0
      %9953 = vmatpush1.msra.mxu0 %v9947
      %9954 = vmatprep.subr.mxu0 0.0
      %9955 = vmatpush1.msra.mxu0 %v9948
      %9956 = vmatprep.subr.mxu0 0.0
      %9957 = vmatpush1.msra.mxu0 0.0
      %9958 = vmatprep.subr.mxu0 0.0
      %9959 = vmatpush1.msra.mxu0 0.0
      %9960 = vmatprep.subr.mxu0 0.0
      %9961 = vmatpush1.msra.mxu0 0.0
      %9962 = vmatprep.subr.mxu0 0.0
      %9963 = vmatpush1.msra.mxu0 0.0
      %9964 = vmatprep.subr.mxu0 0.0
      %9965 = vmatpush1.msra.mxu0 0.0
      %9966 = vmatprep.subr.mxu0 0.0
      %9967 = vmatpush1.msra.mxu0 0.0
      %9968 = vmatprep.subr.mxu0 0.0
      %9969 = vmatpush1.msra.mxu0 0.0
      %9970 = vmatprep.subr.mxu0 0.0
      %9971 = vmatpush1.msra.mxu0 0.0
      %9972 = vmatprep.subr.mxu0 0.0
      %9973 = vmatpush1.msra.mxu0 0.0
      %9974 = vmatprep.subr.mxu0 0.0
      %9975 = vmatpush1.msra.mxu0 0.0
      %9976 = vmatprep.subr.mxu0 0.0
      %9977 = vmatpush1.msra.mxu0 0.0
      %9978 = vmatprep.subr.mxu0 0.0
      %9979 = vmatpush1.msra.mxu0 0.0
      %9980 = vmatprep.subr.mxu0 0.0
      %9981 = vmatpush1.msra.mxu0 0.0
      %9982 = vmatprep.subr.mxu0 0.0
      %9983 = vmatpush1.msra.mxu0 0.0
      %9984 = vmatprep.subr.mxu0 0.0
      %9985 = vmatpush1.msra.mxu0 0.0
      %9986 = vmatprep.subr.mxu0 0.0
      %9987 = vmatpush1.msra.mxu0 0.0
      %9988 = vmatprep.subr.mxu0 0.0
      %9989 = vmatpush1.msra.mxu0 0.0
      %9990 = vmatprep.subr.mxu0 0.0
      %9991 = vmatpush1.msra.mxu0 0.0
      %9992 = vmatprep.subr.mxu0 0.0
      %9993 = vmatpush1.msra.mxu0 0.0
      %9994 = vmatprep.subr.mxu0 0.0
      %9995 = vmatpush1.msra.mxu0 0.0
      %9996 = vmatprep.subr.mxu0 0.0
      %9997 = vmatpush1.msra.mxu0 0.0
      %9998 = vmatprep.subr.mxu0 0.0
      %9999 = vmatpush1.msra.mxu0 0.0
      %10000 = vmatprep.subr.mxu0 0.0
      %10001 = vmatpush1.msra.mxu0 0.0
      %10002 = vmatprep.subr.mxu0 0.0
      %10003 = vmatpush1.msra.mxu0 0.0
      %10004 = vmatprep.subr.mxu0 0.0
      %10005 = vmatpush1.msra.mxu0 0.0
      %10006 = vmatprep.subr.mxu0 0.0
      %10007 = vmatpush1.msra.mxu0 0.0
      %10008 = vmatprep.subr.mxu0 0.0
      %10009 = vmatpush1.msra.mxu0 0.0
      %10010 = vmatprep.subr.mxu0 0.0
      %10011 = vmatpush1.msra.mxu0 0.0
      %10012 = vmatprep.subr.mxu0 0.0
      %10013 = vmatpush1.msra.mxu0 0.0
      %10014 = vmatprep.subr.mxu0 0.0
      %10015 = vmatpush1.msra.mxu0 0.0
      %10016 = vmatprep.mubr.f32.mxu0 0.0
      %10017 = vmatmul.mubr.f32.gmra.mrb[0].mxu0 %v9950
      %v10018 = vpop.f32.mrb[0].mxu0
      %v10019 = vadd.f32 0.0, %v10018
      %v10020 = vpop.f32.mrb[0].mxu0
      %10021 = vdwg.mxu0
      %v10022 = vadd.f32 %v9944, %v10019
      %v10023 = vld [vmem:[#allocation4 + $0x58] sm:$0x1]
      %s10024 = scalar_lea.vmem %s5, 272
      %v10025 = vld [vmem:[%s10024] sm:$0xff]
      %v10026 = vld [vmem:[%s10024 + $0x8] sm:$0xff]
      %v10028 = vsel %vm8700, %v10023, 0
      %10030 = vmatprep.subr.mxu0 0.0
      %10031 = vmatpush1.msra.mxu0 %v10025
      %10032 = vmatprep.subr.mxu0 0.0
      %10033 = vmatpush1.msra.mxu0 %v10026
      %10034 = vmatprep.subr.mxu0 0.0
      %10035 = vmatpush1.msra.mxu0 0.0
      %10036 = vmatprep.subr.mxu0 0.0
      %10037 = vmatpush1.msra.mxu0 0.0
      %10038 = vmatprep.subr.mxu0 0.0
      %10039 = vmatpush1.msra.mxu0 0.0
      %10040 = vmatprep.subr.mxu0 0.0
      %10041 = vmatpush1.msra.mxu0 0.0
      %10042 = vmatprep.subr.mxu0 0.0
      %10043 = vmatpush1.msra.mxu0 0.0
      %10044 = vmatprep.subr.mxu0 0.0
      %10045 = vmatpush1.msra.mxu0 0.0
      %10046 = vmatprep.subr.mxu0 0.0
      %10047 = vmatpush1.msra.mxu0 0.0
      %10048 = vmatprep.subr.mxu0 0.0
      %10049 = vmatpush1.msra.mxu0 0.0
      %10050 = vmatprep.subr.mxu0 0.0
      %10051 = vmatpush1.msra.mxu0 0.0
      %10052 = vmatprep.subr.mxu0 0.0
      %10053 = vmatpush1.msra.mxu0 0.0
      %10054 = vmatprep.subr.mxu0 0.0
      %10055 = vmatpush1.msra.mxu0 0.0
      %10056 = vmatprep.subr.mxu0 0.0
      %10057 = vmatpush1.msra.mxu0 0.0
      %10058 = vmatprep.subr.mxu0 0.0
      %10059 = vmatpush1.msra.mxu0 0.0
      %10060 = vmatprep.subr.mxu0 0.0
      %10061 = vmatpush1.msra.mxu0 0.0
      %10062 = vmatprep.subr.mxu0 0.0
      %10063 = vmatpush1.msra.mxu0 0.0
      %10064 = vmatprep.subr.mxu0 0.0
      %10065 = vmatpush1.msra.mxu0 0.0
      %10066 = vmatprep.subr.mxu0 0.0
      %10067 = vmatpush1.msra.mxu0 0.0
      %10068 = vmatprep.subr.mxu0 0.0
      %10069 = vmatpush1.msra.mxu0 0.0
      %10070 = vmatprep.subr.mxu0 0.0
      %10071 = vmatpush1.msra.mxu0 0.0
      %10072 = vmatprep.subr.mxu0 0.0
      %10073 = vmatpush1.msra.mxu0 0.0
      %10074 = vmatprep.subr.mxu0 0.0
      %10075 = vmatpush1.msra.mxu0 0.0
      %10076 = vmatprep.subr.mxu0 0.0
      %10077 = vmatpush1.msra.mxu0 0.0
      %10078 = vmatprep.subr.mxu0 0.0
      %10079 = vmatpush1.msra.mxu0 0.0
      %10080 = vmatprep.subr.mxu0 0.0
      %10081 = vmatpush1.msra.mxu0 0.0
      %10082 = vmatprep.subr.mxu0 0.0
      %10083 = vmatpush1.msra.mxu0 0.0
      %10084 = vmatprep.subr.mxu0 0.0
      %10085 = vmatpush1.msra.mxu0 0.0
      %10086 = vmatprep.subr.mxu0 0.0
      %10087 = vmatpush1.msra.mxu0 0.0
      %10088 = vmatprep.subr.mxu0 0.0
      %10089 = vmatpush1.msra.mxu0 0.0
      %10090 = vmatprep.subr.mxu0 0.0
      %10091 = vmatpush1.msra.mxu0 0.0
      %10092 = vmatprep.subr.mxu0 0.0
      %10093 = vmatpush1.msra.mxu0 0.0
      %10094 = vmatprep.mubr.f32.mxu0 0.0
      %10095 = vmatmul.mubr.f32.gmra.mrb[0].mxu0 %v10028
      %v10096 = vpop.f32.mrb[0].mxu0
      %v10097 = vadd.f32 0.0, %v10096
      %v10098 = vpop.f32.mrb[0].mxu0
      %10099 = vdwg.mxu0
      %v10100 = vadd.f32 %v10022, %v10097
      %v10101 = vld [vmem:[#allocation4 + $0x5a] sm:$0x1]
      %s10102 = scalar_lea.vmem %s5, 288
      %v10103 = vld [vmem:[%s10102] sm:$0xff]
      %v10104 = vld [vmem:[%s10102 + $0x8] sm:$0xff]
      %v10106 = vsel %vm8700, %v10101, 0
      %10108 = vmatprep.subr.mxu0 0.0
      %10109 = vmatpush1.msra.mxu0 %v10103
      %10110 = vmatprep.subr.mxu0 0.0
      %10111 = vmatpush1.msra.mxu0 %v10104
      %10112 = vmatprep.subr.mxu0 0.0
      %10113 = vmatpush1.msra.mxu0 0.0
      %10114 = vmatprep.subr.mxu0 0.0
      %10115 = vmatpush1.msra.mxu0 0.0
      %10116 = vmatprep.subr.mxu0 0.0
      %10117 = vmatpush1.msra.mxu0 0.0
      %10118 = vmatprep.subr.mxu0 0.0
      %10119 = vmatpush1.msra.mxu0 0.0
      %10120 = vmatprep.subr.mxu0 0.0
      %10121 = vmatpush1.msra.mxu0 0.0
      %10122 = vmatprep.subr.mxu0 0.0
      %10123 = vmatpush1.msra.mxu0 0.0
      %10124 = vmatprep.subr.mxu0 0.0
      %10125 = vmatpush1.msra.mxu0 0.0
      %10126 = vmatprep.subr.mxu0 0.0
      %10127 = vmatpush1.msra.mxu0 0.0
      %10128 = vmatprep.subr.mxu0 0.0
      %10129 = vmatpush1.msra.mxu0 0.0
      %10130 = vmatprep.subr.mxu0 0.0
      %10131 = vmatpush1.msra.mxu0 0.0
      %10132 = vmatprep.subr.mxu0 0.0
      %10133 = vmatpush1.msra.mxu0 0.0
      %10134 = vmatprep.subr.mxu0 0.0
      %10135 = vmatpush1.msra.mxu0 0.0
      %10136 = vmatprep.subr.mxu0 0.0
      %10137 = vmatpush1.msra.mxu0 0.0
      %10138 = vmatprep.subr.mxu0 0.0
      %10139 = vmatpush1.msra.mxu0 0.0
      %10140 = vmatprep.subr.mxu0 0.0
      %10141 = vmatpush1.msra.mxu0 0.0
      %10142 = vmatprep.subr.mxu0 0.0
      %10143 = vmatpush1.msra.mxu0 0.0
      %10144 = vmatprep.subr.mxu0 0.0
      %10145 = vmatpush1.msra.mxu0 0.0
      %10146 = vmatprep.subr.mxu0 0.0
      %10147 = vmatpush1.msra.mxu0 0.0
      %10148 = vmatprep.subr.mxu0 0.0
      %10149 = vmatpush1.msra.mxu0 0.0
      %10150 = vmatprep.subr.mxu0 0.0
      %10151 = vmatpush1.msra.mxu0 0.0
      %10152 = vmatprep.subr.mxu0 0.0
      %10153 = vmatpush1.msra.mxu0 0.0
      %10154 = vmatprep.subr.mxu0 0.0
      %10155 = vmatpush1.msra.mxu0 0.0
      %10156 = vmatprep.subr.mxu0 0.0
      %10157 = vmatpush1.msra.mxu0 0.0
      %10158 = vmatprep.subr.mxu0 0.0
      %10159 = vmatpush1.msra.mxu0 0.0
      %10160 = vmatprep.subr.mxu0 0.0
      %10161 = vmatpush1.msra.mxu0 0.0
      %10162 = vmatprep.subr.mxu0 0.0
      %10163 = vmatpush1.msra.mxu0 0.0
      %10164 = vmatprep.subr.mxu0 0.0
      %10165 = vmatpush1.msra.mxu0 0.0
      %10166 = vmatprep.subr.mxu0 0.0
      %10167 = vmatpush1.msra.mxu0 0.0
      %10168 = vmatprep.subr.mxu0 0.0
      %10169 = vmatpush1.msra.mxu0 0.0
      %10170 = vmatprep.subr.mxu0 0.0
      %10171 = vmatpush1.msra.mxu0 0.0
      %10172 = vmatprep.mubr.f32.mxu0 0.0
      %10173 = vmatmul.mubr.f32.gmra.mrb[0].mxu0 %v10106
      %v10174 = vpop.f32.mrb[0].mxu0
      %v10175 = vadd.f32 0.0, %v10174
      %v10176 = vpop.f32.mrb[0].mxu0
      %10177 = vdwg.mxu0
      %v10178 = vadd.f32 %v10100, %v10175
      %v10179 = vld [vmem:[#allocation4 + $0x5c] sm:$0x1]
      %s10180 = scalar_lea.vmem %s5, 304
      %v10181 = vld [vmem:[%s10180] sm:$0xff]
      %v10182 = vld [vmem:[%s10180 + $0x8] sm:$0xff]
      %v10184 = vsel %vm8700, %v10179, 0
      %10186 = vmatprep.subr.mxu0 0.0
      %10187 = vmatpush1.msra.mxu0 %v10181
      %10188 = vmatprep.subr.mxu0 0.0
      %10189 = vmatpush1.msra.mxu0 %v10182
      %10190 = vmatprep.subr.mxu0 0.0
      %10191 = vmatpush1.msra.mxu0 0.0
      %10192 = vmatprep.subr.mxu0 0.0
      %10193 = vmatpush1.msra.mxu0 0.0
      %10194 = vmatprep.subr.mxu0 0.0
      %10195 = vmatpush1.msra.mxu0 0.0
      %10196 = vmatprep.subr.mxu0 0.0
      %10197 = vmatpush1.msra.mxu0 0.0
      %10198 = vmatprep.subr.mxu0 0.0
      %10199 = vmatpush1.msra.mxu0 0.0
      %10200 = vmatprep.subr.mxu0 0.0
      %10201 = vmatpush1.msra.mxu0 0.0
      %10202 = vmatprep.subr.mxu0 0.0
      %10203 = vmatpush1.msra.mxu0 0.0
      %10204 = vmatprep.subr.mxu0 0.0
      %10205 = vmatpush1.msra.mxu0 0.0
      %10206 = vmatprep.subr.mxu0 0.0
      %10207 = vmatpush1.msra.mxu0 0.0
      %10208 = vmatprep.subr.mxu0 0.0
      %10209 = vmatpush1.msra.mxu0 0.0
      %10210 = vmatprep.subr.mxu0 0.0
      %10211 = vmatpush1.msra.mxu0 0.0
      %10212 = vmatprep.subr.mxu0 0.0
      %10213 = vmatpush1.msra.mxu0 0.0
      %10214 = vmatprep.subr.mxu0 0.0
      %10215 = vmatpush1.msra.mxu0 0.0
      %10216 = vmatprep.subr.mxu0 0.0
      %10217 = vmatpush1.msra.mxu0 0.0
      %10218 = vmatprep.subr.mxu0 0.0
      %10219 = vmatpush1.msra.mxu0 0.0
      %10220 = vmatprep.subr.mxu0 0.0
      %10221 = vmatpush1.msra.mxu0 0.0
      %10222 = vmatprep.subr.mxu0 0.0
      %10223 = vmatpush1.msra.mxu0 0.0
      %10224 = vmatprep.subr.mxu0 0.0
      %10225 = vmatpush1.msra.mxu0 0.0
      %10226 = vmatprep.subr.mxu0 0.0
      %10227 = vmatpush1.msra.mxu0 0.0
      %10228 = vmatprep.subr.mxu0 0.0
      %10229 = vmatpush1.msra.mxu0 0.0
      %10230 = vmatprep.subr.mxu0 0.0
      %10231 = vmatpush1.msra.mxu0 0.0
      %10232 = vmatprep.subr.mxu0 0.0
      %10233 = vmatpush1.msra.mxu0 0.0
      %10234 = vmatprep.subr.mxu0 0.0
      %10235 = vmatpush1.msra.mxu0 0.0
      %10236 = vmatprep.subr.mxu0 0.0
      %10237 = vmatpush1.msra.mxu0 0.0
      %10238 = vmatprep.subr.mxu0 0.0
      %10239 = vmatpush1.msra.mxu0 0.0
      %10240 = vmatprep.subr.mxu0 0.0
      %10241 = vmatpush1.msra.mxu0 0.0
      %10242 = vmatprep.subr.mxu0 0.0
      %10243 = vmatpush1.msra.mxu0 0.0
      %10244 = vmatprep.subr.mxu0 0.0
      %10245 = vmatpush1.msra.mxu0 0.0
      %10246 = vmatprep.subr.mxu0 0.0
      %10247 = vmatpush1.msra.mxu0 0.0
      %10248 = vmatprep.subr.mxu0 0.0
      %10249 = vmatpush1.msra.mxu0 0.0
      %10250 = vmatprep.mubr.f32.mxu0 0.0
      %10251 = vmatmul.mubr.f32.gmra.mrb[0].mxu0 %v10184
      %v10252 = vpop.f32.mrb[0].mxu0
      %v10253 = vadd.f32 0.0, %v10252
      %v10254 = vpop.f32.mrb[0].mxu0
      %10255 = vdwg.mxu0
      %v10256 = vadd.f32 %v10178, %v10253
      %v10257 = vld [vmem:[#allocation4 + $0x70] sm:$0x1]
      %s10258 = scalar_lea.vmem %s5, 320
      %v10259 = vld [vmem:[%s10258] sm:$0xff]
      %v10260 = vld [vmem:[%s10258 + $0x8] sm:$0xff]
      %v10262 = vsel %vm8700, %v10257, 0
      %10264 = vmatprep.subr.mxu0 0.0
      %10265 = vmatpush1.msra.mxu0 %v10259
      %10266 = vmatprep.subr.mxu0 0.0
      %10267 = vmatpush1.msra.mxu0 %v10260
      %10268 = vmatprep.subr.mxu0 0.0
      %10269 = vmatpush1.msra.mxu0 0.0
      %10270 = vmatprep.subr.mxu0 0.0
      %10271 = vmatpush1.msra.mxu0 0.0
      %10272 = vmatprep.subr.mxu0 0.0
      %10273 = vmatpush1.msra.mxu0 0.0
      %10274 = vmatprep.subr.mxu0 0.0
      %10275 = vmatpush1.msra.mxu0 0.0
      %10276 = vmatprep.subr.mxu0 0.0
      %10277 = vmatpush1.msra.mxu0 0.0
      %10278 = vmatprep.subr.mxu0 0.0
      %10279 = vmatpush1.msra.mxu0 0.0
      %10280 = vmatprep.subr.mxu0 0.0
      %10281 = vmatpush1.msra.mxu0 0.0
      %10282 = vmatprep.subr.mxu0 0.0
      %10283 = vmatpush1.msra.mxu0 0.0
      %10284 = vmatprep.subr.mxu0 0.0
      %10285 = vmatpush1.msra.mxu0 0.0
      %10286 = vmatprep.subr.mxu0 0.0
      %10287 = vmatpush1.msra.mxu0 0.0
      %10288 = vmatprep.subr.mxu0 0.0
      %10289 = vmatpush1.msra.mxu0 0.0
      %10290 = vmatprep.subr.mxu0 0.0
      %10291 = vmatpush1.msra.mxu0 0.0
      %10292 = vmatprep.subr.mxu0 0.0
      %10293 = vmatpush1.msra.mxu0 0.0
      %10294 = vmatprep.subr.mxu0 0.0
      %10295 = vmatpush1.msra.mxu0 0.0
      %10296 = vmatprep.subr.mxu0 0.0
      %10297 = vmatpush1.msra.mxu0 0.0
      %10298 = vmatprep.subr.mxu0 0.0
      %10299 = vmatpush1.msra.mxu0 0.0
      %10300 = vmatprep.subr.mxu0 0.0
      %10301 = vmatpush1.msra.mxu0 0.0
      %10302 = vmatprep.subr.mxu0 0.0
      %10303 = vmatpush1.msra.mxu0 0.0
      %10304 = vmatprep.subr.mxu0 0.0
      %10305 = vmatpush1.msra.mxu0 0.0
      %10306 = vmatprep.subr.mxu0 0.0
      %10307 = vmatpush1.msra.mxu0 0.0
      %10308 = vmatprep.subr.mxu0 0.0
      %10309 = vmatpush1.msra.mxu0 0.0
      %10310 = vmatprep.subr.mxu0 0.0
      %10311 = vmatpush1.msra.mxu0 0.0
      %10312 = vmatprep.subr.mxu0 0.0
      %10313 = vmatpush1.msra.mxu0 0.0
      %10314 = vmatprep.subr.mxu0 0.0
      %10315 = vmatpush1.msra.mxu0 0.0
      %10316 = vmatprep.subr.mxu0 0.0
      %10317 = vmatpush1.msra.mxu0 0.0
      %10318 = vmatprep.subr.mxu0 0.0
      %10319 = vmatpush1.msra.mxu0 0.0
      %10320 = vmatprep.subr.mxu0 0.0
      %10321 = vmatpush1.msra.mxu0 0.0
      %10322 = vmatprep.subr.mxu0 0.0
      %10323 = vmatpush1.msra.mxu0 0.0
      %10324 = vmatprep.subr.mxu0 0.0
      %10325 = vmatpush1.msra.mxu0 0.0
      %10326 = vmatprep.subr.mxu0 0.0
      %10327 = vmatpush1.msra.mxu0 0.0
      %10328 = vmatprep.mubr.f32.mxu0 0.0
      %10329 = vmatmul.mubr.f32.gmra.mrb[0].mxu0 %v10262
      %v10330 = vpop.f32.mrb[0].mxu0
      %v10331 = vadd.f32 0.0, %v10330
      %v10332 = vpop.f32.mrb[0].mxu0
      %10333 = vdwg.mxu0
      %v10334 = vadd.f32 %v10256, %v10331
      %v10335 = vld [vmem:[#allocation4 + $0x72] sm:$0x1]
      %s10336 = scalar_lea.vmem %s5, 336
      %v10337 = vld [vmem:[%s10336] sm:$0xff]
      %v10338 = vld [vmem:[%s10336 + $0x8] sm:$0xff]
      %v10340 = vsel %vm8700, %v10335, 0
      %10342 = vmatprep.subr.mxu0 0.0
      %10343 = vmatpush1.msra.mxu0 %v10337
      %10344 = vmatprep.subr.mxu0 0.0
      %10345 = vmatpush1.msra.mxu0 %v10338
      %10346 = vmatprep.subr.mxu0 0.0
      %10347 = vmatpush1.msra.mxu0 0.0
      %10348 = vmatprep.subr.mxu0 0.0
      %10349 = vmatpush1.msra.mxu0 0.0
      %10350 = vmatprep.subr.mxu0 0.0
      %10351 = vmatpush1.msra.mxu0 0.0
      %10352 = vmatprep.subr.mxu0 0.0
      %10353 = vmatpush1.msra.mxu0 0.0
      %10354 = vmatprep.subr.mxu0 0.0
      %10355 = vmatpush1.msra.mxu0 0.0
      %10356 = vmatprep.subr.mxu0 0.0
      %10357 = vmatpush1.msra.mxu0 0.0
      %10358 = vmatprep.subr.mxu0 0.0
      %10359 = vmatpush1.msra.mxu0 0.0
      %10360 = vmatprep.subr.mxu0 0.0
      %10361 = vmatpush1.msra.mxu0 0.0
      %10362 = vmatprep.subr.mxu0 0.0
      %10363 = vmatpush1.msra.mxu0 0.0
      %10364 = vmatprep.subr.mxu0 0.0
      %10365 = vmatpush1.msra.mxu0 0.0
      %10366 = vmatprep.subr.mxu0 0.0
      %10367 = vmatpush1.msra.mxu0 0.0
      %10368 = vmatprep.subr.mxu0 0.0
      %10369 = vmatpush1.msra.mxu0 0.0
      %10370 = vmatprep.subr.mxu0 0.0
      %10371 = vmatpush1.msra.mxu0 0.0
      %10372 = vmatprep.subr.mxu0 0.0
      %10373 = vmatpush1.msra.mxu0 0.0
      %10374 = vmatprep.subr.mxu0 0.0
      %10375 = vmatpush1.msra.mxu0 0.0
      %10376 = vmatprep.subr.mxu0 0.0
      %10377 = vmatpush1.msra.mxu0 0.0
      %10378 = vmatprep.subr.mxu0 0.0
      %10379 = vmatpush1.msra.mxu0 0.0
      %10380 = vmatprep.subr.mxu0 0.0
      %10381 = vmatpush1.msra.mxu0 0.0
      %10382 = vmatprep.subr.mxu0 0.0
      %10383 = vmatpush1.msra.mxu0 0.0
      %10384 = vmatprep.subr.mxu0 0.0
      %10385 = vmatpush1.msra.mxu0 0.0
      %10386 = vmatprep.subr.mxu0 0.0
      %10387 = vmatpush1.msra.mxu0 0.0
      %10388 = vmatprep.subr.mxu0 0.0
      %10389 = vmatpush1.msra.mxu0 0.0
      %10390 = vmatprep.subr.mxu0 0.0
      %10391 = vmatpush1.msra.mxu0 0.0
      %10392 = vmatprep.subr.mxu0 0.0
      %10393 = vmatpush1.msra.mxu0 0.0
      %10394 = vmatprep.subr.mxu0 0.0
      %10395 = vmatpush1.msra.mxu0 0.0
      %10396 = vmatprep.subr.mxu0 0.0
      %10397 = vmatpush1.msra.mxu0 0.0
      %10398 = vmatprep.subr.mxu0 0.0
      %10399 = vmatpush1.msra.mxu0 0.0
      %10400 = vmatprep.subr.mxu0 0.0
      %10401 = vmatpush1.msra.mxu0 0.0
      %10402 = vmatprep.subr.mxu0 0.0
      %10403 = vmatpush1.msra.mxu0 0.0
      %10404 = vmatprep.subr.mxu0 0.0
      %10405 = vmatpush1.msra.mxu0 0.0
      %10406 = vmatprep.mubr.f32.mxu0 0.0
      %10407 = vmatmul.mubr.f32.gmra.mrb[0].mxu0 %v10340
      %v10408 = vpop.f32.mrb[0].mxu0
      %v10409 = vadd.f32 0.0, %v10408
      %v10410 = vpop.f32.mrb[0].mxu0
      %10411 = vdwg.mxu0
      %v10412 = vadd.f32 %v10334, %v10409
      %v10413 = vld [vmem:[#allocation4 + $0x74] sm:$0x1]
      %s10414 = scalar_lea.vmem %s5, 352
      %v10415 = vld [vmem:[%s10414] sm:$0xff]
      %v10416 = vld [vmem:[%s10414 + $0x8] sm:$0xff]
      %v10418 = vsel %vm8700, %v10413, 0
      %10420 = vmatprep.subr.mxu0 0.0
      %10421 = vmatpush1.msra.mxu0 %v10415
      %10422 = vmatprep.subr.mxu0 0.0
      %10423 = vmatpush1.msra.mxu0 %v10416
      %10424 = vmatprep.subr.mxu0 0.0
      %10425 = vmatpush1.msra.mxu0 0.0
      %10426 = vmatprep.subr.mxu0 0.0
      %10427 = vmatpush1.msra.mxu0 0.0
      %10428 = vmatprep.subr.mxu0 0.0
      %10429 = vmatpush1.msra.mxu0 0.0
      %10430 = vmatprep.subr.mxu0 0.0
      %10431 = vmatpush1.msra.mxu0 0.0
      %10432 = vmatprep.subr.mxu0 0.0
      %10433 = vmatpush1.msra.mxu0 0.0
      %10434 = vmatprep.subr.mxu0 0.0
      %10435 = vmatpush1.msra.mxu0 0.0
      %10436 = vmatprep.subr.mxu0 0.0
      %10437 = vmatpush1.msra.mxu0 0.0
      %10438 = vmatprep.subr.mxu0 0.0
      %10439 = vmatpush1.msra.mxu0 0.0
      %10440 = vmatprep.subr.mxu0 0.0
      %10441 = vmatpush1.msra.mxu0 0.0
      %10442 = vmatprep.subr.mxu0 0.0
      %10443 = vmatpush1.msra.mxu0 0.0
      %10444 = vmatprep.subr.mxu0 0.0
      %10445 = vmatpush1.msra.mxu0 0.0
      %10446 = vmatprep.subr.mxu0 0.0
      %10447 = vmatpush1.msra.mxu0 0.0
      %10448 = vmatprep.subr.mxu0 0.0
      %10449 = vmatpush1.msra.mxu0 0.0
      %10450 = vmatprep.subr.mxu0 0.0
      %10451 = vmatpush1.msra.mxu0 0.0
      %10452 = vmatprep.subr.mxu0 0.0
      %10453 = vmatpush1.msra.mxu0 0.0
      %10454 = vmatprep.subr.mxu0 0.0
      %10455 = vmatpush1.msra.mxu0 0.0
      %10456 = vmatprep.subr.mxu0 0.0
      %10457 = vmatpush1.msra.mxu0 0.0
      %10458 = vmatprep.subr.mxu0 0.0
      %10459 = vmatpush1.msra.mxu0 0.0
      %10460 = vmatprep.subr.mxu0 0.0
      %10461 = vmatpush1.msra.mxu0 0.0
      %10462 = vmatprep.subr.mxu0 0.0
      %10463 = vmatpush1.msra.mxu0 0.0
      %10464 = vmatprep.subr.mxu0 0.0
      %10465 = vmatpush1.msra.mxu0 0.0
      %10466 = vmatprep.subr.mxu0 0.0
      %10467 = vmatpush1.msra.mxu0 0.0
      %10468 = vmatprep.subr.mxu0 0.0
      %10469 = vmatpush1.msra.mxu0 0.0
      %10470 = vmatprep.subr.mxu0 0.0
      %10471 = vmatpush1.msra.mxu0 0.0
      %10472 = vmatprep.subr.mxu0 0.0
      %10473 = vmatpush1.msra.mxu0 0.0
      %10474 = vmatprep.subr.mxu0 0.0
      %10475 = vmatpush1.msra.mxu0 0.0
      %10476 = vmatprep.subr.mxu0 0.0
      %10477 = vmatpush1.msra.mxu0 0.0
      %10478 = vmatprep.subr.mxu0 0.0
      %10479 = vmatpush1.msra.mxu0 0.0
      %10480 = vmatprep.subr.mxu0 0.0
      %10481 = vmatpush1.msra.mxu0 0.0
      %10482 = vmatprep.subr.mxu0 0.0
      %10483 = vmatpush1.msra.mxu0 0.0
      %10484 = vmatprep.mubr.f32.mxu0 0.0
      %10485 = vmatmul.mubr.f32.gmra.mrb[0].mxu0 %v10418
      %v10486 = vpop.f32.mrb[0].mxu0
      %v10487 = vadd.f32 0.0, %v10486
      %v10488 = vpop.f32.mrb[0].mxu0
      %10489 = vdwg.mxu0
      %v10490 = vadd.f32 %v10412, %v10487
      %v10491 = vld [vmem:[#allocation4 + $0x76] sm:$0x1]
      %s10492 = scalar_lea.vmem %s5, 368
      %v10493 = vld [vmem:[%s10492] sm:$0xff]
      %v10494 = vld [vmem:[%s10492 + $0x8] sm:$0xff]
      %v10496 = vsel %vm8700, %v10491, 0
      %10498 = vmatprep.subr.mxu0 0.0
      %10499 = vmatpush1.msra.mxu0 %v10493
      %10500 = vmatprep.subr.mxu0 0.0
      %10501 = vmatpush1.msra.mxu0 %v10494
      %10502 = vmatprep.subr.mxu0 0.0
      %10503 = vmatpush1.msra.mxu0 0.0
      %10504 = vmatprep.subr.mxu0 0.0
      %10505 = vmatpush1.msra.mxu0 0.0
      %10506 = vmatprep.subr.mxu0 0.0
      %10507 = vmatpush1.msra.mxu0 0.0
      %10508 = vmatprep.subr.mxu0 0.0
      %10509 = vmatpush1.msra.mxu0 0.0
      %10510 = vmatprep.subr.mxu0 0.0
      %10511 = vmatpush1.msra.mxu0 0.0
      %10512 = vmatprep.subr.mxu0 0.0
      %10513 = vmatpush1.msra.mxu0 0.0
      %10514 = vmatprep.subr.mxu0 0.0
      %10515 = vmatpush1.msra.mxu0 0.0
      %10516 = vmatprep.subr.mxu0 0.0
      %10517 = vmatpush1.msra.mxu0 0.0
      %10518 = vmatprep.subr.mxu0 0.0
      %10519 = vmatpush1.msra.mxu0 0.0
      %10520 = vmatprep.subr.mxu0 0.0
      %10521 = vmatpush1.msra.mxu0 0.0
      %10522 = vmatprep.subr.mxu0 0.0
      %10523 = vmatpush1.msra.mxu0 0.0
      %10524 = vmatprep.subr.mxu0 0.0
      %10525 = vmatpush1.msra.mxu0 0.0
      %10526 = vmatprep.subr.mxu0 0.0
      %10527 = vmatpush1.msra.mxu0 0.0
      %10528 = vmatprep.subr.mxu0 0.0
      %10529 = vmatpush1.msra.mxu0 0.0
      %10530 = vmatprep.subr.mxu0 0.0
      %10531 = vmatpush1.msra.mxu0 0.0
      %10532 = vmatprep.subr.mxu0 0.0
      %10533 = vmatpush1.msra.mxu0 0.0
      %10534 = vmatprep.subr.mxu0 0.0
      %10535 = vmatpush1.msra.mxu0 0.0
      %10536 = vmatprep.subr.mxu0 0.0
      %10537 = vmatpush1.msra.mxu0 0.0
      %10538 = vmatprep.subr.mxu0 0.0
      %10539 = vmatpush1.msra.mxu0 0.0
      %10540 = vmatprep.subr.mxu0 0.0
      %10541 = vmatpush1.msra.mxu0 0.0
      %10542 = vmatprep.subr.mxu0 0.0
      %10543 = vmatpush1.msra.mxu0 0.0
      %10544 = vmatprep.subr.mxu0 0.0
      %10545 = vmatpush1.msra.mxu0 0.0
      %10546 = vmatprep.subr.mxu0 0.0
      %10547 = vmatpush1.msra.mxu0 0.0
      %10548 = vmatprep.subr.mxu0 0.0
      %10549 = vmatpush1.msra.mxu0 0.0
      %10550 = vmatprep.subr.mxu0 0.0
      %10551 = vmatpush1.msra.mxu0 0.0
      %10552 = vmatprep.subr.mxu0 0.0
      %10553 = vmatpush1.msra.mxu0 0.0
      %10554 = vmatprep.subr.mxu0 0.0
      %10555 = vmatpush1.msra.mxu0 0.0
      %10556 = vmatprep.subr.mxu0 0.0
      %10557 = vmatpush1.msra.mxu0 0.0
      %10558 = vmatprep.subr.mxu0 0.0
      %10559 = vmatpush1.msra.mxu0 0.0
      %10560 = vmatprep.subr.mxu0 0.0
      %10561 = vmatpush1.msra.mxu0 0.0
      %10562 = vmatprep.mubr.f32.mxu0 0.0
      %10563 = vmatmul.mubr.f32.gmra.mrb[0].mxu0 %v10496
      %v10564 = vpop.f32.mrb[0].mxu0
      %v10565 = vadd.f32 0.0, %v10564
      %v10566 = vpop.f32.mrb[0].mxu0
      %10567 = vdwg.mxu0
      %v10568 = vadd.f32 %v10490, %v10565
      %v10569 = vld [vmem:[#allocation4 + $0x78] sm:$0x1]
      %s10570 = scalar_lea.vmem %s5, 384
      %v10571 = vld [vmem:[%s10570] sm:$0xff]
      %v10572 = vld [vmem:[%s10570 + $0x8] sm:$0xff]
      %v10574 = vsel %vm8700, %v10569, 0
      %10576 = vmatprep.subr.mxu0 0.0
      %10577 = vmatpush1.msra.mxu0 %v10571
      %10578 = vmatprep.subr.mxu0 0.0
      %10579 = vmatpush1.msra.mxu0 %v10572
      %10580 = vmatprep.subr.mxu0 0.0
      %10581 = vmatpush1.msra.mxu0 0.0
      %10582 = vmatprep.subr.mxu0 0.0
      %10583 = vmatpush1.msra.mxu0 0.0
      %10584 = vmatprep.subr.mxu0 0.0
      %10585 = vmatpush1.msra.mxu0 0.0
      %10586 = vmatprep.subr.mxu0 0.0
      %10587 = vmatpush1.msra.mxu0 0.0
      %10588 = vmatprep.subr.mxu0 0.0
      %10589 = vmatpush1.msra.mxu0 0.0
      %10590 = vmatprep.subr.mxu0 0.0
      %10591 = vmatpush1.msra.mxu0 0.0
      %10592 = vmatprep.subr.mxu0 0.0
      %10593 = vmatpush1.msra.mxu0 0.0
      %10594 = vmatprep.subr.mxu0 0.0
      %10595 = vmatpush1.msra.mxu0 0.0
      %10596 = vmatprep.subr.mxu0 0.0
      %10597 = vmatpush1.msra.mxu0 0.0
      %10598 = vmatprep.subr.mxu0 0.0
      %10599 = vmatpush1.msra.mxu0 0.0
      %10600 = vmatprep.subr.mxu0 0.0
      %10601 = vmatpush1.msra.mxu0 0.0
      %10602 = vmatprep.subr.mxu0 0.0
      %10603 = vmatpush1.msra.mxu0 0.0
      %10604 = vmatprep.subr.mxu0 0.0
      %10605 = vmatpush1.msra.mxu0 0.0
      %10606 = vmatprep.subr.mxu0 0.0
      %10607 = vmatpush1.msra.mxu0 0.0
      %10608 = vmatprep.subr.mxu0 0.0
      %10609 = vmatpush1.msra.mxu0 0.0
      %10610 = vmatprep.subr.mxu0 0.0
      %10611 = vmatpush1.msra.mxu0 0.0
      %10612 = vmatprep.subr.mxu0 0.0
      %10613 = vmatpush1.msra.mxu0 0.0
      %10614 = vmatprep.subr.mxu0 0.0
      %10615 = vmatpush1.msra.mxu0 0.0
      %10616 = vmatprep.subr.mxu0 0.0
      %10617 = vmatpush1.msra.mxu0 0.0
      %10618 = vmatprep.subr.mxu0 0.0
      %10619 = vmatpush1.msra.mxu0 0.0
      %10620 = vmatprep.subr.mxu0 0.0
      %10621 = vmatpush1.msra.mxu0 0.0
      %10622 = vmatprep.subr.mxu0 0.0
      %10623 = vmatpush1.msra.mxu0 0.0
      %10624 = vmatprep.subr.mxu0 0.0
      %10625 = vmatpush1.msra.mxu0 0.0
      %10626 = vmatprep.subr.mxu0 0.0
      %10627 = vmatpush1.msra.mxu0 0.0
      %10628 = vmatprep.subr.mxu0 0.0
      %10629 = vmatpush1.msra.mxu0 0.0
      %10630 = vmatprep.subr.mxu0 0.0
      %10631 = vmatpush1.msra.mxu0 0.0
      %10632 = vmatprep.subr.mxu0 0.0
      %10633 = vmatpush1.msra.mxu0 0.0
      %10634 = vmatprep.subr.mxu0 0.0
      %10635 = vmatpush1.msra.mxu0 0.0
      %10636 = vmatprep.subr.mxu0 0.0
      %10637 = vmatpush1.msra.mxu0 0.0
      %10638 = vmatprep.subr.mxu0 0.0
      %10639 = vmatpush1.msra.mxu0 0.0
      %10640 = vmatprep.mubr.f32.mxu0 0.0
      %10641 = vmatmul.mubr.f32.gmra.mrb[0].mxu0 %v10574
      %v10642 = vpop.f32.mrb[0].mxu0
      %v10643 = vadd.f32 0.0, %v10642
      %v10644 = vpop.f32.mrb[0].mxu0
      %10645 = vdwg.mxu0
      %v10646 = vadd.f32 %v10568, %v10643
      %v10647 = vxor.u32 %v10646, 2147483648
      %v10648 = vmul.f32 %v10647, 1.442695
      %v10649 = vpow.pop %v10648
      %v10650 = vadd.f32 %v10649, 1.0
      %v10651 = vrcp.pop %v10650
      %v10652 = vmul.f32 1.0, %v10651
      %v10653 = vld [vmem:[%s7] sm:$0xff]
      %v10654 = vld [vmem:[%s7 + $0x8] sm:$0xff]
      %v10655 = vld [vmem:[%s7 + $0x10] sm:$0xff]
      %v10656 = vld [vmem:[%s7 + $0x18] sm:$0xff]
      %v10657 = vld [vmem:[%s7 + $0x20] sm:$0xff]
      %v10658 = vld [vmem:[%s7 + $0x28] sm:$0xff]
      %v10659 = vld [vmem:[%s7 + $0x30] sm:$0xff]
      %v10660 = vld [vmem:[%s7 + $0x38] sm:$0xff]
      %v10661 = vld [vmem:[%s7 + $0x40] sm:$0xff]
      %v10662 = vld [vmem:[%s7 + $0x48] sm:$0xff]
      %v10663 = vld [vmem:[%s7 + $0x50] sm:$0xff]
      %v10664 = vld [vmem:[%s7 + $0x58] sm:$0xff]
      %v10665 = vld [vmem:[%s7 + $0x60] sm:$0xff]
      %v10666 = vld [vmem:[%s7 + $0x68] sm:$0xff]
      %v10667 = vld [vmem:[%s7 + $0x70] sm:$0xff]
      %v10668 = vld [vmem:[%s7 + $0x78] sm:$0xff]
      %v10669 = vld [vmem:[%s8] sm:$0x1]
      %10670 = vmatprep.subr.mxu0 0.0
      %10671 = vmatpush1.msra.mxu0 %v10653
      %10672 = vmatprep.subr.mxu0 0.0
      %10673 = vmatpush1.msra.mxu0 %v10654
      %10674 = vmatprep.subr.mxu0 0.0
      %10675 = vmatpush1.msra.mxu0 %v10655
      %10676 = vmatprep.subr.mxu0 0.0
      %10677 = vmatpush1.msra.mxu0 %v10656
      %10678 = vmatprep.subr.mxu0 0.0
      %10679 = vmatpush1.msra.mxu0 %v10657
      %10680 = vmatprep.subr.mxu0 0.0
      %10681 = vmatpush1.msra.mxu0 %v10658
      %10682 = vmatprep.subr.mxu0 0.0
      %10683 = vmatpush1.msra.mxu0 %v10659
      %10684 = vmatprep.subr.mxu0 0.0
      %10685 = vmatpush1.msra.mxu0 %v10660
      %10686 = vmatprep.subr.mxu0 0.0
      %10687 = vmatpush1.msra.mxu0 %v10661
      %10688 = vmatprep.subr.mxu0 0.0
      %10689 = vmatpush1.msra.mxu0 %v10662
      %10690 = vmatprep.subr.mxu0 0.0
      %10691 = vmatpush1.msra.mxu0 %v10663
      %10692 = vmatprep.subr.mxu0 0.0
      %10693 = vmatpush1.msra.mxu0 %v10664
      %10694 = vmatprep.subr.mxu0 0.0
      %10695 = vmatpush1.msra.mxu0 %v10665
      %10696 = vmatprep.subr.mxu0 0.0
      %10697 = vmatpush1.msra.mxu0 %v10666
      %10698 = vmatprep.subr.mxu0 0.0
      %10699 = vmatpush1.msra.mxu0 %v10667
      %10700 = vmatprep.subr.mxu0 0.0
      %10701 = vmatpush1.msra.mxu0 %v10668
      %10702 = vmatprep.subr.mxu0 0.0
      %10703 = vmatpush1.msra.mxu0 0.0
      %10704 = vmatprep.subr.mxu0 0.0
      %10705 = vmatpush1.msra.mxu0 0.0
      %10706 = vmatprep.subr.mxu0 0.0
      %10707 = vmatpush1.msra.mxu0 0.0
      %10708 = vmatprep.subr.mxu0 0.0
      %10709 = vmatpush1.msra.mxu0 0.0
      %10710 = vmatprep.subr.mxu0 0.0
      %10711 = vmatpush1.msra.mxu0 0.0
      %10712 = vmatprep.subr.mxu0 0.0
      %10713 = vmatpush1.msra.mxu0 0.0
      %10714 = vmatprep.subr.mxu0 0.0
      %10715 = vmatpush1.msra.mxu0 0.0
      %10716 = vmatprep.subr.mxu0 0.0
      %10717 = vmatpush1.msra.mxu0 0.0
      %10718 = vmatprep.subr.mxu0 0.0
      %10719 = vmatpush1.msra.mxu0 0.0
      %10720 = vmatprep.subr.mxu0 0.0
      %10721 = vmatpush1.msra.mxu0 0.0
      %10722 = vmatprep.subr.mxu0 0.0
      %10723 = vmatpush1.msra.mxu0 0.0
      %10724 = vmatprep.subr.mxu0 0.0
      %10725 = vmatpush1.msra.mxu0 0.0
      %10726 = vmatprep.subr.mxu0 0.0
      %10727 = vmatpush1.msra.mxu0 0.0
      %10728 = vmatprep.subr.mxu0 0.0
      %10729 = vmatpush1.msra.mxu0 0.0
      %10730 = vmatprep.subr.mxu0 0.0
      %10731 = vmatpush1.msra.mxu0 0.0
      %10732 = vmatprep.subr.mxu0 0.0
      %10733 = vmatpush1.msra.mxu0 0.0
      %10734 = vmatprep.mubr.f32.mxu0 0.0
      %10735 = vmatmul.mubr.f32.gmra.mrb[0].mxu0 %v10652
      %v10736 = vpop.f32.mrb[0].mxu0
      %v10737 = vadd.f32 %v10669, %v10736
      %v10738 = vpop.f32.mrb[0].mxu0
      %10739 = vdwg.mxu0
      %v10740 = vxor.u32 %v10737, 2147483648
      %v10741 = vmul.f32 %v10740, 1.442695
      %v10742 = vpow.pop %v10741
      %v10743 = vadd.f32 %v10742, 1.0
      %v10744 = vrcp.pop %v10743
      %v10745 = vmul.f32 1.0, %v10744
      %v10746 = vld [vmem:[%s9] sm:$0xff]
      %v10747 = vld [vmem:[%s9 + $0x8] sm:$0xff]
      %v10748 = vld [vmem:[%s9 + $0x10] sm:$0xff]
      %v10749 = vld [vmem:[%s9 + $0x18] sm:$0xff]
      %v10750 = vld [vmem:[%s9 + $0x20] sm:$0xff]
      %v10751 = vld [vmem:[%s9 + $0x28] sm:$0xff]
      %v10752 = vld [vmem:[%s9 + $0x30] sm:$0xff]
      %v10753 = vld [vmem:[%s9 + $0x38] sm:$0xff]
      %v10754 = vld [vmem:[%s9 + $0x40] sm:$0xff]
      %v10755 = vld [vmem:[%s9 + $0x48] sm:$0xff]
      %v10756 = vld [vmem:[%s9 + $0x50] sm:$0xff]
      %v10757 = vld [vmem:[%s9 + $0x58] sm:$0xff]
      %v10758 = vld [vmem:[%s9 + $0x60] sm:$0xff]
      %v10759 = vld [vmem:[%s9 + $0x68] sm:$0xff]
      %v10760 = vld [vmem:[%s9 + $0x70] sm:$0xff]
      %v10761 = vld [vmem:[%s9 + $0x78] sm:$0xff]
      %v10762 = vld [vmem:[%s10] sm:$0x1]
      %10763 = vmatprep.subr.mxu0 0.0
      %10764 = vmatpush1.msra.mxu0 %v10746
      %10765 = vmatprep.subr.mxu0 0.0
      %10766 = vmatpush1.msra.mxu0 %v10747
      %10767 = vmatprep.subr.mxu0 0.0
      %10768 = vmatpush1.msra.mxu0 %v10748
      %10769 = vmatprep.subr.mxu0 0.0
      %10770 = vmatpush1.msra.mxu0 %v10749
      %10771 = vmatprep.subr.mxu0 0.0
      %10772 = vmatpush1.msra.mxu0 %v10750
      %10773 = vmatprep.subr.mxu0 0.0
      %10774 = vmatpush1.msra.mxu0 %v10751
      %10775 = vmatprep.subr.mxu0 0.0
      %10776 = vmatpush1.msra.mxu0 %v10752
      %10777 = vmatprep.subr.mxu0 0.0
      %10778 = vmatpush1.msra.mxu0 %v10753
      %10779 = vmatprep.subr.mxu0 0.0
      %10780 = vmatpush1.msra.mxu0 %v10754
      %10781 = vmatprep.subr.mxu0 0.0
      %10782 = vmatpush1.msra.mxu0 %v10755
      %10783 = vmatprep.subr.mxu0 0.0
      %10784 = vmatpush1.msra.mxu0 %v10756
      %10785 = vmatprep.subr.mxu0 0.0
      %10786 = vmatpush1.msra.mxu0 %v10757
      %10787 = vmatprep.subr.mxu0 0.0
      %10788 = vmatpush1.msra.mxu0 %v10758
      %10789 = vmatprep.subr.mxu0 0.0
      %10790 = vmatpush1.msra.mxu0 %v10759
      %10791 = vmatprep.subr.mxu0 0.0
      %10792 = vmatpush1.msra.mxu0 %v10760
      %10793 = vmatprep.subr.mxu0 0.0
      %10794 = vmatpush1.msra.mxu0 %v10761
      %10795 = vmatprep.subr.mxu0 0.0
      %10796 = vmatpush1.msra.mxu0 0.0
      %10797 = vmatprep.subr.mxu0 0.0
      %10798 = vmatpush1.msra.mxu0 0.0
      %10799 = vmatprep.subr.mxu0 0.0
      %10800 = vmatpush1.msra.mxu0 0.0
      %10801 = vmatprep.subr.mxu0 0.0
      %10802 = vmatpush1.msra.mxu0 0.0
      %10803 = vmatprep.subr.mxu0 0.0
      %10804 = vmatpush1.msra.mxu0 0.0
      %10805 = vmatprep.subr.mxu0 0.0
      %10806 = vmatpush1.msra.mxu0 0.0
      %10807 = vmatprep.subr.mxu0 0.0
      %10808 = vmatpush1.msra.mxu0 0.0
      %10809 = vmatprep.subr.mxu0 0.0
      %10810 = vmatpush1.msra.mxu0 0.0
      %10811 = vmatprep.subr.mxu0 0.0
      %10812 = vmatpush1.msra.mxu0 0.0
      %10813 = vmatprep.subr.mxu0 0.0
      %10814 = vmatpush1.msra.mxu0 0.0
      %10815 = vmatprep.subr.mxu0 0.0
      %10816 = vmatpush1.msra.mxu0 0.0
      %10817 = vmatprep.subr.mxu0 0.0
      %10818 = vmatpush1.msra.mxu0 0.0
      %10819 = vmatprep.subr.mxu0 0.0
      %10820 = vmatpush1.msra.mxu0 0.0
      %10821 = vmatprep.subr.mxu0 0.0
      %10822 = vmatpush1.msra.mxu0 0.0
      %10823 = vmatprep.subr.mxu0 0.0
      %10824 = vmatpush1.msra.mxu0 0.0
      %10825 = vmatprep.subr.mxu0 0.0
      %10826 = vmatpush1.msra.mxu0 0.0
      %10827 = vmatprep.mubr.f32.mxu0 0.0
      %10828 = vmatmul.mubr.f32.gmra.mrb[0].mxu0 %v10745
      %v10829 = vpop.f32.mrb[0].mxu0
      %v10830 = vadd.f32 %v10762, %v10829
      %v10831 = vpop.f32.mrb[0].mxu0
      %10832 = vdwg.mxu0
      %v10833 = vlaneseq
      %v10834 = vshrl.u32 %v10833, 7
      %v10835 = vsub.s32 0, %v10834
      %v10836 = vrot.slane %v10830, %v10835
      %10837 = vst [vmem:[%s386] sm:$0xff] %v10836
      %p10838 = scmp.lt.s32.totalorder %s22, 1
      %s10839 = scalar_select %p10838, %s22, 1
      %s10840 = smul.addr %s10839, 8
      %s10841 = scalar_lea.vmem %s11, %s10840
      // Predicated region
      $region65: #{lenet5_forward.1} parent=63 // pred_check
        %p10842 = pneg %p276
      $region66: #{lenet5_forward.1} parent=63 // pred_check_branch
        %10844 = sbr.rel (%p10842) target = $region68
      $region67: #{lenet5_forward.1} parent=63 // pred_region
        _
      $region68: #{lenet5_forward.1} parent=63 // pred_fallthru
        _
    $region64: #{lenet5_forward.1} parent=5 // pred_fallthru
      _
    %p10845 = scmp.le.s32.totalorder 2, %s17
    // Predicated region
    $region69: #{lenet5_forward.1} parent=5 // pred_check
      %p10846 = pneg %p10845
    $region70: #{lenet5_forward.1} parent=5 // pred_check_branch
      %10848 = sbr.rel (%p10846) target = $region72
    $region71: #{lenet5_forward.1} parent=5 // pred_region
      %s10849 = ssub.s32 %s17, 2
      // Predicated region
      $region73: #{lenet5_forward.1} parent=71 // pred_check
        %p10850 = pneg %p282
      $region74: #{lenet5_forward.1} parent=71 // pred_check_branch
        %10852 = sbr.rel (%p10850) target = $region76
      $region75: #{lenet5_forward.1} parent=71 // pred_region
        %p10853 = scmp.lt.s32.totalorder %s23, 1
        %s10854 = scalar_select %p10853, %s23, 1
        %s10855 = smul.addr %s10854, 8
        %s10856 = scalar_lea.vmem %s11, %s10855
      $region76: #{lenet5_forward.1} parent=71 // pred_fallthru
        _
    $region72: #{lenet5_forward.1} parent=5 // pred_fallthru
      _
  $region6: #{lenet5_forward.1} parent=0 // loop_footer
    %s21 = sadd.s32 1, %s17
  $region7: #{lenet5_forward.1} parent=0 // loop_footer_branch
    %16 = sbr.rel target = $region3
  $region8: #{lenet5_forward.1} parent=0 // loop_exit
    _

</llo_original>
